<compile_context>
chip_gen: v7x
topology: tpu7x:2x2x1
jax: 0.10.0
libtpu: 0.0.40
codegen_flags: <defaults>
</compile_context>

<pallas_src>
import jax
import jax.numpy as jnp
from jax.experimental import pallas as pl
from jax.experimental.pallas import tpu as pltpu


# ----------------------------------------------------------------------------
# Host-side one-time preparation: polyphase weight packing + scatter matrices.
# ----------------------------------------------------------------------------
def _input_scatter(H, W):
    """(H*W, (H+2)*(W+2)+2) 0/1 matrix: raw latent pixel (i,j) -> padded flat
    position (i+1)*(W+2)+(j+1); trailing 2 zero columns for tap overrun."""
    pr = jnp.zeros((H, H + 2), jnp.float32)
    pr = pr.at[jnp.arange(H), jnp.arange(H) + 1].set(1.0)
    pc = jnp.zeros((W, W + 2), jnp.float32)
    pc = pc.at[jnp.arange(W), jnp.arange(W) + 1].set(1.0)
    return jnp.pad(jnp.kron(pr, pc), ((0, 0), (0, 2)))


def _phase_scatter(H, W):
    """(H*(W+2), (2H+2)*(2W+2)+2) 0/1 matrix: parity-(0,0) output slab lane
    i*(W+2)+j  ->  next layer's padded flat lane (2i+1)*(2W+2)+(2j+1).
    Garbage columns j >= W map to zero (dropped)."""
    Wp, Wq = W + 2, 2 * W + 2
    pr = jnp.zeros((H, 2 * H + 2), jnp.float32)
    pr = pr.at[jnp.arange(H), 2 * jnp.arange(H) + 1].set(1.0)
    pc = jnp.zeros((Wp, Wq), jnp.float32)
    pc = pc.at[jnp.arange(W), 2 * jnp.arange(W) + 1].set(1.0)
    return jnp.pad(jnp.kron(pr, pc), ((0, 0), (0, 2)))


def prepare_decoder_params(params, spatial):
    """Returns the flat operand list [S_in, (w,b,gamma,beta,S)x3, w3, b3]."""
    H, W = spatial
    ops = [_input_scatter(H, W)]
    for li in range(4):
        w_t = params[f"w{li}"].astype(jnp.float32)          # (Cin, Cout, 5, 5)
        cin, cout = w_t.shape[0], w_t.shape[1]
        w_all = jnp.zeros((4 * cout, 9 * cin), jnp.float32)
        for dy in range(2):
            for dx in range(2):
                p = 2 * dy + dx
                for da in range(dy, 3):
                    for db in range(dx, 3):
                        ky, kx = 2 * da - dy, 2 * db - dx
                        t = 3 * da + db
                        blk = w_t[:, :, 4 - ky, 4 - kx].T     # (Cout, Cin)
                        w_all = w_all.at[p * cout:(p + 1) * cout,
                                         t * cin:(t + 1) * cin].set(blk)
        ops.append(w_all)
        ops.append(jnp.tile(params[f"b{li}"].astype(jnp.float32),
                            4).reshape(4 * cout, 1))
        if li < 3:
            ops.append(params[f"gamma{li}"].astype(jnp.float32))          # (C,C)
            ops.append(params[f"beta{li}"].astype(jnp.float32).reshape(-1, 1))
            ops.append(_phase_scatter(H, W))
            H, W = 2 * H, 2 * W
    return ops


# ----------------------------------------------------------------------------
# The fused decoder kernel (one pallas_call, everything resident in VMEM).
# ----------------------------------------------------------------------------
def _make_kernel(H0, W0):
    def kernel(x_ref, s_in_ref,
               w0_ref, b0_ref, g0_ref, be0_ref, sc0_ref,
               w1_ref, b1_ref, g1_ref, be1_ref, sc1_ref,
               w2_ref, b2_ref, g2_ref, be2_ref, sc2_ref,
               w3_ref, b3_ref,
               o_ref):

        def conv(xflat, w_ref, b_ref, H, W):
            # One deep-K MXU matmul: in-kernel im2col along the contraction
            # axis (9 lane-shifted views stacked on sublanes).
            Wp = W + 2
            Q = H * Wp
            offs = [da * Wp + db for da in range(3) for db in range(3)]
            p9 = jnp.concatenate([xflat[:, o:o + Q] for o in offs], axis=0)
            return jnp.dot(w_ref[...], p9,
                           preferred_element_type=jnp.float32) + b_ref[...]

        def igdn_scatter(acc, g_ref, be_ref, sc_ref, H, W):
            # Per-parity IGDN + scatter into the next layer's padded,
            # flattened input (exact 0/1 permutation matmul + lane shift).
            cout = g_ref.shape[0]
            wq = 2 * W + 2
            pf = (2 * H + 2) * wq + 2
            g = g_ref[...]
            be = be_ref[...]
            S = sc_ref[...]
            xnext = None
            for dy in range(2):
                for dx in range(2):
                    p = 2 * dy + dx
                    a = acc[p * cout:(p + 1) * cout, :]
                    nrm = jnp.dot(g, a * a,
                                  preferred_element_type=jnp.float32) + be
                    a = a * jnp.sqrt(nrm)
                    y = jnp.dot(a, S, preferred_element_type=jnp.float32)
                    k = dy * wq + dx
                    if k:
                        y = jnp.concatenate(
                            [jnp.zeros((cout, k), jnp.float32),
                             y[:, :pf - k]], axis=1)
                    xnext = y if xnext is None else xnext + y
            return xnext

        # Layer-0 padded/flattened input, built in-kernel from the raw latent.
        xflat = jnp.dot(x_ref[0], s_in_ref[...],
                        preferred_element_type=jnp.float32)

        H, W = H0, W0
        layers = ((w0_ref, b0_ref, g0_ref, be0_ref, sc0_ref),
                  (w1_ref, b1_ref, g1_ref, be1_ref, sc1_ref),
                  (w2_ref, b2_ref, g2_ref, be2_ref, sc2_ref))
        for w_ref, b_ref, g_ref, be_ref, sc_ref in layers:
            acc = conv(xflat, w_ref, b_ref, H, W)
            xflat = igdn_scatter(acc, g_ref, be_ref, sc_ref, H, W)
            H, W = 2 * H, 2 * W

        # Final deconv (Cout=3, no IGDN) as the kernel epilogue.
        o_ref[0] = conv(xflat, w3_ref, b3_ref, H, W)

    return kernel


def _cost_numbers(ops, Mch, H0, W0):
    """Advisory flop/transcendental counts per image for pl.CostEstimate."""
    flops = 2 * Mch * (H0 * W0) * ops[0].shape[1]
    trans = 0
    H, W = H0, W0
    for li, wi in enumerate((1, 6, 11, 16)):
        rows, cols = ops[wi].shape                 # (4*Cout, 9*Cin)
        cout = rows // 4
        Q = H * (W + 2)
        flops += 2 * rows * cols * Q
        if li < 3:
            pf_next = ops[wi + 4].shape[1]
            flops += 4 * 2 * cout * cout * Q       # gamma dots
            flops += 4 * 2 * cout * Q * pf_next    # scatter dots
            trans += 4 * cout * Q                  # sqrt
            H, W = 2 * H, 2 * W
    return int(flops), int(trans)


def decoder_forward(ops, x_nchw):
    B, Mch, H0, W0 = x_nchw.shape
    cout3 = ops[-2].shape[0] // 4                  # 3
    H3, W3 = 8 * H0, 8 * W0                        # last layer's input spatial
    Q3 = H3 * (W3 + 2)

    x_flat = x_nchw.reshape(B, Mch, H0 * W0)       # trailing-dim merge only

    in_specs = [pl.BlockSpec((1, Mch, H0 * W0), lambda b: (b, 0, 0))]
    in_specs += [pl.BlockSpec(a.shape, lambda b: (0, 0)) for a in ops]
    out_spec = pl.BlockSpec((1, 4 * cout3, Q3), lambda b: (b, 0, 0))

    flops, trans = _cost_numbers(ops, Mch, H0, W0)
    bytes_acc = (x_flat.size * 4
                 + sum(int(a.size) * a.dtype.itemsize for a in ops)
                 + B * 4 * cout3 * Q3 * 4)

    out = pl.pallas_call(
        _make_kernel(H0, W0),
        out_shape=jax.ShapeDtypeStruct((B, 4 * cout3, Q3), jnp.float32),
        grid=(B,),
        in_specs=in_specs,
        out_specs=out_spec,
        compiler_params=pltpu.CompilerParams(
            dimension_semantics=("parallel",)),
        cost_estimate=pl.CostEstimate(
            flops=B * flops, transcendentals=B * trans,
            bytes_accessed=int(bytes_acc)),
    )(x_flat, *ops)

    # Final parity -> spatial interleave (one-time XLA layout glue).
    y = out.reshape(B, 2, 2, cout3, H3, W3 + 2)[..., :W3]
    y = jnp.transpose(y, (0, 3, 4, 1, 5, 2))       # (B, C, H, dy, W, dx)
    return y.reshape(B, cout3, 2 * H3, 2 * W3)


# ----------------------------------------------------------------------------
# Parameters (deterministic, mirroring the PyTorch module's __init__ math)
# ----------------------------------------------------------------------------
_PED = (2.0 ** -18) ** 2


def _nonneg_init(x):
    return jnp.sqrt(jnp.maximum(x + _PED, _PED))


def _nonneg_forward(x, minimum=0.0):
    bound = (minimum + _PED) ** 0.5
    out = jnp.maximum(x, bound)
    return out * out - _PED


def make_decoder_params(key, N=16, M=24):
    chans = [(M, N), (N, N), (N, N), (N, 3)]
    params = {}
    keys = jax.random.split(key, 2 * len(chans))
    for i, (cin, cout) in enumerate(chans):
        scale = 1.0 / jnp.sqrt(jnp.float32(cin * 25))
        params[f"w{i}"] = scale * jax.random.normal(
            keys[2 * i], (cin, cout, 5, 5), jnp.float32)   # (Cin,Cout,KH,KW)
        params[f"b{i}"] = 0.01 * jax.random.normal(
            keys[2 * i + 1], (cout,), jnp.float32)
    for i in range(3):  # three IGDN layers over N channels
        beta = _nonneg_init(jnp.ones((N,), jnp.float32))
        gamma = _nonneg_init(0.1 * jnp.eye(N, dtype=jnp.float32))
        params[f"beta{i}"] = _nonneg_forward(beta, minimum=1e-6)
        params[f"gamma{i}"] = _nonneg_forward(gamma, minimum=0.0)
    return params


# ----------------------------------------------------------------------------
# Pure-JAX reference (for correctness check of the fused Pallas kernel)
# ----------------------------------------------------------------------------
def _ref_deconv(x, w_t, b):
    B, H, W, Cin = x.shape
    u = jnp.zeros((B, 2 * H, 2 * W, Cin), x.dtype).at[:, ::2, ::2, :].set(x)
    u = jnp.pad(u, ((0, 0), (2, 2), (2, 2), (0, 0)))
    w_conv = jnp.transpose(jnp.flip(w_t, axis=(2, 3)), (2, 3, 0, 1))
    out = jax.lax.conv_general_dilated(
        u, w_conv, (1, 1), "VALID",
        dimension_numbers=("NHWC", "HWIO", "NHWC"))
    return out + b


def _ref_igdn(x, gamma2, beta2):
    norm = jnp.einsum("bhwi,oi->bhwo", x * x, gamma2) + beta2
    return x * jnp.sqrt(norm)


def _ref_forward(params, x_nchw):
    x = jnp.transpose(x_nchw, (0, 2, 3, 1))
    for i in range(3):
        x = _ref_deconv(x, params[f"w{i}"], params[f"b{i}"])
        x = _ref_igdn(x, params[f"gamma{i}"], params[f"beta{i}"])
    x = _ref_deconv(x, params["w3"], params["b3"])
    return jnp.transpose(x, (0, 3, 1, 2))


if __name__ == "__main__":
    key = jax.random.PRNGKey(0)
    k_in, k_par = jax.random.split(key)

    B, M, N, S = 2, 24, 16, 4
    # mimic `torch.load(...).int().float()`: integer-valued float latents
    x = jax.random.randint(k_in, (B, M, S, S), -5, 6).astype(jnp.float32)

    params = make_decoder_params(k_par, N=N, M=M)
    prepped = prepare_decoder_params(params, (S, S))   # one-time packing

    fwd = jax.jit(decoder_forward)
    out = jax.block_until_ready(fwd(prepped, x))
    assert out.shape == (B, 3, 16 * S, 16 * S), out.shape

    ref = jax.block_until_ready(_ref_forward(params, x))
    assert jnp.allclose(out, ref, rtol=1e-3, atol=2e-2), (
        float(jnp.max(jnp.abs(out - ref))))

    print("KERNEL_OK")
</pallas_src>

<mosaic_0001>
module attributes {stable_mosaic.version = 11 : i64} {
  func.func @kernel(%arg0: i32, %arg1: memref<1x24x16xf32, #tpu.memory_space<vmem>>, %arg2: memref<16x38xf32, #tpu.memory_space<vmem>>, %arg3: memref<64x216xf32, #tpu.memory_space<vmem>>, %arg4: memref<64x1xf32, #tpu.memory_space<vmem>>, %arg5: memref<16x16xf32, #tpu.memory_space<vmem>>, %arg6: memref<16x1xf32, #tpu.memory_space<vmem>>, %arg7: memref<24x102xf32, #tpu.memory_space<vmem>>, %arg8: memref<64x144xf32, #tpu.memory_space<vmem>>, %arg9: memref<64x1xf32, #tpu.memory_space<vmem>>, %arg10: memref<16x16xf32, #tpu.memory_space<vmem>>, %arg11: memref<16x1xf32, #tpu.memory_space<vmem>>, %arg12: memref<80x326xf32, #tpu.memory_space<vmem>>, %arg13: memref<64x144xf32, #tpu.memory_space<vmem>>, %arg14: memref<64x1xf32, #tpu.memory_space<vmem>>, %arg15: memref<16x16xf32, #tpu.memory_space<vmem>>, %arg16: memref<16x1xf32, #tpu.memory_space<vmem>>, %arg17: memref<288x1158xf32, #tpu.memory_space<vmem>>, %arg18: memref<12x144xf32, #tpu.memory_space<vmem>>, %arg19: memref<12x1xf32, #tpu.memory_space<vmem>>, %arg20: memref<1x12x1088xf32, #tpu.memory_space<vmem>>) attributes {dimension_semantics = [#tpu.dimension_semantics<parallel>], iteration_bounds = array<i64: 2>, scalar_prefetch = 0 : i64, scratch_operands = 0 : i64, tpu.core_type = #tpu.core_type<tc>, window_params = [{transform_indices = @transform_0, window_bounds = array<i64: 1, 24, 16>}, {pipeline_mode = #tpu.pipeline_mode<synchronous>, transform_indices = @transform_1, window_bounds = array<i64: 16, 38>}, {pipeline_mode = #tpu.pipeline_mode<synchronous>, transform_indices = @transform_2, window_bounds = array<i64: 64, 216>}, {pipeline_mode = #tpu.pipeline_mode<synchronous>, transform_indices = @transform_3, window_bounds = array<i64: 64, 1>}, {pipeline_mode = #tpu.pipeline_mode<synchronous>, transform_indices = @transform_4, window_bounds = array<i64: 16, 16>}, {pipeline_mode = #tpu.pipeline_mode<synchronous>, transform_indices = @transform_5, window_bounds = array<i64: 16, 1>}, {pipeline_mode = #tpu.pipeline_mode<synchronous>, transform_indices = @transform_6, window_bounds = array<i64: 24, 102>}, {pipeline_mode = #tpu.pipeline_mode<synchronous>, transform_indices = @transform_7, window_bounds = array<i64: 64, 144>}, {pipeline_mode = #tpu.pipeline_mode<synchronous>, transform_indices = @transform_8, window_bounds = array<i64: 64, 1>}, {pipeline_mode = #tpu.pipeline_mode<synchronous>, transform_indices = @transform_9, window_bounds = array<i64: 16, 16>}, {pipeline_mode = #tpu.pipeline_mode<synchronous>, transform_indices = @transform_10, window_bounds = array<i64: 16, 1>}, {pipeline_mode = #tpu.pipeline_mode<synchronous>, transform_indices = @transform_11, window_bounds = array<i64: 80, 326>}, {pipeline_mode = #tpu.pipeline_mode<synchronous>, transform_indices = @transform_12, window_bounds = array<i64: 64, 144>}, {pipeline_mode = #tpu.pipeline_mode<synchronous>, transform_indices = @transform_13, window_bounds = array<i64: 64, 1>}, {pipeline_mode = #tpu.pipeline_mode<synchronous>, transform_indices = @transform_14, window_bounds = array<i64: 16, 16>}, {pipeline_mode = #tpu.pipeline_mode<synchronous>, transform_indices = @transform_15, window_bounds = array<i64: 16, 1>}, {pipeline_mode = #tpu.pipeline_mode<synchronous>, transform_indices = @transform_16, window_bounds = array<i64: 288, 1158>}, {pipeline_mode = #tpu.pipeline_mode<synchronous>, transform_indices = @transform_17, window_bounds = array<i64: 12, 144>}, {pipeline_mode = #tpu.pipeline_mode<synchronous>, transform_indices = @transform_18, window_bounds = array<i64: 12, 1>}, {transform_indices = @transform_19, window_bounds = array<i64: 1, 12, 1088>}]} {
    %c0 = arith.constant 0 : index
    %c0_0 = arith.constant 0 : index
    %c0_1 = arith.constant 0 : index
    %0 = vector.load %arg1[%c0, %c0_0, %c0_1] : memref<1x24x16xf32, #tpu.memory_space<vmem>>, vector<1x24x16xf32>
    %1 = vector.shape_cast %0 : vector<1x24x16xf32> to vector<24x16xf32>
    %c0_2 = arith.constant 0 : index
    %c0_3 = arith.constant 0 : index
    %2 = vector.load %arg2[%c0_2, %c0_3] : memref<16x38xf32, #tpu.memory_space<vmem>>, vector<16x38xf32>
    %cst = arith.constant dense<0.000000e+00> : vector<24x38xf32>
    %3 = tpu.matmul %1, %2, %cst {dimension_numbers = #tpu.dot_dimension_numbers<[1], [0], [0], [1], [0, 0, 1, 1], [], []>} : vector<24x16xf32>, vector<16x38xf32>, vector<24x38xf32> -> vector<24x38xf32>
    %4 = vector.extract_strided_slice %3 {offsets = [0, 0], sizes = [24, 24], strides = [1, 1]} : vector<24x38xf32> to vector<24x24xf32>
    %5 = vector.extract_strided_slice %3 {offsets = [0, 1], sizes = [24, 24], strides = [1, 1]} : vector<24x38xf32> to vector<24x24xf32>
    %6 = vector.extract_strided_slice %3 {offsets = [0, 2], sizes = [24, 24], strides = [1, 1]} : vector<24x38xf32> to vector<24x24xf32>
    %7 = vector.extract_strided_slice %3 {offsets = [0, 6], sizes = [24, 24], strides = [1, 1]} : vector<24x38xf32> to vector<24x24xf32>
    %8 = vector.extract_strided_slice %3 {offsets = [0, 7], sizes = [24, 24], strides = [1, 1]} : vector<24x38xf32> to vector<24x24xf32>
    %9 = vector.extract_strided_slice %3 {offsets = [0, 8], sizes = [24, 24], strides = [1, 1]} : vector<24x38xf32> to vector<24x24xf32>
    %10 = vector.extract_strided_slice %3 {offsets = [0, 12], sizes = [24, 24], strides = [1, 1]} : vector<24x38xf32> to vector<24x24xf32>
    %11 = vector.extract_strided_slice %3 {offsets = [0, 13], sizes = [24, 24], strides = [1, 1]} : vector<24x38xf32> to vector<24x24xf32>
    %12 = vector.extract_strided_slice %3 {offsets = [0, 14], sizes = [24, 24], strides = [1, 1]} : vector<24x38xf32> to vector<24x24xf32>
    %13 = tpu.concatenate %4, %5, %6, %7, %8, %9, %10, %11, %12 in 0 : vector<24x24xf32>, vector<24x24xf32>, vector<24x24xf32>, vector<24x24xf32>, vector<24x24xf32>, vector<24x24xf32>, vector<24x24xf32>, vector<24x24xf32>, vector<24x24xf32> -> vector<216x24xf32>
    %c0_4 = arith.constant 0 : index
    %c0_5 = arith.constant 0 : index
    %14 = vector.load %arg3[%c0_4, %c0_5] : memref<64x216xf32, #tpu.memory_space<vmem>>, vector<64x216xf32>
    %cst_6 = arith.constant dense<0.000000e+00> : vector<64x24xf32>
    %15 = tpu.matmul %14, %13, %cst_6 {dimension_numbers = #tpu.dot_dimension_numbers<[1], [0], [0], [1], [0, 0, 1, 1], [], []>} : vector<64x216xf32>, vector<216x24xf32>, vector<64x24xf32> -> vector<64x24xf32>
    %c0_7 = arith.constant 0 : index
    %c0_8 = arith.constant 0 : index
    %16 = vector.load %arg4[%c0_7, %c0_8] : memref<64x1xf32, #tpu.memory_space<vmem>>, vector<64x1xf32>
    %17 = vector.broadcast %16 : vector<64x1xf32> to vector<64x24xf32>
    %18 = arith.addf %15, %17 : vector<64x24xf32>
    %c0_9 = arith.constant 0 : index
    %c0_10 = arith.constant 0 : index
    %19 = vector.load %arg5[%c0_9, %c0_10] : memref<16x16xf32, #tpu.memory_space<vmem>>, vector<16x16xf32>
    %c0_11 = arith.constant 0 : index
    %c0_12 = arith.constant 0 : index
    %20 = vector.load %arg6[%c0_11, %c0_12] : memref<16x1xf32, #tpu.memory_space<vmem>>, vector<16x1xf32>
    %c0_13 = arith.constant 0 : index
    %c0_14 = arith.constant 0 : index
    %21 = vector.load %arg7[%c0_13, %c0_14] : memref<24x102xf32, #tpu.memory_space<vmem>>, vector<24x102xf32>
    %22 = vector.extract_strided_slice %18 {offsets = [0, 0], sizes = [16, 24], strides = [1, 1]} : vector<64x24xf32> to vector<16x24xf32>
    %23 = arith.mulf %22, %22 : vector<16x24xf32>
    %cst_15 = arith.constant dense<0.000000e+00> : vector<16x24xf32>
    %24 = tpu.matmul %19, %23, %cst_15 {dimension_numbers = #tpu.dot_dimension_numbers<[1], [0], [0], [1], [0, 0, 1, 1], [], []>} : vector<16x16xf32>, vector<16x24xf32>, vector<16x24xf32> -> vector<16x24xf32>
    %25 = vector.broadcast %20 : vector<16x1xf32> to vector<16x24xf32>
    %26 = arith.addf %24, %25 : vector<16x24xf32>
    %27 = math.sqrt %26 : vector<16x24xf32>
    %28 = arith.mulf %22, %27 : vector<16x24xf32>
    %cst_16 = arith.constant dense<0.000000e+00> : vector<16x102xf32>
    %29 = tpu.matmul %28, %21, %cst_16 {dimension_numbers = #tpu.dot_dimension_numbers<[1], [0], [0], [1], [0, 0, 1, 1], [], []>} : vector<16x24xf32>, vector<24x102xf32>, vector<16x102xf32> -> vector<16x102xf32>
    %30 = vector.extract_strided_slice %18 {offsets = [16, 0], sizes = [16, 24], strides = [1, 1]} : vector<64x24xf32> to vector<16x24xf32>
    %31 = arith.mulf %30, %30 : vector<16x24xf32>
    %cst_17 = arith.constant dense<0.000000e+00> : vector<16x24xf32>
    %32 = tpu.matmul %19, %31, %cst_17 {dimension_numbers = #tpu.dot_dimension_numbers<[1], [0], [0], [1], [0, 0, 1, 1], [], []>} : vector<16x16xf32>, vector<16x24xf32>, vector<16x24xf32> -> vector<16x24xf32>
    %33 = vector.broadcast %20 : vector<16x1xf32> to vector<16x24xf32>
    %34 = arith.addf %32, %33 : vector<16x24xf32>
    %35 = math.sqrt %34 : vector<16x24xf32>
    %36 = arith.mulf %30, %35 : vector<16x24xf32>
    %cst_18 = arith.constant dense<0.000000e+00> : vector<16x102xf32>
    %37 = tpu.matmul %36, %21, %cst_18 {dimension_numbers = #tpu.dot_dimension_numbers<[1], [0], [0], [1], [0, 0, 1, 1], [], []>} : vector<16x24xf32>, vector<24x102xf32>, vector<16x102xf32> -> vector<16x102xf32>
    %cst_19 = arith.constant 0.000000e+00 : f32
    %38 = vector.broadcast %cst_19 : f32 to vector<16x1xf32>
    %39 = vector.extract_strided_slice %37 {offsets = [0, 0], sizes = [16, 101], strides = [1, 1]} : vector<16x102xf32> to vector<16x101xf32>
    %40 = tpu.concatenate %38, %39 in 1 : vector<16x1xf32>, vector<16x101xf32> -> vector<16x102xf32>
    %41 = arith.addf %29, %40 : vector<16x102xf32>
    %42 = vector.extract_strided_slice %18 {offsets = [32, 0], sizes = [16, 24], strides = [1, 1]} : vector<64x24xf32> to vector<16x24xf32>
    %43 = arith.mulf %42, %42 : vector<16x24xf32>
    %cst_20 = arith.constant dense<0.000000e+00> : vector<16x24xf32>
    %44 = tpu.matmul %19, %43, %cst_20 {dimension_numbers = #tpu.dot_dimension_numbers<[1], [0], [0], [1], [0, 0, 1, 1], [], []>} : vector<16x16xf32>, vector<16x24xf32>, vector<16x24xf32> -> vector<16x24xf32>
    %45 = vector.broadcast %20 : vector<16x1xf32> to vector<16x24xf32>
    %46 = arith.addf %44, %45 : vector<16x24xf32>
    %47 = math.sqrt %46 : vector<16x24xf32>
    %48 = arith.mulf %42, %47 : vector<16x24xf32>
    %cst_21 = arith.constant dense<0.000000e+00> : vector<16x102xf32>
    %49 = tpu.matmul %48, %21, %cst_21 {dimension_numbers = #tpu.dot_dimension_numbers<[1], [0], [0], [1], [0, 0, 1, 1], [], []>} : vector<16x24xf32>, vector<24x102xf32>, vector<16x102xf32> -> vector<16x102xf32>
    %cst_22 = arith.constant 0.000000e+00 : f32
    %50 = vector.broadcast %cst_22 : f32 to vector<16x10xf32>
    %51 = vector.extract_strided_slice %49 {offsets = [0, 0], sizes = [16, 92], strides = [1, 1]} : vector<16x102xf32> to vector<16x92xf32>
    %52 = tpu.concatenate %50, %51 in 1 : vector<16x10xf32>, vector<16x92xf32> -> vector<16x102xf32>
    %53 = arith.addf %41, %52 : vector<16x102xf32>
    %54 = vector.extract_strided_slice %18 {offsets = [48, 0], sizes = [16, 24], strides = [1, 1]} : vector<64x24xf32> to vector<16x24xf32>
    %55 = arith.mulf %54, %54 : vector<16x24xf32>
    %cst_23 = arith.constant dense<0.000000e+00> : vector<16x24xf32>
    %56 = tpu.matmul %19, %55, %cst_23 {dimension_numbers = #tpu.dot_dimension_numbers<[1], [0], [0], [1], [0, 0, 1, 1], [], []>} : vector<16x16xf32>, vector<16x24xf32>, vector<16x24xf32> -> vector<16x24xf32>
    %57 = vector.broadcast %20 : vector<16x1xf32> to vector<16x24xf32>
    %58 = arith.addf %56, %57 : vector<16x24xf32>
    %59 = math.sqrt %58 : vector<16x24xf32>
    %60 = arith.mulf %54, %59 : vector<16x24xf32>
    %cst_24 = arith.constant dense<0.000000e+00> : vector<16x102xf32>
    %61 = tpu.matmul %60, %21, %cst_24 {dimension_numbers = #tpu.dot_dimension_numbers<[1], [0], [0], [1], [0, 0, 1, 1], [], []>} : vector<16x24xf32>, vector<24x102xf32>, vector<16x102xf32> -> vector<16x102xf32>
    %cst_25 = arith.constant 0.000000e+00 : f32
    %62 = vector.broadcast %cst_25 : f32 to vector<16x11xf32>
    %63 = vector.extract_strided_slice %61 {offsets = [0, 0], sizes = [16, 91], strides = [1, 1]} : vector<16x102xf32> to vector<16x91xf32>
    %64 = tpu.concatenate %62, %63 in 1 : vector<16x11xf32>, vector<16x91xf32> -> vector<16x102xf32>
    %65 = arith.addf %53, %64 : vector<16x102xf32>
    %66 = vector.extract_strided_slice %65 {offsets = [0, 0], sizes = [16, 80], strides = [1, 1]} : vector<16x102xf32> to vector<16x80xf32>
    %67 = vector.extract_strided_slice %65 {offsets = [0, 1], sizes = [16, 80], strides = [1, 1]} : vector<16x102xf32> to vector<16x80xf32>
    %68 = vector.extract_strided_slice %65 {offsets = [0, 2], sizes = [16, 80], strides = [1, 1]} : vector<16x102xf32> to vector<16x80xf32>
    %69 = vector.extract_strided_slice %65 {offsets = [0, 10], sizes = [16, 80], strides = [1, 1]} : vector<16x102xf32> to vector<16x80xf32>
    %70 = vector.extract_strided_slice %65 {offsets = [0, 11], sizes = [16, 80], strides = [1, 1]} : vector<16x102xf32> to vector<16x80xf32>
    %71 = vector.extract_strided_slice %65 {offsets = [0, 12], sizes = [16, 80], strides = [1, 1]} : vector<16x102xf32> to vector<16x80xf32>
    %72 = vector.extract_strided_slice %65 {offsets = [0, 20], sizes = [16, 80], strides = [1, 1]} : vector<16x102xf32> to vector<16x80xf32>
    %73 = vector.extract_strided_slice %65 {offsets = [0, 21], sizes = [16, 80], strides = [1, 1]} : vector<16x102xf32> to vector<16x80xf32>
    %74 = vector.extract_strided_slice %65 {offsets = [0, 22], sizes = [16, 80], strides = [1, 1]} : vector<16x102xf32> to vector<16x80xf32>
    %75 = tpu.concatenate %66, %67, %68, %69, %70, %71, %72, %73, %74 in 0 : vector<16x80xf32>, vector<16x80xf32>, vector<16x80xf32>, vector<16x80xf32>, vector<16x80xf32>, vector<16x80xf32>, vector<16x80xf32>, vector<16x80xf32>, vector<16x80xf32> -> vector<144x80xf32>
    %c0_26 = arith.constant 0 : index
    %c0_27 = arith.constant 0 : index
    %76 = vector.load %arg8[%c0_26, %c0_27] : memref<64x144xf32, #tpu.memory_space<vmem>>, vector<64x144xf32>
    %cst_28 = arith.constant dense<0.000000e+00> : vector<64x80xf32>
    %77 = tpu.matmul %76, %75, %cst_28 {dimension_numbers = #tpu.dot_dimension_numbers<[1], [0], [0], [1], [0, 0, 1, 1], [], []>} : vector<64x144xf32>, vector<144x80xf32>, vector<64x80xf32> -> vector<64x80xf32>
    %c0_29 = arith.constant 0 : index
    %c0_30 = arith.constant 0 : index
    %78 = vector.load %arg9[%c0_29, %c0_30] : memref<64x1xf32, #tpu.memory_space<vmem>>, vector<64x1xf32>
    %79 = vector.broadcast %78 : vector<64x1xf32> to vector<64x80xf32>
    %80 = arith.addf %77, %79 : vector<64x80xf32>
    %c0_31 = arith.constant 0 : index
    %c0_32 = arith.constant 0 : index
    %81 = vector.load %arg10[%c0_31, %c0_32] : memref<16x16xf32, #tpu.memory_space<vmem>>, vector<16x16xf32>
    %c0_33 = arith.constant 0 : index
    %c0_34 = arith.constant 0 : index
    %82 = vector.load %arg11[%c0_33, %c0_34] : memref<16x1xf32, #tpu.memory_space<vmem>>, vector<16x1xf32>
    %c0_35 = arith.constant 0 : index
    %c0_36 = arith.constant 0 : index
    %83 = vector.load %arg12[%c0_35, %c0_36] : memref<80x326xf32, #tpu.memory_space<vmem>>, vector<80x326xf32>
    %84 = vector.extract_strided_slice %80 {offsets = [0, 0], sizes = [16, 80], strides = [1, 1]} : vector<64x80xf32> to vector<16x80xf32>
    %85 = arith.mulf %84, %84 : vector<16x80xf32>
    %cst_37 = arith.constant dense<0.000000e+00> : vector<16x80xf32>
    %86 = tpu.matmul %81, %85, %cst_37 {dimension_numbers = #tpu.dot_dimension_numbers<[1], [0], [0], [1], [0, 0, 1, 1], [], []>} : vector<16x16xf32>, vector<16x80xf32>, vector<16x80xf32> -> vector<16x80xf32>
    %87 = vector.broadcast %82 : vector<16x1xf32> to vector<16x80xf32>
    %88 = arith.addf %86, %87 : vector<16x80xf32>
    %89 = math.sqrt %88 : vector<16x80xf32>
    %90 = arith.mulf %84, %89 : vector<16x80xf32>
    %cst_38 = arith.constant dense<0.000000e+00> : vector<16x326xf32>
    %91 = tpu.matmul %90, %83, %cst_38 {dimension_numbers = #tpu.dot_dimension_numbers<[1], [0], [0], [1], [0, 0, 1, 1], [], []>} : vector<16x80xf32>, vector<80x326xf32>, vector<16x326xf32> -> vector<16x326xf32>
    %92 = vector.extract_strided_slice %80 {offsets = [16, 0], sizes = [16, 80], strides = [1, 1]} : vector<64x80xf32> to vector<16x80xf32>
    %93 = arith.mulf %92, %92 : vector<16x80xf32>
    %cst_39 = arith.constant dense<0.000000e+00> : vector<16x80xf32>
    %94 = tpu.matmul %81, %93, %cst_39 {dimension_numbers = #tpu.dot_dimension_numbers<[1], [0], [0], [1], [0, 0, 1, 1], [], []>} : vector<16x16xf32>, vector<16x80xf32>, vector<16x80xf32> -> vector<16x80xf32>
    %95 = vector.broadcast %82 : vector<16x1xf32> to vector<16x80xf32>
    %96 = arith.addf %94, %95 : vector<16x80xf32>
    %97 = math.sqrt %96 : vector<16x80xf32>
    %98 = arith.mulf %92, %97 : vector<16x80xf32>
    %cst_40 = arith.constant dense<0.000000e+00> : vector<16x326xf32>
    %99 = tpu.matmul %98, %83, %cst_40 {dimension_numbers = #tpu.dot_dimension_numbers<[1], [0], [0], [1], [0, 0, 1, 1], [], []>} : vector<16x80xf32>, vector<80x326xf32>, vector<16x326xf32> -> vector<16x326xf32>
    %cst_41 = arith.constant 0.000000e+00 : f32
    %100 = vector.broadcast %cst_41 : f32 to vector<16x1xf32>
    %101 = vector.extract_strided_slice %99 {offsets = [0, 0], sizes = [16, 325], strides = [1, 1]} : vector<16x326xf32> to vector<16x325xf32>
    %102 = tpu.concatenate %100, %101 in 1 : vector<16x1xf32>, vector<16x325xf32> -> vector<16x326xf32>
    %103 = arith.addf %91, %102 : vector<16x326xf32>
    %104 = vector.extract_strided_slice %80 {offsets = [32, 0], sizes = [16, 80], strides = [1, 1]} : vector<64x80xf32> to vector<16x80xf32>
    %105 = arith.mulf %104, %104 : vector<16x80xf32>
    %cst_42 = arith.constant dense<0.000000e+00> : vector<16x80xf32>
    %106 = tpu.matmul %81, %105, %cst_42 {dimension_numbers = #tpu.dot_dimension_numbers<[1], [0], [0], [1], [0, 0, 1, 1], [], []>} : vector<16x16xf32>, vector<16x80xf32>, vector<16x80xf32> -> vector<16x80xf32>
    %107 = vector.broadcast %82 : vector<16x1xf32> to vector<16x80xf32>
    %108 = arith.addf %106, %107 : vector<16x80xf32>
    %109 = math.sqrt %108 : vector<16x80xf32>
    %110 = arith.mulf %104, %109 : vector<16x80xf32>
    %cst_43 = arith.constant dense<0.000000e+00> : vector<16x326xf32>
    %111 = tpu.matmul %110, %83, %cst_43 {dimension_numbers = #tpu.dot_dimension_numbers<[1], [0], [0], [1], [0, 0, 1, 1], [], []>} : vector<16x80xf32>, vector<80x326xf32>, vector<16x326xf32> -> vector<16x326xf32>
    %cst_44 = arith.constant 0.000000e+00 : f32
    %112 = vector.broadcast %cst_44 : f32 to vector<16x18xf32>
    %113 = vector.extract_strided_slice %111 {offsets = [0, 0], sizes = [16, 308], strides = [1, 1]} : vector<16x326xf32> to vector<16x308xf32>
    %114 = tpu.concatenate %112, %113 in 1 : vector<16x18xf32>, vector<16x308xf32> -> vector<16x326xf32>
    %115 = arith.addf %103, %114 : vector<16x326xf32>
    %116 = vector.extract_strided_slice %80 {offsets = [48, 0], sizes = [16, 80], strides = [1, 1]} : vector<64x80xf32> to vector<16x80xf32>
    %117 = arith.mulf %116, %116 : vector<16x80xf32>
    %cst_45 = arith.constant dense<0.000000e+00> : vector<16x80xf32>
    %118 = tpu.matmul %81, %117, %cst_45 {dimension_numbers = #tpu.dot_dimension_numbers<[1], [0], [0], [1], [0, 0, 1, 1], [], []>} : vector<16x16xf32>, vector<16x80xf32>, vector<16x80xf32> -> vector<16x80xf32>
    %119 = vector.broadcast %82 : vector<16x1xf32> to vector<16x80xf32>
    %120 = arith.addf %118, %119 : vector<16x80xf32>
    %121 = math.sqrt %120 : vector<16x80xf32>
    %122 = arith.mulf %116, %121 : vector<16x80xf32>
    %cst_46 = arith.constant dense<0.000000e+00> : vector<16x326xf32>
    %123 = tpu.matmul %122, %83, %cst_46 {dimension_numbers = #tpu.dot_dimension_numbers<[1], [0], [0], [1], [0, 0, 1, 1], [], []>} : vector<16x80xf32>, vector<80x326xf32>, vector<16x326xf32> -> vector<16x326xf32>
    %cst_47 = arith.constant 0.000000e+00 : f32
    %124 = vector.broadcast %cst_47 : f32 to vector<16x19xf32>
    %125 = vector.extract_strided_slice %123 {offsets = [0, 0], sizes = [16, 307], strides = [1, 1]} : vector<16x326xf32> to vector<16x307xf32>
    %126 = tpu.concatenate %124, %125 in 1 : vector<16x19xf32>, vector<16x307xf32> -> vector<16x326xf32>
    %127 = arith.addf %115, %126 : vector<16x326xf32>
    %128 = vector.extract_strided_slice %127 {offsets = [0, 0], sizes = [16, 288], strides = [1, 1]} : vector<16x326xf32> to vector<16x288xf32>
    %129 = vector.extract_strided_slice %127 {offsets = [0, 1], sizes = [16, 288], strides = [1, 1]} : vector<16x326xf32> to vector<16x288xf32>
    %130 = vector.extract_strided_slice %127 {offsets = [0, 2], sizes = [16, 288], strides = [1, 1]} : vector<16x326xf32> to vector<16x288xf32>
    %131 = vector.extract_strided_slice %127 {offsets = [0, 18], sizes = [16, 288], strides = [1, 1]} : vector<16x326xf32> to vector<16x288xf32>
    %132 = vector.extract_strided_slice %127 {offsets = [0, 19], sizes = [16, 288], strides = [1, 1]} : vector<16x326xf32> to vector<16x288xf32>
    %133 = vector.extract_strided_slice %127 {offsets = [0, 20], sizes = [16, 288], strides = [1, 1]} : vector<16x326xf32> to vector<16x288xf32>
    %134 = vector.extract_strided_slice %127 {offsets = [0, 36], sizes = [16, 288], strides = [1, 1]} : vector<16x326xf32> to vector<16x288xf32>
    %135 = vector.extract_strided_slice %127 {offsets = [0, 37], sizes = [16, 288], strides = [1, 1]} : vector<16x326xf32> to vector<16x288xf32>
    %136 = vector.extract_strided_slice %127 {offsets = [0, 38], sizes = [16, 288], strides = [1, 1]} : vector<16x326xf32> to vector<16x288xf32>
    %137 = tpu.concatenate %128, %129, %130, %131, %132, %133, %134, %135, %136 in 0 : vector<16x288xf32>, vector<16x288xf32>, vector<16x288xf32>, vector<16x288xf32>, vector<16x288xf32>, vector<16x288xf32>, vector<16x288xf32>, vector<16x288xf32>, vector<16x288xf32> -> vector<144x288xf32>
    %c0_48 = arith.constant 0 : index
    %c0_49 = arith.constant 0 : index
    %138 = vector.load %arg13[%c0_48, %c0_49] : memref<64x144xf32, #tpu.memory_space<vmem>>, vector<64x144xf32>
    %cst_50 = arith.constant dense<0.000000e+00> : vector<64x288xf32>
    %139 = tpu.matmul %138, %137, %cst_50 {dimension_numbers = #tpu.dot_dimension_numbers<[1], [0], [0], [1], [0, 0, 1, 1], [], []>} : vector<64x144xf32>, vector<144x288xf32>, vector<64x288xf32> -> vector<64x288xf32>
    %c0_51 = arith.constant 0 : index
    %c0_52 = arith.constant 0 : index
    %140 = vector.load %arg14[%c0_51, %c0_52] : memref<64x1xf32, #tpu.memory_space<vmem>>, vector<64x1xf32>
    %141 = vector.broadcast %140 : vector<64x1xf32> to vector<64x288xf32>
    %142 = arith.addf %139, %141 : vector<64x288xf32>
    %c0_53 = arith.constant 0 : index
    %c0_54 = arith.constant 0 : index
    %143 = vector.load %arg15[%c0_53, %c0_54] : memref<16x16xf32, #tpu.memory_space<vmem>>, vector<16x16xf32>
    %c0_55 = arith.constant 0 : index
    %c0_56 = arith.constant 0 : index
    %144 = vector.load %arg16[%c0_55, %c0_56] : memref<16x1xf32, #tpu.memory_space<vmem>>, vector<16x1xf32>
    %c0_57 = arith.constant 0 : index
    %c0_58 = arith.constant 0 : index
    %145 = vector.load %arg17[%c0_57, %c0_58] : memref<288x1158xf32, #tpu.memory_space<vmem>>, vector<288x1158xf32>
    %146 = vector.extract_strided_slice %142 {offsets = [0, 0], sizes = [16, 288], strides = [1, 1]} : vector<64x288xf32> to vector<16x288xf32>
    %147 = arith.mulf %146, %146 : vector<16x288xf32>
    %cst_59 = arith.constant dense<0.000000e+00> : vector<16x288xf32>
    %148 = tpu.matmul %143, %147, %cst_59 {dimension_numbers = #tpu.dot_dimension_numbers<[1], [0], [0], [1], [0, 0, 1, 1], [], []>} : vector<16x16xf32>, vector<16x288xf32>, vector<16x288xf32> -> vector<16x288xf32>
    %149 = vector.broadcast %144 : vector<16x1xf32> to vector<16x288xf32>
    %150 = arith.addf %148, %149 : vector<16x288xf32>
    %151 = math.sqrt %150 : vector<16x288xf32>
    %152 = arith.mulf %146, %151 : vector<16x288xf32>
    %cst_60 = arith.constant dense<0.000000e+00> : vector<16x1158xf32>
    %153 = tpu.matmul %152, %145, %cst_60 {dimension_numbers = #tpu.dot_dimension_numbers<[1], [0], [0], [1], [0, 0, 1, 1], [], []>} : vector<16x288xf32>, vector<288x1158xf32>, vector<16x1158xf32> -> vector<16x1158xf32>
    %154 = vector.extract_strided_slice %142 {offsets = [16, 0], sizes = [16, 288], strides = [1, 1]} : vector<64x288xf32> to vector<16x288xf32>
    %155 = arith.mulf %154, %154 : vector<16x288xf32>
    %cst_61 = arith.constant dense<0.000000e+00> : vector<16x288xf32>
    %156 = tpu.matmul %143, %155, %cst_61 {dimension_numbers = #tpu.dot_dimension_numbers<[1], [0], [0], [1], [0, 0, 1, 1], [], []>} : vector<16x16xf32>, vector<16x288xf32>, vector<16x288xf32> -> vector<16x288xf32>
    %157 = vector.broadcast %144 : vector<16x1xf32> to vector<16x288xf32>
    %158 = arith.addf %156, %157 : vector<16x288xf32>
    %159 = math.sqrt %158 : vector<16x288xf32>
    %160 = arith.mulf %154, %159 : vector<16x288xf32>
    %cst_62 = arith.constant dense<0.000000e+00> : vector<16x1158xf32>
    %161 = tpu.matmul %160, %145, %cst_62 {dimension_numbers = #tpu.dot_dimension_numbers<[1], [0], [0], [1], [0, 0, 1, 1], [], []>} : vector<16x288xf32>, vector<288x1158xf32>, vector<16x1158xf32> -> vector<16x1158xf32>
    %cst_63 = arith.constant 0.000000e+00 : f32
    %162 = vector.broadcast %cst_63 : f32 to vector<16x1xf32>
    %163 = vector.extract_strided_slice %161 {offsets = [0, 0], sizes = [16, 1157], strides = [1, 1]} : vector<16x1158xf32> to vector<16x1157xf32>
    %164 = tpu.concatenate %162, %163 in 1 : vector<16x1xf32>, vector<16x1157xf32> -> vector<16x1158xf32>
    %165 = arith.addf %153, %164 : vector<16x1158xf32>
    %166 = vector.extract_strided_slice %142 {offsets = [32, 0], sizes = [16, 288], strides = [1, 1]} : vector<64x288xf32> to vector<16x288xf32>
    %167 = arith.mulf %166, %166 : vector<16x288xf32>
    %cst_64 = arith.constant dense<0.000000e+00> : vector<16x288xf32>
    %168 = tpu.matmul %143, %167, %cst_64 {dimension_numbers = #tpu.dot_dimension_numbers<[1], [0], [0], [1], [0, 0, 1, 1], [], []>} : vector<16x16xf32>, vector<16x288xf32>, vector<16x288xf32> -> vector<16x288xf32>
    %169 = vector.broadcast %144 : vector<16x1xf32> to vector<16x288xf32>
    %170 = arith.addf %168, %169 : vector<16x288xf32>
    %171 = math.sqrt %170 : vector<16x288xf32>
    %172 = arith.mulf %166, %171 : vector<16x288xf32>
    %cst_65 = arith.constant dense<0.000000e+00> : vector<16x1158xf32>
    %173 = tpu.matmul %172, %145, %cst_65 {dimension_numbers = #tpu.dot_dimension_numbers<[1], [0], [0], [1], [0, 0, 1, 1], [], []>} : vector<16x288xf32>, vector<288x1158xf32>, vector<16x1158xf32> -> vector<16x1158xf32>
    %cst_66 = arith.constant 0.000000e+00 : f32
    %174 = vector.broadcast %cst_66 : f32 to vector<16x34xf32>
    %175 = vector.extract_strided_slice %173 {offsets = [0, 0], sizes = [16, 1124], strides = [1, 1]} : vector<16x1158xf32> to vector<16x1124xf32>
    %176 = tpu.concatenate %174, %175 in 1 : vector<16x34xf32>, vector<16x1124xf32> -> vector<16x1158xf32>
    %177 = arith.addf %165, %176 : vector<16x1158xf32>
    %178 = vector.extract_strided_slice %142 {offsets = [48, 0], sizes = [16, 288], strides = [1, 1]} : vector<64x288xf32> to vector<16x288xf32>
    %179 = arith.mulf %178, %178 : vector<16x288xf32>
    %cst_67 = arith.constant dense<0.000000e+00> : vector<16x288xf32>
    %180 = tpu.matmul %143, %179, %cst_67 {dimension_numbers = #tpu.dot_dimension_numbers<[1], [0], [0], [1], [0, 0, 1, 1], [], []>} : vector<16x16xf32>, vector<16x288xf32>, vector<16x288xf32> -> vector<16x288xf32>
    %181 = vector.broadcast %144 : vector<16x1xf32> to vector<16x288xf32>
    %182 = arith.addf %180, %181 : vector<16x288xf32>
    %183 = math.sqrt %182 : vector<16x288xf32>
    %184 = arith.mulf %178, %183 : vector<16x288xf32>
    %cst_68 = arith.constant dense<0.000000e+00> : vector<16x1158xf32>
    %185 = tpu.matmul %184, %145, %cst_68 {dimension_numbers = #tpu.dot_dimension_numbers<[1], [0], [0], [1], [0, 0, 1, 1], [], []>} : vector<16x288xf32>, vector<288x1158xf32>, vector<16x1158xf32> -> vector<16x1158xf32>
    %cst_69 = arith.constant 0.000000e+00 : f32
    %186 = vector.broadcast %cst_69 : f32 to vector<16x35xf32>
    %187 = vector.extract_strided_slice %185 {offsets = [0, 0], sizes = [16, 1123], strides = [1, 1]} : vector<16x1158xf32> to vector<16x1123xf32>
    %188 = tpu.concatenate %186, %187 in 1 : vector<16x35xf32>, vector<16x1123xf32> -> vector<16x1158xf32>
    %189 = arith.addf %177, %188 : vector<16x1158xf32>
    %190 = vector.extract_strided_slice %189 {offsets = [0, 0], sizes = [16, 1088], strides = [1, 1]} : vector<16x1158xf32> to vector<16x1088xf32>
    %191 = vector.extract_strided_slice %189 {offsets = [0, 1], sizes = [16, 1088], strides = [1, 1]} : vector<16x1158xf32> to vector<16x1088xf32>
    %192 = vector.extract_strided_slice %189 {offsets = [0, 2], sizes = [16, 1088], strides = [1, 1]} : vector<16x1158xf32> to vector<16x1088xf32>
    %193 = vector.extract_strided_slice %189 {offsets = [0, 34], sizes = [16, 1088], strides = [1, 1]} : vector<16x1158xf32> to vector<16x1088xf32>
    %194 = vector.extract_strided_slice %189 {offsets = [0, 35], sizes = [16, 1088], strides = [1, 1]} : vector<16x1158xf32> to vector<16x1088xf32>
    %195 = vector.extract_strided_slice %189 {offsets = [0, 36], sizes = [16, 1088], strides = [1, 1]} : vector<16x1158xf32> to vector<16x1088xf32>
    %196 = vector.extract_strided_slice %189 {offsets = [0, 68], sizes = [16, 1088], strides = [1, 1]} : vector<16x1158xf32> to vector<16x1088xf32>
    %197 = vector.extract_strided_slice %189 {offsets = [0, 69], sizes = [16, 1088], strides = [1, 1]} : vector<16x1158xf32> to vector<16x1088xf32>
    %198 = vector.extract_strided_slice %189 {offsets = [0, 70], sizes = [16, 1088], strides = [1, 1]} : vector<16x1158xf32> to vector<16x1088xf32>
    %199 = tpu.concatenate %190, %191, %192, %193, %194, %195, %196, %197, %198 in 0 : vector<16x1088xf32>, vector<16x1088xf32>, vector<16x1088xf32>, vector<16x1088xf32>, vector<16x1088xf32>, vector<16x1088xf32>, vector<16x1088xf32>, vector<16x1088xf32>, vector<16x1088xf32> -> vector<144x1088xf32>
    %c0_70 = arith.constant 0 : index
    %c0_71 = arith.constant 0 : index
    %200 = vector.load %arg18[%c0_70, %c0_71] : memref<12x144xf32, #tpu.memory_space<vmem>>, vector<12x144xf32>
    %cst_72 = arith.constant dense<0.000000e+00> : vector<12x1088xf32>
    %201 = tpu.matmul %200, %199, %cst_72 {dimension_numbers = #tpu.dot_dimension_numbers<[1], [0], [0], [1], [0, 0, 1, 1], [], []>} : vector<12x144xf32>, vector<144x1088xf32>, vector<12x1088xf32> -> vector<12x1088xf32>
    %c0_73 = arith.constant 0 : index
    %c0_74 = arith.constant 0 : index
    %202 = vector.load %arg19[%c0_73, %c0_74] : memref<12x1xf32, #tpu.memory_space<vmem>>, vector<12x1xf32>
    %203 = vector.broadcast %202 : vector<12x1xf32> to vector<12x1088xf32>
    %204 = arith.addf %201, %203 : vector<12x1088xf32>
    %c0_75 = arith.constant 0 : index
    %c0_76 = arith.constant 0 : index
    %c0_77 = arith.constant 0 : index
    %205 = vector.load %arg20[%c0_75, %c0_76, %c0_77] : memref<1x12x1088xf32, #tpu.memory_space<vmem>>, vector<1x12x1088xf32>
    %206 = vector.shape_cast %205 : vector<1x12x1088xf32> to vector<12x1088xf32>
    %207 = vector.shape_cast %204 : vector<12x1088xf32> to vector<1x12x1088xf32>
    tpu.vector_store %arg20[%c0_75, %c0_76, %c0_77], %207 {strides = array<i32>} : memref<1x12x1088xf32, #tpu.memory_space<vmem>>, vector<1x12x1088xf32>,
    return
  }
  func.func @transform_0(%arg0: i32) -> (i32, i32, i32) {
    %c0_i32 = arith.constant 0 : i32
    %c0_i32_0 = arith.constant 0 : i32
    %c0_i32_1 = arith.constant 0 : i32
    return %arg0, %c0_i32, %c0_i32_0 : i32, i32, i32
  }
  func.func @transform_1(%arg0: i32) -> (i32, i32) {
    %c0_i32 = arith.constant 0 : i32
    %c0_i32_0 = arith.constant 0 : i32
    %c0_i32_1 = arith.constant 0 : i32
    return %c0_i32, %c0_i32_0 : i32, i32
  }
  func.func @transform_2(%arg0: i32) -> (i32, i32) {
    %c0_i32 = arith.constant 0 : i32
    %c0_i32_0 = arith.constant 0 : i32
    %c0_i32_1 = arith.constant 0 : i32
    return %c0_i32, %c0_i32_0 : i32, i32
  }
  func.func @transform_3(%arg0: i32) -> (i32, i32) {
    %c0_i32 = arith.constant 0 : i32
    %c0_i32_0 = arith.constant 0 : i32
    %c0_i32_1 = arith.constant 0 : i32
    return %c0_i32, %c0_i32_0 : i32, i32
  }
  func.func @transform_4(%arg0: i32) -> (i32, i32) {
    %c0_i32 = arith.constant 0 : i32
    %c0_i32_0 = arith.constant 0 : i32
    %c0_i32_1 = arith.constant 0 : i32
    return %c0_i32, %c0_i32_0 : i32, i32
  }
  func.func @transform_5(%arg0: i32) -> (i32, i32) {
    %c0_i32 = arith.constant 0 : i32
    %c0_i32_0 = arith.constant 0 : i32
    %c0_i32_1 = arith.constant 0 : i32
    return %c0_i32, %c0_i32_0 : i32, i32
  }
  func.func @transform_6(%arg0: i32) -> (i32, i32) {
    %c0_i32 = arith.constant 0 : i32
    %c0_i32_0 = arith.constant 0 : i32
    %c0_i32_1 = arith.constant 0 : i32
    return %c0_i32, %c0_i32_0 : i32, i32
  }
  func.func @transform_7(%arg0: i32) -> (i32, i32) {
    %c0_i32 = arith.constant 0 : i32
    %c0_i32_0 = arith.constant 0 : i32
    %c0_i32_1 = arith.constant 0 : i32
    return %c0_i32, %c0_i32_0 : i32, i32
  }
  func.func @transform_8(%arg0: i32) -> (i32, i32) {
    %c0_i32 = arith.constant 0 : i32
    %c0_i32_0 = arith.constant 0 : i32
    %c0_i32_1 = arith.constant 0 : i32
    return %c0_i32, %c0_i32_0 : i32, i32
  }
  func.func @transform_9(%arg0: i32) -> (i32, i32) {
    %c0_i32 = arith.constant 0 : i32
    %c0_i32_0 = arith.constant 0 : i32
    %c0_i32_1 = arith.constant 0 : i32
    return %c0_i32, %c0_i32_0 : i32, i32
  }
  func.func @transform_10(%arg0: i32) -> (i32, i32) {
    %c0_i32 = arith.constant 0 : i32
    %c0_i32_0 = arith.constant 0 : i32
    %c0_i32_1 = arith.constant 0 : i32
    return %c0_i32, %c0_i32_0 : i32, i32
  }
  func.func @transform_11(%arg0: i32) -> (i32, i32) {
    %c0_i32 = arith.constant 0 : i32
    %c0_i32_0 = arith.constant 0 : i32
    %c0_i32_1 = arith.constant 0 : i32
    return %c0_i32, %c0_i32_0 : i32, i32
  }
  func.func @transform_12(%arg0: i32) -> (i32, i32) {
    %c0_i32 = arith.constant 0 : i32
    %c0_i32_0 = arith.constant 0 : i32
    %c0_i32_1 = arith.constant 0 : i32
    return %c0_i32, %c0_i32_0 : i32, i32
  }
  func.func @transform_13(%arg0: i32) -> (i32, i32) {
    %c0_i32 = arith.constant 0 : i32
    %c0_i32_0 = arith.constant 0 : i32
    %c0_i32_1 = arith.constant 0 : i32
    return %c0_i32, %c0_i32_0 : i32, i32
  }
  func.func @transform_14(%arg0: i32) -> (i32, i32) {
    %c0_i32 = arith.constant 0 : i32
    %c0_i32_0 = arith.constant 0 : i32
    %c0_i32_1 = arith.constant 0 : i32
    return %c0_i32, %c0_i32_0 : i32, i32
  }
  func.func @transform_15(%arg0: i32) -> (i32, i32) {
    %c0_i32 = arith.constant 0 : i32
    %c0_i32_0 = arith.constant 0 : i32
    %c0_i32_1 = arith.constant 0 : i32
    return %c0_i32, %c0_i32_0 : i32, i32
  }
  func.func @transform_16(%arg0: i32) -> (i32, i32) {
    %c0_i32 = arith.constant 0 : i32
    %c0_i32_0 = arith.constant 0 : i32
    %c0_i32_1 = arith.constant 0 : i32
    return %c0_i32, %c0_i32_0 : i32, i32
  }
  func.func @transform_17(%arg0: i32) -> (i32, i32) {
    %c0_i32 = arith.constant 0 : i32
    %c0_i32_0 = arith.constant 0 : i32
    %c0_i32_1 = arith.constant 0 : i32
    return %c0_i32, %c0_i32_0 : i32, i32
  }
  func.func @transform_18(%arg0: i32) -> (i32, i32) {
    %c0_i32 = arith.constant 0 : i32
    %c0_i32_0 = arith.constant 0 : i32
    %c0_i32_1 = arith.constant 0 : i32
    return %c0_i32, %c0_i32_0 : i32, i32
  }
  func.func @transform_19(%arg0: i32) -> (i32, i32, i32) {
    %c0_i32 = arith.constant 0 : i32
    %c0_i32_0 = arith.constant 0 : i32
    %c0_i32_1 = arith.constant 0 : i32
    return %arg0, %c0_i32, %c0_i32_0 : i32, i32, i32
  }
}

</mosaic_0001>

<llo_original>
// kernel: decoder_forward.1
$region0: #{decoder_forward.1}
  #allocation0 [shape = 'u32[]', space=smem, size = 0x4, offset = 0x4, fixed_abs, tag = 'smem constant byte address 0x4 - core index']
  #allocation1 [shape = 'u32[144,128]{1,0:T(1,128)}', space=vmem, size = 0x12000, scoped, tag = 'internal scratch']
  %s0 = inlined_call_operand.vmem [shape: f32[2,24,16], index: 0, kind: input, shape index: {}]
  %s1 = inlined_call_operand.hbm [shape: f32[16,38], index: 1, kind: input, shape index: {}]
  %s2 = inlined_call_operand.hbm [shape: f32[64,216], index: 2, kind: input, shape index: {}]
  %s3 = inlined_call_operand.vmem [shape: f32[64,1], index: 3, kind: input, shape index: {}]
  %s4 = inlined_call_operand.hbm [shape: f32[16,16], index: 4, kind: input, shape index: {}]
  %s5 = inlined_call_operand.vmem [shape: f32[16,1], index: 5, kind: input, shape index: {}]
  %s6 = inlined_call_operand.hbm [shape: f32[24,102], index: 6, kind: input, shape index: {}]
  %s7 = inlined_call_operand.hbm [shape: f32[64,144], index: 7, kind: input, shape index: {}]
  %s8 = inlined_call_operand.vmem [shape: f32[64,1], index: 8, kind: input, shape index: {}]
  %s9 = inlined_call_operand.hbm [shape: f32[16,16], index: 9, kind: input, shape index: {}]
  %s10 = inlined_call_operand.vmem [shape: f32[16,1], index: 10, kind: input, shape index: {}]
  %s11 = inlined_call_operand.hbm [shape: f32[80,326], index: 11, kind: input, shape index: {}]
  %s12 = inlined_call_operand.hbm [shape: f32[64,144], index: 12, kind: input, shape index: {}]
  %s13 = inlined_call_operand.vmem [shape: f32[64,1], index: 13, kind: input, shape index: {}]
  %s14 = inlined_call_operand.hbm [shape: f32[16,16], index: 14, kind: input, shape index: {}]
  %s15 = inlined_call_operand.vmem [shape: f32[16,1], index: 15, kind: input, shape index: {}]
  %s16 = inlined_call_operand.hbm [shape: f32[288,1158], index: 16, kind: input, shape index: {}]
  %s17 = inlined_call_operand.hbm [shape: f32[12,144], index: 17, kind: input, shape index: {}]
  %s18 = inlined_call_operand.vmem [shape: f32[12,1], index: 18, kind: input, shape index: {}]
  %s19 = inlined_call_operand.vmem [shape: f32[2,12,1088], index: 19, kind: output, shape index: {}]
  %s20 = sld [smem:[#allocation0]]
  $region153: #{decoder_forward.1} parent=0
    _
  %s22 = ssub.s32 1, %s20
  %s23 = scalar_select 0, %s22, %s20
  $region1: #{decoder_forward.1} parent=0
    #allocation2 [shape = 'u8[8192]{0}', space=vmem, size = 0x2000, scoped, tag = 'input window, operand 1, single buffered']
    #allocation3 [shape = 's32[2]{0}', space=sflag, size = 0x8, scoped, tag = 'scoped memory for decoder_forward.1']
    #allocation4 [shape = 'u8[65536]{0}', space=vmem, size = 0x10000, scoped, tag = 'input window, operand 2, single buffered']
    #allocation5 [shape = 's32[1]{0}', space=sflag, size = 0x4, scoped, tag = 'scoped memory for decoder_forward.1']
    #allocation6 [shape = 'u8[8192]{0}', space=vmem, size = 0x2000, scoped, tag = 'input window, operand 4, single buffered']
    #allocation7 [shape = 'u8[12288]{0}', space=vmem, size = 0x3000, scoped, tag = 'input window, operand 6, single buffered']
    #allocation8 [shape = 's32[1]{0}', space=sflag, size = 0x4, scoped, tag = 'scoped memory for decoder_forward.1']
    #allocation9 [shape = 'u8[65536]{0}', space=vmem, size = 0x10000, scoped, tag = 'input window, operand 7, single buffered']
    #allocation10 [shape = 'u8[8192]{0}', space=vmem, size = 0x2000, scoped, tag = 'input window, operand 9, single buffered']
    #allocation11 [shape = 's32[1]{0}', space=sflag, size = 0x4, scoped, tag = 'scoped memory for decoder_forward.1']
    #allocation12 [shape = 'u8[122880]{0}', space=vmem, size = 0x1e000, scoped, tag = 'input window, operand 11, single buffered']
    #allocation13 [shape = 'u8[65536]{0}', space=vmem, size = 0x10000, scoped, tag = 'input window, operand 12, single buffered']
    #allocation14 [shape = 's32[1]{0}', space=sflag, size = 0x4, scoped, tag = 'scoped memory for decoder_forward.1']
    #allocation15 [shape = 'u8[8192]{0}', space=vmem, size = 0x2000, scoped, tag = 'input window, operand 14, single buffered']
    #allocation16 [shape = 'u8[1474560]{0}', space=vmem, size = 0x168000, scoped, tag = 'input window, operand 16, single buffered']
    #allocation17 [shape = 's32[1]{0}', space=sflag, size = 0x4, scoped, tag = 'scoped memory for decoder_forward.1']
    #allocation18 [shape = 'u8[16384]{0}', space=vmem, size = 0x4000, scoped, tag = 'input window, operand 17, single buffered']
    %24 = vsyncpa [#allocation3], 0
    %25 = vsyncpa [#allocation5], 0
    %26 = vsyncpa [#allocation8], 0
    %27 = vsyncpa [#allocation11], 0
    %28 = vsyncpa [#allocation14], 0
    %29 = vsyncpa [#allocation17], 0
    loop: start=0, step=1, limit=4
    $region2: #{decoder_forward.1} parent=1 // loop_pre_header
      _
    $region3: #{decoder_forward.1} parent=1 // loop_header
      %s31 = sphi 0, %s35
      %p32 = scmp.ge.s32.totalorder %s31, 4
      %s41 = sphi 0, %s43
      %s44 = sphi 0, %s41
      %s45 = sphi 0, %s44
      %s61 = sphi 0, %s45
      %s65 = sphi 0, %s65
      %s67 = sphi 0, %s65
      %s68 = sphi 0, %s67
      %s82 = sphi 0, %s68
      %s86 = sphi 0, %s86
      %s88 = sphi 0, %s86
      %s89 = sphi 0, %s88
      %s103 = sphi 0, %s89
      %s107 = sphi 0, %s107
      %s109 = sphi 0, %s107
      %s110 = sphi 0, %s109
      %s124 = sphi 0, %s110
      %s128 = sphi 0, %s128
      %s130 = sphi 0, %s128
      %s131 = sphi 0, %s130
      %s145 = sphi 0, %s131
      %s149 = sphi 0, %s149
      %s151 = sphi 0, %s149
      %s152 = sphi 0, %s151
      %s166 = sphi 0, %s152
      %s170 = sphi 0, %s170
      %s172 = sphi 0, %s170
      %s173 = sphi 0, %s172
      %s187 = sphi 0, %s173
      %s191 = sphi 0, %s191
      %s193 = sphi 0, %s191
      %s194 = sphi 0, %s193
      %s208 = sphi 0, %s194
      %s212 = sphi 0, %s212
      %s214 = sphi 0, %s212
      %s215 = sphi 0, %s214
      %s229 = sphi 0, %s215
      %s233 = sphi 0, %s233
      %s235 = sphi 0, %s233
      %s236 = sphi 0, %s235
      %s250 = sphi 0, %s236
      %s254 = sphi 0, %s254
      %s256 = sphi 0, %s254
      %s257 = sphi 0, %s256
      %s271 = sphi 0, %s257
      %s275 = sphi 0, %s275
      %s277 = sphi 0, %s275
      %s278 = sphi 0, %s277
      %s292 = sphi 0, %s278
      %s296 = sphi 0, %s296
      %s298 = sphi 0, %s296
      %s299 = sphi 0, %s298
      %s313 = sphi 0, %s299
      %s317 = sphi 0, %s317
      %s319 = sphi 0, %s317
      %s320 = sphi 0, %s319
      %s334 = sphi 0, %s320
      %s338 = sphi 0, %s338
      %s340 = sphi 0, %s338
      %s341 = sphi 0, %s340
      %s355 = sphi 0, %s341
      %s359 = sphi 0, %s359
      %s361 = sphi 0, %s359
      %s362 = sphi 0, %s361
      %s376 = sphi 0, %s362
      %s380 = sphi 0, %s380
      %s382 = sphi 0, %s380
      %s383 = sphi 0, %s382
      %s397 = sphi 0, %s383
      %s401 = sphi 0, %s401
      %s403 = sphi 0, %s401
      %s404 = sphi 0, %s403
      %s418 = sphi 0, %s404
      %s422 = sphi 0, %s422
      %s424 = sphi 0, %s422
      %s425 = sphi 0, %s424
      %s439 = sphi 0, %s425
      %s445 = sphi 0, %s447
      %s448 = sphi 0, %s445
      %s449 = sphi 0, %s448
      %s465 = sphi 0, %s449
    $region4: #{decoder_forward.1} parent=1 // loop_header_branch
      %34 = sbr.rel (%p32) target = $region8
    $region5: #{decoder_forward.1} parent=1 // loop_body
      %s36 = ssub.s32 %s31, 1
      %s37 = ssub.s32 %s31, 2
      %s38 = sadd.s32 %s31, 1
      %s39 = ssub.s32 %s31, %s38
      %p40 = scmp.eq.s32.totalorder %s39, 0
      %s42 = sadd.s32 %s41, 1
      %s43 = scalar_select %p40, %s41, %s42
      %p46 = pneg %p40
      %p47 = scmp.eq.s32.totalorder %s31, 1
      %p48 = por %p46, %p47
      %p49 = scmp.ne.s32.totalorder %s41, %s44
      %p50 = scmp.eq.s32.totalorder %s31, 0
      %p51 = por %p49, %p50
      %p52 = scmp.ne.s32.totalorder %s41, %s44
      %p53 = scmp.eq.s32.totalorder %s36, 1
      %p54 = por %p52, %p53
      %p55 = scmp.ne.s32.totalorder %s44, %s45
      %p56 = scmp.eq.s32.totalorder %s36, 0
      %p57 = por %p55, %p56
      %p58 = scmp.ne.s32.totalorder %s44, %s45
      %p59 = scmp.eq.s32.totalorder %s37, 1
      %p60 = por %p58, %p59
      %p62 = scmp.ne.s32.totalorder %s45, %s61
      %p63 = scmp.eq.s32.totalorder %s37, 0
      %p64 = por %p62, %p63
      %s66 = sadd.s32 %s65, 1
      %p69 = scmp.eq.s32.totalorder %s31, 1
      %p70 = scmp.ne.s32.totalorder %s65, %s67
      %p71 = scmp.eq.s32.totalorder %s31, 0
      %p72 = por %p70, %p71
      %p73 = scmp.ne.s32.totalorder %s65, %s67
      %p74 = scmp.eq.s32.totalorder %s36, 1
      %p75 = por %p73, %p74
      %p76 = scmp.ne.s32.totalorder %s67, %s68
      %p77 = scmp.eq.s32.totalorder %s36, 0
      %p78 = por %p76, %p77
      %p79 = scmp.ne.s32.totalorder %s67, %s68
      %p80 = scmp.eq.s32.totalorder %s37, 1
      %p81 = por %p79, %p80
      %p83 = scmp.ne.s32.totalorder %s68, %s82
      %p84 = scmp.eq.s32.totalorder %s37, 0
      %p85 = por %p83, %p84
      %s87 = sadd.s32 %s86, 1
      %p90 = scmp.eq.s32.totalorder %s31, 1
      %p91 = scmp.ne.s32.totalorder %s86, %s88
      %p92 = scmp.eq.s32.totalorder %s31, 0
      %p93 = por %p91, %p92
      %p94 = scmp.ne.s32.totalorder %s86, %s88
      %p95 = scmp.eq.s32.totalorder %s36, 1
      %p96 = por %p94, %p95
      %p97 = scmp.ne.s32.totalorder %s88, %s89
      %p98 = scmp.eq.s32.totalorder %s36, 0
      %p99 = por %p97, %p98
      %p100 = scmp.ne.s32.totalorder %s88, %s89
      %p101 = scmp.eq.s32.totalorder %s37, 1
      %p102 = por %p100, %p101
      %p104 = scmp.ne.s32.totalorder %s89, %s103
      %p105 = scmp.eq.s32.totalorder %s37, 0
      %p106 = por %p104, %p105
      %s108 = sadd.s32 %s107, 1
      %p111 = scmp.eq.s32.totalorder %s31, 1
      %p112 = scmp.ne.s32.totalorder %s107, %s109
      %p113 = scmp.eq.s32.totalorder %s31, 0
      %p114 = por %p112, %p113
      %p115 = scmp.ne.s32.totalorder %s107, %s109
      %p116 = scmp.eq.s32.totalorder %s36, 1
      %p117 = por %p115, %p116
      %p118 = scmp.ne.s32.totalorder %s109, %s110
      %p119 = scmp.eq.s32.totalorder %s36, 0
      %p120 = por %p118, %p119
      %p121 = scmp.ne.s32.totalorder %s109, %s110
      %p122 = scmp.eq.s32.totalorder %s37, 1
      %p123 = por %p121, %p122
      %p125 = scmp.ne.s32.totalorder %s110, %s124
      %p126 = scmp.eq.s32.totalorder %s37, 0
      %p127 = por %p125, %p126
      %s129 = sadd.s32 %s128, 1
      %p132 = scmp.eq.s32.totalorder %s31, 1
      %p133 = scmp.ne.s32.totalorder %s128, %s130
      %p134 = scmp.eq.s32.totalorder %s31, 0
      %p135 = por %p133, %p134
      %p136 = scmp.ne.s32.totalorder %s128, %s130
      %p137 = scmp.eq.s32.totalorder %s36, 1
      %p138 = por %p136, %p137
      %p139 = scmp.ne.s32.totalorder %s130, %s131
      %p140 = scmp.eq.s32.totalorder %s36, 0
      %p141 = por %p139, %p140
      %p142 = scmp.ne.s32.totalorder %s130, %s131
      %p143 = scmp.eq.s32.totalorder %s37, 1
      %p144 = por %p142, %p143
      %p146 = scmp.ne.s32.totalorder %s131, %s145
      %p147 = scmp.eq.s32.totalorder %s37, 0
      %p148 = por %p146, %p147
      %s150 = sadd.s32 %s149, 1
      %p153 = scmp.eq.s32.totalorder %s31, 1
      %p154 = scmp.ne.s32.totalorder %s149, %s151
      %p155 = scmp.eq.s32.totalorder %s31, 0
      %p156 = por %p154, %p155
      %p157 = scmp.ne.s32.totalorder %s149, %s151
      %p158 = scmp.eq.s32.totalorder %s36, 1
      %p159 = por %p157, %p158
      %p160 = scmp.ne.s32.totalorder %s151, %s152
      %p161 = scmp.eq.s32.totalorder %s36, 0
      %p162 = por %p160, %p161
      %p163 = scmp.ne.s32.totalorder %s151, %s152
      %p164 = scmp.eq.s32.totalorder %s37, 1
      %p165 = por %p163, %p164
      %p167 = scmp.ne.s32.totalorder %s152, %s166
      %p168 = scmp.eq.s32.totalorder %s37, 0
      %p169 = por %p167, %p168
      %s171 = sadd.s32 %s170, 1
      %p174 = scmp.eq.s32.totalorder %s31, 1
      %p175 = scmp.ne.s32.totalorder %s170, %s172
      %p176 = scmp.eq.s32.totalorder %s31, 0
      %p177 = por %p175, %p176
      %p178 = scmp.ne.s32.totalorder %s170, %s172
      %p179 = scmp.eq.s32.totalorder %s36, 1
      %p180 = por %p178, %p179
      %p181 = scmp.ne.s32.totalorder %s172, %s173
      %p182 = scmp.eq.s32.totalorder %s36, 0
      %p183 = por %p181, %p182
      %p184 = scmp.ne.s32.totalorder %s172, %s173
      %p185 = scmp.eq.s32.totalorder %s37, 1
      %p186 = por %p184, %p185
      %p188 = scmp.ne.s32.totalorder %s173, %s187
      %p189 = scmp.eq.s32.totalorder %s37, 0
      %p190 = por %p188, %p189
      %s192 = sadd.s32 %s191, 1
      %p195 = scmp.eq.s32.totalorder %s31, 1
      %p196 = scmp.ne.s32.totalorder %s191, %s193
      %p197 = scmp.eq.s32.totalorder %s31, 0
      %p198 = por %p196, %p197
      %p199 = scmp.ne.s32.totalorder %s191, %s193
      %p200 = scmp.eq.s32.totalorder %s36, 1
      %p201 = por %p199, %p200
      %p202 = scmp.ne.s32.totalorder %s193, %s194
      %p203 = scmp.eq.s32.totalorder %s36, 0
      %p204 = por %p202, %p203
      %p205 = scmp.ne.s32.totalorder %s193, %s194
      %p206 = scmp.eq.s32.totalorder %s37, 1
      %p207 = por %p205, %p206
      %p209 = scmp.ne.s32.totalorder %s194, %s208
      %p210 = scmp.eq.s32.totalorder %s37, 0
      %p211 = por %p209, %p210
      %s213 = sadd.s32 %s212, 1
      %p216 = scmp.eq.s32.totalorder %s31, 1
      %p217 = scmp.ne.s32.totalorder %s212, %s214
      %p218 = scmp.eq.s32.totalorder %s31, 0
      %p219 = por %p217, %p218
      %p220 = scmp.ne.s32.totalorder %s212, %s214
      %p221 = scmp.eq.s32.totalorder %s36, 1
      %p222 = por %p220, %p221
      %p223 = scmp.ne.s32.totalorder %s214, %s215
      %p224 = scmp.eq.s32.totalorder %s36, 0
      %p225 = por %p223, %p224
      %p226 = scmp.ne.s32.totalorder %s214, %s215
      %p227 = scmp.eq.s32.totalorder %s37, 1
      %p228 = por %p226, %p227
      %p230 = scmp.ne.s32.totalorder %s215, %s229
      %p231 = scmp.eq.s32.totalorder %s37, 0
      %p232 = por %p230, %p231
      %s234 = sadd.s32 %s233, 1
      %p237 = scmp.eq.s32.totalorder %s31, 1
      %p238 = scmp.ne.s32.totalorder %s233, %s235
      %p239 = scmp.eq.s32.totalorder %s31, 0
      %p240 = por %p238, %p239
      %p241 = scmp.ne.s32.totalorder %s233, %s235
      %p242 = scmp.eq.s32.totalorder %s36, 1
      %p243 = por %p241, %p242
      %p244 = scmp.ne.s32.totalorder %s235, %s236
      %p245 = scmp.eq.s32.totalorder %s36, 0
      %p246 = por %p244, %p245
      %p247 = scmp.ne.s32.totalorder %s235, %s236
      %p248 = scmp.eq.s32.totalorder %s37, 1
      %p249 = por %p247, %p248
      %p251 = scmp.ne.s32.totalorder %s236, %s250
      %p252 = scmp.eq.s32.totalorder %s37, 0
      %p253 = por %p251, %p252
      %s255 = sadd.s32 %s254, 1
      %p258 = scmp.eq.s32.totalorder %s31, 1
      %p259 = scmp.ne.s32.totalorder %s254, %s256
      %p260 = scmp.eq.s32.totalorder %s31, 0
      %p261 = por %p259, %p260
      %p262 = scmp.ne.s32.totalorder %s254, %s256
      %p263 = scmp.eq.s32.totalorder %s36, 1
      %p264 = por %p262, %p263
      %p265 = scmp.ne.s32.totalorder %s256, %s257
      %p266 = scmp.eq.s32.totalorder %s36, 0
      %p267 = por %p265, %p266
      %p268 = scmp.ne.s32.totalorder %s256, %s257
      %p269 = scmp.eq.s32.totalorder %s37, 1
      %p270 = por %p268, %p269
      %p272 = scmp.ne.s32.totalorder %s257, %s271
      %p273 = scmp.eq.s32.totalorder %s37, 0
      %p274 = por %p272, %p273
      %s276 = sadd.s32 %s275, 1
      %p279 = scmp.eq.s32.totalorder %s31, 1
      %p280 = scmp.ne.s32.totalorder %s275, %s277
      %p281 = scmp.eq.s32.totalorder %s31, 0
      %p282 = por %p280, %p281
      %p283 = scmp.ne.s32.totalorder %s275, %s277
      %p284 = scmp.eq.s32.totalorder %s36, 1
      %p285 = por %p283, %p284
      %p286 = scmp.ne.s32.totalorder %s277, %s278
      %p287 = scmp.eq.s32.totalorder %s36, 0
      %p288 = por %p286, %p287
      %p289 = scmp.ne.s32.totalorder %s277, %s278
      %p290 = scmp.eq.s32.totalorder %s37, 1
      %p291 = por %p289, %p290
      %p293 = scmp.ne.s32.totalorder %s278, %s292
      %p294 = scmp.eq.s32.totalorder %s37, 0
      %p295 = por %p293, %p294
      %s297 = sadd.s32 %s296, 1
      %p300 = scmp.eq.s32.totalorder %s31, 1
      %p301 = scmp.ne.s32.totalorder %s296, %s298
      %p302 = scmp.eq.s32.totalorder %s31, 0
      %p303 = por %p301, %p302
      %p304 = scmp.ne.s32.totalorder %s296, %s298
      %p305 = scmp.eq.s32.totalorder %s36, 1
      %p306 = por %p304, %p305
      %p307 = scmp.ne.s32.totalorder %s298, %s299
      %p308 = scmp.eq.s32.totalorder %s36, 0
      %p309 = por %p307, %p308
      %p310 = scmp.ne.s32.totalorder %s298, %s299
      %p311 = scmp.eq.s32.totalorder %s37, 1
      %p312 = por %p310, %p311
      %p314 = scmp.ne.s32.totalorder %s299, %s313
      %p315 = scmp.eq.s32.totalorder %s37, 0
      %p316 = por %p314, %p315
      %s318 = sadd.s32 %s317, 1
      %p321 = scmp.eq.s32.totalorder %s31, 1
      %p322 = scmp.ne.s32.totalorder %s317, %s319
      %p323 = scmp.eq.s32.totalorder %s31, 0
      %p324 = por %p322, %p323
      %p325 = scmp.ne.s32.totalorder %s317, %s319
      %p326 = scmp.eq.s32.totalorder %s36, 1
      %p327 = por %p325, %p326
      %p328 = scmp.ne.s32.totalorder %s319, %s320
      %p329 = scmp.eq.s32.totalorder %s36, 0
      %p330 = por %p328, %p329
      %p331 = scmp.ne.s32.totalorder %s319, %s320
      %p332 = scmp.eq.s32.totalorder %s37, 1
      %p333 = por %p331, %p332
      %p335 = scmp.ne.s32.totalorder %s320, %s334
      %p336 = scmp.eq.s32.totalorder %s37, 0
      %p337 = por %p335, %p336
      %s339 = sadd.s32 %s338, 1
      %p342 = scmp.eq.s32.totalorder %s31, 1
      %p343 = scmp.ne.s32.totalorder %s338, %s340
      %p344 = scmp.eq.s32.totalorder %s31, 0
      %p345 = por %p343, %p344
      %p346 = scmp.ne.s32.totalorder %s338, %s340
      %p347 = scmp.eq.s32.totalorder %s36, 1
      %p348 = por %p346, %p347
      %p349 = scmp.ne.s32.totalorder %s340, %s341
      %p350 = scmp.eq.s32.totalorder %s36, 0
      %p351 = por %p349, %p350
      %p352 = scmp.ne.s32.totalorder %s340, %s341
      %p353 = scmp.eq.s32.totalorder %s37, 1
      %p354 = por %p352, %p353
      %p356 = scmp.ne.s32.totalorder %s341, %s355
      %p357 = scmp.eq.s32.totalorder %s37, 0
      %p358 = por %p356, %p357
      %s360 = sadd.s32 %s359, 1
      %p363 = scmp.eq.s32.totalorder %s31, 1
      %p364 = scmp.ne.s32.totalorder %s359, %s361
      %p365 = scmp.eq.s32.totalorder %s31, 0
      %p366 = por %p364, %p365
      %p367 = scmp.ne.s32.totalorder %s359, %s361
      %p368 = scmp.eq.s32.totalorder %s36, 1
      %p369 = por %p367, %p368
      %p370 = scmp.ne.s32.totalorder %s361, %s362
      %p371 = scmp.eq.s32.totalorder %s36, 0
      %p372 = por %p370, %p371
      %p373 = scmp.ne.s32.totalorder %s361, %s362
      %p374 = scmp.eq.s32.totalorder %s37, 1
      %p375 = por %p373, %p374
      %p377 = scmp.ne.s32.totalorder %s362, %s376
      %p378 = scmp.eq.s32.totalorder %s37, 0
      %p379 = por %p377, %p378
      %s381 = sadd.s32 %s380, 1
      %p384 = scmp.eq.s32.totalorder %s31, 1
      %p385 = scmp.ne.s32.totalorder %s380, %s382
      %p386 = scmp.eq.s32.totalorder %s31, 0
      %p387 = por %p385, %p386
      %p388 = scmp.ne.s32.totalorder %s380, %s382
      %p389 = scmp.eq.s32.totalorder %s36, 1
      %p390 = por %p388, %p389
      %p391 = scmp.ne.s32.totalorder %s382, %s383
      %p392 = scmp.eq.s32.totalorder %s36, 0
      %p393 = por %p391, %p392
      %p394 = scmp.ne.s32.totalorder %s382, %s383
      %p395 = scmp.eq.s32.totalorder %s37, 1
      %p396 = por %p394, %p395
      %p398 = scmp.ne.s32.totalorder %s383, %s397
      %p399 = scmp.eq.s32.totalorder %s37, 0
      %p400 = por %p398, %p399
      %s402 = sadd.s32 %s401, 1
      %p405 = scmp.eq.s32.totalorder %s31, 1
      %p406 = scmp.ne.s32.totalorder %s401, %s403
      %p407 = scmp.eq.s32.totalorder %s31, 0
      %p408 = por %p406, %p407
      %p409 = scmp.ne.s32.totalorder %s401, %s403
      %p410 = scmp.eq.s32.totalorder %s36, 1
      %p411 = por %p409, %p410
      %p412 = scmp.ne.s32.totalorder %s403, %s404
      %p413 = scmp.eq.s32.totalorder %s36, 0
      %p414 = por %p412, %p413
      %p415 = scmp.ne.s32.totalorder %s403, %s404
      %p416 = scmp.eq.s32.totalorder %s37, 1
      %p417 = por %p415, %p416
      %p419 = scmp.ne.s32.totalorder %s404, %s418
      %p420 = scmp.eq.s32.totalorder %s37, 0
      %p421 = por %p419, %p420
      %s423 = sadd.s32 %s422, 1
      %p426 = scmp.eq.s32.totalorder %s31, 1
      %p427 = scmp.ne.s32.totalorder %s422, %s424
      %p428 = scmp.eq.s32.totalorder %s31, 0
      %p429 = por %p427, %p428
      %p430 = scmp.ne.s32.totalorder %s422, %s424
      %p431 = scmp.eq.s32.totalorder %s36, 1
      %p432 = por %p430, %p431
      %p433 = scmp.ne.s32.totalorder %s424, %s425
      %p434 = scmp.eq.s32.totalorder %s36, 0
      %p435 = por %p433, %p434
      %p436 = scmp.ne.s32.totalorder %s424, %s425
      %p437 = scmp.eq.s32.totalorder %s37, 1
      %p438 = por %p436, %p437
      %p440 = scmp.ne.s32.totalorder %s425, %s439
      %p441 = scmp.eq.s32.totalorder %s37, 0
      %p442 = por %p440, %p441
      %s443 = ssub.s32 %s31, %s38
      %p444 = scmp.eq.s32.totalorder %s443, 0
      %s446 = sadd.s32 %s445, 1
      %s447 = scalar_select %p444, %s445, %s446
      %p450 = pneg %p444
      %p451 = scmp.eq.s32.totalorder %s31, 1
      %p452 = por %p450, %p451
      %p453 = scmp.ne.s32.totalorder %s445, %s448
      %p454 = scmp.eq.s32.totalorder %s31, 0
      %p455 = por %p453, %p454
      %p456 = scmp.ne.s32.totalorder %s445, %s448
      %p457 = scmp.eq.s32.totalorder %s36, 1
      %p458 = por %p456, %p457
      %p459 = scmp.ne.s32.totalorder %s448, %s449
      %p460 = scmp.eq.s32.totalorder %s36, 0
      %p461 = por %p459, %p460
      %p462 = scmp.ne.s32.totalorder %s448, %s449
      %p463 = scmp.eq.s32.totalorder %s37, 1
      %p464 = por %p462, %p463
      %p466 = scmp.ne.s32.totalorder %s449, %s465
      %p467 = scmp.eq.s32.totalorder %s37, 0
      %p468 = por %p466, %p467
      %p469 = scmp.le.s32.totalorder 1, %s31
      %p470 = scmp.lt.s32.totalorder %s31, 3
      %p471 = pnand %p469, %p470
      %p472 = pneg %p471
      // Predicated region
      $region9: #{decoder_forward.1} parent=5 // pred_check
        _
      $region10: #{decoder_forward.1} parent=5 // pred_check_branch
        %474 = sbr.rel (%p471) target = $region12
      $region11: #{decoder_forward.1} parent=5 // pred_region
        %s475 = ssub.s32 %s31, 1
        // Predicated region
        $region13: #{decoder_forward.1} parent=11 // pred_check
          %p476 = pneg %p78
        $region14: #{decoder_forward.1} parent=11 // pred_check_branch
          %478 = sbr.rel (%p476) target = $region16
        $region15: #{decoder_forward.1} parent=11 // pred_region
          %s480 = ssub.s32 256, 256
          %481 = vsyncadd [#allocation3], %s480
          %s482 = sshll.u32 [#allocation2], 4
          %s483 = int_to_ptr.vmem [resolvable:$true] %s482
          %488 = dma.hbm_to_vmem [thread:$0]  %s1, 256, %s483, [#allocation3], 128, 128, 8
        $region16: #{decoder_forward.1} parent=11 // pred_fallthru
          _
        // Predicated region
        $region17: #{decoder_forward.1} parent=11 // pred_check
          %p489 = pneg %p99
        $region18: #{decoder_forward.1} parent=11 // pred_check_branch
          %491 = sbr.rel (%p489) target = $region20
        $region19: #{decoder_forward.1} parent=11 // pred_region
          %s493 = ssub.s32 2048, 2048
          %494 = vsyncadd [#allocation5], %s493
          %s495 = sshll.u32 [#allocation4], 4
          %s496 = int_to_ptr.vmem [resolvable:$true] %s495
          %501 = dma.hbm_to_vmem [thread:$0]  %s2, 2048, %s496, [#allocation5], 256, 256, 16
        $region20: #{decoder_forward.1} parent=11 // pred_fallthru
          _
        // Predicated region
        $region21: #{decoder_forward.1} parent=11 // pred_check
          %p502 = pneg %p120
        $region22: #{decoder_forward.1} parent=11 // pred_check_branch
          %504 = sbr.rel (%p502) target = $region24
        $region23: #{decoder_forward.1} parent=11 // pred_region
          _
        $region24: #{decoder_forward.1} parent=11 // pred_fallthru
          _
        // Predicated region
        $region25: #{decoder_forward.1} parent=11 // pred_check
          %p505 = pneg %p141
        $region26: #{decoder_forward.1} parent=11 // pred_check_branch
          %507 = sbr.rel (%p505) target = $region28
        $region27: #{decoder_forward.1} parent=11 // pred_region
          %s509 = ssub.s32 256, 256
          %510 = vsyncadd [#allocation5], %s509
          %s511 = sshll.u32 [#allocation6], 4
          %s512 = int_to_ptr.vmem [resolvable:$true] %s511
          %517 = dma.hbm_to_vmem [thread:$0]  %s4, 256, %s512, [#allocation5], 128, 128, 8
        $region28: #{decoder_forward.1} parent=11 // pred_fallthru
          _
        // Predicated region
        $region29: #{decoder_forward.1} parent=11 // pred_check
          %p518 = pneg %p162
        $region30: #{decoder_forward.1} parent=11 // pred_check_branch
          %520 = sbr.rel (%p518) target = $region32
        $region31: #{decoder_forward.1} parent=11 // pred_region
          _
        $region32: #{decoder_forward.1} parent=11 // pred_fallthru
          _
        // Predicated region
        $region33: #{decoder_forward.1} parent=11 // pred_check
          %p521 = pneg %p183
        $region34: #{decoder_forward.1} parent=11 // pred_check_branch
          %523 = sbr.rel (%p521) target = $region36
        $region35: #{decoder_forward.1} parent=11 // pred_region
          %s525 = ssub.s32 384, 384
          %526 = vsyncadd [#allocation8], %s525
          %s527 = sshll.u32 [#allocation7], 4
          %s528 = int_to_ptr.vmem [resolvable:$true] %s527
          %533 = dma.hbm_to_vmem [thread:$0]  %s6, 384, %s528, [#allocation8], 128, 128, 8
        $region36: #{decoder_forward.1} parent=11 // pred_fallthru
          _
        // Predicated region
        $region37: #{decoder_forward.1} parent=11 // pred_check
          %p534 = pneg %p204
        $region38: #{decoder_forward.1} parent=11 // pred_check_branch
          %536 = sbr.rel (%p534) target = $region40
        $region39: #{decoder_forward.1} parent=11 // pred_region
          %s538 = ssub.s32 2048, 2048
          %539 = vsyncadd [#allocation8], %s538
          %s540 = sshll.u32 [#allocation9], 4
          %s541 = int_to_ptr.vmem [resolvable:$true] %s540
          %546 = dma.hbm_to_vmem [thread:$0]  %s7, 2048, %s541, [#allocation8], 256, 256, 16
        $region40: #{decoder_forward.1} parent=11 // pred_fallthru
          _
        // Predicated region
        $region41: #{decoder_forward.1} parent=11 // pred_check
          %p547 = pneg %p225
        $region42: #{decoder_forward.1} parent=11 // pred_check_branch
          %549 = sbr.rel (%p547) target = $region44
        $region43: #{decoder_forward.1} parent=11 // pred_region
          _
        $region44: #{decoder_forward.1} parent=11 // pred_fallthru
          _
        // Predicated region
        $region45: #{decoder_forward.1} parent=11 // pred_check
          %p550 = pneg %p246
        $region46: #{decoder_forward.1} parent=11 // pred_check_branch
          %552 = sbr.rel (%p550) target = $region48
        $region47: #{decoder_forward.1} parent=11 // pred_region
          %s554 = ssub.s32 256, 256
          %555 = vsyncadd [#allocation11], %s554
          %s556 = sshll.u32 [#allocation10], 4
          %s557 = int_to_ptr.vmem [resolvable:$true] %s556
          %562 = dma.hbm_to_vmem [thread:$0]  %s9, 256, %s557, [#allocation11], 128, 128, 8
        $region48: #{decoder_forward.1} parent=11 // pred_fallthru
          _
        // Predicated region
        $region49: #{decoder_forward.1} parent=11 // pred_check
          %p563 = pneg %p267
        $region50: #{decoder_forward.1} parent=11 // pred_check_branch
          %565 = sbr.rel (%p563) target = $region52
        $region51: #{decoder_forward.1} parent=11 // pred_region
          _
        $region52: #{decoder_forward.1} parent=11 // pred_fallthru
          _
        // Predicated region
        $region53: #{decoder_forward.1} parent=11 // pred_check
          %p566 = pneg %p288
        $region54: #{decoder_forward.1} parent=11 // pred_check_branch
          %568 = sbr.rel (%p566) target = $region56
        $region55: #{decoder_forward.1} parent=11 // pred_region
          %s570 = ssub.s32 3840, 3840
          %571 = vsyncadd [#allocation11], %s570
          %s572 = sshll.u32 [#allocation12], 4
          %s573 = int_to_ptr.vmem [resolvable:$true] %s572
          %578 = dma.hbm_to_vmem [thread:$0]  %s11, 3840, %s573, [#allocation11], 384, 384, 24
        $region56: #{decoder_forward.1} parent=11 // pred_fallthru
          _
        // Predicated region
        $region57: #{decoder_forward.1} parent=11 // pred_check
          %p579 = pneg %p309
        $region58: #{decoder_forward.1} parent=11 // pred_check_branch
          %581 = sbr.rel (%p579) target = $region60
        $region59: #{decoder_forward.1} parent=11 // pred_region
          %s583 = ssub.s32 2048, 2048
          %584 = vsyncadd [#allocation14], %s583
          %s585 = sshll.u32 [#allocation13], 4
          %s586 = int_to_ptr.vmem [resolvable:$true] %s585
          %591 = dma.hbm_to_vmem [thread:$0]  %s12, 2048, %s586, [#allocation14], 256, 256, 16
        $region60: #{decoder_forward.1} parent=11 // pred_fallthru
          _
        // Predicated region
        $region61: #{decoder_forward.1} parent=11 // pred_check
          %p592 = pneg %p330
        $region62: #{decoder_forward.1} parent=11 // pred_check_branch
          %594 = sbr.rel (%p592) target = $region64
        $region63: #{decoder_forward.1} parent=11 // pred_region
          _
        $region64: #{decoder_forward.1} parent=11 // pred_fallthru
          _
        // Predicated region
        $region65: #{decoder_forward.1} parent=11 // pred_check
          %p595 = pneg %p351
        $region66: #{decoder_forward.1} parent=11 // pred_check_branch
          %597 = sbr.rel (%p595) target = $region68
        $region67: #{decoder_forward.1} parent=11 // pred_region
          %s599 = ssub.s32 256, 256
          %600 = vsyncadd [#allocation14], %s599
          %s601 = sshll.u32 [#allocation15], 4
          %s602 = int_to_ptr.vmem [resolvable:$true] %s601
          %607 = dma.hbm_to_vmem [thread:$0]  %s14, 256, %s602, [#allocation14], 128, 128, 8
        $region68: #{decoder_forward.1} parent=11 // pred_fallthru
          _
        // Predicated region
        $region69: #{decoder_forward.1} parent=11 // pred_check
          %p608 = pneg %p372
        $region70: #{decoder_forward.1} parent=11 // pred_check_branch
          %610 = sbr.rel (%p608) target = $region72
        $region71: #{decoder_forward.1} parent=11 // pred_region
          _
        $region72: #{decoder_forward.1} parent=11 // pred_fallthru
          _
        // Predicated region
        $region73: #{decoder_forward.1} parent=11 // pred_check
          %p611 = pneg %p393
        $region74: #{decoder_forward.1} parent=11 // pred_check_branch
          %613 = sbr.rel (%p611) target = $region76
        $region75: #{decoder_forward.1} parent=11 // pred_region
          %s615 = ssub.s32 46080, 46080
          %616 = vsyncadd [#allocation17], %s615
          %s617 = sshll.u32 [#allocation16], 4
          %s618 = int_to_ptr.vmem [resolvable:$true] %s617
          %623 = dma.hbm_to_vmem [thread:$0]  %s16, 46080, %s618, [#allocation17], 1280, 1280, 80
        $region76: #{decoder_forward.1} parent=11 // pred_fallthru
          _
        // Predicated region
        $region77: #{decoder_forward.1} parent=11 // pred_check
          %p624 = pneg %p414
        $region78: #{decoder_forward.1} parent=11 // pred_check_branch
          %626 = sbr.rel (%p624) target = $region80
        $region79: #{decoder_forward.1} parent=11 // pred_region
          %s628 = ssub.s32 512, 512
          %629 = vsyncadd [#allocation17], %s628
          %s630 = sshll.u32 [#allocation18], 4
          %s631 = int_to_ptr.vmem [resolvable:$true] %s630
          %636 = dma.hbm_to_vmem [thread:$0]  %s17, 512, %s631, [#allocation17], 256, 256, 16
        $region80: #{decoder_forward.1} parent=11 // pred_fallthru
          _
        // Predicated region
        $region81: #{decoder_forward.1} parent=11 // pred_check
          %p637 = pneg %p435
        $region82: #{decoder_forward.1} parent=11 // pred_check_branch
          %639 = sbr.rel (%p637) target = $region84
        $region83: #{decoder_forward.1} parent=11 // pred_region
          _
        $region84: #{decoder_forward.1} parent=11 // pred_fallthru
          _
      $region12: #{decoder_forward.1} parent=5 // pred_fallthru
        _
      %p640 = scmp.lt.s32.totalorder %s31, 2
      // Predicated region
      $region85: #{decoder_forward.1} parent=5 // pred_check
        %p641 = pneg %p640
      $region86: #{decoder_forward.1} parent=5 // pred_check_branch
        %643 = sbr.rel (%p641) target = $region88
      $region87: #{decoder_forward.1} parent=5 // pred_region
        // Predicated region
        $region89: #{decoder_forward.1} parent=87 // pred_check
          %p644 = pneg %p51
        $region90: #{decoder_forward.1} parent=87 // pred_check_branch
          %646 = sbr.rel (%p644) target = $region92
        $region91: #{decoder_forward.1} parent=87 // pred_region
          %p647 = scmp.lt.s32.totalorder %s31, 1
          %s648 = scalar_select %p647, %s31, 1
          %s649 = smul.addr %s648, 3
          %s650 = smul.addr %s649, 8
          %s651 = scalar_lea.vmem %s0, %s650
        $region92: #{decoder_forward.1} parent=87 // pred_fallthru
          _
      $region88: #{decoder_forward.1} parent=5 // pred_fallthru
        _
      %p652 = scmp.le.s32.totalorder 1, %s31
      %p653 = scmp.lt.s32.totalorder %s31, 3
      %p654 = pnand %p652, %p653
      %p655 = pneg %p654
      // Predicated region
      $region93: #{decoder_forward.1} parent=5 // pred_check
        _
      $region94: #{decoder_forward.1} parent=5 // pred_check_branch
        %657 = sbr.rel (%p654) target = $region96
      $region95: #{decoder_forward.1} parent=5 // pred_region
        %s658 = ssub.s32 %s31, 1
        // Predicated region
        $region97: #{decoder_forward.1} parent=95 // pred_check
          %p659 = pneg %p78
        $region98: #{decoder_forward.1} parent=95 // pred_check_branch
          %661 = sbr.rel (%p659) target = $region100
        $region99: #{decoder_forward.1} parent=95 // pred_region
          %662 = dma.done [#allocation3], 256
        $region100: #{decoder_forward.1} parent=95 // pred_fallthru
          _
        // Predicated region
        $region101: #{decoder_forward.1} parent=95 // pred_check
          %p663 = pneg %p99
        $region102: #{decoder_forward.1} parent=95 // pred_check_branch
          %665 = sbr.rel (%p663) target = $region104
        $region103: #{decoder_forward.1} parent=95 // pred_region
          %666 = dma.done [#allocation5], 2048
        $region104: #{decoder_forward.1} parent=95 // pred_fallthru
          _
        // Predicated region
        $region105: #{decoder_forward.1} parent=95 // pred_check
          %p667 = pneg %p141
        $region106: #{decoder_forward.1} parent=95 // pred_check_branch
          %669 = sbr.rel (%p667) target = $region108
        $region107: #{decoder_forward.1} parent=95 // pred_region
          %670 = dma.done [#allocation5], 256
        $region108: #{decoder_forward.1} parent=95 // pred_fallthru
          _
        // Predicated region
        $region109: #{decoder_forward.1} parent=95 // pred_check
          %p671 = pneg %p183
        $region110: #{decoder_forward.1} parent=95 // pred_check_branch
          %673 = sbr.rel (%p671) target = $region112
        $region111: #{decoder_forward.1} parent=95 // pred_region
          %674 = dma.done [#allocation8], 384
        $region112: #{decoder_forward.1} parent=95 // pred_fallthru
          _
        // Predicated region
        $region113: #{decoder_forward.1} parent=95 // pred_check
          %p675 = pneg %p204
        $region114: #{decoder_forward.1} parent=95 // pred_check_branch
          %677 = sbr.rel (%p675) target = $region116
        $region115: #{decoder_forward.1} parent=95 // pred_region
          %678 = dma.done [#allocation8], 2048
        $region116: #{decoder_forward.1} parent=95 // pred_fallthru
          _
        // Predicated region
        $region117: #{decoder_forward.1} parent=95 // pred_check
          %p679 = pneg %p246
        $region118: #{decoder_forward.1} parent=95 // pred_check_branch
          %681 = sbr.rel (%p679) target = $region120
        $region119: #{decoder_forward.1} parent=95 // pred_region
          %682 = dma.done [#allocation11], 256
        $region120: #{decoder_forward.1} parent=95 // pred_fallthru
          _
        // Predicated region
        $region121: #{decoder_forward.1} parent=95 // pred_check
          %p683 = pneg %p288
        $region122: #{decoder_forward.1} parent=95 // pred_check_branch
          %685 = sbr.rel (%p683) target = $region124
        $region123: #{decoder_forward.1} parent=95 // pred_region
          %686 = dma.done [#allocation11], 3840
        $region124: #{decoder_forward.1} parent=95 // pred_fallthru
          _
        // Predicated region
        $region125: #{decoder_forward.1} parent=95 // pred_check
          %p687 = pneg %p309
        $region126: #{decoder_forward.1} parent=95 // pred_check_branch
          %689 = sbr.rel (%p687) target = $region128
        $region127: #{decoder_forward.1} parent=95 // pred_region
          %690 = dma.done [#allocation14], 2048
        $region128: #{decoder_forward.1} parent=95 // pred_fallthru
          _
        // Predicated region
        $region129: #{decoder_forward.1} parent=95 // pred_check
          %p691 = pneg %p351
        $region130: #{decoder_forward.1} parent=95 // pred_check_branch
          %693 = sbr.rel (%p691) target = $region132
        $region131: #{decoder_forward.1} parent=95 // pred_region
          %694 = dma.done [#allocation14], 256
        $region132: #{decoder_forward.1} parent=95 // pred_fallthru
          _
        // Predicated region
        $region133: #{decoder_forward.1} parent=95 // pred_check
          %p695 = pneg %p393
        $region134: #{decoder_forward.1} parent=95 // pred_check_branch
          %697 = sbr.rel (%p695) target = $region136
        $region135: #{decoder_forward.1} parent=95 // pred_region
          %698 = dma.done [#allocation17], 46080
        $region136: #{decoder_forward.1} parent=95 // pred_fallthru
          _
        // Predicated region
        $region137: #{decoder_forward.1} parent=95 // pred_check
          %p699 = pneg %p414
        $region138: #{decoder_forward.1} parent=95 // pred_check_branch
          %701 = sbr.rel (%p699) target = $region140
        $region139: #{decoder_forward.1} parent=95 // pred_region
          %702 = dma.done [#allocation17], 512
        $region140: #{decoder_forward.1} parent=95 // pred_fallthru
          _
        %p703 = scmp.lt.s32.totalorder %s36, 1
        %s704 = scalar_select %p703, %s36, 1
        %s705 = smul.addr %s704, 3
        %s706 = smul.addr %s705, 8
        %s707 = scalar_lea.vmem %s0, %s706
        %p708 = pneg %p57
        %p709 = pneg %p54
        %p710 = pneg %p78
        %p711 = pneg %p75
        %p712 = pneg %p99
        %p713 = pneg %p96
        %p714 = pneg %p120
        %p715 = pneg %p117
        %p716 = pneg %p141
        %p717 = pneg %p138
        %p718 = pneg %p162
        %p719 = pneg %p159
        %p720 = pneg %p183
        %p721 = pneg %p180
        %p722 = pneg %p204
        %p723 = pneg %p201
        %p724 = pneg %p225
        %p725 = pneg %p222
        %p726 = pneg %p246
        %p727 = pneg %p243
        %p728 = pneg %p267
        %p729 = pneg %p264
        %p730 = pneg %p288
        %p731 = pneg %p285
        %p732 = pneg %p309
        %p733 = pneg %p306
        %p734 = pneg %p330
        %p735 = pneg %p327
        %p736 = pneg %p351
        %p737 = pneg %p348
        %p738 = pneg %p372
        %p739 = pneg %p369
        %p740 = pneg %p393
        %p741 = pneg %p390
        %p742 = pneg %p414
        %p743 = pneg %p411
        %p744 = pneg %p435
        %p745 = pneg %p432
        %p746 = pneg %p461
        %p747 = pneg %p458
        %p748 = scmp.lt.s32.totalorder %s36, 1
        %s749 = scalar_select %p748, %s36, 1
        %s750 = smul.addr %s749, 18
        %s751 = smul.addr %s750, 8
        %s752 = scalar_lea.vmem %s19, %s751
        %p753 = scmp.lt.s32.totalorder %s36, 1
        %s754 = scalar_select %p753, %s36, 1
        %s755 = smul.addr %s754, 3
        %s756 = smul.addr %s755, 8
        %s757 = scalar_lea.vmem %s0, %s756
        %p758 = scmp.lt.s32.totalorder %s36, 1
        %s759 = scalar_select %p758, %s36, 1
        %s760 = smul.addr %s759, 18
        %s761 = smul.addr %s760, 8
        %s762 = scalar_lea.vmem %s19, %s761
        %v763 = vld [vmem:[%s757] sm:$0xff]
        %v764 = vld [vmem:[%s757 + $0x8] sm:$0xff]
        %v765 = vld [vmem:[%s757 + $0x10] sm:$0xff]
        %v766 = vld [vmem:[#allocation2] sm:$0xff]
        %v767 = vld [vmem:[#allocation2 + $0x8] sm:$0xff]
        %vm768 = vcmask 130048
        %v770 = vsel %vm768, %v763, 0
        %v773 = vsel %vm768, %v764, 0
        %v776 = vsel %vm768, %v765, 0
        %778 = vmatprep.subr.mxu0 0.0
        %779 = vmatpush1.msra.mxu0 %v766
        %780 = vmatprep.subr.mxu0 0.0
        %781 = vmatpush1.msra.mxu0 %v767
        %782 = vmatprep.subr.mxu0 0.0
        %783 = vmatpush1.msra.mxu0 0.0
        %784 = vmatprep.subr.mxu0 0.0
        %785 = vmatpush1.msra.mxu0 0.0
        %786 = vmatprep.subr.mxu0 0.0
        %787 = vmatpush1.msra.mxu0 0.0
        %788 = vmatprep.subr.mxu0 0.0
        %789 = vmatpush1.msra.mxu0 0.0
        %790 = vmatprep.subr.mxu0 0.0
        %791 = vmatpush1.msra.mxu0 0.0
        %792 = vmatprep.subr.mxu0 0.0
        %793 = vmatpush1.msra.mxu0 0.0
        %794 = vmatprep.subr.mxu0 0.0
        %795 = vmatpush1.msra.mxu0 0.0
        %796 = vmatprep.subr.mxu0 0.0
        %797 = vmatpush1.msra.mxu0 0.0
        %798 = vmatprep.subr.mxu0 0.0
        %799 = vmatpush1.msra.mxu0 0.0
        %800 = vmatprep.subr.mxu0 0.0
        %801 = vmatpush1.msra.mxu0 0.0
        %802 = vmatprep.subr.mxu0 0.0
        %803 = vmatpush1.msra.mxu0 0.0
        %804 = vmatprep.subr.mxu0 0.0
        %805 = vmatpush1.msra.mxu0 0.0
        %806 = vmatprep.subr.mxu0 0.0
        %807 = vmatpush1.msra.mxu0 0.0
        %808 = vmatprep.subr.mxu0 0.0
        %809 = vmatpush1.msra.mxu0 0.0
        %810 = vmatprep.subr.mxu0 0.0
        %811 = vmatpush1.msra.mxu0 0.0
        %812 = vmatprep.subr.mxu0 0.0
        %813 = vmatpush1.msra.mxu0 0.0
        %814 = vmatprep.subr.mxu0 0.0
        %815 = vmatpush1.msra.mxu0 0.0
        %816 = vmatprep.subr.mxu0 0.0
        %817 = vmatpush1.msra.mxu0 0.0
        %818 = vmatprep.subr.mxu0 0.0
        %819 = vmatpush1.msra.mxu0 0.0
        %820 = vmatprep.subr.mxu0 0.0
        %821 = vmatpush1.msra.mxu0 0.0
        %822 = vmatprep.subr.mxu0 0.0
        %823 = vmatpush1.msra.mxu0 0.0
        %824 = vmatprep.subr.mxu0 0.0
        %825 = vmatpush1.msra.mxu0 0.0
        %826 = vmatprep.subr.mxu0 0.0
        %827 = vmatpush1.msra.mxu0 0.0
        %828 = vmatprep.subr.mxu0 0.0
        %829 = vmatpush1.msra.mxu0 0.0
        %830 = vmatprep.subr.mxu0 0.0
        %831 = vmatpush1.msra.mxu0 0.0
        %832 = vmatprep.subr.mxu0 0.0
        %833 = vmatpush1.msra.mxu0 0.0
        %834 = vmatprep.subr.mxu0 0.0
        %835 = vmatpush1.msra.mxu0 0.0
        %836 = vmatprep.subr.mxu0 0.0
        %837 = vmatpush1.msra.mxu0 0.0
        %838 = vmatprep.subr.mxu0 0.0
        %839 = vmatpush1.msra.mxu0 0.0
        %840 = vmatprep.subr.mxu0 0.0
        %841 = vmatpush1.msra.mxu0 0.0
        %842 = vmatprep.mubr.f32.mxu0 0.0
        %843 = vmatmul.mubr.f32.gmra.mrb[0].mxu0 %v770
        %v844 = vpop.f32.mrb[0].mxu0
        %v845 = vadd.f32 0.0, %v844
        %v846 = vpop.f32.mrb[0].mxu0
        %847 = vmatprep.mubr.f32.mxu0 0.0
        %848 = vmatmul.mubr.f32.gmra.mrb[0].mxu0 %v773
        %v849 = vpop.f32.mrb[0].mxu0
        %v850 = vadd.f32 0.0, %v849
        %v851 = vpop.f32.mrb[0].mxu0
        %852 = vmatprep.mubr.f32.mxu0 0.0
        %853 = vmatmul.mubr.f32.gmra.mrb[0].mxu0 %v776
        %v854 = vpop.f32.mrb[0].mxu0
        %v855 = vadd.f32 0.0, %v854
        %v856 = vpop.f32.mrb[0].mxu0
        %857 = vdwg.mxu0
        %861 = vrot.lane.b32.xlu0 %v845, 127
        %v862 = vpop.permute.xlu0 %861
        %863 = vrot.lane.b32.xlu0 %v850, 127
        %v864 = vpop.permute.xlu0 %863
        %865 = vrot.lane.b32.xlu0 %v855, 127
        %v866 = vpop.permute.xlu0 %865
        %870 = vrot.lane.b32.xlu0 %v845, 126
        %v871 = vpop.permute.xlu0 %870
        %872 = vrot.lane.b32.xlu0 %v850, 126
        %v873 = vpop.permute.xlu0 %872
        %874 = vrot.lane.b32.xlu0 %v855, 126
        %v875 = vpop.permute.xlu0 %874
        %879 = vrot.lane.b32.xlu0 %v845, 122
        %v880 = vpop.permute.xlu0 %879
        %881 = vrot.lane.b32.xlu0 %v850, 122
        %v882 = vpop.permute.xlu0 %881
        %883 = vrot.lane.b32.xlu0 %v855, 122
        %v884 = vpop.permute.xlu0 %883
        %888 = vrot.lane.b32.xlu0 %v845, 121
        %v889 = vpop.permute.xlu0 %888
        %890 = vrot.lane.b32.xlu0 %v850, 121
        %v891 = vpop.permute.xlu0 %890
        %892 = vrot.lane.b32.xlu0 %v855, 121
        %v893 = vpop.permute.xlu0 %892
        %897 = vrot.lane.b32.xlu0 %v845, 120
        %v898 = vpop.permute.xlu0 %897
        %899 = vrot.lane.b32.xlu0 %v850, 120
        %v900 = vpop.permute.xlu0 %899
        %901 = vrot.lane.b32.xlu0 %v855, 120
        %v902 = vpop.permute.xlu0 %901
        %906 = vrot.lane.b32.xlu0 %v845, 116
        %v907 = vpop.permute.xlu0 %906
        %908 = vrot.lane.b32.xlu0 %v850, 116
        %v909 = vpop.permute.xlu0 %908
        %910 = vrot.lane.b32.xlu0 %v855, 116
        %v911 = vpop.permute.xlu0 %910
        %915 = vrot.lane.b32.xlu0 %v845, 115
        %v916 = vpop.permute.xlu0 %915
        %917 = vrot.lane.b32.xlu0 %v850, 115
        %v918 = vpop.permute.xlu0 %917
        %919 = vrot.lane.b32.xlu0 %v855, 115
        %v920 = vpop.permute.xlu0 %919
        %924 = vrot.lane.b32.xlu0 %v845, 114
        %v925 = vpop.permute.xlu0 %924
        %926 = vrot.lane.b32.xlu0 %v850, 114
        %v927 = vpop.permute.xlu0 %926
        %928 = vrot.lane.b32.xlu0 %v855, 114
        %v929 = vpop.permute.xlu0 %928
        %v933 = vld [vmem:[#allocation4] sm:$0xff]
        %v934 = vld [vmem:[#allocation4 + $0x8] sm:$0xff]
        %v935 = vld [vmem:[#allocation4 + $0x10] sm:$0xff]
        %v936 = vld [vmem:[#allocation4 + $0x18] sm:$0xff]
        %v937 = vld [vmem:[#allocation4 + $0x20] sm:$0xff]
        %v938 = vld [vmem:[#allocation4 + $0x28] sm:$0xff]
        %v939 = vld [vmem:[#allocation4 + $0x30] sm:$0xff]
        %v940 = vld [vmem:[#allocation4 + $0x38] sm:$0xff]
        %v941 = vld [vmem:[#allocation4 + $0x40] sm:$0xff]
        %v942 = vld [vmem:[#allocation4 + $0x48] sm:$0xff]
        %v943 = vld [vmem:[#allocation4 + $0x50] sm:$0xff]
        %v944 = vld [vmem:[#allocation4 + $0x58] sm:$0xff]
        %v945 = vld [vmem:[#allocation4 + $0x60] sm:$0xff]
        %v946 = vld [vmem:[#allocation4 + $0x68] sm:$0xff]
        %v947 = vld [vmem:[#allocation4 + $0x70] sm:$0xff]
        %v948 = vld [vmem:[#allocation4 + $0x78] sm:$0xff]
        %v949 = vld [vmem:[%s3] sm:$0xff]
        %v950 = vld [vmem:[%s3 + $0x8] sm:$0xff]
        %v951 = vld [vmem:[%s3 + $0x10] sm:$0xff]
        %v952 = vld [vmem:[%s3 + $0x18] sm:$0xff]
        %v953 = vld [vmem:[%s3 + $0x20] sm:$0xff]
        %v954 = vld [vmem:[%s3 + $0x28] sm:$0xff]
        %v955 = vld [vmem:[%s3 + $0x30] sm:$0xff]
        %v956 = vld [vmem:[%s3 + $0x38] sm:$0xff]
        %958 = vset.pattern.permute.xlu0 0
        %959 = vperm.xlu0 %958, %v949
        %v960 = vpop.permute.xlu0 %959
        %963 = vset.pattern.permute.xlu0 0
        %964 = vperm.xlu0 %963, %v950
        %v965 = vpop.permute.xlu0 %964
        %968 = vset.pattern.permute.xlu0 0
        %969 = vperm.xlu0 %968, %v951
        %v970 = vpop.permute.xlu0 %969
        %973 = vset.pattern.permute.xlu0 0
        %974 = vperm.xlu0 %973, %v952
        %v975 = vpop.permute.xlu0 %974
        %978 = vset.pattern.permute.xlu0 0
        %979 = vperm.xlu0 %978, %v953
        %v980 = vpop.permute.xlu0 %979
        %983 = vset.pattern.permute.xlu0 0
        %984 = vperm.xlu0 %983, %v954
        %v985 = vpop.permute.xlu0 %984
        %988 = vset.pattern.permute.xlu0 0
        %989 = vperm.xlu0 %988, %v955
        %v990 = vpop.permute.xlu0 %989
        %993 = vset.pattern.permute.xlu0 0
        %994 = vperm.xlu0 %993, %v956
        %v995 = vpop.permute.xlu0 %994
        %vm997 = vcmask 719872
        %v999 = vsel %vm997, %v934, 0
        %v1002 = vsel %vm997, %v936, 0
        %v1005 = vsel %vm997, %v938, 0
        %v1008 = vsel %vm997, %v940, 0
        %v1011 = vsel %vm997, %v942, 0
        %v1014 = vsel %vm997, %v944, 0
        %v1017 = vsel %vm997, %v946, 0
        %v1020 = vsel %vm997, %v948, 0
        %1022 = vmatprep.subr.mxu0 0.0
        %1023 = vmatpush1.msra.mxu0 %v845
        %1024 = vmatprep.subr.mxu0 0.0
        %1025 = vmatpush1.msra.mxu0 %v850
        %1026 = vmatprep.subr.mxu0 0.0
        %1027 = vmatpush1.msra.mxu0 %v855
        %1028 = vmatprep.subr.mxu0 0.0
        %1029 = vmatpush1.msra.mxu0 %v862
        %1030 = vmatprep.subr.mxu0 0.0
        %1031 = vmatpush1.msra.mxu0 %v864
        %1032 = vmatprep.subr.mxu0 0.0
        %1033 = vmatpush1.msra.mxu0 %v866
        %1034 = vmatprep.subr.mxu0 0.0
        %1035 = vmatpush1.msra.mxu0 %v871
        %1036 = vmatprep.subr.mxu0 0.0
        %1037 = vmatpush1.msra.mxu0 %v873
        %1038 = vmatprep.subr.mxu0 0.0
        %1039 = vmatpush1.msra.mxu0 %v875
        %1040 = vmatprep.subr.mxu0 0.0
        %1041 = vmatpush1.msra.mxu0 %v880
        %1042 = vmatprep.subr.mxu0 0.0
        %1043 = vmatpush1.msra.mxu0 %v882
        %1044 = vmatprep.subr.mxu0 0.0
        %1045 = vmatpush1.msra.mxu0 %v884
        %1046 = vmatprep.subr.mxu0 0.0
        %1047 = vmatpush1.msra.mxu0 %v889
        %1048 = vmatprep.subr.mxu0 0.0
        %1049 = vmatpush1.msra.mxu0 %v891
        %1050 = vmatprep.subr.mxu0 0.0
        %1051 = vmatpush1.msra.mxu0 %v893
        %1052 = vmatprep.subr.mxu0 0.0
        %1053 = vmatpush1.msra.mxu0 %v898
        %1054 = vmatprep.subr.mxu0 0.0
        %1055 = vmatpush1.msra.mxu0 %v900
        %1056 = vmatprep.subr.mxu0 0.0
        %1057 = vmatpush1.msra.mxu0 %v902
        %1058 = vmatprep.subr.mxu0 0.0
        %1059 = vmatpush1.msra.mxu0 %v907
        %1060 = vmatprep.subr.mxu0 0.0
        %1061 = vmatpush1.msra.mxu0 %v909
        %1062 = vmatprep.subr.mxu0 0.0
        %1063 = vmatpush1.msra.mxu0 %v911
        %1064 = vmatprep.subr.mxu0 0.0
        %1065 = vmatpush1.msra.mxu0 %v916
        %1066 = vmatprep.subr.mxu0 0.0
        %1067 = vmatpush1.msra.mxu0 %v918
        %1068 = vmatprep.subr.mxu0 0.0
        %1069 = vmatpush1.msra.mxu0 %v920
        %1070 = vmatprep.subr.mxu0 0.0
        %1071 = vmatpush1.msra.mxu0 %v925
        %1072 = vmatprep.subr.mxu0 0.0
        %1073 = vmatpush1.msra.mxu0 %v927
        %1074 = vmatprep.subr.mxu0 0.0
        %1075 = vmatpush1.msra.mxu0 %v929
        %1076 = vmatprep.subr.mxu0 0.0
        %1077 = vmatpush1.msra.mxu0 0.0
        %1078 = vmatprep.subr.mxu0 0.0
        %1079 = vmatpush1.msra.mxu0 0.0
        %1080 = vmatprep.subr.mxu0 0.0
        %1081 = vmatpush1.msra.mxu0 0.0
        %1082 = vmatprep.subr.mxu0 0.0
        %1083 = vmatpush1.msra.mxu0 0.0
        %1084 = vmatprep.subr.mxu0 0.0
        %1085 = vmatpush1.msra.mxu0 0.0
        %1086 = vmatprep.mubr.f32.mxu0 %v999
        %1087 = vmatmul.mubr.f32.gmra.mrb[0].mxu0 %v933
        %v1088 = vpop.f32.mrb[0].mxu0
        %v1089 = vadd.f32 %v960, %v1088
        %v1090 = vpop.f32.mrb[0].mxu0
        %1091 = vmatprep.mubr.f32.mxu0 %v1002
        %1092 = vmatmul.mubr.f32.gmra.mrb[0].mxu0 %v935
        %v1093 = vpop.f32.mrb[0].mxu0
        %v1094 = vadd.f32 %v965, %v1093
        %v1095 = vpop.f32.mrb[0].mxu0
        %1096 = vmatprep.mubr.f32.mxu0 %v1005
        %1097 = vmatmul.mubr.f32.gmra.mrb[0].mxu0 %v937
        %v1098 = vpop.f32.mrb[0].mxu0
        %v1099 = vadd.f32 %v970, %v1098
        %v1100 = vpop.f32.mrb[0].mxu0
        %1101 = vmatprep.mubr.f32.mxu0 %v1008
        %1102 = vmatmul.mubr.f32.gmra.mrb[0].mxu0 %v939
        %v1103 = vpop.f32.mrb[0].mxu0
        %v1104 = vadd.f32 %v975, %v1103
        %v1105 = vpop.f32.mrb[0].mxu0
        %1106 = vmatprep.mubr.f32.mxu0 %v1011
        %1107 = vmatmul.mubr.f32.gmra.mrb[0].mxu0 %v941
        %v1108 = vpop.f32.mrb[0].mxu0
        %v1109 = vadd.f32 %v980, %v1108
        %v1110 = vpop.f32.mrb[0].mxu0
        %1111 = vmatprep.mubr.f32.mxu0 %v1014
        %1112 = vmatmul.mubr.f32.gmra.mrb[0].mxu0 %v943
        %v1113 = vpop.f32.mrb[0].mxu0
        %v1114 = vadd.f32 %v985, %v1113
        %v1115 = vpop.f32.mrb[0].mxu0
        %1116 = vmatprep.mubr.f32.mxu0 %v1017
        %1117 = vmatmul.mubr.f32.gmra.mrb[0].mxu0 %v945
        %v1118 = vpop.f32.mrb[0].mxu0
        %v1119 = vadd.f32 %v990, %v1118
        %v1120 = vpop.f32.mrb[0].mxu0
        %1121 = vmatprep.mubr.f32.mxu0 %v1020
        %1122 = vmatmul.mubr.f32.gmra.mrb[0].mxu0 %v947
        %v1123 = vpop.f32.mrb[0].mxu0
        %v1124 = vadd.f32 %v995, %v1123
        %v1125 = vpop.f32.mrb[0].mxu0
        %1126 = vdwg.mxu0
        %v1127 = vld [vmem:[#allocation6] sm:$0xff]
        %v1128 = vld [vmem:[#allocation6 + $0x8] sm:$0xff]
        %v1129 = vld [vmem:[%s5] sm:$0xff]
        %v1130 = vld [vmem:[%s5 + $0x8] sm:$0xff]
        %v1131 = vld [vmem:[#allocation7] sm:$0xff]
        %v1132 = vld [vmem:[#allocation7 + $0x8] sm:$0xff]
        %v1133 = vld [vmem:[#allocation7 + $0x10] sm:$0xff]
        %v1134 = vmul.f32 %v1089, %v1089
        %v1135 = vmul.f32 %v1094, %v1094
        %1137 = vset.pattern.permute.xlu0 0
        %1138 = vperm.xlu0 %1137, %v1129
        %v1139 = vpop.permute.xlu0 %1138
        %1142 = vset.pattern.permute.xlu0 0
        %1143 = vperm.xlu0 %1142, %v1130
        %v1144 = vpop.permute.xlu0 %1143
        %v1147 = vsel %vm768, %v1127, 0
        %v1150 = vsel %vm768, %v1128, 0
        %1152 = vmatprep.subr.mxu0 0.0
        %1153 = vmatpush1.msra.mxu0 %v1134
        %1154 = vmatprep.subr.mxu0 0.0
        %1155 = vmatpush1.msra.mxu0 %v1135
        %1156 = vmatprep.subr.mxu0 0.0
        %1157 = vmatpush1.msra.mxu0 0.0
        %1158 = vmatprep.subr.mxu0 0.0
        %1159 = vmatpush1.msra.mxu0 0.0
        %1160 = vmatprep.subr.mxu0 0.0
        %1161 = vmatpush1.msra.mxu0 0.0
        %1162 = vmatprep.subr.mxu0 0.0
        %1163 = vmatpush1.msra.mxu0 0.0
        %1164 = vmatprep.subr.mxu0 0.0
        %1165 = vmatpush1.msra.mxu0 0.0
        %1166 = vmatprep.subr.mxu0 0.0
        %1167 = vmatpush1.msra.mxu0 0.0
        %1168 = vmatprep.subr.mxu0 0.0
        %1169 = vmatpush1.msra.mxu0 0.0
        %1170 = vmatprep.subr.mxu0 0.0
        %1171 = vmatpush1.msra.mxu0 0.0
        %1172 = vmatprep.subr.mxu0 0.0
        %1173 = vmatpush1.msra.mxu0 0.0
        %1174 = vmatprep.subr.mxu0 0.0
        %1175 = vmatpush1.msra.mxu0 0.0
        %1176 = vmatprep.subr.mxu0 0.0
        %1177 = vmatpush1.msra.mxu0 0.0
        %1178 = vmatprep.subr.mxu0 0.0
        %1179 = vmatpush1.msra.mxu0 0.0
        %1180 = vmatprep.subr.mxu0 0.0
        %1181 = vmatpush1.msra.mxu0 0.0
        %1182 = vmatprep.subr.mxu0 0.0
        %1183 = vmatpush1.msra.mxu0 0.0
        %1184 = vmatprep.subr.mxu0 0.0
        %1185 = vmatpush1.msra.mxu0 0.0
        %1186 = vmatprep.subr.mxu0 0.0
        %1187 = vmatpush1.msra.mxu0 0.0
        %1188 = vmatprep.subr.mxu0 0.0
        %1189 = vmatpush1.msra.mxu0 0.0
        %1190 = vmatprep.subr.mxu0 0.0
        %1191 = vmatpush1.msra.mxu0 0.0
        %1192 = vmatprep.subr.mxu0 0.0
        %1193 = vmatpush1.msra.mxu0 0.0
        %1194 = vmatprep.subr.mxu0 0.0
        %1195 = vmatpush1.msra.mxu0 0.0
        %1196 = vmatprep.subr.mxu0 0.0
        %1197 = vmatpush1.msra.mxu0 0.0
        %1198 = vmatprep.subr.mxu0 0.0
        %1199 = vmatpush1.msra.mxu0 0.0
        %1200 = vmatprep.subr.mxu0 0.0
        %1201 = vmatpush1.msra.mxu0 0.0
        %1202 = vmatprep.subr.mxu0 0.0
        %1203 = vmatpush1.msra.mxu0 0.0
        %1204 = vmatprep.subr.mxu0 0.0
        %1205 = vmatpush1.msra.mxu0 0.0
        %1206 = vmatprep.subr.mxu0 0.0
        %1207 = vmatpush1.msra.mxu0 0.0
        %1208 = vmatprep.subr.mxu0 0.0
        %1209 = vmatpush1.msra.mxu0 0.0
        %1210 = vmatprep.subr.mxu0 0.0
        %1211 = vmatpush1.msra.mxu0 0.0
        %1212 = vmatprep.subr.mxu0 0.0
        %1213 = vmatpush1.msra.mxu0 0.0
        %1214 = vmatprep.subr.mxu0 0.0
        %1215 = vmatpush1.msra.mxu0 0.0
        %1216 = vmatprep.mubr.f32.mxu0 0.0
        %1217 = vmatmul.mubr.f32.gmra.mrb[0].mxu0 %v1147
        %v1218 = vpop.f32.mrb[0].mxu0
        %v1219 = vadd.f32 %v1139, %v1218
        %v1220 = vpop.f32.mrb[0].mxu0
        %1221 = vmatprep.mubr.f32.mxu0 0.0
        %1222 = vmatmul.mubr.f32.gmra.mrb[0].mxu0 %v1150
        %v1223 = vpop.f32.mrb[0].mxu0
        %v1224 = vadd.f32 %v1144, %v1223
        %v1225 = vpop.f32.mrb[0].mxu0
        %1226 = vdwg.mxu0
        %v1227 = vrsqrt.pop %v1219
        %v1228 = vmul.f32 %v1219, %v1227
        %vm1229 = vcmp.eq.f32.partialorder %v1219, inf
        %v1230 = vsel %vm1229, %v1219, %v1228
        %vm1231 = vcmp.eq.f32.partialorder %v1219, 0.0
        %v1232 = vand.u32 %v1219, 2147483648
        %v1233 = vsel %vm1231, %v1232, %v1230
        %v1234 = vrsqrt.pop %v1224
        %v1235 = vmul.f32 %v1224, %v1234
        %vm1236 = vcmp.eq.f32.partialorder %v1224, inf
        %v1237 = vsel %vm1236, %v1224, %v1235
        %vm1238 = vcmp.eq.f32.partialorder %v1224, 0.0
        %v1239 = vand.u32 %v1224, 2147483648
        %v1240 = vsel %vm1238, %v1239, %v1237
        %v1241 = vmul.f32 %v1089, %v1233
        %v1242 = vmul.f32 %v1094, %v1240
        %v1243 = vmul.f32 %v1099, %v1099
        %v1244 = vmul.f32 %v1104, %v1104
        %1245 = vmatprep.subr.mxu0 0.0
        %1246 = vmatpush1.msra.mxu0 %v1243
        %1247 = vmatprep.subr.mxu0 0.0
        %1248 = vmatpush1.msra.mxu0 %v1244
        %1249 = vmatprep.subr.mxu0 0.0
        %1250 = vmatpush1.msra.mxu0 0.0
        %1251 = vmatprep.subr.mxu0 0.0
        %1252 = vmatpush1.msra.mxu0 0.0
        %1253 = vmatprep.subr.mxu0 0.0
        %1254 = vmatpush1.msra.mxu0 0.0
        %1255 = vmatprep.subr.mxu0 0.0
        %1256 = vmatpush1.msra.mxu0 0.0
        %1257 = vmatprep.subr.mxu0 0.0
        %1258 = vmatpush1.msra.mxu0 0.0
        %1259 = vmatprep.subr.mxu0 0.0
        %1260 = vmatpush1.msra.mxu0 0.0
        %1261 = vmatprep.subr.mxu0 0.0
        %1262 = vmatpush1.msra.mxu0 0.0
        %1263 = vmatprep.subr.mxu0 0.0
        %1264 = vmatpush1.msra.mxu0 0.0
        %1265 = vmatprep.subr.mxu0 0.0
        %1266 = vmatpush1.msra.mxu0 0.0
        %1267 = vmatprep.subr.mxu0 0.0
        %1268 = vmatpush1.msra.mxu0 0.0
        %1269 = vmatprep.subr.mxu0 0.0
        %1270 = vmatpush1.msra.mxu0 0.0
        %1271 = vmatprep.subr.mxu0 0.0
        %1272 = vmatpush1.msra.mxu0 0.0
        %1273 = vmatprep.subr.mxu0 0.0
        %1274 = vmatpush1.msra.mxu0 0.0
        %1275 = vmatprep.subr.mxu0 0.0
        %1276 = vmatpush1.msra.mxu0 0.0
        %1277 = vmatprep.subr.mxu0 0.0
        %1278 = vmatpush1.msra.mxu0 0.0
        %1279 = vmatprep.subr.mxu0 0.0
        %1280 = vmatpush1.msra.mxu0 0.0
        %1281 = vmatprep.subr.mxu0 0.0
        %1282 = vmatpush1.msra.mxu0 0.0
        %1283 = vmatprep.subr.mxu0 0.0
        %1284 = vmatpush1.msra.mxu0 0.0
        %1285 = vmatprep.subr.mxu0 0.0
        %1286 = vmatpush1.msra.mxu0 0.0
        %1287 = vmatprep.subr.mxu0 0.0
        %1288 = vmatpush1.msra.mxu0 0.0
        %1289 = vmatprep.subr.mxu0 0.0
        %1290 = vmatpush1.msra.mxu0 0.0
        %1291 = vmatprep.subr.mxu0 0.0
        %1292 = vmatpush1.msra.mxu0 0.0
        %1293 = vmatprep.subr.mxu0 0.0
        %1294 = vmatpush1.msra.mxu0 0.0
        %1295 = vmatprep.subr.mxu0 0.0
        %1296 = vmatpush1.msra.mxu0 0.0
        %1297 = vmatprep.subr.mxu0 0.0
        %1298 = vmatpush1.msra.mxu0 0.0
        %1299 = vmatprep.subr.mxu0 0.0
        %1300 = vmatpush1.msra.mxu0 0.0
        %1301 = vmatprep.subr.mxu0 0.0
        %1302 = vmatpush1.msra.mxu0 0.0
        %1303 = vmatprep.subr.mxu0 0.0
        %1304 = vmatpush1.msra.mxu0 0.0
        %1305 = vmatprep.subr.mxu0 0.0
        %1306 = vmatpush1.msra.mxu0 0.0
        %1307 = vmatprep.subr.mxu0 0.0
        %1308 = vmatpush1.msra.mxu0 0.0
        %1309 = vmatprep.mubr.f32.mxu0 0.0
        %1310 = vmatmul.mubr.f32.gmra.mrb[0].mxu0 %v1147
        %v1311 = vpop.f32.mrb[0].mxu0
        %v1312 = vadd.f32 %v1139, %v1311
        %v1313 = vpop.f32.mrb[0].mxu0
        %1314 = vmatprep.mubr.f32.mxu0 0.0
        %1315 = vmatmul.mubr.f32.gmra.mrb[0].mxu0 %v1150
        %v1316 = vpop.f32.mrb[0].mxu0
        %v1317 = vadd.f32 %v1144, %v1316
        %v1318 = vpop.f32.mrb[0].mxu0
        %1319 = vdwg.mxu0
        %v1320 = vrsqrt.pop %v1312
        %v1321 = vmul.f32 %v1312, %v1320
        %vm1322 = vcmp.eq.f32.partialorder %v1312, inf
        %v1323 = vsel %vm1322, %v1312, %v1321
        %vm1324 = vcmp.eq.f32.partialorder %v1312, 0.0
        %v1325 = vand.u32 %v1312, 2147483648
        %v1326 = vsel %vm1324, %v1325, %v1323
        %v1327 = vrsqrt.pop %v1317
        %v1328 = vmul.f32 %v1317, %v1327
        %vm1329 = vcmp.eq.f32.partialorder %v1317, inf
        %v1330 = vsel %vm1329, %v1317, %v1328
        %vm1331 = vcmp.eq.f32.partialorder %v1317, 0.0
        %v1332 = vand.u32 %v1317, 2147483648
        %v1333 = vsel %vm1331, %v1332, %v1330
        %v1334 = vmul.f32 %v1099, %v1326
        %v1335 = vmul.f32 %v1104, %v1333
        %vm1336 = vcmask 195584
        %v1338 = vsel %vm1336, %v1334, 0
        %v1341 = vsel %vm1336, %v1335, 0
        %1343 = vmatprep.subr.mxu0 0.0
        %1344 = vmatpush1.msra.mxu0 %v1131
        %1345 = vmatprep.subr.mxu0 0.0
        %1346 = vmatpush1.msra.mxu0 %v1132
        %1347 = vmatprep.subr.mxu0 0.0
        %1348 = vmatpush1.msra.mxu0 %v1133
        %1349 = vmatprep.subr.mxu0 0.0
        %1350 = vmatpush1.msra.mxu0 0.0
        %1351 = vmatprep.subr.mxu0 0.0
        %1352 = vmatpush1.msra.mxu0 0.0
        %1353 = vmatprep.subr.mxu0 0.0
        %1354 = vmatpush1.msra.mxu0 0.0
        %1355 = vmatprep.subr.mxu0 0.0
        %1356 = vmatpush1.msra.mxu0 0.0
        %1357 = vmatprep.subr.mxu0 0.0
        %1358 = vmatpush1.msra.mxu0 0.0
        %1359 = vmatprep.subr.mxu0 0.0
        %1360 = vmatpush1.msra.mxu0 0.0
        %1361 = vmatprep.subr.mxu0 0.0
        %1362 = vmatpush1.msra.mxu0 0.0
        %1363 = vmatprep.subr.mxu0 0.0
        %1364 = vmatpush1.msra.mxu0 0.0
        %1365 = vmatprep.subr.mxu0 0.0
        %1366 = vmatpush1.msra.mxu0 0.0
        %1367 = vmatprep.subr.mxu0 0.0
        %1368 = vmatpush1.msra.mxu0 0.0
        %1369 = vmatprep.subr.mxu0 0.0
        %1370 = vmatpush1.msra.mxu0 0.0
        %1371 = vmatprep.subr.mxu0 0.0
        %1372 = vmatpush1.msra.mxu0 0.0
        %1373 = vmatprep.subr.mxu0 0.0
        %1374 = vmatpush1.msra.mxu0 0.0
        %1375 = vmatprep.subr.mxu0 0.0
        %1376 = vmatpush1.msra.mxu0 0.0
        %1377 = vmatprep.subr.mxu0 0.0
        %1378 = vmatpush1.msra.mxu0 0.0
        %1379 = vmatprep.subr.mxu0 0.0
        %1380 = vmatpush1.msra.mxu0 0.0
        %1381 = vmatprep.subr.mxu0 0.0
        %1382 = vmatpush1.msra.mxu0 0.0
        %1383 = vmatprep.subr.mxu0 0.0
        %1384 = vmatpush1.msra.mxu0 0.0
        %1385 = vmatprep.subr.mxu0 0.0
        %1386 = vmatpush1.msra.mxu0 0.0
        %1387 = vmatprep.subr.mxu0 0.0
        %1388 = vmatpush1.msra.mxu0 0.0
        %1389 = vmatprep.subr.mxu0 0.0
        %1390 = vmatpush1.msra.mxu0 0.0
        %1391 = vmatprep.subr.mxu0 0.0
        %1392 = vmatpush1.msra.mxu0 0.0
        %1393 = vmatprep.subr.mxu0 0.0
        %1394 = vmatpush1.msra.mxu0 0.0
        %1395 = vmatprep.subr.mxu0 0.0
        %1396 = vmatpush1.msra.mxu0 0.0
        %1397 = vmatprep.subr.mxu0 0.0
        %1398 = vmatpush1.msra.mxu0 0.0
        %1399 = vmatprep.subr.mxu0 0.0
        %1400 = vmatpush1.msra.mxu0 0.0
        %1401 = vmatprep.subr.mxu0 0.0
        %1402 = vmatpush1.msra.mxu0 0.0
        %1403 = vmatprep.subr.mxu0 0.0
        %1404 = vmatpush1.msra.mxu0 0.0
        %1405 = vmatprep.subr.mxu0 0.0
        %1406 = vmatpush1.msra.mxu0 0.0
        %1407 = vmatprep.mubr.f32.mxu0 0.0
        %1408 = vmatmul.mubr.f32.gmra.mrb[0].mxu0 %v1338
        %v1409 = vpop.f32.mrb[0].mxu0
        %v1410 = vadd.f32 0.0, %v1409
        %v1411 = vpop.f32.mrb[0].mxu0
        %1412 = vmatprep.mubr.f32.mxu0 0.0
        %1413 = vmatmul.mubr.f32.gmra.mrb[0].mxu0 %v1341
        %v1414 = vpop.f32.mrb[0].mxu0
        %v1415 = vadd.f32 0.0, %v1414
        %v1416 = vpop.f32.mrb[0].mxu0
        %1417 = vdwg.mxu0
        %1420 = vrot.lane.b32.xlu0 %v1410, 1
        %v1421 = vpop.permute.xlu0 %1420
        %1422 = vrot.lane.b32.xlu0 %v1415, 1
        %v1423 = vpop.permute.xlu0 %1422
        %vm1426 = vcmask 7168
        %v1427 = vsel %vm1426, 0.0, %v1421
        %v1428 = vsel %vm1426, 0.0, %v1423
        %v1430 = vsel %vm1336, %v1241, 0
        %v1433 = vsel %vm1336, %v1242, 0
        %1435 = vmatprep.subr.mxu0 0.0
        %1436 = vmatpush1.msra.mxu0 %v1131
        %1437 = vmatprep.subr.mxu0 0.0
        %1438 = vmatpush1.msra.mxu0 %v1132
        %1439 = vmatprep.subr.mxu0 0.0
        %1440 = vmatpush1.msra.mxu0 %v1133
        %1441 = vmatprep.subr.mxu0 0.0
        %1442 = vmatpush1.msra.mxu0 0.0
        %1443 = vmatprep.subr.mxu0 0.0
        %1444 = vmatpush1.msra.mxu0 0.0
        %1445 = vmatprep.subr.mxu0 0.0
        %1446 = vmatpush1.msra.mxu0 0.0
        %1447 = vmatprep.subr.mxu0 0.0
        %1448 = vmatpush1.msra.mxu0 0.0
        %1449 = vmatprep.subr.mxu0 0.0
        %1450 = vmatpush1.msra.mxu0 0.0
        %1451 = vmatprep.subr.mxu0 0.0
        %1452 = vmatpush1.msra.mxu0 0.0
        %1453 = vmatprep.subr.mxu0 0.0
        %1454 = vmatpush1.msra.mxu0 0.0
        %1455 = vmatprep.subr.mxu0 0.0
        %1456 = vmatpush1.msra.mxu0 0.0
        %1457 = vmatprep.subr.mxu0 0.0
        %1458 = vmatpush1.msra.mxu0 0.0
        %1459 = vmatprep.subr.mxu0 0.0
        %1460 = vmatpush1.msra.mxu0 0.0
        %1461 = vmatprep.subr.mxu0 0.0
        %1462 = vmatpush1.msra.mxu0 0.0
        %1463 = vmatprep.subr.mxu0 0.0
        %1464 = vmatpush1.msra.mxu0 0.0
        %1465 = vmatprep.subr.mxu0 0.0
        %1466 = vmatpush1.msra.mxu0 0.0
        %1467 = vmatprep.subr.mxu0 0.0
        %1468 = vmatpush1.msra.mxu0 0.0
        %1469 = vmatprep.subr.mxu0 0.0
        %1470 = vmatpush1.msra.mxu0 0.0
        %1471 = vmatprep.subr.mxu0 0.0
        %1472 = vmatpush1.msra.mxu0 0.0
        %1473 = vmatprep.subr.mxu0 0.0
        %1474 = vmatpush1.msra.mxu0 0.0
        %1475 = vmatprep.subr.mxu0 0.0
        %1476 = vmatpush1.msra.mxu0 0.0
        %1477 = vmatprep.subr.mxu0 0.0
        %1478 = vmatpush1.msra.mxu0 0.0
        %1479 = vmatprep.subr.mxu0 0.0
        %1480 = vmatpush1.msra.mxu0 0.0
        %1481 = vmatprep.subr.mxu0 0.0
        %1482 = vmatpush1.msra.mxu0 0.0
        %1483 = vmatprep.subr.mxu0 0.0
        %1484 = vmatpush1.msra.mxu0 0.0
        %1485 = vmatprep.subr.mxu0 0.0
        %1486 = vmatpush1.msra.mxu0 0.0
        %1487 = vmatprep.subr.mxu0 0.0
        %1488 = vmatpush1.msra.mxu0 0.0
        %1489 = vmatprep.subr.mxu0 0.0
        %1490 = vmatpush1.msra.mxu0 0.0
        %1491 = vmatprep.subr.mxu0 0.0
        %1492 = vmatpush1.msra.mxu0 0.0
        %1493 = vmatprep.subr.mxu0 0.0
        %1494 = vmatpush1.msra.mxu0 0.0
        %1495 = vmatprep.subr.mxu0 0.0
        %1496 = vmatpush1.msra.mxu0 0.0
        %1497 = vmatprep.subr.mxu0 0.0
        %1498 = vmatpush1.msra.mxu0 0.0
        %1499 = vmatprep.mubr.f32.mxu0 0.0
        %1500 = vmatmul.mubr.f32.gmra.mrb[0].mxu0 %v1430
        %v1501 = vpop.f32.mrb[0].mxu0
        %v1502 = vadd.f32 %v1427, %v1501
        %v1503 = vpop.f32.mrb[0].mxu0
        %1504 = vmatprep.mubr.f32.mxu0 0.0
        %1505 = vmatmul.mubr.f32.gmra.mrb[0].mxu0 %v1433
        %v1506 = vpop.f32.mrb[0].mxu0
        %v1507 = vadd.f32 %v1428, %v1506
        %v1508 = vpop.f32.mrb[0].mxu0
        %1509 = vdwg.mxu0
        %v1510 = vmul.f32 %v1109, %v1109
        %v1511 = vmul.f32 %v1114, %v1114
        %1512 = vmatprep.subr.mxu0 0.0
        %1513 = vmatpush1.msra.mxu0 %v1510
        %1514 = vmatprep.subr.mxu0 0.0
        %1515 = vmatpush1.msra.mxu0 %v1511
        %1516 = vmatprep.subr.mxu0 0.0
        %1517 = vmatpush1.msra.mxu0 0.0
        %1518 = vmatprep.subr.mxu0 0.0
        %1519 = vmatpush1.msra.mxu0 0.0
        %1520 = vmatprep.subr.mxu0 0.0
        %1521 = vmatpush1.msra.mxu0 0.0
        %1522 = vmatprep.subr.mxu0 0.0
        %1523 = vmatpush1.msra.mxu0 0.0
        %1524 = vmatprep.subr.mxu0 0.0
        %1525 = vmatpush1.msra.mxu0 0.0
        %1526 = vmatprep.subr.mxu0 0.0
        %1527 = vmatpush1.msra.mxu0 0.0
        %1528 = vmatprep.subr.mxu0 0.0
        %1529 = vmatpush1.msra.mxu0 0.0
        %1530 = vmatprep.subr.mxu0 0.0
        %1531 = vmatpush1.msra.mxu0 0.0
        %1532 = vmatprep.subr.mxu0 0.0
        %1533 = vmatpush1.msra.mxu0 0.0
        %1534 = vmatprep.subr.mxu0 0.0
        %1535 = vmatpush1.msra.mxu0 0.0
        %1536 = vmatprep.subr.mxu0 0.0
        %1537 = vmatpush1.msra.mxu0 0.0
        %1538 = vmatprep.subr.mxu0 0.0
        %1539 = vmatpush1.msra.mxu0 0.0
        %1540 = vmatprep.subr.mxu0 0.0
        %1541 = vmatpush1.msra.mxu0 0.0
        %1542 = vmatprep.subr.mxu0 0.0
        %1543 = vmatpush1.msra.mxu0 0.0
        %1544 = vmatprep.subr.mxu0 0.0
        %1545 = vmatpush1.msra.mxu0 0.0
        %1546 = vmatprep.subr.mxu0 0.0
        %1547 = vmatpush1.msra.mxu0 0.0
        %1548 = vmatprep.subr.mxu0 0.0
        %1549 = vmatpush1.msra.mxu0 0.0
        %1550 = vmatprep.subr.mxu0 0.0
        %1551 = vmatpush1.msra.mxu0 0.0
        %1552 = vmatprep.subr.mxu0 0.0
        %1553 = vmatpush1.msra.mxu0 0.0
        %1554 = vmatprep.subr.mxu0 0.0
        %1555 = vmatpush1.msra.mxu0 0.0
        %1556 = vmatprep.subr.mxu0 0.0
        %1557 = vmatpush1.msra.mxu0 0.0
        %1558 = vmatprep.subr.mxu0 0.0
        %1559 = vmatpush1.msra.mxu0 0.0
        %1560 = vmatprep.subr.mxu0 0.0
        %1561 = vmatpush1.msra.mxu0 0.0
        %1562 = vmatprep.subr.mxu0 0.0
        %1563 = vmatpush1.msra.mxu0 0.0
        %1564 = vmatprep.subr.mxu0 0.0
        %1565 = vmatpush1.msra.mxu0 0.0
        %1566 = vmatprep.subr.mxu0 0.0
        %1567 = vmatpush1.msra.mxu0 0.0
        %1568 = vmatprep.subr.mxu0 0.0
        %1569 = vmatpush1.msra.mxu0 0.0
        %1570 = vmatprep.subr.mxu0 0.0
        %1571 = vmatpush1.msra.mxu0 0.0
        %1572 = vmatprep.subr.mxu0 0.0
        %1573 = vmatpush1.msra.mxu0 0.0
        %1574 = vmatprep.subr.mxu0 0.0
        %1575 = vmatpush1.msra.mxu0 0.0
        %1576 = vmatprep.mubr.f32.mxu0 0.0
        %1577 = vmatmul.mubr.f32.gmra.mrb[0].mxu0 %v1147
        %v1578 = vpop.f32.mrb[0].mxu0
        %v1579 = vadd.f32 %v1139, %v1578
        %v1580 = vpop.f32.mrb[0].mxu0
        %1581 = vmatprep.mubr.f32.mxu0 0.0
        %1582 = vmatmul.mubr.f32.gmra.mrb[0].mxu0 %v1150
        %v1583 = vpop.f32.mrb[0].mxu0
        %v1584 = vadd.f32 %v1144, %v1583
        %v1585 = vpop.f32.mrb[0].mxu0
        %1586 = vdwg.mxu0
        %v1587 = vrsqrt.pop %v1579
        %v1588 = vmul.f32 %v1579, %v1587
        %vm1589 = vcmp.eq.f32.partialorder %v1579, inf
        %v1590 = vsel %vm1589, %v1579, %v1588
        %vm1591 = vcmp.eq.f32.partialorder %v1579, 0.0
        %v1592 = vand.u32 %v1579, 2147483648
        %v1593 = vsel %vm1591, %v1592, %v1590
        %v1594 = vrsqrt.pop %v1584
        %v1595 = vmul.f32 %v1584, %v1594
        %vm1596 = vcmp.eq.f32.partialorder %v1584, inf
        %v1597 = vsel %vm1596, %v1584, %v1595
        %vm1598 = vcmp.eq.f32.partialorder %v1584, 0.0
        %v1599 = vand.u32 %v1584, 2147483648
        %v1600 = vsel %vm1598, %v1599, %v1597
        %v1601 = vmul.f32 %v1109, %v1593
        %v1602 = vmul.f32 %v1114, %v1600
        %v1604 = vsel %vm1336, %v1601, 0
        %v1607 = vsel %vm1336, %v1602, 0
        %1609 = vmatprep.subr.mxu0 0.0
        %1610 = vmatpush1.msra.mxu0 %v1131
        %1611 = vmatprep.subr.mxu0 0.0
        %1612 = vmatpush1.msra.mxu0 %v1132
        %1613 = vmatprep.subr.mxu0 0.0
        %1614 = vmatpush1.msra.mxu0 %v1133
        %1615 = vmatprep.subr.mxu0 0.0
        %1616 = vmatpush1.msra.mxu0 0.0
        %1617 = vmatprep.subr.mxu0 0.0
        %1618 = vmatpush1.msra.mxu0 0.0
        %1619 = vmatprep.subr.mxu0 0.0
        %1620 = vmatpush1.msra.mxu0 0.0
        %1621 = vmatprep.subr.mxu0 0.0
        %1622 = vmatpush1.msra.mxu0 0.0
        %1623 = vmatprep.subr.mxu0 0.0
        %1624 = vmatpush1.msra.mxu0 0.0
        %1625 = vmatprep.subr.mxu0 0.0
        %1626 = vmatpush1.msra.mxu0 0.0
        %1627 = vmatprep.subr.mxu0 0.0
        %1628 = vmatpush1.msra.mxu0 0.0
        %1629 = vmatprep.subr.mxu0 0.0
        %1630 = vmatpush1.msra.mxu0 0.0
        %1631 = vmatprep.subr.mxu0 0.0
        %1632 = vmatpush1.msra.mxu0 0.0
        %1633 = vmatprep.subr.mxu0 0.0
        %1634 = vmatpush1.msra.mxu0 0.0
        %1635 = vmatprep.subr.mxu0 0.0
        %1636 = vmatpush1.msra.mxu0 0.0
        %1637 = vmatprep.subr.mxu0 0.0
        %1638 = vmatpush1.msra.mxu0 0.0
        %1639 = vmatprep.subr.mxu0 0.0
        %1640 = vmatpush1.msra.mxu0 0.0
        %1641 = vmatprep.subr.mxu0 0.0
        %1642 = vmatpush1.msra.mxu0 0.0
        %1643 = vmatprep.subr.mxu0 0.0
        %1644 = vmatpush1.msra.mxu0 0.0
        %1645 = vmatprep.subr.mxu0 0.0
        %1646 = vmatpush1.msra.mxu0 0.0
        %1647 = vmatprep.subr.mxu0 0.0
        %1648 = vmatpush1.msra.mxu0 0.0
        %1649 = vmatprep.subr.mxu0 0.0
        %1650 = vmatpush1.msra.mxu0 0.0
        %1651 = vmatprep.subr.mxu0 0.0
        %1652 = vmatpush1.msra.mxu0 0.0
        %1653 = vmatprep.subr.mxu0 0.0
        %1654 = vmatpush1.msra.mxu0 0.0
        %1655 = vmatprep.subr.mxu0 0.0
        %1656 = vmatpush1.msra.mxu0 0.0
        %1657 = vmatprep.subr.mxu0 0.0
        %1658 = vmatpush1.msra.mxu0 0.0
        %1659 = vmatprep.subr.mxu0 0.0
        %1660 = vmatpush1.msra.mxu0 0.0
        %1661 = vmatprep.subr.mxu0 0.0
        %1662 = vmatpush1.msra.mxu0 0.0
        %1663 = vmatprep.subr.mxu0 0.0
        %1664 = vmatpush1.msra.mxu0 0.0
        %1665 = vmatprep.subr.mxu0 0.0
        %1666 = vmatpush1.msra.mxu0 0.0
        %1667 = vmatprep.subr.mxu0 0.0
        %1668 = vmatpush1.msra.mxu0 0.0
        %1669 = vmatprep.subr.mxu0 0.0
        %1670 = vmatpush1.msra.mxu0 0.0
        %1671 = vmatprep.subr.mxu0 0.0
        %1672 = vmatpush1.msra.mxu0 0.0
        %1673 = vmatprep.mubr.f32.mxu0 0.0
        %1674 = vmatmul.mubr.f32.gmra.mrb[0].mxu0 %v1604
        %v1675 = vpop.f32.mrb[0].mxu0
        %v1676 = vadd.f32 0.0, %v1675
        %v1677 = vpop.f32.mrb[0].mxu0
        %1678 = vmatprep.mubr.f32.mxu0 0.0
        %1679 = vmatmul.mubr.f32.gmra.mrb[0].mxu0 %v1607
        %v1680 = vpop.f32.mrb[0].mxu0
        %v1681 = vadd.f32 0.0, %v1680
        %v1682 = vpop.f32.mrb[0].mxu0
        %1683 = vdwg.mxu0
        %1686 = vrot.lane.b32.xlu0 %v1676, 10
        %v1687 = vpop.permute.xlu0 %1686
        %1688 = vrot.lane.b32.xlu0 %v1681, 10
        %v1689 = vpop.permute.xlu0 %1688
        %vm1692 = vcmask 80896
        %v1693 = vsel %vm1692, 0.0, %v1687
        %v1694 = vsel %vm1692, 0.0, %v1689
        %v1695 = vadd.f32 %v1502, %v1693
        %v1696 = vadd.f32 %v1507, %v1694
        %v1697 = vmul.f32 %v1119, %v1119
        %v1698 = vmul.f32 %v1124, %v1124
        %1699 = vmatprep.subr.mxu0 0.0
        %1700 = vmatpush1.msra.mxu0 %v1697
        %1701 = vmatprep.subr.mxu0 0.0
        %1702 = vmatpush1.msra.mxu0 %v1698
        %1703 = vmatprep.subr.mxu0 0.0
        %1704 = vmatpush1.msra.mxu0 0.0
        %1705 = vmatprep.subr.mxu0 0.0
        %1706 = vmatpush1.msra.mxu0 0.0
        %1707 = vmatprep.subr.mxu0 0.0
        %1708 = vmatpush1.msra.mxu0 0.0
        %1709 = vmatprep.subr.mxu0 0.0
        %1710 = vmatpush1.msra.mxu0 0.0
        %1711 = vmatprep.subr.mxu0 0.0
        %1712 = vmatpush1.msra.mxu0 0.0
        %1713 = vmatprep.subr.mxu0 0.0
        %1714 = vmatpush1.msra.mxu0 0.0
        %1715 = vmatprep.subr.mxu0 0.0
        %1716 = vmatpush1.msra.mxu0 0.0
        %1717 = vmatprep.subr.mxu0 0.0
        %1718 = vmatpush1.msra.mxu0 0.0
        %1719 = vmatprep.subr.mxu0 0.0
        %1720 = vmatpush1.msra.mxu0 0.0
        %1721 = vmatprep.subr.mxu0 0.0
        %1722 = vmatpush1.msra.mxu0 0.0
        %1723 = vmatprep.subr.mxu0 0.0
        %1724 = vmatpush1.msra.mxu0 0.0
        %1725 = vmatprep.subr.mxu0 0.0
        %1726 = vmatpush1.msra.mxu0 0.0
        %1727 = vmatprep.subr.mxu0 0.0
        %1728 = vmatpush1.msra.mxu0 0.0
        %1729 = vmatprep.subr.mxu0 0.0
        %1730 = vmatpush1.msra.mxu0 0.0
        %1731 = vmatprep.subr.mxu0 0.0
        %1732 = vmatpush1.msra.mxu0 0.0
        %1733 = vmatprep.subr.mxu0 0.0
        %1734 = vmatpush1.msra.mxu0 0.0
        %1735 = vmatprep.subr.mxu0 0.0
        %1736 = vmatpush1.msra.mxu0 0.0
        %1737 = vmatprep.subr.mxu0 0.0
        %1738 = vmatpush1.msra.mxu0 0.0
        %1739 = vmatprep.subr.mxu0 0.0
        %1740 = vmatpush1.msra.mxu0 0.0
        %1741 = vmatprep.subr.mxu0 0.0
        %1742 = vmatpush1.msra.mxu0 0.0
        %1743 = vmatprep.subr.mxu0 0.0
        %1744 = vmatpush1.msra.mxu0 0.0
        %1745 = vmatprep.subr.mxu0 0.0
        %1746 = vmatpush1.msra.mxu0 0.0
        %1747 = vmatprep.subr.mxu0 0.0
        %1748 = vmatpush1.msra.mxu0 0.0
        %1749 = vmatprep.subr.mxu0 0.0
        %1750 = vmatpush1.msra.mxu0 0.0
        %1751 = vmatprep.subr.mxu0 0.0
        %1752 = vmatpush1.msra.mxu0 0.0
        %1753 = vmatprep.subr.mxu0 0.0
        %1754 = vmatpush1.msra.mxu0 0.0
        %1755 = vmatprep.subr.mxu0 0.0
        %1756 = vmatpush1.msra.mxu0 0.0
        %1757 = vmatprep.subr.mxu0 0.0
        %1758 = vmatpush1.msra.mxu0 0.0
        %1759 = vmatprep.subr.mxu0 0.0
        %1760 = vmatpush1.msra.mxu0 0.0
        %1761 = vmatprep.subr.mxu0 0.0
        %1762 = vmatpush1.msra.mxu0 0.0
        %1763 = vmatprep.mubr.f32.mxu0 0.0
        %1764 = vmatmul.mubr.f32.gmra.mrb[0].mxu0 %v1147
        %v1765 = vpop.f32.mrb[0].mxu0
        %v1766 = vadd.f32 %v1139, %v1765
        %v1767 = vpop.f32.mrb[0].mxu0
        %1768 = vmatprep.mubr.f32.mxu0 0.0
        %1769 = vmatmul.mubr.f32.gmra.mrb[0].mxu0 %v1150
        %v1770 = vpop.f32.mrb[0].mxu0
        %v1771 = vadd.f32 %v1144, %v1770
        %v1772 = vpop.f32.mrb[0].mxu0
        %1773 = vdwg.mxu0
        %v1774 = vrsqrt.pop %v1766
        %v1775 = vmul.f32 %v1766, %v1774
        %vm1776 = vcmp.eq.f32.partialorder %v1766, inf
        %v1777 = vsel %vm1776, %v1766, %v1775
        %vm1778 = vcmp.eq.f32.partialorder %v1766, 0.0
        %v1779 = vand.u32 %v1766, 2147483648
        %v1780 = vsel %vm1778, %v1779, %v1777
        %v1781 = vrsqrt.pop %v1771
        %v1782 = vmul.f32 %v1771, %v1781
        %vm1783 = vcmp.eq.f32.partialorder %v1771, inf
        %v1784 = vsel %vm1783, %v1771, %v1782
        %vm1785 = vcmp.eq.f32.partialorder %v1771, 0.0
        %v1786 = vand.u32 %v1771, 2147483648
        %v1787 = vsel %vm1785, %v1786, %v1784
        %v1788 = vmul.f32 %v1119, %v1780
        %v1789 = vmul.f32 %v1124, %v1787
        %v1791 = vsel %vm1336, %v1788, 0
        %v1794 = vsel %vm1336, %v1789, 0
        %1796 = vmatprep.subr.mxu0 0.0
        %1797 = vmatpush1.msra.mxu0 %v1131
        %1798 = vmatprep.subr.mxu0 0.0
        %1799 = vmatpush1.msra.mxu0 %v1132
        %1800 = vmatprep.subr.mxu0 0.0
        %1801 = vmatpush1.msra.mxu0 %v1133
        %1802 = vmatprep.subr.mxu0 0.0
        %1803 = vmatpush1.msra.mxu0 0.0
        %1804 = vmatprep.subr.mxu0 0.0
        %1805 = vmatpush1.msra.mxu0 0.0
        %1806 = vmatprep.subr.mxu0 0.0
        %1807 = vmatpush1.msra.mxu0 0.0
        %1808 = vmatprep.subr.mxu0 0.0
        %1809 = vmatpush1.msra.mxu0 0.0
        %1810 = vmatprep.subr.mxu0 0.0
        %1811 = vmatpush1.msra.mxu0 0.0
        %1812 = vmatprep.subr.mxu0 0.0
        %1813 = vmatpush1.msra.mxu0 0.0
        %1814 = vmatprep.subr.mxu0 0.0
        %1815 = vmatpush1.msra.mxu0 0.0
        %1816 = vmatprep.subr.mxu0 0.0
        %1817 = vmatpush1.msra.mxu0 0.0
        %1818 = vmatprep.subr.mxu0 0.0
        %1819 = vmatpush1.msra.mxu0 0.0
        %1820 = vmatprep.subr.mxu0 0.0
        %1821 = vmatpush1.msra.mxu0 0.0
        %1822 = vmatprep.subr.mxu0 0.0
        %1823 = vmatpush1.msra.mxu0 0.0
        %1824 = vmatprep.subr.mxu0 0.0
        %1825 = vmatpush1.msra.mxu0 0.0
        %1826 = vmatprep.subr.mxu0 0.0
        %1827 = vmatpush1.msra.mxu0 0.0
        %1828 = vmatprep.subr.mxu0 0.0
        %1829 = vmatpush1.msra.mxu0 0.0
        %1830 = vmatprep.subr.mxu0 0.0
        %1831 = vmatpush1.msra.mxu0 0.0
        %1832 = vmatprep.subr.mxu0 0.0
        %1833 = vmatpush1.msra.mxu0 0.0
        %1834 = vmatprep.subr.mxu0 0.0
        %1835 = vmatpush1.msra.mxu0 0.0
        %1836 = vmatprep.subr.mxu0 0.0
        %1837 = vmatpush1.msra.mxu0 0.0
        %1838 = vmatprep.subr.mxu0 0.0
        %1839 = vmatpush1.msra.mxu0 0.0
        %1840 = vmatprep.subr.mxu0 0.0
        %1841 = vmatpush1.msra.mxu0 0.0
        %1842 = vmatprep.subr.mxu0 0.0
        %1843 = vmatpush1.msra.mxu0 0.0
        %1844 = vmatprep.subr.mxu0 0.0
        %1845 = vmatpush1.msra.mxu0 0.0
        %1846 = vmatprep.subr.mxu0 0.0
        %1847 = vmatpush1.msra.mxu0 0.0
        %1848 = vmatprep.subr.mxu0 0.0
        %1849 = vmatpush1.msra.mxu0 0.0
        %1850 = vmatprep.subr.mxu0 0.0
        %1851 = vmatpush1.msra.mxu0 0.0
        %1852 = vmatprep.subr.mxu0 0.0
        %1853 = vmatpush1.msra.mxu0 0.0
        %1854 = vmatprep.subr.mxu0 0.0
        %1855 = vmatpush1.msra.mxu0 0.0
        %1856 = vmatprep.subr.mxu0 0.0
        %1857 = vmatpush1.msra.mxu0 0.0
        %1858 = vmatprep.subr.mxu0 0.0
        %1859 = vmatpush1.msra.mxu0 0.0
        %1860 = vmatprep.mubr.f32.mxu0 0.0
        %1861 = vmatmul.mubr.f32.gmra.mrb[0].mxu0 %v1791
        %v1862 = vpop.f32.mrb[0].mxu0
        %v1863 = vadd.f32 0.0, %v1862
        %v1864 = vpop.f32.mrb[0].mxu0
        %1865 = vmatprep.mubr.f32.mxu0 0.0
        %1866 = vmatmul.mubr.f32.gmra.mrb[0].mxu0 %v1794
        %v1867 = vpop.f32.mrb[0].mxu0
        %v1868 = vadd.f32 0.0, %v1867
        %v1869 = vpop.f32.mrb[0].mxu0
        %1870 = vdwg.mxu0
        %1873 = vrot.lane.b32.xlu0 %v1863, 11
        %v1874 = vpop.permute.xlu0 %1873
        %1875 = vrot.lane.b32.xlu0 %v1868, 11
        %v1876 = vpop.permute.xlu0 %1875
        %vm1879 = vcmask 89088
        %v1880 = vsel %vm1879, 0.0, %v1874
        %v1881 = vsel %vm1879, 0.0, %v1876
        %v1882 = vadd.f32 %v1695, %v1880
        %v1883 = vadd.f32 %v1696, %v1881
        %1886 = vrot.lane.b32.xlu0 %v1882, 127
        %v1887 = vpop.permute.xlu0 %1886
        %1888 = vrot.lane.b32.xlu0 %v1883, 127
        %v1889 = vpop.permute.xlu0 %1888
        %1892 = vrot.lane.b32.xlu0 %v1882, 126
        %v1893 = vpop.permute.xlu0 %1892
        %1894 = vrot.lane.b32.xlu0 %v1883, 126
        %v1895 = vpop.permute.xlu0 %1894
        %1898 = vrot.lane.b32.xlu0 %v1882, 118
        %v1899 = vpop.permute.xlu0 %1898
        %1900 = vrot.lane.b32.xlu0 %v1883, 118
        %v1901 = vpop.permute.xlu0 %1900
        %1904 = vrot.lane.b32.xlu0 %v1882, 117
        %v1905 = vpop.permute.xlu0 %1904
        %1906 = vrot.lane.b32.xlu0 %v1883, 117
        %v1907 = vpop.permute.xlu0 %1906
        %1910 = vrot.lane.b32.xlu0 %v1882, 116
        %v1911 = vpop.permute.xlu0 %1910
        %1912 = vrot.lane.b32.xlu0 %v1883, 116
        %v1913 = vpop.permute.xlu0 %1912
        %1916 = vrot.lane.b32.xlu0 %v1882, 108
        %v1917 = vpop.permute.xlu0 %1916
        %1918 = vrot.lane.b32.xlu0 %v1883, 108
        %v1919 = vpop.permute.xlu0 %1918
        %1922 = vrot.lane.b32.xlu0 %v1882, 107
        %v1923 = vpop.permute.xlu0 %1922
        %1924 = vrot.lane.b32.xlu0 %v1883, 107
        %v1925 = vpop.permute.xlu0 %1924
        %1928 = vrot.lane.b32.xlu0 %v1882, 106
        %v1929 = vpop.permute.xlu0 %1928
        %1930 = vrot.lane.b32.xlu0 %v1883, 106
        %v1931 = vpop.permute.xlu0 %1930
        %v1934 = vld [vmem:[#allocation9] sm:$0xff]
        %v1935 = vld [vmem:[#allocation9 + $0x8] sm:$0xff]
        %v1936 = vld [vmem:[#allocation9 + $0x10] sm:$0xff]
        %v1937 = vld [vmem:[#allocation9 + $0x18] sm:$0xff]
        %v1938 = vld [vmem:[#allocation9 + $0x20] sm:$0xff]
        %v1939 = vld [vmem:[#allocation9 + $0x28] sm:$0xff]
        %v1940 = vld [vmem:[#allocation9 + $0x30] sm:$0xff]
        %v1941 = vld [vmem:[#allocation9 + $0x38] sm:$0xff]
        %v1942 = vld [vmem:[#allocation9 + $0x40] sm:$0xff]
        %v1943 = vld [vmem:[#allocation9 + $0x48] sm:$0xff]
        %v1944 = vld [vmem:[#allocation9 + $0x50] sm:$0xff]
        %v1945 = vld [vmem:[#allocation9 + $0x58] sm:$0xff]
        %v1946 = vld [vmem:[#allocation9 + $0x60] sm:$0xff]
        %v1947 = vld [vmem:[#allocation9 + $0x68] sm:$0xff]
        %v1948 = vld [vmem:[#allocation9 + $0x70] sm:$0xff]
        %v1949 = vld [vmem:[#allocation9 + $0x78] sm:$0xff]
        %v1950 = vld [vmem:[%s8] sm:$0xff]
        %v1951 = vld [vmem:[%s8 + $0x8] sm:$0xff]
        %v1952 = vld [vmem:[%s8 + $0x10] sm:$0xff]
        %v1953 = vld [vmem:[%s8 + $0x18] sm:$0xff]
        %v1954 = vld [vmem:[%s8 + $0x20] sm:$0xff]
        %v1955 = vld [vmem:[%s8 + $0x28] sm:$0xff]
        %v1956 = vld [vmem:[%s8 + $0x30] sm:$0xff]
        %v1957 = vld [vmem:[%s8 + $0x38] sm:$0xff]
        %1959 = vset.pattern.permute.xlu0 0
        %1960 = vperm.xlu0 %1959, %v1950
        %v1961 = vpop.permute.xlu0 %1960
        %1964 = vset.pattern.permute.xlu0 0
        %1965 = vperm.xlu0 %1964, %v1951
        %v1966 = vpop.permute.xlu0 %1965
        %1969 = vset.pattern.permute.xlu0 0
        %1970 = vperm.xlu0 %1969, %v1952
        %v1971 = vpop.permute.xlu0 %1970
        %1974 = vset.pattern.permute.xlu0 0
        %1975 = vperm.xlu0 %1974, %v1953
        %v1976 = vpop.permute.xlu0 %1975
        %1979 = vset.pattern.permute.xlu0 0
        %1980 = vperm.xlu0 %1979, %v1954
        %v1981 = vpop.permute.xlu0 %1980
        %1984 = vset.pattern.permute.xlu0 0
        %1985 = vperm.xlu0 %1984, %v1955
        %v1986 = vpop.permute.xlu0 %1985
        %1989 = vset.pattern.permute.xlu0 0
        %1990 = vperm.xlu0 %1989, %v1956
        %v1991 = vpop.permute.xlu0 %1990
        %1994 = vset.pattern.permute.xlu0 0
        %1995 = vperm.xlu0 %1994, %v1957
        %v1996 = vpop.permute.xlu0 %1995
        %v1999 = vsel %vm768, %v1935, 0
        %v2002 = vsel %vm768, %v1937, 0
        %v2005 = vsel %vm768, %v1939, 0
        %v2008 = vsel %vm768, %v1941, 0
        %v2011 = vsel %vm768, %v1943, 0
        %v2014 = vsel %vm768, %v1945, 0
        %v2017 = vsel %vm768, %v1947, 0
        %v2020 = vsel %vm768, %v1949, 0
        %2022 = vmatprep.subr.mxu0 0.0
        %2023 = vmatpush1.msra.mxu0 %v1882
        %2024 = vmatprep.subr.mxu0 0.0
        %2025 = vmatpush1.msra.mxu0 %v1883
        %2026 = vmatprep.subr.mxu0 0.0
        %2027 = vmatpush1.msra.mxu0 %v1887
        %2028 = vmatprep.subr.mxu0 0.0
        %2029 = vmatpush1.msra.mxu0 %v1889
        %2030 = vmatprep.subr.mxu0 0.0
        %2031 = vmatpush1.msra.mxu0 %v1893
        %2032 = vmatprep.subr.mxu0 0.0
        %2033 = vmatpush1.msra.mxu0 %v1895
        %2034 = vmatprep.subr.mxu0 0.0
        %2035 = vmatpush1.msra.mxu0 %v1899
        %2036 = vmatprep.subr.mxu0 0.0
        %2037 = vmatpush1.msra.mxu0 %v1901
        %2038 = vmatprep.subr.mxu0 0.0
        %2039 = vmatpush1.msra.mxu0 %v1905
        %2040 = vmatprep.subr.mxu0 0.0
        %2041 = vmatpush1.msra.mxu0 %v1907
        %2042 = vmatprep.subr.mxu0 0.0
        %2043 = vmatpush1.msra.mxu0 %v1911
        %2044 = vmatprep.subr.mxu0 0.0
        %2045 = vmatpush1.msra.mxu0 %v1913
        %2046 = vmatprep.subr.mxu0 0.0
        %2047 = vmatpush1.msra.mxu0 %v1917
        %2048 = vmatprep.subr.mxu0 0.0
        %2049 = vmatpush1.msra.mxu0 %v1919
        %2050 = vmatprep.subr.mxu0 0.0
        %2051 = vmatpush1.msra.mxu0 %v1923
        %2052 = vmatprep.subr.mxu0 0.0
        %2053 = vmatpush1.msra.mxu0 %v1925
        %2054 = vmatprep.subr.mxu0 0.0
        %2055 = vmatpush1.msra.mxu0 %v1929
        %2056 = vmatprep.subr.mxu0 0.0
        %2057 = vmatpush1.msra.mxu0 %v1931
        %2058 = vmatprep.subr.mxu0 0.0
        %2059 = vmatpush1.msra.mxu0 0.0
        %2060 = vmatprep.subr.mxu0 0.0
        %2061 = vmatpush1.msra.mxu0 0.0
        %2062 = vmatprep.subr.mxu0 0.0
        %2063 = vmatpush1.msra.mxu0 0.0
        %2064 = vmatprep.subr.mxu0 0.0
        %2065 = vmatpush1.msra.mxu0 0.0
        %2066 = vmatprep.subr.mxu0 0.0
        %2067 = vmatpush1.msra.mxu0 0.0
        %2068 = vmatprep.subr.mxu0 0.0
        %2069 = vmatpush1.msra.mxu0 0.0
        %2070 = vmatprep.subr.mxu0 0.0
        %2071 = vmatpush1.msra.mxu0 0.0
        %2072 = vmatprep.subr.mxu0 0.0
        %2073 = vmatpush1.msra.mxu0 0.0
        %2074 = vmatprep.subr.mxu0 0.0
        %2075 = vmatpush1.msra.mxu0 0.0
        %2076 = vmatprep.subr.mxu0 0.0
        %2077 = vmatpush1.msra.mxu0 0.0
        %2078 = vmatprep.subr.mxu0 0.0
        %2079 = vmatpush1.msra.mxu0 0.0
        %2080 = vmatprep.subr.mxu0 0.0
        %2081 = vmatpush1.msra.mxu0 0.0
        %2082 = vmatprep.subr.mxu0 0.0
        %2083 = vmatpush1.msra.mxu0 0.0
        %2084 = vmatprep.subr.mxu0 0.0
        %2085 = vmatpush1.msra.mxu0 0.0
        %2086 = vmatprep.mubr.f32.mxu0 %v1999
        %2087 = vmatmul.mubr.f32.gmra.mrb[0].mxu0 %v1934
        %v2088 = vpop.f32.mrb[0].mxu0
        %v2089 = vadd.f32 %v1961, %v2088
        %v2090 = vpop.f32.mrb[0].mxu0
        %2091 = vmatprep.mubr.f32.mxu0 %v2002
        %2092 = vmatmul.mubr.f32.gmra.mrb[0].mxu0 %v1936
        %v2093 = vpop.f32.mrb[0].mxu0
        %v2094 = vadd.f32 %v1966, %v2093
        %v2095 = vpop.f32.mrb[0].mxu0
        %2096 = vmatprep.mubr.f32.mxu0 %v2005
        %2097 = vmatmul.mubr.f32.gmra.mrb[0].mxu0 %v1938
        %v2098 = vpop.f32.mrb[0].mxu0
        %v2099 = vadd.f32 %v1971, %v2098
        %v2100 = vpop.f32.mrb[0].mxu0
        %2101 = vmatprep.mubr.f32.mxu0 %v2008
        %2102 = vmatmul.mubr.f32.gmra.mrb[0].mxu0 %v1940
        %v2103 = vpop.f32.mrb[0].mxu0
        %v2104 = vadd.f32 %v1976, %v2103
        %v2105 = vpop.f32.mrb[0].mxu0
        %2106 = vmatprep.mubr.f32.mxu0 %v2011
        %2107 = vmatmul.mubr.f32.gmra.mrb[0].mxu0 %v1942
        %v2108 = vpop.f32.mrb[0].mxu0
        %v2109 = vadd.f32 %v1981, %v2108
        %v2110 = vpop.f32.mrb[0].mxu0
        %2111 = vmatprep.mubr.f32.mxu0 %v2014
        %2112 = vmatmul.mubr.f32.gmra.mrb[0].mxu0 %v1944
        %v2113 = vpop.f32.mrb[0].mxu0
        %v2114 = vadd.f32 %v1986, %v2113
        %v2115 = vpop.f32.mrb[0].mxu0
        %2116 = vmatprep.mubr.f32.mxu0 %v2017
        %2117 = vmatmul.mubr.f32.gmra.mrb[0].mxu0 %v1946
        %v2118 = vpop.f32.mrb[0].mxu0
        %v2119 = vadd.f32 %v1991, %v2118
        %v2120 = vpop.f32.mrb[0].mxu0
        %2121 = vmatprep.mubr.f32.mxu0 %v2020
        %2122 = vmatmul.mubr.f32.gmra.mrb[0].mxu0 %v1948
        %v2123 = vpop.f32.mrb[0].mxu0
        %v2124 = vadd.f32 %v1996, %v2123
        %v2125 = vpop.f32.mrb[0].mxu0
        %2126 = vdwg.mxu0
        %v2127 = vld [vmem:[#allocation10] sm:$0xff]
        %v2128 = vld [vmem:[#allocation10 + $0x8] sm:$0xff]
        %v2129 = vld [vmem:[%s10] sm:$0xff]
        %v2130 = vld [vmem:[%s10 + $0x8] sm:$0xff]
        %v2131 = vld [vmem:[#allocation12] sm:$0xff]
        %v2132 = vld [vmem:[#allocation12 + $0x8] sm:$0xff]
        %v2133 = vld [vmem:[#allocation12 + $0x10] sm:$0xff]
        %v2134 = vld [vmem:[#allocation12 + $0x18] sm:$0xff]
        %v2135 = vld [vmem:[#allocation12 + $0x20] sm:$0xff]
        %v2136 = vld [vmem:[#allocation12 + $0x28] sm:$0xff]
        %v2137 = vld [vmem:[#allocation12 + $0x30] sm:$0xff]
        %v2138 = vld [vmem:[#allocation12 + $0x38] sm:$0xff]
        %v2139 = vld [vmem:[#allocation12 + $0x40] sm:$0xff]
        %v2140 = vld [vmem:[#allocation12 + $0x48] sm:$0xff]
        %v2141 = vld [vmem:[#allocation12 + $0x50] sm:$0xff]
        %v2142 = vld [vmem:[#allocation12 + $0x58] sm:$0xff]
        %v2143 = vld [vmem:[#allocation12 + $0x60] sm:$0xff]
        %v2144 = vld [vmem:[#allocation12 + $0x68] sm:$0xff]
        %v2145 = vld [vmem:[#allocation12 + $0x70] sm:$0xff]
        %v2146 = vld [vmem:[#allocation12 + $0x78] sm:$0xff]
        %v2147 = vld [vmem:[#allocation12 + $0x80] sm:$0xff]
        %v2148 = vld [vmem:[#allocation12 + $0x88] sm:$0xff]
        %v2149 = vld [vmem:[#allocation12 + $0x90] sm:$0xff]
        %v2150 = vld [vmem:[#allocation12 + $0x98] sm:$0xff]
        %v2151 = vld [vmem:[#allocation12 + $0xa0] sm:$0xff]
        %v2152 = vld [vmem:[#allocation12 + $0xa8] sm:$0xff]
        %v2153 = vld [vmem:[#allocation12 + $0xb0] sm:$0xff]
        %v2154 = vld [vmem:[#allocation12 + $0xb8] sm:$0xff]
        %v2155 = vld [vmem:[#allocation12 + $0xc0] sm:$0xff]
        %v2156 = vld [vmem:[#allocation12 + $0xc8] sm:$0xff]
        %v2157 = vld [vmem:[#allocation12 + $0xd0] sm:$0xff]
        %v2158 = vld [vmem:[#allocation12 + $0xd8] sm:$0xff]
        %v2159 = vld [vmem:[#allocation12 + $0xe0] sm:$0xff]
        %v2160 = vld [vmem:[#allocation12 + $0xe8] sm:$0xff]
        %v2161 = vmul.f32 %v2089, %v2089
        %v2162 = vmul.f32 %v2094, %v2094
        %2164 = vset.pattern.permute.xlu0 0
        %2165 = vperm.xlu0 %2164, %v2129
        %v2166 = vpop.permute.xlu0 %2165
        %2169 = vset.pattern.permute.xlu0 0
        %2170 = vperm.xlu0 %2169, %v2130
        %v2171 = vpop.permute.xlu0 %2170
        %v2174 = vsel %vm768, %v2127, 0
        %v2177 = vsel %vm768, %v2128, 0
        %2179 = vmatprep.subr.mxu0 0.0
        %2180 = vmatpush1.msra.mxu0 %v2161
        %2181 = vmatprep.subr.mxu0 0.0
        %2182 = vmatpush1.msra.mxu0 %v2162
        %2183 = vmatprep.subr.mxu0 0.0
        %2184 = vmatpush1.msra.mxu0 0.0
        %2185 = vmatprep.subr.mxu0 0.0
        %2186 = vmatpush1.msra.mxu0 0.0
        %2187 = vmatprep.subr.mxu0 0.0
        %2188 = vmatpush1.msra.mxu0 0.0
        %2189 = vmatprep.subr.mxu0 0.0
        %2190 = vmatpush1.msra.mxu0 0.0
        %2191 = vmatprep.subr.mxu0 0.0
        %2192 = vmatpush1.msra.mxu0 0.0
        %2193 = vmatprep.subr.mxu0 0.0
        %2194 = vmatpush1.msra.mxu0 0.0
        %2195 = vmatprep.subr.mxu0 0.0
        %2196 = vmatpush1.msra.mxu0 0.0
        %2197 = vmatprep.subr.mxu0 0.0
        %2198 = vmatpush1.msra.mxu0 0.0
        %2199 = vmatprep.subr.mxu0 0.0
        %2200 = vmatpush1.msra.mxu0 0.0
        %2201 = vmatprep.subr.mxu0 0.0
        %2202 = vmatpush1.msra.mxu0 0.0
        %2203 = vmatprep.subr.mxu0 0.0
        %2204 = vmatpush1.msra.mxu0 0.0
        %2205 = vmatprep.subr.mxu0 0.0
        %2206 = vmatpush1.msra.mxu0 0.0
        %2207 = vmatprep.subr.mxu0 0.0
        %2208 = vmatpush1.msra.mxu0 0.0
        %2209 = vmatprep.subr.mxu0 0.0
        %2210 = vmatpush1.msra.mxu0 0.0
        %2211 = vmatprep.subr.mxu0 0.0
        %2212 = vmatpush1.msra.mxu0 0.0
        %2213 = vmatprep.subr.mxu0 0.0
        %2214 = vmatpush1.msra.mxu0 0.0
        %2215 = vmatprep.subr.mxu0 0.0
        %2216 = vmatpush1.msra.mxu0 0.0
        %2217 = vmatprep.subr.mxu0 0.0
        %2218 = vmatpush1.msra.mxu0 0.0
        %2219 = vmatprep.subr.mxu0 0.0
        %2220 = vmatpush1.msra.mxu0 0.0
        %2221 = vmatprep.subr.mxu0 0.0
        %2222 = vmatpush1.msra.mxu0 0.0
        %2223 = vmatprep.subr.mxu0 0.0
        %2224 = vmatpush1.msra.mxu0 0.0
        %2225 = vmatprep.subr.mxu0 0.0
        %2226 = vmatpush1.msra.mxu0 0.0
        %2227 = vmatprep.subr.mxu0 0.0
        %2228 = vmatpush1.msra.mxu0 0.0
        %2229 = vmatprep.subr.mxu0 0.0
        %2230 = vmatpush1.msra.mxu0 0.0
        %2231 = vmatprep.subr.mxu0 0.0
        %2232 = vmatpush1.msra.mxu0 0.0
        %2233 = vmatprep.subr.mxu0 0.0
        %2234 = vmatpush1.msra.mxu0 0.0
        %2235 = vmatprep.subr.mxu0 0.0
        %2236 = vmatpush1.msra.mxu0 0.0
        %2237 = vmatprep.subr.mxu0 0.0
        %2238 = vmatpush1.msra.mxu0 0.0
        %2239 = vmatprep.subr.mxu0 0.0
        %2240 = vmatpush1.msra.mxu0 0.0
        %2241 = vmatprep.subr.mxu0 0.0
        %2242 = vmatpush1.msra.mxu0 0.0
        %2243 = vmatprep.mubr.f32.mxu0 0.0
        %2244 = vmatmul.mubr.f32.gmra.mrb[0].mxu0 %v2174
        %v2245 = vpop.f32.mrb[0].mxu0
        %v2246 = vadd.f32 %v2166, %v2245
        %v2247 = vpop.f32.mrb[0].mxu0
        %2248 = vmatprep.mubr.f32.mxu0 0.0
        %2249 = vmatmul.mubr.f32.gmra.mrb[0].mxu0 %v2177
        %v2250 = vpop.f32.mrb[0].mxu0
        %v2251 = vadd.f32 %v2171, %v2250
        %v2252 = vpop.f32.mrb[0].mxu0
        %2253 = vdwg.mxu0
        %v2254 = vrsqrt.pop %v2246
        %v2255 = vmul.f32 %v2246, %v2254
        %vm2256 = vcmp.eq.f32.partialorder %v2246, inf
        %v2257 = vsel %vm2256, %v2246, %v2255
        %vm2258 = vcmp.eq.f32.partialorder %v2246, 0.0
        %v2259 = vand.u32 %v2246, 2147483648
        %v2260 = vsel %vm2258, %v2259, %v2257
        %v2261 = vrsqrt.pop %v2251
        %v2262 = vmul.f32 %v2251, %v2261
        %vm2263 = vcmp.eq.f32.partialorder %v2251, inf
        %v2264 = vsel %vm2263, %v2251, %v2262
        %vm2265 = vcmp.eq.f32.partialorder %v2251, 0.0
        %v2266 = vand.u32 %v2251, 2147483648
        %v2267 = vsel %vm2265, %v2266, %v2264
        %v2268 = vmul.f32 %v2089, %v2260
        %v2269 = vmul.f32 %v2094, %v2267
        %v2270 = vmul.f32 %v2099, %v2099
        %v2271 = vmul.f32 %v2104, %v2104
        %2272 = vmatprep.subr.mxu0 0.0
        %2273 = vmatpush1.msra.mxu0 %v2270
        %2274 = vmatprep.subr.mxu0 0.0
        %2275 = vmatpush1.msra.mxu0 %v2271
        %2276 = vmatprep.subr.mxu0 0.0
        %2277 = vmatpush1.msra.mxu0 0.0
        %2278 = vmatprep.subr.mxu0 0.0
        %2279 = vmatpush1.msra.mxu0 0.0
        %2280 = vmatprep.subr.mxu0 0.0
        %2281 = vmatpush1.msra.mxu0 0.0
        %2282 = vmatprep.subr.mxu0 0.0
        %2283 = vmatpush1.msra.mxu0 0.0
        %2284 = vmatprep.subr.mxu0 0.0
        %2285 = vmatpush1.msra.mxu0 0.0
        %2286 = vmatprep.subr.mxu0 0.0
        %2287 = vmatpush1.msra.mxu0 0.0
        %2288 = vmatprep.subr.mxu0 0.0
        %2289 = vmatpush1.msra.mxu0 0.0
        %2290 = vmatprep.subr.mxu0 0.0
        %2291 = vmatpush1.msra.mxu0 0.0
        %2292 = vmatprep.subr.mxu0 0.0
        %2293 = vmatpush1.msra.mxu0 0.0
        %2294 = vmatprep.subr.mxu0 0.0
        %2295 = vmatpush1.msra.mxu0 0.0
        %2296 = vmatprep.subr.mxu0 0.0
        %2297 = vmatpush1.msra.mxu0 0.0
        %2298 = vmatprep.subr.mxu0 0.0
        %2299 = vmatpush1.msra.mxu0 0.0
        %2300 = vmatprep.subr.mxu0 0.0
        %2301 = vmatpush1.msra.mxu0 0.0
        %2302 = vmatprep.subr.mxu0 0.0
        %2303 = vmatpush1.msra.mxu0 0.0
        %2304 = vmatprep.subr.mxu0 0.0
        %2305 = vmatpush1.msra.mxu0 0.0
        %2306 = vmatprep.subr.mxu0 0.0
        %2307 = vmatpush1.msra.mxu0 0.0
        %2308 = vmatprep.subr.mxu0 0.0
        %2309 = vmatpush1.msra.mxu0 0.0
        %2310 = vmatprep.subr.mxu0 0.0
        %2311 = vmatpush1.msra.mxu0 0.0
        %2312 = vmatprep.subr.mxu0 0.0
        %2313 = vmatpush1.msra.mxu0 0.0
        %2314 = vmatprep.subr.mxu0 0.0
        %2315 = vmatpush1.msra.mxu0 0.0
        %2316 = vmatprep.subr.mxu0 0.0
        %2317 = vmatpush1.msra.mxu0 0.0
        %2318 = vmatprep.subr.mxu0 0.0
        %2319 = vmatpush1.msra.mxu0 0.0
        %2320 = vmatprep.subr.mxu0 0.0
        %2321 = vmatpush1.msra.mxu0 0.0
        %2322 = vmatprep.subr.mxu0 0.0
        %2323 = vmatpush1.msra.mxu0 0.0
        %2324 = vmatprep.subr.mxu0 0.0
        %2325 = vmatpush1.msra.mxu0 0.0
        %2326 = vmatprep.subr.mxu0 0.0
        %2327 = vmatpush1.msra.mxu0 0.0
        %2328 = vmatprep.subr.mxu0 0.0
        %2329 = vmatpush1.msra.mxu0 0.0
        %2330 = vmatprep.subr.mxu0 0.0
        %2331 = vmatpush1.msra.mxu0 0.0
        %2332 = vmatprep.subr.mxu0 0.0
        %2333 = vmatpush1.msra.mxu0 0.0
        %2334 = vmatprep.subr.mxu0 0.0
        %2335 = vmatpush1.msra.mxu0 0.0
        %2336 = vmatprep.mubr.f32.mxu0 0.0
        %2337 = vmatmul.mubr.f32.gmra.mrb[0].mxu0 %v2174
        %v2338 = vpop.f32.mrb[0].mxu0
        %v2339 = vadd.f32 %v2166, %v2338
        %v2340 = vpop.f32.mrb[0].mxu0
        %2341 = vmatprep.mubr.f32.mxu0 0.0
        %2342 = vmatmul.mubr.f32.gmra.mrb[0].mxu0 %v2177
        %v2343 = vpop.f32.mrb[0].mxu0
        %v2344 = vadd.f32 %v2171, %v2343
        %v2345 = vpop.f32.mrb[0].mxu0
        %2346 = vdwg.mxu0
        %v2347 = vrsqrt.pop %v2339
        %v2348 = vmul.f32 %v2339, %v2347
        %vm2349 = vcmp.eq.f32.partialorder %v2339, inf
        %v2350 = vsel %vm2349, %v2339, %v2348
        %vm2351 = vcmp.eq.f32.partialorder %v2339, 0.0
        %v2352 = vand.u32 %v2339, 2147483648
        %v2353 = vsel %vm2351, %v2352, %v2350
        %v2354 = vrsqrt.pop %v2344
        %v2355 = vmul.f32 %v2344, %v2354
        %vm2356 = vcmp.eq.f32.partialorder %v2344, inf
        %v2357 = vsel %vm2356, %v2344, %v2355
        %vm2358 = vcmp.eq.f32.partialorder %v2344, 0.0
        %v2359 = vand.u32 %v2344, 2147483648
        %v2360 = vsel %vm2358, %v2359, %v2357
        %v2361 = vmul.f32 %v2099, %v2353
        %v2362 = vmul.f32 %v2104, %v2360
        %vm2363 = vcmask 654336
        %v2365 = vsel %vm2363, %v2361, 0
        %v2368 = vsel %vm2363, %v2362, 0
        %2370 = vmatprep.subr.mxu0 %v2132
        %2371 = vmatpush1.msra.mxu0 %v2131
        %2372 = vmatprep.subr.mxu0 %v2135
        %2373 = vmatpush1.msra.mxu0 %v2134
        %2374 = vmatprep.subr.mxu0 %v2138
        %2375 = vmatpush1.msra.mxu0 %v2137
        %2376 = vmatprep.subr.mxu0 %v2141
        %2377 = vmatpush1.msra.mxu0 %v2140
        %2378 = vmatprep.subr.mxu0 %v2144
        %2379 = vmatpush1.msra.mxu0 %v2143
        %2380 = vmatprep.subr.mxu0 %v2147
        %2381 = vmatpush1.msra.mxu0 %v2146
        %2382 = vmatprep.subr.mxu0 %v2150
        %2383 = vmatpush1.msra.mxu0 %v2149
        %2384 = vmatprep.subr.mxu0 %v2153
        %2385 = vmatpush1.msra.mxu0 %v2152
        %2386 = vmatprep.subr.mxu0 %v2156
        %2387 = vmatpush1.msra.mxu0 %v2155
        %2388 = vmatprep.subr.mxu0 %v2159
        %2389 = vmatpush1.msra.mxu0 %v2158
        %2390 = vmatprep.subr.mxu0 0.0
        %2391 = vmatpush1.msra.mxu0 0.0
        %2392 = vmatprep.subr.mxu0 0.0
        %2393 = vmatpush1.msra.mxu0 0.0
        %2394 = vmatprep.subr.mxu0 0.0
        %2395 = vmatpush1.msra.mxu0 0.0
        %2396 = vmatprep.subr.mxu0 0.0
        %2397 = vmatpush1.msra.mxu0 0.0
        %2398 = vmatprep.subr.mxu0 0.0
        %2399 = vmatpush1.msra.mxu0 0.0
        %2400 = vmatprep.subr.mxu0 0.0
        %2401 = vmatpush1.msra.mxu0 0.0
        %2402 = vmatprep.subr.mxu0 0.0
        %2403 = vmatpush1.msra.mxu0 0.0
        %2404 = vmatprep.subr.mxu0 0.0
        %2405 = vmatpush1.msra.mxu0 0.0
        %2406 = vmatprep.subr.mxu0 0.0
        %2407 = vmatpush1.msra.mxu0 0.0
        %2408 = vmatprep.subr.mxu0 0.0
        %2409 = vmatpush1.msra.mxu0 0.0
        %2410 = vmatprep.subr.mxu0 0.0
        %2411 = vmatpush1.msra.mxu0 0.0
        %2412 = vmatprep.subr.mxu0 0.0
        %2413 = vmatpush1.msra.mxu0 0.0
        %2414 = vmatprep.subr.mxu0 0.0
        %2415 = vmatpush1.msra.mxu0 0.0
        %2416 = vmatprep.subr.mxu0 0.0
        %2417 = vmatpush1.msra.mxu0 0.0
        %2418 = vmatprep.subr.mxu0 0.0
        %2419 = vmatpush1.msra.mxu0 0.0
        %2420 = vmatprep.subr.mxu0 0.0
        %2421 = vmatpush1.msra.mxu0 0.0
        %2422 = vmatprep.subr.mxu0 0.0
        %2423 = vmatpush1.msra.mxu0 0.0
        %2424 = vmatprep.subr.mxu0 0.0
        %2425 = vmatpush1.msra.mxu0 0.0
        %2426 = vmatprep.subr.mxu0 0.0
        %2427 = vmatpush1.msra.mxu0 0.0
        %2428 = vmatprep.subr.mxu0 0.0
        %2429 = vmatpush1.msra.mxu0 0.0
        %2430 = vmatprep.subr.mxu0 0.0
        %2431 = vmatpush1.msra.mxu0 0.0
        %2432 = vmatprep.subr.mxu0 0.0
        %2433 = vmatpush1.msra.mxu0 0.0
        %2434 = vmatprep.mubr.f32.mxu0 0.0
        %2435 = vmatmul.mubr.f32.gmra.mrb[0].mxu0 %v2365
        %v2436 = vpop.f32.mrb[0].mxu0
        %v2437 = vadd.f32 0.0, %v2436
        %v2438 = vpop.f32.mrb[0].mxu0
        %v2439 = vadd.f32 0.0, %v2438
        %2440 = vmatprep.mubr.f32.mxu0 0.0
        %2441 = vmatmul.mubr.f32.gmra.mrb[0].mxu0 %v2368
        %v2442 = vpop.f32.mrb[0].mxu0
        %v2443 = vadd.f32 0.0, %v2442
        %v2444 = vpop.f32.mrb[0].mxu0
        %v2445 = vadd.f32 0.0, %v2444
        %2446 = vdwg.mxu0
        %2447 = vmatprep.subr.mxu0 0.0
        %2448 = vmatpush1.msra.mxu0 %v2133
        %2449 = vmatprep.subr.mxu0 0.0
        %2450 = vmatpush1.msra.mxu0 %v2136
        %2451 = vmatprep.subr.mxu0 0.0
        %2452 = vmatpush1.msra.mxu0 %v2139
        %2453 = vmatprep.subr.mxu0 0.0
        %2454 = vmatpush1.msra.mxu0 %v2142
        %2455 = vmatprep.subr.mxu0 0.0
        %2456 = vmatpush1.msra.mxu0 %v2145
        %2457 = vmatprep.subr.mxu0 0.0
        %2458 = vmatpush1.msra.mxu0 %v2148
        %2459 = vmatprep.subr.mxu0 0.0
        %2460 = vmatpush1.msra.mxu0 %v2151
        %2461 = vmatprep.subr.mxu0 0.0
        %2462 = vmatpush1.msra.mxu0 %v2154
        %2463 = vmatprep.subr.mxu0 0.0
        %2464 = vmatpush1.msra.mxu0 %v2157
        %2465 = vmatprep.subr.mxu0 0.0
        %2466 = vmatpush1.msra.mxu0 %v2160
        %2467 = vmatprep.subr.mxu0 0.0
        %2468 = vmatpush1.msra.mxu0 0.0
        %2469 = vmatprep.subr.mxu0 0.0
        %2470 = vmatpush1.msra.mxu0 0.0
        %2471 = vmatprep.subr.mxu0 0.0
        %2472 = vmatpush1.msra.mxu0 0.0
        %2473 = vmatprep.subr.mxu0 0.0
        %2474 = vmatpush1.msra.mxu0 0.0
        %2475 = vmatprep.subr.mxu0 0.0
        %2476 = vmatpush1.msra.mxu0 0.0
        %2477 = vmatprep.subr.mxu0 0.0
        %2478 = vmatpush1.msra.mxu0 0.0
        %2479 = vmatprep.subr.mxu0 0.0
        %2480 = vmatpush1.msra.mxu0 0.0
        %2481 = vmatprep.subr.mxu0 0.0
        %2482 = vmatpush1.msra.mxu0 0.0
        %2483 = vmatprep.subr.mxu0 0.0
        %2484 = vmatpush1.msra.mxu0 0.0
        %2485 = vmatprep.subr.mxu0 0.0
        %2486 = vmatpush1.msra.mxu0 0.0
        %2487 = vmatprep.subr.mxu0 0.0
        %2488 = vmatpush1.msra.mxu0 0.0
        %2489 = vmatprep.subr.mxu0 0.0
        %2490 = vmatpush1.msra.mxu0 0.0
        %2491 = vmatprep.subr.mxu0 0.0
        %2492 = vmatpush1.msra.mxu0 0.0
        %2493 = vmatprep.subr.mxu0 0.0
        %2494 = vmatpush1.msra.mxu0 0.0
        %2495 = vmatprep.subr.mxu0 0.0
        %2496 = vmatpush1.msra.mxu0 0.0
        %2497 = vmatprep.subr.mxu0 0.0
        %2498 = vmatpush1.msra.mxu0 0.0
        %2499 = vmatprep.subr.mxu0 0.0
        %2500 = vmatpush1.msra.mxu0 0.0
        %2501 = vmatprep.subr.mxu0 0.0
        %2502 = vmatpush1.msra.mxu0 0.0
        %2503 = vmatprep.subr.mxu0 0.0
        %2504 = vmatpush1.msra.mxu0 0.0
        %2505 = vmatprep.subr.mxu0 0.0
        %2506 = vmatpush1.msra.mxu0 0.0
        %2507 = vmatprep.subr.mxu0 0.0
        %2508 = vmatpush1.msra.mxu0 0.0
        %2509 = vmatprep.subr.mxu0 0.0
        %2510 = vmatpush1.msra.mxu0 0.0
        %2511 = vmatprep.mubr.f32.mxu0 0.0
        %2512 = vmatmul.mubr.f32.gmra.mrb[0].mxu0 %v2365
        %v2513 = vpop.f32.mrb[0].mxu0
        %v2514 = vadd.f32 0.0, %v2513
        %v2515 = vpop.f32.mrb[0].mxu0
        %2516 = vmatprep.mubr.f32.mxu0 0.0
        %2517 = vmatmul.mubr.f32.gmra.mrb[0].mxu0 %v2368
        %v2518 = vpop.f32.mrb[0].mxu0
        %v2519 = vadd.f32 0.0, %v2518
        %v2520 = vpop.f32.mrb[0].mxu0
        %2521 = vdwg.mxu0
        %2528 = vrot.lane.b32.xlu0 %v2437, 1
        %v2529 = vpop.permute.xlu0 %2528
        %2530 = vrot.lane.b32.xlu0 %v2439, 1
        %v2531 = vpop.permute.xlu0 %2530
        %2532 = vrot.lane.b32.xlu0 %v2514, 1
        %v2533 = vpop.permute.xlu0 %2532
        %2534 = vrot.lane.b32.xlu0 %v2443, 1
        %v2535 = vpop.permute.xlu0 %2534
        %2536 = vrot.lane.b32.xlu0 %v2445, 1
        %v2537 = vpop.permute.xlu0 %2536
        %2538 = vrot.lane.b32.xlu0 %v2519, 1
        %v2539 = vpop.permute.xlu0 %2538
        %v2540 = vsel %vm1426, %v2529, %v2531
        %v2541 = vsel %vm1426, %v2531, %v2533
        %v2542 = vsel %vm1426, %v2535, %v2537
        %v2543 = vsel %vm1426, %v2537, %v2539
        %v2550 = vsel %vm1426, 0.0, %v2529
        %v2551 = vsel %vm1426, 0.0, %v2535
        %v2553 = vsel %vm2363, %v2268, 0
        %v2556 = vsel %vm2363, %v2269, 0
        %2558 = vmatprep.subr.mxu0 %v2132
        %2559 = vmatpush1.msra.mxu0 %v2131
        %2560 = vmatprep.subr.mxu0 %v2135
        %2561 = vmatpush1.msra.mxu0 %v2134
        %2562 = vmatprep.subr.mxu0 %v2138
        %2563 = vmatpush1.msra.mxu0 %v2137
        %2564 = vmatprep.subr.mxu0 %v2141
        %2565 = vmatpush1.msra.mxu0 %v2140
        %2566 = vmatprep.subr.mxu0 %v2144
        %2567 = vmatpush1.msra.mxu0 %v2143
        %2568 = vmatprep.subr.mxu0 %v2147
        %2569 = vmatpush1.msra.mxu0 %v2146
        %2570 = vmatprep.subr.mxu0 %v2150
        %2571 = vmatpush1.msra.mxu0 %v2149
        %2572 = vmatprep.subr.mxu0 %v2153
        %2573 = vmatpush1.msra.mxu0 %v2152
        %2574 = vmatprep.subr.mxu0 %v2156
        %2575 = vmatpush1.msra.mxu0 %v2155
        %2576 = vmatprep.subr.mxu0 %v2159
        %2577 = vmatpush1.msra.mxu0 %v2158
        %2578 = vmatprep.subr.mxu0 0.0
        %2579 = vmatpush1.msra.mxu0 0.0
        %2580 = vmatprep.subr.mxu0 0.0
        %2581 = vmatpush1.msra.mxu0 0.0
        %2582 = vmatprep.subr.mxu0 0.0
        %2583 = vmatpush1.msra.mxu0 0.0
        %2584 = vmatprep.subr.mxu0 0.0
        %2585 = vmatpush1.msra.mxu0 0.0
        %2586 = vmatprep.subr.mxu0 0.0
        %2587 = vmatpush1.msra.mxu0 0.0
        %2588 = vmatprep.subr.mxu0 0.0
        %2589 = vmatpush1.msra.mxu0 0.0
        %2590 = vmatprep.subr.mxu0 0.0
        %2591 = vmatpush1.msra.mxu0 0.0
        %2592 = vmatprep.subr.mxu0 0.0
        %2593 = vmatpush1.msra.mxu0 0.0
        %2594 = vmatprep.subr.mxu0 0.0
        %2595 = vmatpush1.msra.mxu0 0.0
        %2596 = vmatprep.subr.mxu0 0.0
        %2597 = vmatpush1.msra.mxu0 0.0
        %2598 = vmatprep.subr.mxu0 0.0
        %2599 = vmatpush1.msra.mxu0 0.0
        %2600 = vmatprep.subr.mxu0 0.0
        %2601 = vmatpush1.msra.mxu0 0.0
        %2602 = vmatprep.subr.mxu0 0.0
        %2603 = vmatpush1.msra.mxu0 0.0
        %2604 = vmatprep.subr.mxu0 0.0
        %2605 = vmatpush1.msra.mxu0 0.0
        %2606 = vmatprep.subr.mxu0 0.0
        %2607 = vmatpush1.msra.mxu0 0.0
        %2608 = vmatprep.subr.mxu0 0.0
        %2609 = vmatpush1.msra.mxu0 0.0
        %2610 = vmatprep.subr.mxu0 0.0
        %2611 = vmatpush1.msra.mxu0 0.0
        %2612 = vmatprep.subr.mxu0 0.0
        %2613 = vmatpush1.msra.mxu0 0.0
        %2614 = vmatprep.subr.mxu0 0.0
        %2615 = vmatpush1.msra.mxu0 0.0
        %2616 = vmatprep.subr.mxu0 0.0
        %2617 = vmatpush1.msra.mxu0 0.0
        %2618 = vmatprep.subr.mxu0 0.0
        %2619 = vmatpush1.msra.mxu0 0.0
        %2620 = vmatprep.subr.mxu0 0.0
        %2621 = vmatpush1.msra.mxu0 0.0
        %2622 = vmatprep.mubr.f32.mxu0 0.0
        %2623 = vmatmul.mubr.f32.gmra.mrb[0].mxu0 %v2553
        %v2624 = vpop.f32.mrb[0].mxu0
        %v2625 = vadd.f32 %v2550, %v2624
        %v2626 = vpop.f32.mrb[0].mxu0
        %v2627 = vadd.f32 %v2540, %v2626
        %2628 = vmatprep.mubr.f32.mxu0 0.0
        %2629 = vmatmul.mubr.f32.gmra.mrb[0].mxu0 %v2556
        %v2630 = vpop.f32.mrb[0].mxu0
        %v2631 = vadd.f32 %v2551, %v2630
        %v2632 = vpop.f32.mrb[0].mxu0
        %v2633 = vadd.f32 %v2542, %v2632
        %2634 = vdwg.mxu0
        %2635 = vmatprep.subr.mxu0 0.0
        %2636 = vmatpush1.msra.mxu0 %v2133
        %2637 = vmatprep.subr.mxu0 0.0
        %2638 = vmatpush1.msra.mxu0 %v2136
        %2639 = vmatprep.subr.mxu0 0.0
        %2640 = vmatpush1.msra.mxu0 %v2139
        %2641 = vmatprep.subr.mxu0 0.0
        %2642 = vmatpush1.msra.mxu0 %v2142
        %2643 = vmatprep.subr.mxu0 0.0
        %2644 = vmatpush1.msra.mxu0 %v2145
        %2645 = vmatprep.subr.mxu0 0.0
        %2646 = vmatpush1.msra.mxu0 %v2148
        %2647 = vmatprep.subr.mxu0 0.0
        %2648 = vmatpush1.msra.mxu0 %v2151
        %2649 = vmatprep.subr.mxu0 0.0
        %2650 = vmatpush1.msra.mxu0 %v2154
        %2651 = vmatprep.subr.mxu0 0.0
        %2652 = vmatpush1.msra.mxu0 %v2157
        %2653 = vmatprep.subr.mxu0 0.0
        %2654 = vmatpush1.msra.mxu0 %v2160
        %2655 = vmatprep.subr.mxu0 0.0
        %2656 = vmatpush1.msra.mxu0 0.0
        %2657 = vmatprep.subr.mxu0 0.0
        %2658 = vmatpush1.msra.mxu0 0.0
        %2659 = vmatprep.subr.mxu0 0.0
        %2660 = vmatpush1.msra.mxu0 0.0
        %2661 = vmatprep.subr.mxu0 0.0
        %2662 = vmatpush1.msra.mxu0 0.0
        %2663 = vmatprep.subr.mxu0 0.0
        %2664 = vmatpush1.msra.mxu0 0.0
        %2665 = vmatprep.subr.mxu0 0.0
        %2666 = vmatpush1.msra.mxu0 0.0
        %2667 = vmatprep.subr.mxu0 0.0
        %2668 = vmatpush1.msra.mxu0 0.0
        %2669 = vmatprep.subr.mxu0 0.0
        %2670 = vmatpush1.msra.mxu0 0.0
        %2671 = vmatprep.subr.mxu0 0.0
        %2672 = vmatpush1.msra.mxu0 0.0
        %2673 = vmatprep.subr.mxu0 0.0
        %2674 = vmatpush1.msra.mxu0 0.0
        %2675 = vmatprep.subr.mxu0 0.0
        %2676 = vmatpush1.msra.mxu0 0.0
        %2677 = vmatprep.subr.mxu0 0.0
        %2678 = vmatpush1.msra.mxu0 0.0
        %2679 = vmatprep.subr.mxu0 0.0
        %2680 = vmatpush1.msra.mxu0 0.0
        %2681 = vmatprep.subr.mxu0 0.0
        %2682 = vmatpush1.msra.mxu0 0.0
        %2683 = vmatprep.subr.mxu0 0.0
        %2684 = vmatpush1.msra.mxu0 0.0
        %2685 = vmatprep.subr.mxu0 0.0
        %2686 = vmatpush1.msra.mxu0 0.0
        %2687 = vmatprep.subr.mxu0 0.0
        %2688 = vmatpush1.msra.mxu0 0.0
        %2689 = vmatprep.subr.mxu0 0.0
        %2690 = vmatpush1.msra.mxu0 0.0
        %2691 = vmatprep.subr.mxu0 0.0
        %2692 = vmatpush1.msra.mxu0 0.0
        %2693 = vmatprep.subr.mxu0 0.0
        %2694 = vmatpush1.msra.mxu0 0.0
        %2695 = vmatprep.subr.mxu0 0.0
        %2696 = vmatpush1.msra.mxu0 0.0
        %2697 = vmatprep.subr.mxu0 0.0
        %2698 = vmatpush1.msra.mxu0 0.0
        %2699 = vmatprep.mubr.f32.mxu0 0.0
        %2700 = vmatmul.mubr.f32.gmra.mrb[0].mxu0 %v2553
        %v2701 = vpop.f32.mrb[0].mxu0
        %v2702 = vadd.f32 %v2541, %v2701
        %v2703 = vpop.f32.mrb[0].mxu0
        %2704 = vmatprep.mubr.f32.mxu0 0.0
        %2705 = vmatmul.mubr.f32.gmra.mrb[0].mxu0 %v2556
        %v2706 = vpop.f32.mrb[0].mxu0
        %v2707 = vadd.f32 %v2543, %v2706
        %v2708 = vpop.f32.mrb[0].mxu0
        %2709 = vdwg.mxu0
        %v2710 = vmul.f32 %v2109, %v2109
        %v2711 = vmul.f32 %v2114, %v2114
        %2712 = vmatprep.subr.mxu0 0.0
        %2713 = vmatpush1.msra.mxu0 %v2710
        %2714 = vmatprep.subr.mxu0 0.0
        %2715 = vmatpush1.msra.mxu0 %v2711
        %2716 = vmatprep.subr.mxu0 0.0
        %2717 = vmatpush1.msra.mxu0 0.0
        %2718 = vmatprep.subr.mxu0 0.0
        %2719 = vmatpush1.msra.mxu0 0.0
        %2720 = vmatprep.subr.mxu0 0.0
        %2721 = vmatpush1.msra.mxu0 0.0
        %2722 = vmatprep.subr.mxu0 0.0
        %2723 = vmatpush1.msra.mxu0 0.0
        %2724 = vmatprep.subr.mxu0 0.0
        %2725 = vmatpush1.msra.mxu0 0.0
        %2726 = vmatprep.subr.mxu0 0.0
        %2727 = vmatpush1.msra.mxu0 0.0
        %2728 = vmatprep.subr.mxu0 0.0
        %2729 = vmatpush1.msra.mxu0 0.0
        %2730 = vmatprep.subr.mxu0 0.0
        %2731 = vmatpush1.msra.mxu0 0.0
        %2732 = vmatprep.subr.mxu0 0.0
        %2733 = vmatpush1.msra.mxu0 0.0
        %2734 = vmatprep.subr.mxu0 0.0
        %2735 = vmatpush1.msra.mxu0 0.0
        %2736 = vmatprep.subr.mxu0 0.0
        %2737 = vmatpush1.msra.mxu0 0.0
        %2738 = vmatprep.subr.mxu0 0.0
        %2739 = vmatpush1.msra.mxu0 0.0
        %2740 = vmatprep.subr.mxu0 0.0
        %2741 = vmatpush1.msra.mxu0 0.0
        %2742 = vmatprep.subr.mxu0 0.0
        %2743 = vmatpush1.msra.mxu0 0.0
        %2744 = vmatprep.subr.mxu0 0.0
        %2745 = vmatpush1.msra.mxu0 0.0
        %2746 = vmatprep.subr.mxu0 0.0
        %2747 = vmatpush1.msra.mxu0 0.0
        %2748 = vmatprep.subr.mxu0 0.0
        %2749 = vmatpush1.msra.mxu0 0.0
        %2750 = vmatprep.subr.mxu0 0.0
        %2751 = vmatpush1.msra.mxu0 0.0
        %2752 = vmatprep.subr.mxu0 0.0
        %2753 = vmatpush1.msra.mxu0 0.0
        %2754 = vmatprep.subr.mxu0 0.0
        %2755 = vmatpush1.msra.mxu0 0.0
        %2756 = vmatprep.subr.mxu0 0.0
        %2757 = vmatpush1.msra.mxu0 0.0
        %2758 = vmatprep.subr.mxu0 0.0
        %2759 = vmatpush1.msra.mxu0 0.0
        %2760 = vmatprep.subr.mxu0 0.0
        %2761 = vmatpush1.msra.mxu0 0.0
        %2762 = vmatprep.subr.mxu0 0.0
        %2763 = vmatpush1.msra.mxu0 0.0
        %2764 = vmatprep.subr.mxu0 0.0
        %2765 = vmatpush1.msra.mxu0 0.0
        %2766 = vmatprep.subr.mxu0 0.0
        %2767 = vmatpush1.msra.mxu0 0.0
        %2768 = vmatprep.subr.mxu0 0.0
        %2769 = vmatpush1.msra.mxu0 0.0
        %2770 = vmatprep.subr.mxu0 0.0
        %2771 = vmatpush1.msra.mxu0 0.0
        %2772 = vmatprep.subr.mxu0 0.0
        %2773 = vmatpush1.msra.mxu0 0.0
        %2774 = vmatprep.subr.mxu0 0.0
        %2775 = vmatpush1.msra.mxu0 0.0
        %2776 = vmatprep.mubr.f32.mxu0 0.0
        %2777 = vmatmul.mubr.f32.gmra.mrb[0].mxu0 %v2174
        %v2778 = vpop.f32.mrb[0].mxu0
        %v2779 = vadd.f32 %v2166, %v2778
        %v2780 = vpop.f32.mrb[0].mxu0
        %2781 = vmatprep.mubr.f32.mxu0 0.0
        %2782 = vmatmul.mubr.f32.gmra.mrb[0].mxu0 %v2177
        %v2783 = vpop.f32.mrb[0].mxu0
        %v2784 = vadd.f32 %v2171, %v2783
        %v2785 = vpop.f32.mrb[0].mxu0
        %2786 = vdwg.mxu0
        %v2787 = vrsqrt.pop %v2779
        %v2788 = vmul.f32 %v2779, %v2787
        %vm2789 = vcmp.eq.f32.partialorder %v2779, inf
        %v2790 = vsel %vm2789, %v2779, %v2788
        %vm2791 = vcmp.eq.f32.partialorder %v2779, 0.0
        %v2792 = vand.u32 %v2779, 2147483648
        %v2793 = vsel %vm2791, %v2792, %v2790
        %v2794 = vrsqrt.pop %v2784
        %v2795 = vmul.f32 %v2784, %v2794
        %vm2796 = vcmp.eq.f32.partialorder %v2784, inf
        %v2797 = vsel %vm2796, %v2784, %v2795
        %vm2798 = vcmp.eq.f32.partialorder %v2784, 0.0
        %v2799 = vand.u32 %v2784, 2147483648
        %v2800 = vsel %vm2798, %v2799, %v2797
        %v2801 = vmul.f32 %v2109, %v2793
        %v2802 = vmul.f32 %v2114, %v2800
        %v2804 = vsel %vm2363, %v2801, 0
        %v2807 = vsel %vm2363, %v2802, 0
        %2809 = vmatprep.subr.mxu0 %v2132
        %2810 = vmatpush1.msra.mxu0 %v2131
        %2811 = vmatprep.subr.mxu0 %v2135
        %2812 = vmatpush1.msra.mxu0 %v2134
        %2813 = vmatprep.subr.mxu0 %v2138
        %2814 = vmatpush1.msra.mxu0 %v2137
        %2815 = vmatprep.subr.mxu0 %v2141
        %2816 = vmatpush1.msra.mxu0 %v2140
        %2817 = vmatprep.subr.mxu0 %v2144
        %2818 = vmatpush1.msra.mxu0 %v2143
        %2819 = vmatprep.subr.mxu0 %v2147
        %2820 = vmatpush1.msra.mxu0 %v2146
        %2821 = vmatprep.subr.mxu0 %v2150
        %2822 = vmatpush1.msra.mxu0 %v2149
        %2823 = vmatprep.subr.mxu0 %v2153
        %2824 = vmatpush1.msra.mxu0 %v2152
        %2825 = vmatprep.subr.mxu0 %v2156
        %2826 = vmatpush1.msra.mxu0 %v2155
        %2827 = vmatprep.subr.mxu0 %v2159
        %2828 = vmatpush1.msra.mxu0 %v2158
        %2829 = vmatprep.subr.mxu0 0.0
        %2830 = vmatpush1.msra.mxu0 0.0
        %2831 = vmatprep.subr.mxu0 0.0
        %2832 = vmatpush1.msra.mxu0 0.0
        %2833 = vmatprep.subr.mxu0 0.0
        %2834 = vmatpush1.msra.mxu0 0.0
        %2835 = vmatprep.subr.mxu0 0.0
        %2836 = vmatpush1.msra.mxu0 0.0
        %2837 = vmatprep.subr.mxu0 0.0
        %2838 = vmatpush1.msra.mxu0 0.0
        %2839 = vmatprep.subr.mxu0 0.0
        %2840 = vmatpush1.msra.mxu0 0.0
        %2841 = vmatprep.subr.mxu0 0.0
        %2842 = vmatpush1.msra.mxu0 0.0
        %2843 = vmatprep.subr.mxu0 0.0
        %2844 = vmatpush1.msra.mxu0 0.0
        %2845 = vmatprep.subr.mxu0 0.0
        %2846 = vmatpush1.msra.mxu0 0.0
        %2847 = vmatprep.subr.mxu0 0.0
        %2848 = vmatpush1.msra.mxu0 0.0
        %2849 = vmatprep.subr.mxu0 0.0
        %2850 = vmatpush1.msra.mxu0 0.0
        %2851 = vmatprep.subr.mxu0 0.0
        %2852 = vmatpush1.msra.mxu0 0.0
        %2853 = vmatprep.subr.mxu0 0.0
        %2854 = vmatpush1.msra.mxu0 0.0
        %2855 = vmatprep.subr.mxu0 0.0
        %2856 = vmatpush1.msra.mxu0 0.0
        %2857 = vmatprep.subr.mxu0 0.0
        %2858 = vmatpush1.msra.mxu0 0.0
        %2859 = vmatprep.subr.mxu0 0.0
        %2860 = vmatpush1.msra.mxu0 0.0
        %2861 = vmatprep.subr.mxu0 0.0
        %2862 = vmatpush1.msra.mxu0 0.0
        %2863 = vmatprep.subr.mxu0 0.0
        %2864 = vmatpush1.msra.mxu0 0.0
        %2865 = vmatprep.subr.mxu0 0.0
        %2866 = vmatpush1.msra.mxu0 0.0
        %2867 = vmatprep.subr.mxu0 0.0
        %2868 = vmatpush1.msra.mxu0 0.0
        %2869 = vmatprep.subr.mxu0 0.0
        %2870 = vmatpush1.msra.mxu0 0.0
        %2871 = vmatprep.subr.mxu0 0.0
        %2872 = vmatpush1.msra.mxu0 0.0
        %2873 = vmatprep.mubr.f32.mxu0 0.0
        %2874 = vmatmul.mubr.f32.gmra.mrb[0].mxu0 %v2804
        %v2875 = vpop.f32.mrb[0].mxu0
        %v2876 = vadd.f32 0.0, %v2875
        %v2877 = vpop.f32.mrb[0].mxu0
        %v2878 = vadd.f32 0.0, %v2877
        %2879 = vmatprep.mubr.f32.mxu0 0.0
        %2880 = vmatmul.mubr.f32.gmra.mrb[0].mxu0 %v2807
        %v2881 = vpop.f32.mrb[0].mxu0
        %v2882 = vadd.f32 0.0, %v2881
        %v2883 = vpop.f32.mrb[0].mxu0
        %v2884 = vadd.f32 0.0, %v2883
        %2885 = vdwg.mxu0
        %2886 = vmatprep.subr.mxu0 0.0
        %2887 = vmatpush1.msra.mxu0 %v2133
        %2888 = vmatprep.subr.mxu0 0.0
        %2889 = vmatpush1.msra.mxu0 %v2136
        %2890 = vmatprep.subr.mxu0 0.0
        %2891 = vmatpush1.msra.mxu0 %v2139
        %2892 = vmatprep.subr.mxu0 0.0
        %2893 = vmatpush1.msra.mxu0 %v2142
        %2894 = vmatprep.subr.mxu0 0.0
        %2895 = vmatpush1.msra.mxu0 %v2145
        %2896 = vmatprep.subr.mxu0 0.0
        %2897 = vmatpush1.msra.mxu0 %v2148
        %2898 = vmatprep.subr.mxu0 0.0
        %2899 = vmatpush1.msra.mxu0 %v2151
        %2900 = vmatprep.subr.mxu0 0.0
        %2901 = vmatpush1.msra.mxu0 %v2154
        %2902 = vmatprep.subr.mxu0 0.0
        %2903 = vmatpush1.msra.mxu0 %v2157
        %2904 = vmatprep.subr.mxu0 0.0
        %2905 = vmatpush1.msra.mxu0 %v2160
        %2906 = vmatprep.subr.mxu0 0.0
        %2907 = vmatpush1.msra.mxu0 0.0
        %2908 = vmatprep.subr.mxu0 0.0
        %2909 = vmatpush1.msra.mxu0 0.0
        %2910 = vmatprep.subr.mxu0 0.0
        %2911 = vmatpush1.msra.mxu0 0.0
        %2912 = vmatprep.subr.mxu0 0.0
        %2913 = vmatpush1.msra.mxu0 0.0
        %2914 = vmatprep.subr.mxu0 0.0
        %2915 = vmatpush1.msra.mxu0 0.0
        %2916 = vmatprep.subr.mxu0 0.0
        %2917 = vmatpush1.msra.mxu0 0.0
        %2918 = vmatprep.subr.mxu0 0.0
        %2919 = vmatpush1.msra.mxu0 0.0
        %2920 = vmatprep.subr.mxu0 0.0
        %2921 = vmatpush1.msra.mxu0 0.0
        %2922 = vmatprep.subr.mxu0 0.0
        %2923 = vmatpush1.msra.mxu0 0.0
        %2924 = vmatprep.subr.mxu0 0.0
        %2925 = vmatpush1.msra.mxu0 0.0
        %2926 = vmatprep.subr.mxu0 0.0
        %2927 = vmatpush1.msra.mxu0 0.0
        %2928 = vmatprep.subr.mxu0 0.0
        %2929 = vmatpush1.msra.mxu0 0.0
        %2930 = vmatprep.subr.mxu0 0.0
        %2931 = vmatpush1.msra.mxu0 0.0
        %2932 = vmatprep.subr.mxu0 0.0
        %2933 = vmatpush1.msra.mxu0 0.0
        %2934 = vmatprep.subr.mxu0 0.0
        %2935 = vmatpush1.msra.mxu0 0.0
        %2936 = vmatprep.subr.mxu0 0.0
        %2937 = vmatpush1.msra.mxu0 0.0
        %2938 = vmatprep.subr.mxu0 0.0
        %2939 = vmatpush1.msra.mxu0 0.0
        %2940 = vmatprep.subr.mxu0 0.0
        %2941 = vmatpush1.msra.mxu0 0.0
        %2942 = vmatprep.subr.mxu0 0.0
        %2943 = vmatpush1.msra.mxu0 0.0
        %2944 = vmatprep.subr.mxu0 0.0
        %2945 = vmatpush1.msra.mxu0 0.0
        %2946 = vmatprep.subr.mxu0 0.0
        %2947 = vmatpush1.msra.mxu0 0.0
        %2948 = vmatprep.subr.mxu0 0.0
        %2949 = vmatpush1.msra.mxu0 0.0
        %2950 = vmatprep.mubr.f32.mxu0 0.0
        %2951 = vmatmul.mubr.f32.gmra.mrb[0].mxu0 %v2804
        %v2952 = vpop.f32.mrb[0].mxu0
        %v2953 = vadd.f32 0.0, %v2952
        %v2954 = vpop.f32.mrb[0].mxu0
        %2955 = vmatprep.mubr.f32.mxu0 0.0
        %2956 = vmatmul.mubr.f32.gmra.mrb[0].mxu0 %v2807
        %v2957 = vpop.f32.mrb[0].mxu0
        %v2958 = vadd.f32 0.0, %v2957
        %v2959 = vpop.f32.mrb[0].mxu0
        %2960 = vdwg.mxu0
        %2967 = vrot.lane.b32.xlu0 %v2876, 18
        %v2968 = vpop.permute.xlu0 %2967
        %2969 = vrot.lane.b32.xlu0 %v2878, 18
        %v2970 = vpop.permute.xlu0 %2969
        %2971 = vrot.lane.b32.xlu0 %v2953, 18
        %v2972 = vpop.permute.xlu0 %2971
        %2973 = vrot.lane.b32.xlu0 %v2882, 18
        %v2974 = vpop.permute.xlu0 %2973
        %2975 = vrot.lane.b32.xlu0 %v2884, 18
        %v2976 = vpop.permute.xlu0 %2975
        %2977 = vrot.lane.b32.xlu0 %v2958, 18
        %v2978 = vpop.permute.xlu0 %2977
        %vm2979 = vcmask 146432
        %v2980 = vsel %vm2979, %v2968, %v2970
        %v2981 = vsel %vm2979, %v2970, %v2972
        %v2982 = vsel %vm2979, %v2974, %v2976
        %v2983 = vsel %vm2979, %v2976, %v2978
        %v2990 = vsel %vm2979, 0.0, %v2968
        %v2991 = vsel %vm2979, 0.0, %v2974
        %v2992 = vadd.f32 %v2625, %v2990
        %v2993 = vadd.f32 %v2627, %v2980
        %v2994 = vadd.f32 %v2702, %v2981
        %v2995 = vadd.f32 %v2631, %v2991
        %v2996 = vadd.f32 %v2633, %v2982
        %v2997 = vadd.f32 %v2707, %v2983
        %v2998 = vmul.f32 %v2119, %v2119
        %v2999 = vmul.f32 %v2124, %v2124
        %3000 = vmatprep.subr.mxu0 0.0
        %3001 = vmatpush1.msra.mxu0 %v2998
        %3002 = vmatprep.subr.mxu0 0.0
        %3003 = vmatpush1.msra.mxu0 %v2999
        %3004 = vmatprep.subr.mxu0 0.0
        %3005 = vmatpush1.msra.mxu0 0.0
        %3006 = vmatprep.subr.mxu0 0.0
        %3007 = vmatpush1.msra.mxu0 0.0
        %3008 = vmatprep.subr.mxu0 0.0
        %3009 = vmatpush1.msra.mxu0 0.0
        %3010 = vmatprep.subr.mxu0 0.0
        %3011 = vmatpush1.msra.mxu0 0.0
        %3012 = vmatprep.subr.mxu0 0.0
        %3013 = vmatpush1.msra.mxu0 0.0
        %3014 = vmatprep.subr.mxu0 0.0
        %3015 = vmatpush1.msra.mxu0 0.0
        %3016 = vmatprep.subr.mxu0 0.0
        %3017 = vmatpush1.msra.mxu0 0.0
        %3018 = vmatprep.subr.mxu0 0.0
        %3019 = vmatpush1.msra.mxu0 0.0
        %3020 = vmatprep.subr.mxu0 0.0
        %3021 = vmatpush1.msra.mxu0 0.0
        %3022 = vmatprep.subr.mxu0 0.0
        %3023 = vmatpush1.msra.mxu0 0.0
        %3024 = vmatprep.subr.mxu0 0.0
        %3025 = vmatpush1.msra.mxu0 0.0
        %3026 = vmatprep.subr.mxu0 0.0
        %3027 = vmatpush1.msra.mxu0 0.0
        %3028 = vmatprep.subr.mxu0 0.0
        %3029 = vmatpush1.msra.mxu0 0.0
        %3030 = vmatprep.subr.mxu0 0.0
        %3031 = vmatpush1.msra.mxu0 0.0
        %3032 = vmatprep.subr.mxu0 0.0
        %3033 = vmatpush1.msra.mxu0 0.0
        %3034 = vmatprep.subr.mxu0 0.0
        %3035 = vmatpush1.msra.mxu0 0.0
        %3036 = vmatprep.subr.mxu0 0.0
        %3037 = vmatpush1.msra.mxu0 0.0
        %3038 = vmatprep.subr.mxu0 0.0
        %3039 = vmatpush1.msra.mxu0 0.0
        %3040 = vmatprep.subr.mxu0 0.0
        %3041 = vmatpush1.msra.mxu0 0.0
        %3042 = vmatprep.subr.mxu0 0.0
        %3043 = vmatpush1.msra.mxu0 0.0
        %3044 = vmatprep.subr.mxu0 0.0
        %3045 = vmatpush1.msra.mxu0 0.0
        %3046 = vmatprep.subr.mxu0 0.0
        %3047 = vmatpush1.msra.mxu0 0.0
        %3048 = vmatprep.subr.mxu0 0.0
        %3049 = vmatpush1.msra.mxu0 0.0
        %3050 = vmatprep.subr.mxu0 0.0
        %3051 = vmatpush1.msra.mxu0 0.0
        %3052 = vmatprep.subr.mxu0 0.0
        %3053 = vmatpush1.msra.mxu0 0.0
        %3054 = vmatprep.subr.mxu0 0.0
        %3055 = vmatpush1.msra.mxu0 0.0
        %3056 = vmatprep.subr.mxu0 0.0
        %3057 = vmatpush1.msra.mxu0 0.0
        %3058 = vmatprep.subr.mxu0 0.0
        %3059 = vmatpush1.msra.mxu0 0.0
        %3060 = vmatprep.subr.mxu0 0.0
        %3061 = vmatpush1.msra.mxu0 0.0
        %3062 = vmatprep.subr.mxu0 0.0
        %3063 = vmatpush1.msra.mxu0 0.0
        %3064 = vmatprep.mubr.f32.mxu0 0.0
        %3065 = vmatmul.mubr.f32.gmra.mrb[0].mxu0 %v2174
        %v3066 = vpop.f32.mrb[0].mxu0
        %v3067 = vadd.f32 %v2166, %v3066
        %v3068 = vpop.f32.mrb[0].mxu0
        %3069 = vmatprep.mubr.f32.mxu0 0.0
        %3070 = vmatmul.mubr.f32.gmra.mrb[0].mxu0 %v2177
        %v3071 = vpop.f32.mrb[0].mxu0
        %v3072 = vadd.f32 %v2171, %v3071
        %v3073 = vpop.f32.mrb[0].mxu0
        %3074 = vdwg.mxu0
        %v3075 = vrsqrt.pop %v3067
        %v3076 = vmul.f32 %v3067, %v3075
        %vm3077 = vcmp.eq.f32.partialorder %v3067, inf
        %v3078 = vsel %vm3077, %v3067, %v3076
        %vm3079 = vcmp.eq.f32.partialorder %v3067, 0.0
        %v3080 = vand.u32 %v3067, 2147483648
        %v3081 = vsel %vm3079, %v3080, %v3078
        %v3082 = vrsqrt.pop %v3072
        %v3083 = vmul.f32 %v3072, %v3082
        %vm3084 = vcmp.eq.f32.partialorder %v3072, inf
        %v3085 = vsel %vm3084, %v3072, %v3083
        %vm3086 = vcmp.eq.f32.partialorder %v3072, 0.0
        %v3087 = vand.u32 %v3072, 2147483648
        %v3088 = vsel %vm3086, %v3087, %v3085
        %v3089 = vmul.f32 %v2119, %v3081
        %v3090 = vmul.f32 %v2124, %v3088
        %v3092 = vsel %vm2363, %v3089, 0
        %v3095 = vsel %vm2363, %v3090, 0
        %3097 = vmatprep.subr.mxu0 %v2132
        %3098 = vmatpush1.msra.mxu0 %v2131
        %3099 = vmatprep.subr.mxu0 %v2135
        %3100 = vmatpush1.msra.mxu0 %v2134
        %3101 = vmatprep.subr.mxu0 %v2138
        %3102 = vmatpush1.msra.mxu0 %v2137
        %3103 = vmatprep.subr.mxu0 %v2141
        %3104 = vmatpush1.msra.mxu0 %v2140
        %3105 = vmatprep.subr.mxu0 %v2144
        %3106 = vmatpush1.msra.mxu0 %v2143
        %3107 = vmatprep.subr.mxu0 %v2147
        %3108 = vmatpush1.msra.mxu0 %v2146
        %3109 = vmatprep.subr.mxu0 %v2150
        %3110 = vmatpush1.msra.mxu0 %v2149
        %3111 = vmatprep.subr.mxu0 %v2153
        %3112 = vmatpush1.msra.mxu0 %v2152
        %3113 = vmatprep.subr.mxu0 %v2156
        %3114 = vmatpush1.msra.mxu0 %v2155
        %3115 = vmatprep.subr.mxu0 %v2159
        %3116 = vmatpush1.msra.mxu0 %v2158
        %3117 = vmatprep.subr.mxu0 0.0
        %3118 = vmatpush1.msra.mxu0 0.0
        %3119 = vmatprep.subr.mxu0 0.0
        %3120 = vmatpush1.msra.mxu0 0.0
        %3121 = vmatprep.subr.mxu0 0.0
        %3122 = vmatpush1.msra.mxu0 0.0
        %3123 = vmatprep.subr.mxu0 0.0
        %3124 = vmatpush1.msra.mxu0 0.0
        %3125 = vmatprep.subr.mxu0 0.0
        %3126 = vmatpush1.msra.mxu0 0.0
        %3127 = vmatprep.subr.mxu0 0.0
        %3128 = vmatpush1.msra.mxu0 0.0
        %3129 = vmatprep.subr.mxu0 0.0
        %3130 = vmatpush1.msra.mxu0 0.0
        %3131 = vmatprep.subr.mxu0 0.0
        %3132 = vmatpush1.msra.mxu0 0.0
        %3133 = vmatprep.subr.mxu0 0.0
        %3134 = vmatpush1.msra.mxu0 0.0
        %3135 = vmatprep.subr.mxu0 0.0
        %3136 = vmatpush1.msra.mxu0 0.0
        %3137 = vmatprep.subr.mxu0 0.0
        %3138 = vmatpush1.msra.mxu0 0.0
        %3139 = vmatprep.subr.mxu0 0.0
        %3140 = vmatpush1.msra.mxu0 0.0
        %3141 = vmatprep.subr.mxu0 0.0
        %3142 = vmatpush1.msra.mxu0 0.0
        %3143 = vmatprep.subr.mxu0 0.0
        %3144 = vmatpush1.msra.mxu0 0.0
        %3145 = vmatprep.subr.mxu0 0.0
        %3146 = vmatpush1.msra.mxu0 0.0
        %3147 = vmatprep.subr.mxu0 0.0
        %3148 = vmatpush1.msra.mxu0 0.0
        %3149 = vmatprep.subr.mxu0 0.0
        %3150 = vmatpush1.msra.mxu0 0.0
        %3151 = vmatprep.subr.mxu0 0.0
        %3152 = vmatpush1.msra.mxu0 0.0
        %3153 = vmatprep.subr.mxu0 0.0
        %3154 = vmatpush1.msra.mxu0 0.0
        %3155 = vmatprep.subr.mxu0 0.0
        %3156 = vmatpush1.msra.mxu0 0.0
        %3157 = vmatprep.subr.mxu0 0.0
        %3158 = vmatpush1.msra.mxu0 0.0
        %3159 = vmatprep.subr.mxu0 0.0
        %3160 = vmatpush1.msra.mxu0 0.0
        %3161 = vmatprep.mubr.f32.mxu0 0.0
        %3162 = vmatmul.mubr.f32.gmra.mrb[0].mxu0 %v3092
        %v3163 = vpop.f32.mrb[0].mxu0
        %v3164 = vadd.f32 0.0, %v3163
        %v3165 = vpop.f32.mrb[0].mxu0
        %v3166 = vadd.f32 0.0, %v3165
        %3167 = vmatprep.mubr.f32.mxu0 0.0
        %3168 = vmatmul.mubr.f32.gmra.mrb[0].mxu0 %v3095
        %v3169 = vpop.f32.mrb[0].mxu0
        %v3170 = vadd.f32 0.0, %v3169
        %v3171 = vpop.f32.mrb[0].mxu0
        %v3172 = vadd.f32 0.0, %v3171
        %3173 = vdwg.mxu0
        %3174 = vmatprep.subr.mxu0 0.0
        %3175 = vmatpush1.msra.mxu0 %v2133
        %3176 = vmatprep.subr.mxu0 0.0
        %3177 = vmatpush1.msra.mxu0 %v2136
        %3178 = vmatprep.subr.mxu0 0.0
        %3179 = vmatpush1.msra.mxu0 %v2139
        %3180 = vmatprep.subr.mxu0 0.0
        %3181 = vmatpush1.msra.mxu0 %v2142
        %3182 = vmatprep.subr.mxu0 0.0
        %3183 = vmatpush1.msra.mxu0 %v2145
        %3184 = vmatprep.subr.mxu0 0.0
        %3185 = vmatpush1.msra.mxu0 %v2148
        %3186 = vmatprep.subr.mxu0 0.0
        %3187 = vmatpush1.msra.mxu0 %v2151
        %3188 = vmatprep.subr.mxu0 0.0
        %3189 = vmatpush1.msra.mxu0 %v2154
        %3190 = vmatprep.subr.mxu0 0.0
        %3191 = vmatpush1.msra.mxu0 %v2157
        %3192 = vmatprep.subr.mxu0 0.0
        %3193 = vmatpush1.msra.mxu0 %v2160
        %3194 = vmatprep.subr.mxu0 0.0
        %3195 = vmatpush1.msra.mxu0 0.0
        %3196 = vmatprep.subr.mxu0 0.0
        %3197 = vmatpush1.msra.mxu0 0.0
        %3198 = vmatprep.subr.mxu0 0.0
        %3199 = vmatpush1.msra.mxu0 0.0
        %3200 = vmatprep.subr.mxu0 0.0
        %3201 = vmatpush1.msra.mxu0 0.0
        %3202 = vmatprep.subr.mxu0 0.0
        %3203 = vmatpush1.msra.mxu0 0.0
        %3204 = vmatprep.subr.mxu0 0.0
        %3205 = vmatpush1.msra.mxu0 0.0
        %3206 = vmatprep.subr.mxu0 0.0
        %3207 = vmatpush1.msra.mxu0 0.0
        %3208 = vmatprep.subr.mxu0 0.0
        %3209 = vmatpush1.msra.mxu0 0.0
        %3210 = vmatprep.subr.mxu0 0.0
        %3211 = vmatpush1.msra.mxu0 0.0
        %3212 = vmatprep.subr.mxu0 0.0
        %3213 = vmatpush1.msra.mxu0 0.0
        %3214 = vmatprep.subr.mxu0 0.0
        %3215 = vmatpush1.msra.mxu0 0.0
        %3216 = vmatprep.subr.mxu0 0.0
        %3217 = vmatpush1.msra.mxu0 0.0
        %3218 = vmatprep.subr.mxu0 0.0
        %3219 = vmatpush1.msra.mxu0 0.0
        %3220 = vmatprep.subr.mxu0 0.0
        %3221 = vmatpush1.msra.mxu0 0.0
        %3222 = vmatprep.subr.mxu0 0.0
        %3223 = vmatpush1.msra.mxu0 0.0
        %3224 = vmatprep.subr.mxu0 0.0
        %3225 = vmatpush1.msra.mxu0 0.0
        %3226 = vmatprep.subr.mxu0 0.0
        %3227 = vmatpush1.msra.mxu0 0.0
        %3228 = vmatprep.subr.mxu0 0.0
        %3229 = vmatpush1.msra.mxu0 0.0
        %3230 = vmatprep.subr.mxu0 0.0
        %3231 = vmatpush1.msra.mxu0 0.0
        %3232 = vmatprep.subr.mxu0 0.0
        %3233 = vmatpush1.msra.mxu0 0.0
        %3234 = vmatprep.subr.mxu0 0.0
        %3235 = vmatpush1.msra.mxu0 0.0
        %3236 = vmatprep.subr.mxu0 0.0
        %3237 = vmatpush1.msra.mxu0 0.0
        %3238 = vmatprep.mubr.f32.mxu0 0.0
        %3239 = vmatmul.mubr.f32.gmra.mrb[0].mxu0 %v3092
        %v3240 = vpop.f32.mrb[0].mxu0
        %v3241 = vadd.f32 0.0, %v3240
        %v3242 = vpop.f32.mrb[0].mxu0
        %3243 = vmatprep.mubr.f32.mxu0 0.0
        %3244 = vmatmul.mubr.f32.gmra.mrb[0].mxu0 %v3095
        %v3245 = vpop.f32.mrb[0].mxu0
        %v3246 = vadd.f32 0.0, %v3245
        %v3247 = vpop.f32.mrb[0].mxu0
        %3248 = vdwg.mxu0
        %3255 = vrot.lane.b32.xlu0 %v3164, 19
        %v3256 = vpop.permute.xlu0 %3255
        %3257 = vrot.lane.b32.xlu0 %v3166, 19
        %v3258 = vpop.permute.xlu0 %3257
        %3259 = vrot.lane.b32.xlu0 %v3241, 19
        %v3260 = vpop.permute.xlu0 %3259
        %3261 = vrot.lane.b32.xlu0 %v3170, 19
        %v3262 = vpop.permute.xlu0 %3261
        %3263 = vrot.lane.b32.xlu0 %v3172, 19
        %v3264 = vpop.permute.xlu0 %3263
        %3265 = vrot.lane.b32.xlu0 %v3246, 19
        %v3266 = vpop.permute.xlu0 %3265
        %vm3267 = vcmask 154624
        %v3268 = vsel %vm3267, %v3256, %v3258
        %v3269 = vsel %vm3267, %v3258, %v3260
        %v3270 = vsel %vm3267, %v3262, %v3264
        %v3271 = vsel %vm3267, %v3264, %v3266
        %v3278 = vsel %vm3267, 0.0, %v3256
        %v3279 = vsel %vm3267, 0.0, %v3262
        %v3280 = vadd.f32 %v2992, %v3278
        %v3281 = vadd.f32 %v2993, %v3268
        %v3282 = vadd.f32 %v2994, %v3269
        %v3283 = vadd.f32 %v2995, %v3279
        %v3284 = vadd.f32 %v2996, %v3270
        %v3285 = vadd.f32 %v2997, %v3271
        %3292 = vrot.lane.b32.xlu0 %v3280, 127
        %v3293 = vpop.permute.xlu0 %3292
        %3294 = vrot.lane.b32.xlu0 %v3281, 127
        %v3295 = vpop.permute.xlu0 %3294
        %3296 = vrot.lane.b32.xlu0 %v3282, 127
        %v3297 = vpop.permute.xlu0 %3296
        %3298 = vrot.lane.b32.xlu0 %v3283, 127
        %v3299 = vpop.permute.xlu0 %3298
        %3300 = vrot.lane.b32.xlu0 %v3284, 127
        %v3301 = vpop.permute.xlu0 %3300
        %3302 = vrot.lane.b32.xlu0 %v3285, 127
        %v3303 = vpop.permute.xlu0 %3302
        %vm3304 = vcmask 1039360
        %v3305 = vsel %vm3304, %v3293, %v3295
        %v3306 = vsel %vm3304, %v3295, %v3297
        %v3307 = vsel %vm3304, %v3299, %v3301
        %v3308 = vsel %vm3304, %v3301, %v3303
        %3315 = vrot.lane.b32.xlu0 %v3280, 126
        %v3316 = vpop.permute.xlu0 %3315
        %3317 = vrot.lane.b32.xlu0 %v3281, 126
        %v3318 = vpop.permute.xlu0 %3317
        %3319 = vrot.lane.b32.xlu0 %v3282, 126
        %v3320 = vpop.permute.xlu0 %3319
        %3321 = vrot.lane.b32.xlu0 %v3283, 126
        %v3322 = vpop.permute.xlu0 %3321
        %3323 = vrot.lane.b32.xlu0 %v3284, 126
        %v3324 = vpop.permute.xlu0 %3323
        %3325 = vrot.lane.b32.xlu0 %v3285, 126
        %v3326 = vpop.permute.xlu0 %3325
        %vm3327 = vcmask 1031168
        %v3328 = vsel %vm3327, %v3316, %v3318
        %v3329 = vsel %vm3327, %v3318, %v3320
        %v3330 = vsel %vm3327, %v3322, %v3324
        %v3331 = vsel %vm3327, %v3324, %v3326
        %3338 = vrot.lane.b32.xlu0 %v3280, 110
        %v3339 = vpop.permute.xlu0 %3338
        %3340 = vrot.lane.b32.xlu0 %v3281, 110
        %v3341 = vpop.permute.xlu0 %3340
        %3342 = vrot.lane.b32.xlu0 %v3282, 110
        %v3343 = vpop.permute.xlu0 %3342
        %3344 = vrot.lane.b32.xlu0 %v3283, 110
        %v3345 = vpop.permute.xlu0 %3344
        %3346 = vrot.lane.b32.xlu0 %v3284, 110
        %v3347 = vpop.permute.xlu0 %3346
        %3348 = vrot.lane.b32.xlu0 %v3285, 110
        %v3349 = vpop.permute.xlu0 %3348
        %vm3350 = vcmask 900096
        %v3351 = vsel %vm3350, %v3339, %v3341
        %v3352 = vsel %vm3350, %v3341, %v3343
        %v3353 = vsel %vm3350, %v3345, %v3347
        %v3354 = vsel %vm3350, %v3347, %v3349
        %3361 = vrot.lane.b32.xlu0 %v3280, 109
        %v3362 = vpop.permute.xlu0 %3361
        %3363 = vrot.lane.b32.xlu0 %v3281, 109
        %v3364 = vpop.permute.xlu0 %3363
        %3365 = vrot.lane.b32.xlu0 %v3282, 109
        %v3366 = vpop.permute.xlu0 %3365
        %3367 = vrot.lane.b32.xlu0 %v3283, 109
        %v3368 = vpop.permute.xlu0 %3367
        %3369 = vrot.lane.b32.xlu0 %v3284, 109
        %v3370 = vpop.permute.xlu0 %3369
        %3371 = vrot.lane.b32.xlu0 %v3285, 109
        %v3372 = vpop.permute.xlu0 %3371
        %vm3373 = vcmask 891904
        %v3374 = vsel %vm3373, %v3362, %v3364
        %v3375 = vsel %vm3373, %v3364, %v3366
        %v3376 = vsel %vm3373, %v3368, %v3370
        %v3377 = vsel %vm3373, %v3370, %v3372
        %3384 = vrot.lane.b32.xlu0 %v3280, 108
        %v3385 = vpop.permute.xlu0 %3384
        %3386 = vrot.lane.b32.xlu0 %v3281, 108
        %v3387 = vpop.permute.xlu0 %3386
        %3388 = vrot.lane.b32.xlu0 %v3282, 108
        %v3389 = vpop.permute.xlu0 %3388
        %3390 = vrot.lane.b32.xlu0 %v3283, 108
        %v3391 = vpop.permute.xlu0 %3390
        %3392 = vrot.lane.b32.xlu0 %v3284, 108
        %v3393 = vpop.permute.xlu0 %3392
        %3394 = vrot.lane.b32.xlu0 %v3285, 108
        %v3395 = vpop.permute.xlu0 %3394
        %vm3396 = vcmask 883712
        %v3397 = vsel %vm3396, %v3385, %v3387
        %v3398 = vsel %vm3396, %v3387, %v3389
        %v3399 = vsel %vm3396, %v3391, %v3393
        %v3400 = vsel %vm3396, %v3393, %v3395
        %3407 = vrot.lane.b32.xlu0 %v3280, 92
        %v3408 = vpop.permute.xlu0 %3407
        %3409 = vrot.lane.b32.xlu0 %v3281, 92
        %v3410 = vpop.permute.xlu0 %3409
        %3411 = vrot.lane.b32.xlu0 %v3282, 92
        %v3412 = vpop.permute.xlu0 %3411
        %3413 = vrot.lane.b32.xlu0 %v3283, 92
        %v3414 = vpop.permute.xlu0 %3413
        %3415 = vrot.lane.b32.xlu0 %v3284, 92
        %v3416 = vpop.permute.xlu0 %3415
        %3417 = vrot.lane.b32.xlu0 %v3285, 92
        %v3418 = vpop.permute.xlu0 %3417
        %vm3419 = vcmask 752640
        %v3420 = vsel %vm3419, %v3408, %v3410
        %v3421 = vsel %vm3419, %v3410, %v3412
        %v3422 = vsel %vm3419, %v3414, %v3416
        %v3423 = vsel %vm3419, %v3416, %v3418
        %3430 = vrot.lane.b32.xlu0 %v3280, 91
        %v3431 = vpop.permute.xlu0 %3430
        %3432 = vrot.lane.b32.xlu0 %v3281, 91
        %v3433 = vpop.permute.xlu0 %3432
        %3434 = vrot.lane.b32.xlu0 %v3282, 91
        %v3435 = vpop.permute.xlu0 %3434
        %3436 = vrot.lane.b32.xlu0 %v3283, 91
        %v3437 = vpop.permute.xlu0 %3436
        %3438 = vrot.lane.b32.xlu0 %v3284, 91
        %v3439 = vpop.permute.xlu0 %3438
        %3440 = vrot.lane.b32.xlu0 %v3285, 91
        %v3441 = vpop.permute.xlu0 %3440
        %vm3442 = vcmask 744448
        %v3443 = vsel %vm3442, %v3431, %v3433
        %v3444 = vsel %vm3442, %v3433, %v3435
        %v3445 = vsel %vm3442, %v3437, %v3439
        %v3446 = vsel %vm3442, %v3439, %v3441
        %3453 = vrot.lane.b32.xlu0 %v3280, 90
        %v3454 = vpop.permute.xlu0 %3453
        %3455 = vrot.lane.b32.xlu0 %v3281, 90
        %v3456 = vpop.permute.xlu0 %3455
        %3457 = vrot.lane.b32.xlu0 %v3282, 90
        %v3458 = vpop.permute.xlu0 %3457
        %3459 = vrot.lane.b32.xlu0 %v3283, 90
        %v3460 = vpop.permute.xlu0 %3459
        %3461 = vrot.lane.b32.xlu0 %v3284, 90
        %v3462 = vpop.permute.xlu0 %3461
        %3463 = vrot.lane.b32.xlu0 %v3285, 90
        %v3464 = vpop.permute.xlu0 %3463
        %vm3465 = vcmask 736256
        %v3466 = vsel %vm3465, %v3454, %v3456
        %v3467 = vsel %vm3465, %v3456, %v3458
        %v3468 = vsel %vm3465, %v3460, %v3462
        %v3469 = vsel %vm3465, %v3462, %v3464
        %v3476 = vld [vmem:[#allocation13] sm:$0xff]
        %v3477 = vld [vmem:[#allocation13 + $0x8] sm:$0xff]
        %v3478 = vld [vmem:[#allocation13 + $0x10] sm:$0xff]
        %v3479 = vld [vmem:[#allocation13 + $0x18] sm:$0xff]
        %v3480 = vld [vmem:[#allocation13 + $0x20] sm:$0xff]
        %v3481 = vld [vmem:[#allocation13 + $0x28] sm:$0xff]
        %v3482 = vld [vmem:[#allocation13 + $0x30] sm:$0xff]
        %v3483 = vld [vmem:[#allocation13 + $0x38] sm:$0xff]
        %v3484 = vld [vmem:[#allocation13 + $0x40] sm:$0xff]
        %v3485 = vld [vmem:[#allocation13 + $0x48] sm:$0xff]
        %v3486 = vld [vmem:[#allocation13 + $0x50] sm:$0xff]
        %v3487 = vld [vmem:[#allocation13 + $0x58] sm:$0xff]
        %v3488 = vld [vmem:[#allocation13 + $0x60] sm:$0xff]
        %v3489 = vld [vmem:[#allocation13 + $0x68] sm:$0xff]
        %v3490 = vld [vmem:[#allocation13 + $0x70] sm:$0xff]
        %v3491 = vld [vmem:[#allocation13 + $0x78] sm:$0xff]
        %v3492 = vld [vmem:[%s13] sm:$0xff]
        %v3493 = vld [vmem:[%s13 + $0x8] sm:$0xff]
        %v3494 = vld [vmem:[%s13 + $0x10] sm:$0xff]
        %v3495 = vld [vmem:[%s13 + $0x18] sm:$0xff]
        %v3496 = vld [vmem:[%s13 + $0x20] sm:$0xff]
        %v3497 = vld [vmem:[%s13 + $0x28] sm:$0xff]
        %v3498 = vld [vmem:[%s13 + $0x30] sm:$0xff]
        %v3499 = vld [vmem:[%s13 + $0x38] sm:$0xff]
        %3501 = vset.pattern.permute.xlu0 0
        %3502 = vperm.xlu0 %3501, %v3492
        %v3503 = vpop.permute.xlu0 %3502
        %3506 = vset.pattern.permute.xlu0 0
        %3507 = vperm.xlu0 %3506, %v3493
        %v3508 = vpop.permute.xlu0 %3507
        %3511 = vset.pattern.permute.xlu0 0
        %3512 = vperm.xlu0 %3511, %v3494
        %v3513 = vpop.permute.xlu0 %3512
        %3516 = vset.pattern.permute.xlu0 0
        %3517 = vperm.xlu0 %3516, %v3495
        %v3518 = vpop.permute.xlu0 %3517
        %3521 = vset.pattern.permute.xlu0 0
        %3522 = vperm.xlu0 %3521, %v3496
        %v3523 = vpop.permute.xlu0 %3522
        %3526 = vset.pattern.permute.xlu0 0
        %3527 = vperm.xlu0 %3526, %v3497
        %v3528 = vpop.permute.xlu0 %3527
        %3531 = vset.pattern.permute.xlu0 0
        %3532 = vperm.xlu0 %3531, %v3498
        %v3533 = vpop.permute.xlu0 %3532
        %3536 = vset.pattern.permute.xlu0 0
        %3537 = vperm.xlu0 %3536, %v3499
        %v3538 = vpop.permute.xlu0 %3537
        %v3541 = vsel %vm768, %v3477, 0
        %v3544 = vsel %vm768, %v3479, 0
        %v3547 = vsel %vm768, %v3481, 0
        %v3550 = vsel %vm768, %v3483, 0
        %v3553 = vsel %vm768, %v3485, 0
        %v3556 = vsel %vm768, %v3487, 0
        %v3559 = vsel %vm768, %v3489, 0
        %v3562 = vsel %vm768, %v3491, 0
        %3564 = vmatprep.subr.mxu0 %v3281
        %3565 = vmatpush1.msra.mxu0 %v3280
        %3566 = vmatprep.subr.mxu0 %v3284
        %3567 = vmatpush1.msra.mxu0 %v3283
        %3568 = vmatprep.subr.mxu0 %v3306
        %3569 = vmatpush1.msra.mxu0 %v3305
        %3570 = vmatprep.subr.mxu0 %v3308
        %3571 = vmatpush1.msra.mxu0 %v3307
        %3572 = vmatprep.subr.mxu0 %v3329
        %3573 = vmatpush1.msra.mxu0 %v3328
        %3574 = vmatprep.subr.mxu0 %v3331
        %3575 = vmatpush1.msra.mxu0 %v3330
        %3576 = vmatprep.subr.mxu0 %v3352
        %3577 = vmatpush1.msra.mxu0 %v3351
        %3578 = vmatprep.subr.mxu0 %v3354
        %3579 = vmatpush1.msra.mxu0 %v3353
        %3580 = vmatprep.subr.mxu0 %v3375
        %3581 = vmatpush1.msra.mxu0 %v3374
        %3582 = vmatprep.subr.mxu0 %v3377
        %3583 = vmatpush1.msra.mxu0 %v3376
        %3584 = vmatprep.subr.mxu0 %v3398
        %3585 = vmatpush1.msra.mxu0 %v3397
        %3586 = vmatprep.subr.mxu0 %v3400
        %3587 = vmatpush1.msra.mxu0 %v3399
        %3588 = vmatprep.subr.mxu0 %v3421
        %3589 = vmatpush1.msra.mxu0 %v3420
        %3590 = vmatprep.subr.mxu0 %v3423
        %3591 = vmatpush1.msra.mxu0 %v3422
        %3592 = vmatprep.subr.mxu0 %v3444
        %3593 = vmatpush1.msra.mxu0 %v3443
        %3594 = vmatprep.subr.mxu0 %v3446
        %3595 = vmatpush1.msra.mxu0 %v3445
        %3596 = vmatprep.subr.mxu0 %v3467
        %3597 = vmatpush1.msra.mxu0 %v3466
        %3598 = vmatprep.subr.mxu0 %v3469
        %3599 = vmatpush1.msra.mxu0 %v3468
        %3600 = vmatprep.subr.mxu0 0.0
        %3601 = vmatpush1.msra.mxu0 0.0
        %3602 = vmatprep.subr.mxu0 0.0
        %3603 = vmatpush1.msra.mxu0 0.0
        %3604 = vmatprep.subr.mxu0 0.0
        %3605 = vmatpush1.msra.mxu0 0.0
        %3606 = vmatprep.subr.mxu0 0.0
        %3607 = vmatpush1.msra.mxu0 0.0
        %3608 = vmatprep.subr.mxu0 0.0
        %3609 = vmatpush1.msra.mxu0 0.0
        %3610 = vmatprep.subr.mxu0 0.0
        %3611 = vmatpush1.msra.mxu0 0.0
        %3612 = vmatprep.subr.mxu0 0.0
        %3613 = vmatpush1.msra.mxu0 0.0
        %3614 = vmatprep.subr.mxu0 0.0
        %3615 = vmatpush1.msra.mxu0 0.0
        %3616 = vmatprep.subr.mxu0 0.0
        %3617 = vmatpush1.msra.mxu0 0.0
        %3618 = vmatprep.subr.mxu0 0.0
        %3619 = vmatpush1.msra.mxu0 0.0
        %3620 = vmatprep.subr.mxu0 0.0
        %3621 = vmatpush1.msra.mxu0 0.0
        %3622 = vmatprep.subr.mxu0 0.0
        %3623 = vmatpush1.msra.mxu0 0.0
        %3624 = vmatprep.subr.mxu0 0.0
        %3625 = vmatpush1.msra.mxu0 0.0
        %3626 = vmatprep.subr.mxu0 0.0
        %3627 = vmatpush1.msra.mxu0 0.0
        %3628 = vmatprep.mubr.f32.mxu0 %v3541
        %3629 = vmatmul.mubr.f32.gmra.mrb[0].mxu0 %v3476
        %v3630 = vpop.f32.mrb[0].mxu0
        %v3631 = vadd.f32 %v3503, %v3630
        %v3632 = vpop.f32.mrb[0].mxu0
        %v3633 = vadd.f32 %v3503, %v3632
        %3634 = vmatprep.mubr.f32.mxu0 %v3544
        %3635 = vmatmul.mubr.f32.gmra.mrb[0].mxu0 %v3478
        %v3636 = vpop.f32.mrb[0].mxu0
        %v3637 = vadd.f32 %v3508, %v3636
        %v3638 = vpop.f32.mrb[0].mxu0
        %v3639 = vadd.f32 %v3508, %v3638
        %3640 = vmatprep.mubr.f32.mxu0 %v3547
        %3641 = vmatmul.mubr.f32.gmra.mrb[0].mxu0 %v3480
        %v3642 = vpop.f32.mrb[0].mxu0
        %v3643 = vadd.f32 %v3513, %v3642
        %v3644 = vpop.f32.mrb[0].mxu0
        %v3645 = vadd.f32 %v3513, %v3644
        %3646 = vmatprep.mubr.f32.mxu0 %v3550
        %3647 = vmatmul.mubr.f32.gmra.mrb[0].mxu0 %v3482
        %v3648 = vpop.f32.mrb[0].mxu0
        %v3649 = vadd.f32 %v3518, %v3648
        %v3650 = vpop.f32.mrb[0].mxu0
        %v3651 = vadd.f32 %v3518, %v3650
        %3652 = vmatprep.mubr.f32.mxu0 %v3553
        %3653 = vmatmul.mubr.f32.gmra.mrb[0].mxu0 %v3484
        %v3654 = vpop.f32.mrb[0].mxu0
        %v3655 = vadd.f32 %v3523, %v3654
        %v3656 = vpop.f32.mrb[0].mxu0
        %v3657 = vadd.f32 %v3523, %v3656
        %3658 = vmatprep.mubr.f32.mxu0 %v3556
        %3659 = vmatmul.mubr.f32.gmra.mrb[0].mxu0 %v3486
        %v3660 = vpop.f32.mrb[0].mxu0
        %v3661 = vadd.f32 %v3528, %v3660
        %v3662 = vpop.f32.mrb[0].mxu0
        %v3663 = vadd.f32 %v3528, %v3662
        %3664 = vmatprep.mubr.f32.mxu0 %v3559
        %3665 = vmatmul.mubr.f32.gmra.mrb[0].mxu0 %v3488
        %v3666 = vpop.f32.mrb[0].mxu0
        %v3667 = vadd.f32 %v3533, %v3666
        %v3668 = vpop.f32.mrb[0].mxu0
        %v3669 = vadd.f32 %v3533, %v3668
        %3670 = vmatprep.mubr.f32.mxu0 %v3562
        %3671 = vmatmul.mubr.f32.gmra.mrb[0].mxu0 %v3490
        %v3672 = vpop.f32.mrb[0].mxu0
        %v3673 = vadd.f32 %v3538, %v3672
        %v3674 = vpop.f32.mrb[0].mxu0
        %v3675 = vadd.f32 %v3538, %v3674
        %3676 = vdwg.mxu0
        %3677 = vmatprep.subr.mxu0 0.0
        %3678 = vmatpush1.msra.mxu0 %v3282
        %3679 = vmatprep.subr.mxu0 0.0
        %3680 = vmatpush1.msra.mxu0 %v3285
        %3681 = vmatprep.subr.mxu0 0.0
        %3682 = vmatpush1.msra.mxu0 %v3297
        %3683 = vmatprep.subr.mxu0 0.0
        %3684 = vmatpush1.msra.mxu0 %v3303
        %3685 = vmatprep.subr.mxu0 0.0
        %3686 = vmatpush1.msra.mxu0 %v3320
        %3687 = vmatprep.subr.mxu0 0.0
        %3688 = vmatpush1.msra.mxu0 %v3326
        %3689 = vmatprep.subr.mxu0 0.0
        %3690 = vmatpush1.msra.mxu0 %v3343
        %3691 = vmatprep.subr.mxu0 0.0
        %3692 = vmatpush1.msra.mxu0 %v3349
        %3693 = vmatprep.subr.mxu0 0.0
        %3694 = vmatpush1.msra.mxu0 %v3366
        %3695 = vmatprep.subr.mxu0 0.0
        %3696 = vmatpush1.msra.mxu0 %v3372
        %3697 = vmatprep.subr.mxu0 0.0
        %3698 = vmatpush1.msra.mxu0 %v3389
        %3699 = vmatprep.subr.mxu0 0.0
        %3700 = vmatpush1.msra.mxu0 %v3395
        %3701 = vmatprep.subr.mxu0 0.0
        %3702 = vmatpush1.msra.mxu0 %v3412
        %3703 = vmatprep.subr.mxu0 0.0
        %3704 = vmatpush1.msra.mxu0 %v3418
        %3705 = vmatprep.subr.mxu0 0.0
        %3706 = vmatpush1.msra.mxu0 %v3435
        %3707 = vmatprep.subr.mxu0 0.0
        %3708 = vmatpush1.msra.mxu0 %v3441
        %3709 = vmatprep.subr.mxu0 0.0
        %3710 = vmatpush1.msra.mxu0 %v3458
        %3711 = vmatprep.subr.mxu0 0.0
        %3712 = vmatpush1.msra.mxu0 %v3464
        %3713 = vmatprep.subr.mxu0 0.0
        %3714 = vmatpush1.msra.mxu0 0.0
        %3715 = vmatprep.subr.mxu0 0.0
        %3716 = vmatpush1.msra.mxu0 0.0
        %3717 = vmatprep.subr.mxu0 0.0
        %3718 = vmatpush1.msra.mxu0 0.0
        %3719 = vmatprep.subr.mxu0 0.0
        %3720 = vmatpush1.msra.mxu0 0.0
        %3721 = vmatprep.subr.mxu0 0.0
        %3722 = vmatpush1.msra.mxu0 0.0
        %3723 = vmatprep.subr.mxu0 0.0
        %3724 = vmatpush1.msra.mxu0 0.0
        %3725 = vmatprep.subr.mxu0 0.0
        %3726 = vmatpush1.msra.mxu0 0.0
        %3727 = vmatprep.subr.mxu0 0.0
        %3728 = vmatpush1.msra.mxu0 0.0
        %3729 = vmatprep.subr.mxu0 0.0
        %3730 = vmatpush1.msra.mxu0 0.0
        %3731 = vmatprep.subr.mxu0 0.0
        %3732 = vmatpush1.msra.mxu0 0.0
        %3733 = vmatprep.subr.mxu0 0.0
        %3734 = vmatpush1.msra.mxu0 0.0
        %3735 = vmatprep.subr.mxu0 0.0
        %3736 = vmatpush1.msra.mxu0 0.0
        %3737 = vmatprep.subr.mxu0 0.0
        %3738 = vmatpush1.msra.mxu0 0.0
        %3739 = vmatprep.subr.mxu0 0.0
        %3740 = vmatpush1.msra.mxu0 0.0
        %3741 = vmatprep.mubr.f32.mxu0 %v3541
        %3742 = vmatmul.mubr.f32.gmra.mrb[0].mxu0 %v3476
        %v3743 = vpop.f32.mrb[0].mxu0
        %v3744 = vadd.f32 %v3503, %v3743
        %v3745 = vpop.f32.mrb[0].mxu0
        %3746 = vmatprep.mubr.f32.mxu0 %v3544
        %3747 = vmatmul.mubr.f32.gmra.mrb[0].mxu0 %v3478
        %v3748 = vpop.f32.mrb[0].mxu0
        %v3749 = vadd.f32 %v3508, %v3748
        %v3750 = vpop.f32.mrb[0].mxu0
        %3751 = vmatprep.mubr.f32.mxu0 %v3547
        %3752 = vmatmul.mubr.f32.gmra.mrb[0].mxu0 %v3480
        %v3753 = vpop.f32.mrb[0].mxu0
        %v3754 = vadd.f32 %v3513, %v3753
        %v3755 = vpop.f32.mrb[0].mxu0
        %3756 = vmatprep.mubr.f32.mxu0 %v3550
        %3757 = vmatmul.mubr.f32.gmra.mrb[0].mxu0 %v3482
        %v3758 = vpop.f32.mrb[0].mxu0
        %v3759 = vadd.f32 %v3518, %v3758
        %v3760 = vpop.f32.mrb[0].mxu0
        %3761 = vmatprep.mubr.f32.mxu0 %v3553
        %3762 = vmatmul.mubr.f32.gmra.mrb[0].mxu0 %v3484
        %v3763 = vpop.f32.mrb[0].mxu0
        %v3764 = vadd.f32 %v3523, %v3763
        %v3765 = vpop.f32.mrb[0].mxu0
        %3766 = vmatprep.mubr.f32.mxu0 %v3556
        %3767 = vmatmul.mubr.f32.gmra.mrb[0].mxu0 %v3486
        %v3768 = vpop.f32.mrb[0].mxu0
        %v3769 = vadd.f32 %v3528, %v3768
        %v3770 = vpop.f32.mrb[0].mxu0
        %3771 = vmatprep.mubr.f32.mxu0 %v3559
        %3772 = vmatmul.mubr.f32.gmra.mrb[0].mxu0 %v3488
        %v3773 = vpop.f32.mrb[0].mxu0
        %v3774 = vadd.f32 %v3533, %v3773
        %v3775 = vpop.f32.mrb[0].mxu0
        %3776 = vmatprep.mubr.f32.mxu0 %v3562
        %3777 = vmatmul.mubr.f32.gmra.mrb[0].mxu0 %v3490
        %v3778 = vpop.f32.mrb[0].mxu0
        %v3779 = vadd.f32 %v3538, %v3778
        %v3780 = vpop.f32.mrb[0].mxu0
        %3781 = vdwg.mxu0
        %v3782 = vld [vmem:[#allocation15] sm:$0xff]
        %v3783 = vld [vmem:[#allocation15 + $0x8] sm:$0xff]
        %v3784 = vld [vmem:[%s15] sm:$0xff]
        %v3785 = vld [vmem:[%s15 + $0x8] sm:$0xff]
        %v3786 = vld [vmem:[#allocation16] sm:$0xff]
        %v3787 = vld [vmem:[#allocation16 + $0x8] sm:$0xff]
        %v3788 = vld [vmem:[#allocation16 + $0x10] sm:$0xff]
        %v3789 = vld [vmem:[#allocation16 + $0x18] sm:$0xff]
        %v3790 = vld [vmem:[#allocation16 + $0x20] sm:$0xff]
        %v3791 = vld [vmem:[#allocation16 + $0x28] sm:$0xff]
        %v3792 = vld [vmem:[#allocation16 + $0x30] sm:$0xff]
        %v3793 = vld [vmem:[#allocation16 + $0x38] sm:$0xff]
        %v3794 = vld [vmem:[#allocation16 + $0x40] sm:$0xff]
        %v3795 = vld [vmem:[#allocation16 + $0x48] sm:$0xff]
        %v3796 = vld [vmem:[#allocation16 + $0x50] sm:$0xff]
        %v3797 = vld [vmem:[#allocation16 + $0x58] sm:$0xff]
        %v3798 = vld [vmem:[#allocation16 + $0x60] sm:$0xff]
        %v3799 = vld [vmem:[#allocation16 + $0x68] sm:$0xff]
        %v3800 = vld [vmem:[#allocation16 + $0x70] sm:$0xff]
        %v3801 = vld [vmem:[#allocation16 + $0x78] sm:$0xff]
        %v3802 = vld [vmem:[#allocation16 + $0x80] sm:$0xff]
        %v3803 = vld [vmem:[#allocation16 + $0x88] sm:$0xff]
        %v3804 = vld [vmem:[#allocation16 + $0x90] sm:$0xff]
        %v3805 = vld [vmem:[#allocation16 + $0x98] sm:$0xff]
        %v3806 = vld [vmem:[#allocation16 + $0xa0] sm:$0xff]
        %v3807 = vld [vmem:[#allocation16 + $0xa8] sm:$0xff]
        %v3808 = vld [vmem:[#allocation16 + $0xb0] sm:$0xff]
        %v3809 = vld [vmem:[#allocation16 + $0xb8] sm:$0xff]
        %v3810 = vld [vmem:[#allocation16 + $0xc0] sm:$0xff]
        %v3811 = vld [vmem:[#allocation16 + $0xc8] sm:$0xff]
        %v3812 = vld [vmem:[#allocation16 + $0xd0] sm:$0xff]
        %v3813 = vld [vmem:[#allocation16 + $0xd8] sm:$0xff]
        %v3814 = vld [vmem:[#allocation16 + $0xe0] sm:$0xff]
        %v3815 = vld [vmem:[#allocation16 + $0xe8] sm:$0xff]
        %v3816 = vld [vmem:[#allocation16 + $0xf0] sm:$0xff]
        %v3817 = vld [vmem:[#allocation16 + $0xf8] sm:$0xff]
        %v3818 = vld [vmem:[#allocation16 + $0x100] sm:$0xff]
        %v3819 = vld [vmem:[#allocation16 + $0x108] sm:$0xff]
        %v3820 = vld [vmem:[#allocation16 + $0x110] sm:$0xff]
        %v3821 = vld [vmem:[#allocation16 + $0x118] sm:$0xff]
        %v3822 = vld [vmem:[#allocation16 + $0x120] sm:$0xff]
        %v3823 = vld [vmem:[#allocation16 + $0x128] sm:$0xff]
        %v3824 = vld [vmem:[#allocation16 + $0x130] sm:$0xff]
        %v3825 = vld [vmem:[#allocation16 + $0x138] sm:$0xff]
        %v3826 = vld [vmem:[#allocation16 + $0x140] sm:$0xff]
        %v3827 = vld [vmem:[#allocation16 + $0x148] sm:$0xff]
        %v3828 = vld [vmem:[#allocation16 + $0x150] sm:$0xff]
        %v3829 = vld [vmem:[#allocation16 + $0x158] sm:$0xff]
        %v3830 = vld [vmem:[#allocation16 + $0x160] sm:$0xff]
        %v3831 = vld [vmem:[#allocation16 + $0x168] sm:$0xff]
        %v3832 = vld [vmem:[#allocation16 + $0x170] sm:$0xff]
        %v3833 = vld [vmem:[#allocation16 + $0x178] sm:$0xff]
        %v3834 = vld [vmem:[#allocation16 + $0x180] sm:$0xff]
        %v3835 = vld [vmem:[#allocation16 + $0x188] sm:$0xff]
        %v3836 = vld [vmem:[#allocation16 + $0x190] sm:$0xff]
        %v3837 = vld [vmem:[#allocation16 + $0x198] sm:$0xff]
        %v3838 = vld [vmem:[#allocation16 + $0x1a0] sm:$0xff]
        %v3839 = vld [vmem:[#allocation16 + $0x1a8] sm:$0xff]
        %v3840 = vld [vmem:[#allocation16 + $0x1b0] sm:$0xff]
        %v3841 = vld [vmem:[#allocation16 + $0x1b8] sm:$0xff]
        %v3842 = vld [vmem:[#allocation16 + $0x1c0] sm:$0xff]
        %v3843 = vld [vmem:[#allocation16 + $0x1c8] sm:$0xff]
        %v3844 = vld [vmem:[#allocation16 + $0x1d0] sm:$0xff]
        %v3845 = vld [vmem:[#allocation16 + $0x1d8] sm:$0xff]
        %v3846 = vld [vmem:[#allocation16 + $0x1e0] sm:$0xff]
        %v3847 = vld [vmem:[#allocation16 + $0x1e8] sm:$0xff]
        %v3848 = vld [vmem:[#allocation16 + $0x1f0] sm:$0xff]
        %v3849 = vld [vmem:[#allocation16 + $0x1f8] sm:$0xff]
        %v3850 = vld [vmem:[#allocation16 + $0x200] sm:$0xff]
        %v3851 = vld [vmem:[#allocation16 + $0x208] sm:$0xff]
        %v3852 = vld [vmem:[#allocation16 + $0x210] sm:$0xff]
        %v3853 = vld [vmem:[#allocation16 + $0x218] sm:$0xff]
        %v3854 = vld [vmem:[#allocation16 + $0x220] sm:$0xff]
        %v3855 = vld [vmem:[#allocation16 + $0x228] sm:$0xff]
        %v3856 = vld [vmem:[#allocation16 + $0x230] sm:$0xff]
        %v3857 = vld [vmem:[#allocation16 + $0x238] sm:$0xff]
        %v3858 = vld [vmem:[#allocation16 + $0x240] sm:$0xff]
        %v3859 = vld [vmem:[#allocation16 + $0x248] sm:$0xff]
        %v3860 = vld [vmem:[#allocation16 + $0x250] sm:$0xff]
        %v3861 = vld [vmem:[#allocation16 + $0x258] sm:$0xff]
        %v3862 = vld [vmem:[#allocation16 + $0x260] sm:$0xff]
        %v3863 = vld [vmem:[#allocation16 + $0x268] sm:$0xff]
        %v3864 = vld [vmem:[#allocation16 + $0x270] sm:$0xff]
        %v3865 = vld [vmem:[#allocation16 + $0x278] sm:$0xff]
        %v3866 = vld [vmem:[#allocation16 + $0x280] sm:$0xff]
        %v3867 = vld [vmem:[#allocation16 + $0x288] sm:$0xff]
        %v3868 = vld [vmem:[#allocation16 + $0x290] sm:$0xff]
        %v3869 = vld [vmem:[#allocation16 + $0x298] sm:$0xff]
        %v3870 = vld [vmem:[#allocation16 + $0x2a0] sm:$0xff]
        %v3871 = vld [vmem:[#allocation16 + $0x2a8] sm:$0xff]
        %v3872 = vld [vmem:[#allocation16 + $0x2b0] sm:$0xff]
        %v3873 = vld [vmem:[#allocation16 + $0x2b8] sm:$0xff]
        %v3874 = vld [vmem:[#allocation16 + $0x2c0] sm:$0xff]
        %v3875 = vld [vmem:[#allocation16 + $0x2c8] sm:$0xff]
        %v3876 = vld [vmem:[#allocation16 + $0x2d0] sm:$0xff]
        %v3877 = vld [vmem:[#allocation16 + $0x2d8] sm:$0xff]
        %v3878 = vld [vmem:[#allocation16 + $0x2e0] sm:$0xff]
        %v3879 = vld [vmem:[#allocation16 + $0x2e8] sm:$0xff]
        %v3880 = vld [vmem:[#allocation16 + $0x2f0] sm:$0xff]
        %v3881 = vld [vmem:[#allocation16 + $0x2f8] sm:$0xff]
        %v3882 = vld [vmem:[#allocation16 + $0x300] sm:$0xff]
        %v3883 = vld [vmem:[#allocation16 + $0x308] sm:$0xff]
        %v3884 = vld [vmem:[#allocation16 + $0x310] sm:$0xff]
        %v3885 = vld [vmem:[#allocation16 + $0x318] sm:$0xff]
        %v3886 = vld [vmem:[#allocation16 + $0x320] sm:$0xff]
        %v3887 = vld [vmem:[#allocation16 + $0x328] sm:$0xff]
        %v3888 = vld [vmem:[#allocation16 + $0x330] sm:$0xff]
        %v3889 = vld [vmem:[#allocation16 + $0x338] sm:$0xff]
        %v3890 = vld [vmem:[#allocation16 + $0x340] sm:$0xff]
        %v3891 = vld [vmem:[#allocation16 + $0x348] sm:$0xff]
        %v3892 = vld [vmem:[#allocation16 + $0x350] sm:$0xff]
        %v3893 = vld [vmem:[#allocation16 + $0x358] sm:$0xff]
        %v3894 = vld [vmem:[#allocation16 + $0x360] sm:$0xff]
        %v3895 = vld [vmem:[#allocation16 + $0x368] sm:$0xff]
        %v3896 = vld [vmem:[#allocation16 + $0x370] sm:$0xff]
        %v3897 = vld [vmem:[#allocation16 + $0x378] sm:$0xff]
        %v3898 = vld [vmem:[#allocation16 + $0x380] sm:$0xff]
        %v3899 = vld [vmem:[#allocation16 + $0x388] sm:$0xff]
        %v3900 = vld [vmem:[#allocation16 + $0x390] sm:$0xff]
        %v3901 = vld [vmem:[#allocation16 + $0x398] sm:$0xff]
        %v3902 = vld [vmem:[#allocation16 + $0x3a0] sm:$0xff]
        %v3903 = vld [vmem:[#allocation16 + $0x3a8] sm:$0xff]
        %v3904 = vld [vmem:[#allocation16 + $0x3b0] sm:$0xff]
        %v3905 = vld [vmem:[#allocation16 + $0x3b8] sm:$0xff]
        %v3906 = vld [vmem:[#allocation16 + $0x3c0] sm:$0xff]
        %v3907 = vld [vmem:[#allocation16 + $0x3c8] sm:$0xff]
        %v3908 = vld [vmem:[#allocation16 + $0x3d0] sm:$0xff]
        %v3909 = vld [vmem:[#allocation16 + $0x3d8] sm:$0xff]
        %v3910 = vld [vmem:[#allocation16 + $0x3e0] sm:$0xff]
        %v3911 = vld [vmem:[#allocation16 + $0x3e8] sm:$0xff]
        %v3912 = vld [vmem:[#allocation16 + $0x3f0] sm:$0xff]
        %v3913 = vld [vmem:[#allocation16 + $0x3f8] sm:$0xff]
        %v3914 = vld [vmem:[#allocation16 + $0x400] sm:$0xff]
        %v3915 = vld [vmem:[#allocation16 + $0x408] sm:$0xff]
        %v3916 = vld [vmem:[#allocation16 + $0x410] sm:$0xff]
        %v3917 = vld [vmem:[#allocation16 + $0x418] sm:$0xff]
        %v3918 = vld [vmem:[#allocation16 + $0x420] sm:$0xff]
        %v3919 = vld [vmem:[#allocation16 + $0x428] sm:$0xff]
        %v3920 = vld [vmem:[#allocation16 + $0x430] sm:$0xff]
        %v3921 = vld [vmem:[#allocation16 + $0x438] sm:$0xff]
        %v3922 = vld [vmem:[#allocation16 + $0x440] sm:$0xff]
        %v3923 = vld [vmem:[#allocation16 + $0x448] sm:$0xff]
        %v3924 = vld [vmem:[#allocation16 + $0x450] sm:$0xff]
        %v3925 = vld [vmem:[#allocation16 + $0x458] sm:$0xff]
        %v3926 = vld [vmem:[#allocation16 + $0x460] sm:$0xff]
        %v3927 = vld [vmem:[#allocation16 + $0x468] sm:$0xff]
        %v3928 = vld [vmem:[#allocation16 + $0x470] sm:$0xff]
        %v3929 = vld [vmem:[#allocation16 + $0x478] sm:$0xff]
        %v3930 = vld [vmem:[#allocation16 + $0x480] sm:$0xff]
        %v3931 = vld [vmem:[#allocation16 + $0x488] sm:$0xff]
        %v3932 = vld [vmem:[#allocation16 + $0x490] sm:$0xff]
        %v3933 = vld [vmem:[#allocation16 + $0x498] sm:$0xff]
        %v3934 = vld [vmem:[#allocation16 + $0x4a0] sm:$0xff]
        %v3935 = vld [vmem:[#allocation16 + $0x4a8] sm:$0xff]
        %v3936 = vld [vmem:[#allocation16 + $0x4b0] sm:$0xff]
        %v3937 = vld [vmem:[#allocation16 + $0x4b8] sm:$0xff]
        %v3938 = vld [vmem:[#allocation16 + $0x4c0] sm:$0xff]
        %v3939 = vld [vmem:[#allocation16 + $0x4c8] sm:$0xff]
        %v3940 = vld [vmem:[#allocation16 + $0x4d0] sm:$0xff]
        %v3941 = vld [vmem:[#allocation16 + $0x4d8] sm:$0xff]
        %v3942 = vld [vmem:[#allocation16 + $0x4e0] sm:$0xff]
        %v3943 = vld [vmem:[#allocation16 + $0x4e8] sm:$0xff]
        %v3944 = vld [vmem:[#allocation16 + $0x4f0] sm:$0xff]
        %v3945 = vld [vmem:[#allocation16 + $0x4f8] sm:$0xff]
        %v3946 = vld [vmem:[#allocation16 + $0x500] sm:$0xff]
        %v3947 = vld [vmem:[#allocation16 + $0x508] sm:$0xff]
        %v3948 = vld [vmem:[#allocation16 + $0x510] sm:$0xff]
        %v3949 = vld [vmem:[#allocation16 + $0x518] sm:$0xff]
        %v3950 = vld [vmem:[#allocation16 + $0x520] sm:$0xff]
        %v3951 = vld [vmem:[#allocation16 + $0x528] sm:$0xff]
        %v3952 = vld [vmem:[#allocation16 + $0x530] sm:$0xff]
        %v3953 = vld [vmem:[#allocation16 + $0x538] sm:$0xff]
        %v3954 = vld [vmem:[#allocation16 + $0x540] sm:$0xff]
        %v3955 = vld [vmem:[#allocation16 + $0x548] sm:$0xff]
        %v3956 = vld [vmem:[#allocation16 + $0x550] sm:$0xff]
        %v3957 = vld [vmem:[#allocation16 + $0x558] sm:$0xff]
        %v3958 = vld [vmem:[#allocation16 + $0x560] sm:$0xff]
        %v3959 = vld [vmem:[#allocation16 + $0x568] sm:$0xff]
        %v3960 = vld [vmem:[#allocation16 + $0x570] sm:$0xff]
        %v3961 = vld [vmem:[#allocation16 + $0x578] sm:$0xff]
        %v3962 = vld [vmem:[#allocation16 + $0x580] sm:$0xff]
        %v3963 = vld [vmem:[#allocation16 + $0x588] sm:$0xff]
        %v3964 = vld [vmem:[#allocation16 + $0x590] sm:$0xff]
        %v3965 = vld [vmem:[#allocation16 + $0x598] sm:$0xff]
        %v3966 = vld [vmem:[#allocation16 + $0x5a0] sm:$0xff]
        %v3967 = vld [vmem:[#allocation16 + $0x5a8] sm:$0xff]
        %v3968 = vld [vmem:[#allocation16 + $0x5b0] sm:$0xff]
        %v3969 = vld [vmem:[#allocation16 + $0x5b8] sm:$0xff]
        %v3970 = vld [vmem:[#allocation16 + $0x5c0] sm:$0xff]
        %v3971 = vld [vmem:[#allocation16 + $0x5c8] sm:$0xff]
        %v3972 = vld [vmem:[#allocation16 + $0x5d0] sm:$0xff]
        %v3973 = vld [vmem:[#allocation16 + $0x5d8] sm:$0xff]
        %v3974 = vld [vmem:[#allocation16 + $0x5e0] sm:$0xff]
        %v3975 = vld [vmem:[#allocation16 + $0x5e8] sm:$0xff]
        %v3976 = vld [vmem:[#allocation16 + $0x5f0] sm:$0xff]
        %v3977 = vld [vmem:[#allocation16 + $0x5f8] sm:$0xff]
        %v3978 = vld [vmem:[#allocation16 + $0x600] sm:$0xff]
        %v3979 = vld [vmem:[#allocation16 + $0x608] sm:$0xff]
        %v3980 = vld [vmem:[#allocation16 + $0x610] sm:$0xff]
        %v3981 = vld [vmem:[#allocation16 + $0x618] sm:$0xff]
        %v3982 = vld [vmem:[#allocation16 + $0x620] sm:$0xff]
        %v3983 = vld [vmem:[#allocation16 + $0x628] sm:$0xff]
        %v3984 = vld [vmem:[#allocation16 + $0x630] sm:$0xff]
        %v3985 = vld [vmem:[#allocation16 + $0x638] sm:$0xff]
        %v3986 = vld [vmem:[#allocation16 + $0x640] sm:$0xff]
        %v3987 = vld [vmem:[#allocation16 + $0x648] sm:$0xff]
        %v3988 = vld [vmem:[#allocation16 + $0x650] sm:$0xff]
        %v3989 = vld [vmem:[#allocation16 + $0x658] sm:$0xff]
        %v3990 = vld [vmem:[#allocation16 + $0x660] sm:$0xff]
        %v3991 = vld [vmem:[#allocation16 + $0x668] sm:$0xff]
        %v3992 = vld [vmem:[#allocation16 + $0x670] sm:$0xff]
        %v3993 = vld [vmem:[#allocation16 + $0x678] sm:$0xff]
        %v3994 = vld [vmem:[#allocation16 + $0x680] sm:$0xff]
        %v3995 = vld [vmem:[#allocation16 + $0x688] sm:$0xff]
        %v3996 = vld [vmem:[#allocation16 + $0x690] sm:$0xff]
        %v3997 = vld [vmem:[#allocation16 + $0x698] sm:$0xff]
        %v3998 = vld [vmem:[#allocation16 + $0x6a0] sm:$0xff]
        %v3999 = vld [vmem:[#allocation16 + $0x6a8] sm:$0xff]
        %v4000 = vld [vmem:[#allocation16 + $0x6b0] sm:$0xff]
        %v4001 = vld [vmem:[#allocation16 + $0x6b8] sm:$0xff]
        %v4002 = vld [vmem:[#allocation16 + $0x6c0] sm:$0xff]
        %v4003 = vld [vmem:[#allocation16 + $0x6c8] sm:$0xff]
        %v4004 = vld [vmem:[#allocation16 + $0x6d0] sm:$0xff]
        %v4005 = vld [vmem:[#allocation16 + $0x6d8] sm:$0xff]
        %v4006 = vld [vmem:[#allocation16 + $0x6e0] sm:$0xff]
        %v4007 = vld [vmem:[#allocation16 + $0x6e8] sm:$0xff]
        %v4008 = vld [vmem:[#allocation16 + $0x6f0] sm:$0xff]
        %v4009 = vld [vmem:[#allocation16 + $0x6f8] sm:$0xff]
        %v4010 = vld [vmem:[#allocation16 + $0x700] sm:$0xff]
        %v4011 = vld [vmem:[#allocation16 + $0x708] sm:$0xff]
        %v4012 = vld [vmem:[#allocation16 + $0x710] sm:$0xff]
        %v4013 = vld [vmem:[#allocation16 + $0x718] sm:$0xff]
        %v4014 = vld [vmem:[#allocation16 + $0x720] sm:$0xff]
        %v4015 = vld [vmem:[#allocation16 + $0x728] sm:$0xff]
        %v4016 = vld [vmem:[#allocation16 + $0x730] sm:$0xff]
        %v4017 = vld [vmem:[#allocation16 + $0x738] sm:$0xff]
        %v4018 = vld [vmem:[#allocation16 + $0x740] sm:$0xff]
        %v4019 = vld [vmem:[#allocation16 + $0x748] sm:$0xff]
        %v4020 = vld [vmem:[#allocation16 + $0x750] sm:$0xff]
        %v4021 = vld [vmem:[#allocation16 + $0x758] sm:$0xff]
        %v4022 = vld [vmem:[#allocation16 + $0x760] sm:$0xff]
        %v4023 = vld [vmem:[#allocation16 + $0x768] sm:$0xff]
        %v4024 = vld [vmem:[#allocation16 + $0x770] sm:$0xff]
        %v4025 = vld [vmem:[#allocation16 + $0x778] sm:$0xff]
        %v4026 = vld [vmem:[#allocation16 + $0x780] sm:$0xff]
        %v4027 = vld [vmem:[#allocation16 + $0x788] sm:$0xff]
        %v4028 = vld [vmem:[#allocation16 + $0x790] sm:$0xff]
        %v4029 = vld [vmem:[#allocation16 + $0x798] sm:$0xff]
        %v4030 = vld [vmem:[#allocation16 + $0x7a0] sm:$0xff]
        %v4031 = vld [vmem:[#allocation16 + $0x7a8] sm:$0xff]
        %v4032 = vld [vmem:[#allocation16 + $0x7b0] sm:$0xff]
        %v4033 = vld [vmem:[#allocation16 + $0x7b8] sm:$0xff]
        %v4034 = vld [vmem:[#allocation16 + $0x7c0] sm:$0xff]
        %v4035 = vld [vmem:[#allocation16 + $0x7c8] sm:$0xff]
        %v4036 = vld [vmem:[#allocation16 + $0x7d0] sm:$0xff]
        %v4037 = vld [vmem:[#allocation16 + $0x7d8] sm:$0xff]
        %v4038 = vld [vmem:[#allocation16 + $0x7e0] sm:$0xff]
        %v4039 = vld [vmem:[#allocation16 + $0x7e8] sm:$0xff]
        %v4040 = vld [vmem:[#allocation16 + $0x7f0] sm:$0xff]
        %v4041 = vld [vmem:[#allocation16 + $0x7f8] sm:$0xff]
        %v4042 = vld [vmem:[#allocation16 + $0x800] sm:$0xff]
        %v4043 = vld [vmem:[#allocation16 + $0x808] sm:$0xff]
        %v4044 = vld [vmem:[#allocation16 + $0x810] sm:$0xff]
        %v4045 = vld [vmem:[#allocation16 + $0x818] sm:$0xff]
        %v4046 = vld [vmem:[#allocation16 + $0x820] sm:$0xff]
        %v4047 = vld [vmem:[#allocation16 + $0x828] sm:$0xff]
        %v4048 = vld [vmem:[#allocation16 + $0x830] sm:$0xff]
        %v4049 = vld [vmem:[#allocation16 + $0x838] sm:$0xff]
        %v4050 = vld [vmem:[#allocation16 + $0x840] sm:$0xff]
        %v4051 = vld [vmem:[#allocation16 + $0x848] sm:$0xff]
        %v4052 = vld [vmem:[#allocation16 + $0x850] sm:$0xff]
        %v4053 = vld [vmem:[#allocation16 + $0x858] sm:$0xff]
        %v4054 = vld [vmem:[#allocation16 + $0x860] sm:$0xff]
        %v4055 = vld [vmem:[#allocation16 + $0x868] sm:$0xff]
        %v4056 = vld [vmem:[#allocation16 + $0x870] sm:$0xff]
        %v4057 = vld [vmem:[#allocation16 + $0x878] sm:$0xff]
        %v4058 = vld [vmem:[#allocation16 + $0x880] sm:$0xff]
        %v4059 = vld [vmem:[#allocation16 + $0x888] sm:$0xff]
        %v4060 = vld [vmem:[#allocation16 + $0x890] sm:$0xff]
        %v4061 = vld [vmem:[#allocation16 + $0x898] sm:$0xff]
        %v4062 = vld [vmem:[#allocation16 + $0x8a0] sm:$0xff]
        %v4063 = vld [vmem:[#allocation16 + $0x8a8] sm:$0xff]
        %v4064 = vld [vmem:[#allocation16 + $0x8b0] sm:$0xff]
        %v4065 = vld [vmem:[#allocation16 + $0x8b8] sm:$0xff]
        %v4066 = vld [vmem:[#allocation16 + $0x8c0] sm:$0xff]
        %v4067 = vld [vmem:[#allocation16 + $0x8c8] sm:$0xff]
        %v4068 = vld [vmem:[#allocation16 + $0x8d0] sm:$0xff]
        %v4069 = vld [vmem:[#allocation16 + $0x8d8] sm:$0xff]
        %v4070 = vld [vmem:[#allocation16 + $0x8e0] sm:$0xff]
        %v4071 = vld [vmem:[#allocation16 + $0x8e8] sm:$0xff]
        %v4072 = vld [vmem:[#allocation16 + $0x8f0] sm:$0xff]
        %v4073 = vld [vmem:[#allocation16 + $0x8f8] sm:$0xff]
        %v4074 = vld [vmem:[#allocation16 + $0x900] sm:$0xff]
        %v4075 = vld [vmem:[#allocation16 + $0x908] sm:$0xff]
        %v4076 = vld [vmem:[#allocation16 + $0x910] sm:$0xff]
        %v4077 = vld [vmem:[#allocation16 + $0x918] sm:$0xff]
        %v4078 = vld [vmem:[#allocation16 + $0x920] sm:$0xff]
        %v4079 = vld [vmem:[#allocation16 + $0x928] sm:$0xff]
        %v4080 = vld [vmem:[#allocation16 + $0x930] sm:$0xff]
        %v4081 = vld [vmem:[#allocation16 + $0x938] sm:$0xff]
        %v4082 = vld [vmem:[#allocation16 + $0x940] sm:$0xff]
        %v4083 = vld [vmem:[#allocation16 + $0x948] sm:$0xff]
        %v4084 = vld [vmem:[#allocation16 + $0x950] sm:$0xff]
        %v4085 = vld [vmem:[#allocation16 + $0x958] sm:$0xff]
        %v4086 = vld [vmem:[#allocation16 + $0x960] sm:$0xff]
        %v4087 = vld [vmem:[#allocation16 + $0x968] sm:$0xff]
        %v4088 = vld [vmem:[#allocation16 + $0x970] sm:$0xff]
        %v4089 = vld [vmem:[#allocation16 + $0x978] sm:$0xff]
        %v4090 = vld [vmem:[#allocation16 + $0x980] sm:$0xff]
        %v4091 = vld [vmem:[#allocation16 + $0x988] sm:$0xff]
        %v4092 = vld [vmem:[#allocation16 + $0x990] sm:$0xff]
        %v4093 = vld [vmem:[#allocation16 + $0x998] sm:$0xff]
        %v4094 = vld [vmem:[#allocation16 + $0x9a0] sm:$0xff]
        %v4095 = vld [vmem:[#allocation16 + $0x9a8] sm:$0xff]
        %v4096 = vld [vmem:[#allocation16 + $0x9b0] sm:$0xff]
        %v4097 = vld [vmem:[#allocation16 + $0x9b8] sm:$0xff]
        %v4098 = vld [vmem:[#allocation16 + $0x9c0] sm:$0xff]
        %v4099 = vld [vmem:[#allocation16 + $0x9c8] sm:$0xff]
        %v4100 = vld [vmem:[#allocation16 + $0x9d0] sm:$0xff]
        %v4101 = vld [vmem:[#allocation16 + $0x9d8] sm:$0xff]
        %v4102 = vld [vmem:[#allocation16 + $0x9e0] sm:$0xff]
        %v4103 = vld [vmem:[#allocation16 + $0x9e8] sm:$0xff]
        %v4104 = vld [vmem:[#allocation16 + $0x9f0] sm:$0xff]
        %v4105 = vld [vmem:[#allocation16 + $0x9f8] sm:$0xff]
        %v4106 = vld [vmem:[#allocation16 + $0xa00] sm:$0xff]
        %v4107 = vld [vmem:[#allocation16 + $0xa08] sm:$0xff]
        %v4108 = vld [vmem:[#allocation16 + $0xa10] sm:$0xff]
        %v4109 = vld [vmem:[#allocation16 + $0xa18] sm:$0xff]
        %v4110 = vld [vmem:[#allocation16 + $0xa20] sm:$0xff]
        %v4111 = vld [vmem:[#allocation16 + $0xa28] sm:$0xff]
        %v4112 = vld [vmem:[#allocation16 + $0xa30] sm:$0xff]
        %v4113 = vld [vmem:[#allocation16 + $0xa38] sm:$0xff]
        %v4114 = vld [vmem:[#allocation16 + $0xa40] sm:$0xff]
        %v4115 = vld [vmem:[#allocation16 + $0xa48] sm:$0xff]
        %v4116 = vld [vmem:[#allocation16 + $0xa50] sm:$0xff]
        %v4117 = vld [vmem:[#allocation16 + $0xa58] sm:$0xff]
        %v4118 = vld [vmem:[#allocation16 + $0xa60] sm:$0xff]
        %v4119 = vld [vmem:[#allocation16 + $0xa68] sm:$0xff]
        %v4120 = vld [vmem:[#allocation16 + $0xa70] sm:$0xff]
        %v4121 = vld [vmem:[#allocation16 + $0xa78] sm:$0xff]
        %v4122 = vld [vmem:[#allocation16 + $0xa80] sm:$0xff]
        %v4123 = vld [vmem:[#allocation16 + $0xa88] sm:$0xff]
        %v4124 = vld [vmem:[#allocation16 + $0xa90] sm:$0xff]
        %v4125 = vld [vmem:[#allocation16 + $0xa98] sm:$0xff]
        %v4126 = vld [vmem:[#allocation16 + $0xaa0] sm:$0xff]
        %v4127 = vld [vmem:[#allocation16 + $0xaa8] sm:$0xff]
        %v4128 = vld [vmem:[#allocation16 + $0xab0] sm:$0xff]
        %v4129 = vld [vmem:[#allocation16 + $0xab8] sm:$0xff]
        %v4130 = vld [vmem:[#allocation16 + $0xac0] sm:$0xff]
        %v4131 = vld [vmem:[#allocation16 + $0xac8] sm:$0xff]
        %v4132 = vld [vmem:[#allocation16 + $0xad0] sm:$0xff]
        %v4133 = vld [vmem:[#allocation16 + $0xad8] sm:$0xff]
        %v4134 = vld [vmem:[#allocation16 + $0xae0] sm:$0xff]
        %v4135 = vld [vmem:[#allocation16 + $0xae8] sm:$0xff]
        %v4136 = vld [vmem:[#allocation16 + $0xaf0] sm:$0xff]
        %v4137 = vld [vmem:[#allocation16 + $0xaf8] sm:$0xff]
        %v4138 = vld [vmem:[#allocation16 + $0xb00] sm:$0xff]
        %v4139 = vld [vmem:[#allocation16 + $0xb08] sm:$0xff]
        %v4140 = vld [vmem:[#allocation16 + $0xb10] sm:$0xff]
        %v4141 = vld [vmem:[#allocation16 + $0xb18] sm:$0xff]
        %v4142 = vld [vmem:[#allocation16 + $0xb20] sm:$0xff]
        %v4143 = vld [vmem:[#allocation16 + $0xb28] sm:$0xff]
        %v4144 = vld [vmem:[#allocation16 + $0xb30] sm:$0xff]
        %v4145 = vld [vmem:[#allocation16 + $0xb38] sm:$0xff]
        %v4146 = vmul.f32 %v3631, %v3631
        %v4147 = vmul.f32 %v3633, %v3633
        %v4148 = vmul.f32 %v3744, %v3744
        %v4149 = vmul.f32 %v3637, %v3637
        %v4150 = vmul.f32 %v3639, %v3639
        %v4151 = vmul.f32 %v3749, %v3749
        %4153 = vset.pattern.permute.xlu0 0
        %4154 = vperm.xlu0 %4153, %v3784
        %v4155 = vpop.permute.xlu0 %4154
        %4158 = vset.pattern.permute.xlu0 0
        %4159 = vperm.xlu0 %4158, %v3785
        %v4160 = vpop.permute.xlu0 %4159
        %v4163 = vsel %vm768, %v3782, 0
        %v4166 = vsel %vm768, %v3783, 0
        %4168 = vmatprep.subr.mxu0 %v4147
        %4169 = vmatpush1.msra.mxu0 %v4146
        %4170 = vmatprep.subr.mxu0 %v4150
        %4171 = vmatpush1.msra.mxu0 %v4149
        %4172 = vmatprep.subr.mxu0 0.0
        %4173 = vmatpush1.msra.mxu0 0.0
        %4174 = vmatprep.subr.mxu0 0.0
        %4175 = vmatpush1.msra.mxu0 0.0
        %4176 = vmatprep.subr.mxu0 0.0
        %4177 = vmatpush1.msra.mxu0 0.0
        %4178 = vmatprep.subr.mxu0 0.0
        %4179 = vmatpush1.msra.mxu0 0.0
        %4180 = vmatprep.subr.mxu0 0.0
        %4181 = vmatpush1.msra.mxu0 0.0
        %4182 = vmatprep.subr.mxu0 0.0
        %4183 = vmatpush1.msra.mxu0 0.0
        %4184 = vmatprep.subr.mxu0 0.0
        %4185 = vmatpush1.msra.mxu0 0.0
        %4186 = vmatprep.subr.mxu0 0.0
        %4187 = vmatpush1.msra.mxu0 0.0
        %4188 = vmatprep.subr.mxu0 0.0
        %4189 = vmatpush1.msra.mxu0 0.0
        %4190 = vmatprep.subr.mxu0 0.0
        %4191 = vmatpush1.msra.mxu0 0.0
        %4192 = vmatprep.subr.mxu0 0.0
        %4193 = vmatpush1.msra.mxu0 0.0
        %4194 = vmatprep.subr.mxu0 0.0
        %4195 = vmatpush1.msra.mxu0 0.0
        %4196 = vmatprep.subr.mxu0 0.0
        %4197 = vmatpush1.msra.mxu0 0.0
        %4198 = vmatprep.subr.mxu0 0.0
        %4199 = vmatpush1.msra.mxu0 0.0
        %4200 = vmatprep.subr.mxu0 0.0
        %4201 = vmatpush1.msra.mxu0 0.0
        %4202 = vmatprep.subr.mxu0 0.0
        %4203 = vmatpush1.msra.mxu0 0.0
        %4204 = vmatprep.subr.mxu0 0.0
        %4205 = vmatpush1.msra.mxu0 0.0
        %4206 = vmatprep.subr.mxu0 0.0
        %4207 = vmatpush1.msra.mxu0 0.0
        %4208 = vmatprep.subr.mxu0 0.0
        %4209 = vmatpush1.msra.mxu0 0.0
        %4210 = vmatprep.subr.mxu0 0.0
        %4211 = vmatpush1.msra.mxu0 0.0
        %4212 = vmatprep.subr.mxu0 0.0
        %4213 = vmatpush1.msra.mxu0 0.0
        %4214 = vmatprep.subr.mxu0 0.0
        %4215 = vmatpush1.msra.mxu0 0.0
        %4216 = vmatprep.subr.mxu0 0.0
        %4217 = vmatpush1.msra.mxu0 0.0
        %4218 = vmatprep.subr.mxu0 0.0
        %4219 = vmatpush1.msra.mxu0 0.0
        %4220 = vmatprep.subr.mxu0 0.0
        %4221 = vmatpush1.msra.mxu0 0.0
        %4222 = vmatprep.subr.mxu0 0.0
        %4223 = vmatpush1.msra.mxu0 0.0
        %4224 = vmatprep.subr.mxu0 0.0
        %4225 = vmatpush1.msra.mxu0 0.0
        %4226 = vmatprep.subr.mxu0 0.0
        %4227 = vmatpush1.msra.mxu0 0.0
        %4228 = vmatprep.subr.mxu0 0.0
        %4229 = vmatpush1.msra.mxu0 0.0
        %4230 = vmatprep.subr.mxu0 0.0
        %4231 = vmatpush1.msra.mxu0 0.0
        %4232 = vmatprep.mubr.f32.mxu0 0.0
        %4233 = vmatmul.mubr.f32.gmra.mrb[0].mxu0 %v4163
        %v4234 = vpop.f32.mrb[0].mxu0
        %v4235 = vadd.f32 %v4155, %v4234
        %v4236 = vpop.f32.mrb[0].mxu0
        %v4237 = vadd.f32 %v4155, %v4236
        %4238 = vmatprep.mubr.f32.mxu0 0.0
        %4239 = vmatmul.mubr.f32.gmra.mrb[0].mxu0 %v4166
        %v4240 = vpop.f32.mrb[0].mxu0
        %v4241 = vadd.f32 %v4160, %v4240
        %v4242 = vpop.f32.mrb[0].mxu0
        %v4243 = vadd.f32 %v4160, %v4242
        %4244 = vdwg.mxu0
        %4245 = vmatprep.subr.mxu0 0.0
        %4246 = vmatpush1.msra.mxu0 %v4148
        %4247 = vmatprep.subr.mxu0 0.0
        %4248 = vmatpush1.msra.mxu0 %v4151
        %4249 = vmatprep.subr.mxu0 0.0
        %4250 = vmatpush1.msra.mxu0 0.0
        %4251 = vmatprep.subr.mxu0 0.0
        %4252 = vmatpush1.msra.mxu0 0.0
        %4253 = vmatprep.subr.mxu0 0.0
        %4254 = vmatpush1.msra.mxu0 0.0
        %4255 = vmatprep.subr.mxu0 0.0
        %4256 = vmatpush1.msra.mxu0 0.0
        %4257 = vmatprep.subr.mxu0 0.0
        %4258 = vmatpush1.msra.mxu0 0.0
        %4259 = vmatprep.subr.mxu0 0.0
        %4260 = vmatpush1.msra.mxu0 0.0
        %4261 = vmatprep.subr.mxu0 0.0
        %4262 = vmatpush1.msra.mxu0 0.0
        %4263 = vmatprep.subr.mxu0 0.0
        %4264 = vmatpush1.msra.mxu0 0.0
        %4265 = vmatprep.subr.mxu0 0.0
        %4266 = vmatpush1.msra.mxu0 0.0
        %4267 = vmatprep.subr.mxu0 0.0
        %4268 = vmatpush1.msra.mxu0 0.0
        %4269 = vmatprep.subr.mxu0 0.0
        %4270 = vmatpush1.msra.mxu0 0.0
        %4271 = vmatprep.subr.mxu0 0.0
        %4272 = vmatpush1.msra.mxu0 0.0
        %4273 = vmatprep.subr.mxu0 0.0
        %4274 = vmatpush1.msra.mxu0 0.0
        %4275 = vmatprep.subr.mxu0 0.0
        %4276 = vmatpush1.msra.mxu0 0.0
        %4277 = vmatprep.subr.mxu0 0.0
        %4278 = vmatpush1.msra.mxu0 0.0
        %4279 = vmatprep.subr.mxu0 0.0
        %4280 = vmatpush1.msra.mxu0 0.0
        %4281 = vmatprep.subr.mxu0 0.0
        %4282 = vmatpush1.msra.mxu0 0.0
        %4283 = vmatprep.subr.mxu0 0.0
        %4284 = vmatpush1.msra.mxu0 0.0
        %4285 = vmatprep.subr.mxu0 0.0
        %4286 = vmatpush1.msra.mxu0 0.0
        %4287 = vmatprep.subr.mxu0 0.0
        %4288 = vmatpush1.msra.mxu0 0.0
        %4289 = vmatprep.subr.mxu0 0.0
        %4290 = vmatpush1.msra.mxu0 0.0
        %4291 = vmatprep.subr.mxu0 0.0
        %4292 = vmatpush1.msra.mxu0 0.0
        %4293 = vmatprep.subr.mxu0 0.0
        %4294 = vmatpush1.msra.mxu0 0.0
        %4295 = vmatprep.subr.mxu0 0.0
        %4296 = vmatpush1.msra.mxu0 0.0
        %4297 = vmatprep.subr.mxu0 0.0
        %4298 = vmatpush1.msra.mxu0 0.0
        %4299 = vmatprep.subr.mxu0 0.0
        %4300 = vmatpush1.msra.mxu0 0.0
        %4301 = vmatprep.subr.mxu0 0.0
        %4302 = vmatpush1.msra.mxu0 0.0
        %4303 = vmatprep.subr.mxu0 0.0
        %4304 = vmatpush1.msra.mxu0 0.0
        %4305 = vmatprep.subr.mxu0 0.0
        %4306 = vmatpush1.msra.mxu0 0.0
        %4307 = vmatprep.subr.mxu0 0.0
        %4308 = vmatpush1.msra.mxu0 0.0
        %4309 = vmatprep.mubr.f32.mxu0 0.0
        %4310 = vmatmul.mubr.f32.gmra.mrb[0].mxu0 %v4163
        %v4311 = vpop.f32.mrb[0].mxu0
        %v4312 = vadd.f32 %v4155, %v4311
        %v4313 = vpop.f32.mrb[0].mxu0
        %4314 = vmatprep.mubr.f32.mxu0 0.0
        %4315 = vmatmul.mubr.f32.gmra.mrb[0].mxu0 %v4166
        %v4316 = vpop.f32.mrb[0].mxu0
        %v4317 = vadd.f32 %v4160, %v4316
        %v4318 = vpop.f32.mrb[0].mxu0
        %4319 = vdwg.mxu0
        %v4320 = vrsqrt.pop %v4235
        %v4321 = vmul.f32 %v4235, %v4320
        %vm4322 = vcmp.eq.f32.partialorder %v4235, inf
        %v4323 = vsel %vm4322, %v4235, %v4321
        %vm4324 = vcmp.eq.f32.partialorder %v4235, 0.0
        %v4325 = vand.u32 %v4235, 2147483648
        %v4326 = vsel %vm4324, %v4325, %v4323
        %v4327 = vrsqrt.pop %v4237
        %v4328 = vmul.f32 %v4237, %v4327
        %vm4329 = vcmp.eq.f32.partialorder %v4237, inf
        %v4330 = vsel %vm4329, %v4237, %v4328
        %vm4331 = vcmp.eq.f32.partialorder %v4237, 0.0
        %v4332 = vand.u32 %v4237, 2147483648
        %v4333 = vsel %vm4331, %v4332, %v4330
        %v4334 = vrsqrt.pop %v4312
        %v4335 = vmul.f32 %v4312, %v4334
        %vm4336 = vcmp.eq.f32.partialorder %v4312, inf
        %v4337 = vsel %vm4336, %v4312, %v4335
        %vm4338 = vcmp.eq.f32.partialorder %v4312, 0.0
        %v4339 = vand.u32 %v4312, 2147483648
        %v4340 = vsel %vm4338, %v4339, %v4337
        %v4341 = vrsqrt.pop %v4241
        %v4342 = vmul.f32 %v4241, %v4341
        %vm4343 = vcmp.eq.f32.partialorder %v4241, inf
        %v4344 = vsel %vm4343, %v4241, %v4342
        %vm4345 = vcmp.eq.f32.partialorder %v4241, 0.0
        %v4346 = vand.u32 %v4241, 2147483648
        %v4347 = vsel %vm4345, %v4346, %v4344
        %v4348 = vrsqrt.pop %v4243
        %v4349 = vmul.f32 %v4243, %v4348
        %vm4350 = vcmp.eq.f32.partialorder %v4243, inf
        %v4351 = vsel %vm4350, %v4243, %v4349
        %vm4352 = vcmp.eq.f32.partialorder %v4243, 0.0
        %v4353 = vand.u32 %v4243, 2147483648
        %v4354 = vsel %vm4352, %v4353, %v4351
        %v4355 = vrsqrt.pop %v4317
        %v4356 = vmul.f32 %v4317, %v4355
        %vm4357 = vcmp.eq.f32.partialorder %v4317, inf
        %v4358 = vsel %vm4357, %v4317, %v4356
        %vm4359 = vcmp.eq.f32.partialorder %v4317, 0.0
        %v4360 = vand.u32 %v4317, 2147483648
        %v4361 = vsel %vm4359, %v4360, %v4358
        %v4362 = vmul.f32 %v3631, %v4326
        %v4363 = vmul.f32 %v3633, %v4333
        %v4364 = vmul.f32 %v3744, %v4340
        %v4365 = vmul.f32 %v3637, %v4347
        %v4366 = vmul.f32 %v3639, %v4354
        %v4367 = vmul.f32 %v3749, %v4361
        %v4368 = vmul.f32 %v3643, %v3643
        %v4369 = vmul.f32 %v3645, %v3645
        %v4370 = vmul.f32 %v3754, %v3754
        %v4371 = vmul.f32 %v3649, %v3649
        %v4372 = vmul.f32 %v3651, %v3651
        %v4373 = vmul.f32 %v3759, %v3759
        %4374 = vmatprep.subr.mxu0 %v4369
        %4375 = vmatpush1.msra.mxu0 %v4368
        %4376 = vmatprep.subr.mxu0 %v4372
        %4377 = vmatpush1.msra.mxu0 %v4371
        %4378 = vmatprep.subr.mxu0 0.0
        %4379 = vmatpush1.msra.mxu0 0.0
        %4380 = vmatprep.subr.mxu0 0.0
        %4381 = vmatpush1.msra.mxu0 0.0
        %4382 = vmatprep.subr.mxu0 0.0
        %4383 = vmatpush1.msra.mxu0 0.0
        %4384 = vmatprep.subr.mxu0 0.0
        %4385 = vmatpush1.msra.mxu0 0.0
        %4386 = vmatprep.subr.mxu0 0.0
        %4387 = vmatpush1.msra.mxu0 0.0
        %4388 = vmatprep.subr.mxu0 0.0
        %4389 = vmatpush1.msra.mxu0 0.0
        %4390 = vmatprep.subr.mxu0 0.0
        %4391 = vmatpush1.msra.mxu0 0.0
        %4392 = vmatprep.subr.mxu0 0.0
        %4393 = vmatpush1.msra.mxu0 0.0
        %4394 = vmatprep.subr.mxu0 0.0
        %4395 = vmatpush1.msra.mxu0 0.0
        %4396 = vmatprep.subr.mxu0 0.0
        %4397 = vmatpush1.msra.mxu0 0.0
        %4398 = vmatprep.subr.mxu0 0.0
        %4399 = vmatpush1.msra.mxu0 0.0
        %4400 = vmatprep.subr.mxu0 0.0
        %4401 = vmatpush1.msra.mxu0 0.0
        %4402 = vmatprep.subr.mxu0 0.0
        %4403 = vmatpush1.msra.mxu0 0.0
        %4404 = vmatprep.subr.mxu0 0.0
        %4405 = vmatpush1.msra.mxu0 0.0
        %4406 = vmatprep.subr.mxu0 0.0
        %4407 = vmatpush1.msra.mxu0 0.0
        %4408 = vmatprep.subr.mxu0 0.0
        %4409 = vmatpush1.msra.mxu0 0.0
        %4410 = vmatprep.subr.mxu0 0.0
        %4411 = vmatpush1.msra.mxu0 0.0
        %4412 = vmatprep.subr.mxu0 0.0
        %4413 = vmatpush1.msra.mxu0 0.0
        %4414 = vmatprep.subr.mxu0 0.0
        %4415 = vmatpush1.msra.mxu0 0.0
        %4416 = vmatprep.subr.mxu0 0.0
        %4417 = vmatpush1.msra.mxu0 0.0
        %4418 = vmatprep.subr.mxu0 0.0
        %4419 = vmatpush1.msra.mxu0 0.0
        %4420 = vmatprep.subr.mxu0 0.0
        %4421 = vmatpush1.msra.mxu0 0.0
        %4422 = vmatprep.subr.mxu0 0.0
        %4423 = vmatpush1.msra.mxu0 0.0
        %4424 = vmatprep.subr.mxu0 0.0
        %4425 = vmatpush1.msra.mxu0 0.0
        %4426 = vmatprep.subr.mxu0 0.0
        %4427 = vmatpush1.msra.mxu0 0.0
        %4428 = vmatprep.subr.mxu0 0.0
        %4429 = vmatpush1.msra.mxu0 0.0
        %4430 = vmatprep.subr.mxu0 0.0
        %4431 = vmatpush1.msra.mxu0 0.0
        %4432 = vmatprep.subr.mxu0 0.0
        %4433 = vmatpush1.msra.mxu0 0.0
        %4434 = vmatprep.subr.mxu0 0.0
        %4435 = vmatpush1.msra.mxu0 0.0
        %4436 = vmatprep.subr.mxu0 0.0
        %4437 = vmatpush1.msra.mxu0 0.0
        %4438 = vmatprep.mubr.f32.mxu0 0.0
        %4439 = vmatmul.mubr.f32.gmra.mrb[0].mxu0 %v4163
        %v4440 = vpop.f32.mrb[0].mxu0
        %v4441 = vadd.f32 %v4155, %v4440
        %v4442 = vpop.f32.mrb[0].mxu0
        %v4443 = vadd.f32 %v4155, %v4442
        %4444 = vmatprep.mubr.f32.mxu0 0.0
        %4445 = vmatmul.mubr.f32.gmra.mrb[0].mxu0 %v4166
        %v4446 = vpop.f32.mrb[0].mxu0
        %v4447 = vadd.f32 %v4160, %v4446
        %v4448 = vpop.f32.mrb[0].mxu0
        %v4449 = vadd.f32 %v4160, %v4448
        %4450 = vdwg.mxu0
        %4451 = vmatprep.subr.mxu0 0.0
        %4452 = vmatpush1.msra.mxu0 %v4370
        %4453 = vmatprep.subr.mxu0 0.0
        %4454 = vmatpush1.msra.mxu0 %v4373
        %4455 = vmatprep.subr.mxu0 0.0
        %4456 = vmatpush1.msra.mxu0 0.0
        %4457 = vmatprep.subr.mxu0 0.0
        %4458 = vmatpush1.msra.mxu0 0.0
        %4459 = vmatprep.subr.mxu0 0.0
        %4460 = vmatpush1.msra.mxu0 0.0
        %4461 = vmatprep.subr.mxu0 0.0
        %4462 = vmatpush1.msra.mxu0 0.0
        %4463 = vmatprep.subr.mxu0 0.0
        %4464 = vmatpush1.msra.mxu0 0.0
        %4465 = vmatprep.subr.mxu0 0.0
        %4466 = vmatpush1.msra.mxu0 0.0
        %4467 = vmatprep.subr.mxu0 0.0
        %4468 = vmatpush1.msra.mxu0 0.0
        %4469 = vmatprep.subr.mxu0 0.0
        %4470 = vmatpush1.msra.mxu0 0.0
        %4471 = vmatprep.subr.mxu0 0.0
        %4472 = vmatpush1.msra.mxu0 0.0
        %4473 = vmatprep.subr.mxu0 0.0
        %4474 = vmatpush1.msra.mxu0 0.0
        %4475 = vmatprep.subr.mxu0 0.0
        %4476 = vmatpush1.msra.mxu0 0.0
        %4477 = vmatprep.subr.mxu0 0.0
        %4478 = vmatpush1.msra.mxu0 0.0
        %4479 = vmatprep.subr.mxu0 0.0
        %4480 = vmatpush1.msra.mxu0 0.0
        %4481 = vmatprep.subr.mxu0 0.0
        %4482 = vmatpush1.msra.mxu0 0.0
        %4483 = vmatprep.subr.mxu0 0.0
        %4484 = vmatpush1.msra.mxu0 0.0
        %4485 = vmatprep.subr.mxu0 0.0
        %4486 = vmatpush1.msra.mxu0 0.0
        %4487 = vmatprep.subr.mxu0 0.0
        %4488 = vmatpush1.msra.mxu0 0.0
        %4489 = vmatprep.subr.mxu0 0.0
        %4490 = vmatpush1.msra.mxu0 0.0
        %4491 = vmatprep.subr.mxu0 0.0
        %4492 = vmatpush1.msra.mxu0 0.0
        %4493 = vmatprep.subr.mxu0 0.0
        %4494 = vmatpush1.msra.mxu0 0.0
        %4495 = vmatprep.subr.mxu0 0.0
        %4496 = vmatpush1.msra.mxu0 0.0
        %4497 = vmatprep.subr.mxu0 0.0
        %4498 = vmatpush1.msra.mxu0 0.0
        %4499 = vmatprep.subr.mxu0 0.0
        %4500 = vmatpush1.msra.mxu0 0.0
        %4501 = vmatprep.subr.mxu0 0.0
        %4502 = vmatpush1.msra.mxu0 0.0
        %4503 = vmatprep.subr.mxu0 0.0
        %4504 = vmatpush1.msra.mxu0 0.0
        %4505 = vmatprep.subr.mxu0 0.0
        %4506 = vmatpush1.msra.mxu0 0.0
        %4507 = vmatprep.subr.mxu0 0.0
        %4508 = vmatpush1.msra.mxu0 0.0
        %4509 = vmatprep.subr.mxu0 0.0
        %4510 = vmatpush1.msra.mxu0 0.0
        %4511 = vmatprep.subr.mxu0 0.0
        %4512 = vmatpush1.msra.mxu0 0.0
        %4513 = vmatprep.subr.mxu0 0.0
        %4514 = vmatpush1.msra.mxu0 0.0
        %4515 = vmatprep.mubr.f32.mxu0 0.0
        %4516 = vmatmul.mubr.f32.gmra.mrb[0].mxu0 %v4163
        %v4517 = vpop.f32.mrb[0].mxu0
        %v4518 = vadd.f32 %v4155, %v4517
        %v4519 = vpop.f32.mrb[0].mxu0
        %4520 = vmatprep.mubr.f32.mxu0 0.0
        %4521 = vmatmul.mubr.f32.gmra.mrb[0].mxu0 %v4166
        %v4522 = vpop.f32.mrb[0].mxu0
        %v4523 = vadd.f32 %v4160, %v4522
        %v4524 = vpop.f32.mrb[0].mxu0
        %4525 = vdwg.mxu0
        %v4526 = vrsqrt.pop %v4441
        %v4527 = vmul.f32 %v4441, %v4526
        %vm4528 = vcmp.eq.f32.partialorder %v4441, inf
        %v4529 = vsel %vm4528, %v4441, %v4527
        %vm4530 = vcmp.eq.f32.partialorder %v4441, 0.0
        %v4531 = vand.u32 %v4441, 2147483648
        %v4532 = vsel %vm4530, %v4531, %v4529
        %v4533 = vrsqrt.pop %v4443
        %v4534 = vmul.f32 %v4443, %v4533
        %vm4535 = vcmp.eq.f32.partialorder %v4443, inf
        %v4536 = vsel %vm4535, %v4443, %v4534
        %vm4537 = vcmp.eq.f32.partialorder %v4443, 0.0
        %v4538 = vand.u32 %v4443, 2147483648
        %v4539 = vsel %vm4537, %v4538, %v4536
        %v4540 = vrsqrt.pop %v4518
        %v4541 = vmul.f32 %v4518, %v4540
        %vm4542 = vcmp.eq.f32.partialorder %v4518, inf
        %v4543 = vsel %vm4542, %v4518, %v4541
        %vm4544 = vcmp.eq.f32.partialorder %v4518, 0.0
        %v4545 = vand.u32 %v4518, 2147483648
        %v4546 = vsel %vm4544, %v4545, %v4543
        %v4547 = vrsqrt.pop %v4447
        %v4548 = vmul.f32 %v4447, %v4547
        %vm4549 = vcmp.eq.f32.partialorder %v4447, inf
        %v4550 = vsel %vm4549, %v4447, %v4548
        %vm4551 = vcmp.eq.f32.partialorder %v4447, 0.0
        %v4552 = vand.u32 %v4447, 2147483648
        %v4553 = vsel %vm4551, %v4552, %v4550
        %v4554 = vrsqrt.pop %v4449
        %v4555 = vmul.f32 %v4449, %v4554
        %vm4556 = vcmp.eq.f32.partialorder %v4449, inf
        %v4557 = vsel %vm4556, %v4449, %v4555
        %vm4558 = vcmp.eq.f32.partialorder %v4449, 0.0
        %v4559 = vand.u32 %v4449, 2147483648
        %v4560 = vsel %vm4558, %v4559, %v4557
        %v4561 = vrsqrt.pop %v4523
        %v4562 = vmul.f32 %v4523, %v4561
        %vm4563 = vcmp.eq.f32.partialorder %v4523, inf
        %v4564 = vsel %vm4563, %v4523, %v4562
        %vm4565 = vcmp.eq.f32.partialorder %v4523, 0.0
        %v4566 = vand.u32 %v4523, 2147483648
        %v4567 = vsel %vm4565, %v4566, %v4564
        %v4568 = vmul.f32 %v3643, %v4532
        %v4569 = vmul.f32 %v3645, %v4539
        %v4570 = vmul.f32 %v3754, %v4546
        %v4571 = vmul.f32 %v3649, %v4553
        %v4572 = vmul.f32 %v3651, %v4560
        %v4573 = vmul.f32 %v3759, %v4567
        %vm4574 = vcmask 261120
        %v4576 = vsel %vm4574, %v4570, 0
        %v4579 = vsel %vm4574, %v4573, 0
        %4581 = vmatprep.subr.mxu0 %v3787
        %4582 = vmatpush1.msra.mxu0 %v3786
        %4583 = vmatprep.subr.mxu0 %v3797
        %4584 = vmatpush1.msra.mxu0 %v3796
        %4585 = vmatprep.subr.mxu0 %v3807
        %4586 = vmatpush1.msra.mxu0 %v3806
        %4587 = vmatprep.subr.mxu0 %v3817
        %4588 = vmatpush1.msra.mxu0 %v3816
        %4589 = vmatprep.subr.mxu0 %v3827
        %4590 = vmatpush1.msra.mxu0 %v3826
        %4591 = vmatprep.subr.mxu0 %v3837
        %4592 = vmatpush1.msra.mxu0 %v3836
        %4593 = vmatprep.subr.mxu0 %v3847
        %4594 = vmatpush1.msra.mxu0 %v3846
        %4595 = vmatprep.subr.mxu0 %v3857
        %4596 = vmatpush1.msra.mxu0 %v3856
        %4597 = vmatprep.subr.mxu0 %v3867
        %4598 = vmatpush1.msra.mxu0 %v3866
        %4599 = vmatprep.subr.mxu0 %v3877
        %4600 = vmatpush1.msra.mxu0 %v3876
        %4601 = vmatprep.subr.mxu0 %v3887
        %4602 = vmatpush1.msra.mxu0 %v3886
        %4603 = vmatprep.subr.mxu0 %v3897
        %4604 = vmatpush1.msra.mxu0 %v3896
        %4605 = vmatprep.subr.mxu0 %v3907
        %4606 = vmatpush1.msra.mxu0 %v3906
        %4607 = vmatprep.subr.mxu0 %v3917
        %4608 = vmatpush1.msra.mxu0 %v3916
        %4609 = vmatprep.subr.mxu0 %v3927
        %4610 = vmatpush1.msra.mxu0 %v3926
        %4611 = vmatprep.subr.mxu0 %v3937
        %4612 = vmatpush1.msra.mxu0 %v3936
        %4613 = vmatprep.subr.mxu0 %v3947
        %4614 = vmatpush1.msra.mxu0 %v3946
        %4615 = vmatprep.subr.mxu0 %v3957
        %4616 = vmatpush1.msra.mxu0 %v3956
        %4617 = vmatprep.subr.mxu0 %v3967
        %4618 = vmatpush1.msra.mxu0 %v3966
        %4619 = vmatprep.subr.mxu0 %v3977
        %4620 = vmatpush1.msra.mxu0 %v3976
        %4621 = vmatprep.subr.mxu0 %v3987
        %4622 = vmatpush1.msra.mxu0 %v3986
        %4623 = vmatprep.subr.mxu0 %v3997
        %4624 = vmatpush1.msra.mxu0 %v3996
        %4625 = vmatprep.subr.mxu0 %v4007
        %4626 = vmatpush1.msra.mxu0 %v4006
        %4627 = vmatprep.subr.mxu0 %v4017
        %4628 = vmatpush1.msra.mxu0 %v4016
        %4629 = vmatprep.subr.mxu0 %v4027
        %4630 = vmatpush1.msra.mxu0 %v4026
        %4631 = vmatprep.subr.mxu0 %v4037
        %4632 = vmatpush1.msra.mxu0 %v4036
        %4633 = vmatprep.subr.mxu0 %v4047
        %4634 = vmatpush1.msra.mxu0 %v4046
        %4635 = vmatprep.subr.mxu0 %v4057
        %4636 = vmatpush1.msra.mxu0 %v4056
        %4637 = vmatprep.subr.mxu0 %v4067
        %4638 = vmatpush1.msra.mxu0 %v4066
        %4639 = vmatprep.subr.mxu0 %v4077
        %4640 = vmatpush1.msra.mxu0 %v4076
        %4641 = vmatprep.subr.mxu0 %v4087
        %4642 = vmatpush1.msra.mxu0 %v4086
        %4643 = vmatprep.subr.mxu0 %v4097
        %4644 = vmatpush1.msra.mxu0 %v4096
        %4645 = vmatprep.mubr.f32.mxu0 %v4569
        %4646 = vmatmul.mubr.f32.gmra.mrb[0].mxu0 %v4568
        %v4647 = vpop.f32.mrb[0].mxu0
        %v4648 = vadd.f32 0.0, %v4647
        %v4649 = vpop.f32.mrb[0].mxu0
        %v4650 = vadd.f32 0.0, %v4649
        %4651 = vmatprep.mubr.f32.mxu0 %v4572
        %4652 = vmatmul.mubr.f32.gmra.mrb[0].mxu0 %v4571
        %v4653 = vpop.f32.mrb[0].mxu0
        %v4654 = vadd.f32 0.0, %v4653
        %v4655 = vpop.f32.mrb[0].mxu0
        %v4656 = vadd.f32 0.0, %v4655
        %4657 = vdwg.mxu0
        %4658 = vmatprep.subr.mxu0 %v4107
        %4659 = vmatpush1.msra.mxu0 %v4106
        %4660 = vmatprep.subr.mxu0 %v4117
        %4661 = vmatpush1.msra.mxu0 %v4116
        %4662 = vmatprep.subr.mxu0 %v4127
        %4663 = vmatpush1.msra.mxu0 %v4126
        %4664 = vmatprep.subr.mxu0 %v4137
        %4665 = vmatpush1.msra.mxu0 %v4136
        %4666 = vmatprep.subr.mxu0 0.0
        %4667 = vmatpush1.msra.mxu0 0.0
        %4668 = vmatprep.subr.mxu0 0.0
        %4669 = vmatpush1.msra.mxu0 0.0
        %4670 = vmatprep.subr.mxu0 0.0
        %4671 = vmatpush1.msra.mxu0 0.0
        %4672 = vmatprep.subr.mxu0 0.0
        %4673 = vmatpush1.msra.mxu0 0.0
        %4674 = vmatprep.subr.mxu0 0.0
        %4675 = vmatpush1.msra.mxu0 0.0
        %4676 = vmatprep.subr.mxu0 0.0
        %4677 = vmatpush1.msra.mxu0 0.0
        %4678 = vmatprep.subr.mxu0 0.0
        %4679 = vmatpush1.msra.mxu0 0.0
        %4680 = vmatprep.subr.mxu0 0.0
        %4681 = vmatpush1.msra.mxu0 0.0
        %4682 = vmatprep.subr.mxu0 0.0
        %4683 = vmatpush1.msra.mxu0 0.0
        %4684 = vmatprep.subr.mxu0 0.0
        %4685 = vmatpush1.msra.mxu0 0.0
        %4686 = vmatprep.subr.mxu0 0.0
        %4687 = vmatpush1.msra.mxu0 0.0
        %4688 = vmatprep.subr.mxu0 0.0
        %4689 = vmatpush1.msra.mxu0 0.0
        %4690 = vmatprep.subr.mxu0 0.0
        %4691 = vmatpush1.msra.mxu0 0.0
        %4692 = vmatprep.subr.mxu0 0.0
        %4693 = vmatpush1.msra.mxu0 0.0
        %4694 = vmatprep.subr.mxu0 0.0
        %4695 = vmatpush1.msra.mxu0 0.0
        %4696 = vmatprep.subr.mxu0 0.0
        %4697 = vmatpush1.msra.mxu0 0.0
        %4698 = vmatprep.subr.mxu0 0.0
        %4699 = vmatpush1.msra.mxu0 0.0
        %4700 = vmatprep.subr.mxu0 0.0
        %4701 = vmatpush1.msra.mxu0 0.0
        %4702 = vmatprep.subr.mxu0 0.0
        %4703 = vmatpush1.msra.mxu0 0.0
        %4704 = vmatprep.subr.mxu0 0.0
        %4705 = vmatpush1.msra.mxu0 0.0
        %4706 = vmatprep.subr.mxu0 0.0
        %4707 = vmatpush1.msra.mxu0 0.0
        %4708 = vmatprep.subr.mxu0 0.0
        %4709 = vmatpush1.msra.mxu0 0.0
        %4710 = vmatprep.subr.mxu0 0.0
        %4711 = vmatpush1.msra.mxu0 0.0
        %4712 = vmatprep.subr.mxu0 0.0
        %4713 = vmatpush1.msra.mxu0 0.0
        %4714 = vmatprep.subr.mxu0 0.0
        %4715 = vmatpush1.msra.mxu0 0.0
        %4716 = vmatprep.subr.mxu0 0.0
        %4717 = vmatpush1.msra.mxu0 0.0
        %4718 = vmatprep.subr.mxu0 0.0
        %4719 = vmatpush1.msra.mxu0 0.0
        %4720 = vmatprep.subr.mxu0 0.0
        %4721 = vmatpush1.msra.mxu0 0.0
        %4722 = vmatprep.mubr.f32.mxu0 0.0
        %4723 = vmatmul.mubr.f32.gmra.mrb[0].mxu0 %v4576
        %v4724 = vpop.f32.mrb[0].mxu0
        %v4725 = vadd.f32 %v4648, %v4724
        %v4726 = vpop.f32.mrb[0].mxu0
        %v4727 = vadd.f32 %v4650, %v4726
        %4728 = vmatprep.mubr.f32.mxu0 0.0
        %4729 = vmatmul.mubr.f32.gmra.mrb[0].mxu0 %v4579
        %v4730 = vpop.f32.mrb[0].mxu0
        %v4731 = vadd.f32 %v4654, %v4730
        %v4732 = vpop.f32.mrb[0].mxu0
        %v4733 = vadd.f32 %v4656, %v4732
        %4734 = vdwg.mxu0
        %4735 = vmatprep.subr.mxu0 %v3789
        %4736 = vmatpush1.msra.mxu0 %v3788
        %4737 = vmatprep.subr.mxu0 %v3799
        %4738 = vmatpush1.msra.mxu0 %v3798
        %4739 = vmatprep.subr.mxu0 %v3809
        %4740 = vmatpush1.msra.mxu0 %v3808
        %4741 = vmatprep.subr.mxu0 %v3819
        %4742 = vmatpush1.msra.mxu0 %v3818
        %4743 = vmatprep.subr.mxu0 %v3829
        %4744 = vmatpush1.msra.mxu0 %v3828
        %4745 = vmatprep.subr.mxu0 %v3839
        %4746 = vmatpush1.msra.mxu0 %v3838
        %4747 = vmatprep.subr.mxu0 %v3849
        %4748 = vmatpush1.msra.mxu0 %v3848
        %4749 = vmatprep.subr.mxu0 %v3859
        %4750 = vmatpush1.msra.mxu0 %v3858
        %4751 = vmatprep.subr.mxu0 %v3869
        %4752 = vmatpush1.msra.mxu0 %v3868
        %4753 = vmatprep.subr.mxu0 %v3879
        %4754 = vmatpush1.msra.mxu0 %v3878
        %4755 = vmatprep.subr.mxu0 %v3889
        %4756 = vmatpush1.msra.mxu0 %v3888
        %4757 = vmatprep.subr.mxu0 %v3899
        %4758 = vmatpush1.msra.mxu0 %v3898
        %4759 = vmatprep.subr.mxu0 %v3909
        %4760 = vmatpush1.msra.mxu0 %v3908
        %4761 = vmatprep.subr.mxu0 %v3919
        %4762 = vmatpush1.msra.mxu0 %v3918
        %4763 = vmatprep.subr.mxu0 %v3929
        %4764 = vmatpush1.msra.mxu0 %v3928
        %4765 = vmatprep.subr.mxu0 %v3939
        %4766 = vmatpush1.msra.mxu0 %v3938
        %4767 = vmatprep.subr.mxu0 %v3949
        %4768 = vmatpush1.msra.mxu0 %v3948
        %4769 = vmatprep.subr.mxu0 %v3959
        %4770 = vmatpush1.msra.mxu0 %v3958
        %4771 = vmatprep.subr.mxu0 %v3969
        %4772 = vmatpush1.msra.mxu0 %v3968
        %4773 = vmatprep.subr.mxu0 %v3979
        %4774 = vmatpush1.msra.mxu0 %v3978
        %4775 = vmatprep.subr.mxu0 %v3989
        %4776 = vmatpush1.msra.mxu0 %v3988
        %4777 = vmatprep.subr.mxu0 %v3999
        %4778 = vmatpush1.msra.mxu0 %v3998
        %4779 = vmatprep.subr.mxu0 %v4009
        %4780 = vmatpush1.msra.mxu0 %v4008
        %4781 = vmatprep.subr.mxu0 %v4019
        %4782 = vmatpush1.msra.mxu0 %v4018
        %4783 = vmatprep.subr.mxu0 %v4029
        %4784 = vmatpush1.msra.mxu0 %v4028
        %4785 = vmatprep.subr.mxu0 %v4039
        %4786 = vmatpush1.msra.mxu0 %v4038
        %4787 = vmatprep.subr.mxu0 %v4049
        %4788 = vmatpush1.msra.mxu0 %v4048
        %4789 = vmatprep.subr.mxu0 %v4059
        %4790 = vmatpush1.msra.mxu0 %v4058
        %4791 = vmatprep.subr.mxu0 %v4069
        %4792 = vmatpush1.msra.mxu0 %v4068
        %4793 = vmatprep.subr.mxu0 %v4079
        %4794 = vmatpush1.msra.mxu0 %v4078
        %4795 = vmatprep.subr.mxu0 %v4089
        %4796 = vmatpush1.msra.mxu0 %v4088
        %4797 = vmatprep.subr.mxu0 %v4099
        %4798 = vmatpush1.msra.mxu0 %v4098
        %4799 = vmatprep.mubr.f32.mxu0 %v4569
        %4800 = vmatmul.mubr.f32.gmra.mrb[0].mxu0 %v4568
        %v4801 = vpop.f32.mrb[0].mxu0
        %v4802 = vadd.f32 0.0, %v4801
        %v4803 = vpop.f32.mrb[0].mxu0
        %v4804 = vadd.f32 0.0, %v4803
        %4805 = vmatprep.mubr.f32.mxu0 %v4572
        %4806 = vmatmul.mubr.f32.gmra.mrb[0].mxu0 %v4571
        %v4807 = vpop.f32.mrb[0].mxu0
        %v4808 = vadd.f32 0.0, %v4807
        %v4809 = vpop.f32.mrb[0].mxu0
        %v4810 = vadd.f32 0.0, %v4809
        %4811 = vdwg.mxu0
        %4812 = vmatprep.subr.mxu0 %v4109
        %4813 = vmatpush1.msra.mxu0 %v4108
        %4814 = vmatprep.subr.mxu0 %v4119
        %4815 = vmatpush1.msra.mxu0 %v4118
        %4816 = vmatprep.subr.mxu0 %v4129
        %4817 = vmatpush1.msra.mxu0 %v4128
        %4818 = vmatprep.subr.mxu0 %v4139
        %4819 = vmatpush1.msra.mxu0 %v4138
        %4820 = vmatprep.subr.mxu0 0.0
        %4821 = vmatpush1.msra.mxu0 0.0
        %4822 = vmatprep.subr.mxu0 0.0
        %4823 = vmatpush1.msra.mxu0 0.0
        %4824 = vmatprep.subr.mxu0 0.0
        %4825 = vmatpush1.msra.mxu0 0.0
        %4826 = vmatprep.subr.mxu0 0.0
        %4827 = vmatpush1.msra.mxu0 0.0
        %4828 = vmatprep.subr.mxu0 0.0
        %4829 = vmatpush1.msra.mxu0 0.0
        %4830 = vmatprep.subr.mxu0 0.0
        %4831 = vmatpush1.msra.mxu0 0.0
        %4832 = vmatprep.subr.mxu0 0.0
        %4833 = vmatpush1.msra.mxu0 0.0
        %4834 = vmatprep.subr.mxu0 0.0
        %4835 = vmatpush1.msra.mxu0 0.0
        %4836 = vmatprep.subr.mxu0 0.0
        %4837 = vmatpush1.msra.mxu0 0.0
        %4838 = vmatprep.subr.mxu0 0.0
        %4839 = vmatpush1.msra.mxu0 0.0
        %4840 = vmatprep.subr.mxu0 0.0
        %4841 = vmatpush1.msra.mxu0 0.0
        %4842 = vmatprep.subr.mxu0 0.0
        %4843 = vmatpush1.msra.mxu0 0.0
        %4844 = vmatprep.subr.mxu0 0.0
        %4845 = vmatpush1.msra.mxu0 0.0
        %4846 = vmatprep.subr.mxu0 0.0
        %4847 = vmatpush1.msra.mxu0 0.0
        %4848 = vmatprep.subr.mxu0 0.0
        %4849 = vmatpush1.msra.mxu0 0.0
        %4850 = vmatprep.subr.mxu0 0.0
        %4851 = vmatpush1.msra.mxu0 0.0
        %4852 = vmatprep.subr.mxu0 0.0
        %4853 = vmatpush1.msra.mxu0 0.0
        %4854 = vmatprep.subr.mxu0 0.0
        %4855 = vmatpush1.msra.mxu0 0.0
        %4856 = vmatprep.subr.mxu0 0.0
        %4857 = vmatpush1.msra.mxu0 0.0
        %4858 = vmatprep.subr.mxu0 0.0
        %4859 = vmatpush1.msra.mxu0 0.0
        %4860 = vmatprep.subr.mxu0 0.0
        %4861 = vmatpush1.msra.mxu0 0.0
        %4862 = vmatprep.subr.mxu0 0.0
        %4863 = vmatpush1.msra.mxu0 0.0
        %4864 = vmatprep.subr.mxu0 0.0
        %4865 = vmatpush1.msra.mxu0 0.0
        %4866 = vmatprep.subr.mxu0 0.0
        %4867 = vmatpush1.msra.mxu0 0.0
        %4868 = vmatprep.subr.mxu0 0.0
        %4869 = vmatpush1.msra.mxu0 0.0
        %4870 = vmatprep.subr.mxu0 0.0
        %4871 = vmatpush1.msra.mxu0 0.0
        %4872 = vmatprep.subr.mxu0 0.0
        %4873 = vmatpush1.msra.mxu0 0.0
        %4874 = vmatprep.subr.mxu0 0.0
        %4875 = vmatpush1.msra.mxu0 0.0
        %4876 = vmatprep.mubr.f32.mxu0 0.0
        %4877 = vmatmul.mubr.f32.gmra.mrb[0].mxu0 %v4576
        %v4878 = vpop.f32.mrb[0].mxu0
        %v4879 = vadd.f32 %v4802, %v4878
        %v4880 = vpop.f32.mrb[0].mxu0
        %v4881 = vadd.f32 %v4804, %v4880
        %4882 = vmatprep.mubr.f32.mxu0 0.0
        %4883 = vmatmul.mubr.f32.gmra.mrb[0].mxu0 %v4579
        %v4884 = vpop.f32.mrb[0].mxu0
        %v4885 = vadd.f32 %v4808, %v4884
        %v4886 = vpop.f32.mrb[0].mxu0
        %v4887 = vadd.f32 %v4810, %v4886
        %4888 = vdwg.mxu0
        %4889 = vmatprep.subr.mxu0 %v3791
        %4890 = vmatpush1.msra.mxu0 %v3790
        %4891 = vmatprep.subr.mxu0 %v3801
        %4892 = vmatpush1.msra.mxu0 %v3800
        %4893 = vmatprep.subr.mxu0 %v3811
        %4894 = vmatpush1.msra.mxu0 %v3810
        %4895 = vmatprep.subr.mxu0 %v3821
        %4896 = vmatpush1.msra.mxu0 %v3820
        %4897 = vmatprep.subr.mxu0 %v3831
        %4898 = vmatpush1.msra.mxu0 %v3830
        %4899 = vmatprep.subr.mxu0 %v3841
        %4900 = vmatpush1.msra.mxu0 %v3840
        %4901 = vmatprep.subr.mxu0 %v3851
        %4902 = vmatpush1.msra.mxu0 %v3850
        %4903 = vmatprep.subr.mxu0 %v3861
        %4904 = vmatpush1.msra.mxu0 %v3860
        %4905 = vmatprep.subr.mxu0 %v3871
        %4906 = vmatpush1.msra.mxu0 %v3870
        %4907 = vmatprep.subr.mxu0 %v3881
        %4908 = vmatpush1.msra.mxu0 %v3880
        %4909 = vmatprep.subr.mxu0 %v3891
        %4910 = vmatpush1.msra.mxu0 %v3890
        %4911 = vmatprep.subr.mxu0 %v3901
        %4912 = vmatpush1.msra.mxu0 %v3900
        %4913 = vmatprep.subr.mxu0 %v3911
        %4914 = vmatpush1.msra.mxu0 %v3910
        %4915 = vmatprep.subr.mxu0 %v3921
        %4916 = vmatpush1.msra.mxu0 %v3920
        %4917 = vmatprep.subr.mxu0 %v3931
        %4918 = vmatpush1.msra.mxu0 %v3930
        %4919 = vmatprep.subr.mxu0 %v3941
        %4920 = vmatpush1.msra.mxu0 %v3940
        %4921 = vmatprep.subr.mxu0 %v3951
        %4922 = vmatpush1.msra.mxu0 %v3950
        %4923 = vmatprep.subr.mxu0 %v3961
        %4924 = vmatpush1.msra.mxu0 %v3960
        %4925 = vmatprep.subr.mxu0 %v3971
        %4926 = vmatpush1.msra.mxu0 %v3970
        %4927 = vmatprep.subr.mxu0 %v3981
        %4928 = vmatpush1.msra.mxu0 %v3980
        %4929 = vmatprep.subr.mxu0 %v3991
        %4930 = vmatpush1.msra.mxu0 %v3990
        %4931 = vmatprep.subr.mxu0 %v4001
        %4932 = vmatpush1.msra.mxu0 %v4000
        %4933 = vmatprep.subr.mxu0 %v4011
        %4934 = vmatpush1.msra.mxu0 %v4010
        %4935 = vmatprep.subr.mxu0 %v4021
        %4936 = vmatpush1.msra.mxu0 %v4020
        %4937 = vmatprep.subr.mxu0 %v4031
        %4938 = vmatpush1.msra.mxu0 %v4030
        %4939 = vmatprep.subr.mxu0 %v4041
        %4940 = vmatpush1.msra.mxu0 %v4040
        %4941 = vmatprep.subr.mxu0 %v4051
        %4942 = vmatpush1.msra.mxu0 %v4050
        %4943 = vmatprep.subr.mxu0 %v4061
        %4944 = vmatpush1.msra.mxu0 %v4060
        %4945 = vmatprep.subr.mxu0 %v4071
        %4946 = vmatpush1.msra.mxu0 %v4070
        %4947 = vmatprep.subr.mxu0 %v4081
        %4948 = vmatpush1.msra.mxu0 %v4080
        %4949 = vmatprep.subr.mxu0 %v4091
        %4950 = vmatpush1.msra.mxu0 %v4090
        %4951 = vmatprep.subr.mxu0 %v4101
        %4952 = vmatpush1.msra.mxu0 %v4100
        %4953 = vmatprep.mubr.f32.mxu0 %v4569
        %4954 = vmatmul.mubr.f32.gmra.mrb[0].mxu0 %v4568
        %v4955 = vpop.f32.mrb[0].mxu0
        %v4956 = vadd.f32 0.0, %v4955
        %v4957 = vpop.f32.mrb[0].mxu0
        %v4958 = vadd.f32 0.0, %v4957
        %4959 = vmatprep.mubr.f32.mxu0 %v4572
        %4960 = vmatmul.mubr.f32.gmra.mrb[0].mxu0 %v4571
        %v4961 = vpop.f32.mrb[0].mxu0
        %v4962 = vadd.f32 0.0, %v4961
        %v4963 = vpop.f32.mrb[0].mxu0
        %v4964 = vadd.f32 0.0, %v4963
        %4965 = vdwg.mxu0
        %4966 = vmatprep.subr.mxu0 %v4111
        %4967 = vmatpush1.msra.mxu0 %v4110
        %4968 = vmatprep.subr.mxu0 %v4121
        %4969 = vmatpush1.msra.mxu0 %v4120
        %4970 = vmatprep.subr.mxu0 %v4131
        %4971 = vmatpush1.msra.mxu0 %v4130
        %4972 = vmatprep.subr.mxu0 %v4141
        %4973 = vmatpush1.msra.mxu0 %v4140
        %4974 = vmatprep.subr.mxu0 0.0
        %4975 = vmatpush1.msra.mxu0 0.0
        %4976 = vmatprep.subr.mxu0 0.0
        %4977 = vmatpush1.msra.mxu0 0.0
        %4978 = vmatprep.subr.mxu0 0.0
        %4979 = vmatpush1.msra.mxu0 0.0
        %4980 = vmatprep.subr.mxu0 0.0
        %4981 = vmatpush1.msra.mxu0 0.0
        %4982 = vmatprep.subr.mxu0 0.0
        %4983 = vmatpush1.msra.mxu0 0.0
        %4984 = vmatprep.subr.mxu0 0.0
        %4985 = vmatpush1.msra.mxu0 0.0
        %4986 = vmatprep.subr.mxu0 0.0
        %4987 = vmatpush1.msra.mxu0 0.0
        %4988 = vmatprep.subr.mxu0 0.0
        %4989 = vmatpush1.msra.mxu0 0.0
        %4990 = vmatprep.subr.mxu0 0.0
        %4991 = vmatpush1.msra.mxu0 0.0
        %4992 = vmatprep.subr.mxu0 0.0
        %4993 = vmatpush1.msra.mxu0 0.0
        %4994 = vmatprep.subr.mxu0 0.0
        %4995 = vmatpush1.msra.mxu0 0.0
        %4996 = vmatprep.subr.mxu0 0.0
        %4997 = vmatpush1.msra.mxu0 0.0
        %4998 = vmatprep.subr.mxu0 0.0
        %4999 = vmatpush1.msra.mxu0 0.0
        %5000 = vmatprep.subr.mxu0 0.0
        %5001 = vmatpush1.msra.mxu0 0.0
        %5002 = vmatprep.subr.mxu0 0.0
        %5003 = vmatpush1.msra.mxu0 0.0
        %5004 = vmatprep.subr.mxu0 0.0
        %5005 = vmatpush1.msra.mxu0 0.0
        %5006 = vmatprep.subr.mxu0 0.0
        %5007 = vmatpush1.msra.mxu0 0.0
        %5008 = vmatprep.subr.mxu0 0.0
        %5009 = vmatpush1.msra.mxu0 0.0
        %5010 = vmatprep.subr.mxu0 0.0
        %5011 = vmatpush1.msra.mxu0 0.0
        %5012 = vmatprep.subr.mxu0 0.0
        %5013 = vmatpush1.msra.mxu0 0.0
        %5014 = vmatprep.subr.mxu0 0.0
        %5015 = vmatpush1.msra.mxu0 0.0
        %5016 = vmatprep.subr.mxu0 0.0
        %5017 = vmatpush1.msra.mxu0 0.0
        %5018 = vmatprep.subr.mxu0 0.0
        %5019 = vmatpush1.msra.mxu0 0.0
        %5020 = vmatprep.subr.mxu0 0.0
        %5021 = vmatpush1.msra.mxu0 0.0
        %5022 = vmatprep.subr.mxu0 0.0
        %5023 = vmatpush1.msra.mxu0 0.0
        %5024 = vmatprep.subr.mxu0 0.0
        %5025 = vmatpush1.msra.mxu0 0.0
        %5026 = vmatprep.subr.mxu0 0.0
        %5027 = vmatpush1.msra.mxu0 0.0
        %5028 = vmatprep.subr.mxu0 0.0
        %5029 = vmatpush1.msra.mxu0 0.0
        %5030 = vmatprep.mubr.f32.mxu0 0.0
        %5031 = vmatmul.mubr.f32.gmra.mrb[0].mxu0 %v4576
        %v5032 = vpop.f32.mrb[0].mxu0
        %v5033 = vadd.f32 %v4956, %v5032
        %v5034 = vpop.f32.mrb[0].mxu0
        %v5035 = vadd.f32 %v4958, %v5034
        %5036 = vmatprep.mubr.f32.mxu0 0.0
        %5037 = vmatmul.mubr.f32.gmra.mrb[0].mxu0 %v4579
        %v5038 = vpop.f32.mrb[0].mxu0
        %v5039 = vadd.f32 %v4962, %v5038
        %v5040 = vpop.f32.mrb[0].mxu0
        %v5041 = vadd.f32 %v4964, %v5040
        %5042 = vdwg.mxu0
        %5043 = vmatprep.subr.mxu0 %v3793
        %5044 = vmatpush1.msra.mxu0 %v3792
        %5045 = vmatprep.subr.mxu0 %v3803
        %5046 = vmatpush1.msra.mxu0 %v3802
        %5047 = vmatprep.subr.mxu0 %v3813
        %5048 = vmatpush1.msra.mxu0 %v3812
        %5049 = vmatprep.subr.mxu0 %v3823
        %5050 = vmatpush1.msra.mxu0 %v3822
        %5051 = vmatprep.subr.mxu0 %v3833
        %5052 = vmatpush1.msra.mxu0 %v3832
        %5053 = vmatprep.subr.mxu0 %v3843
        %5054 = vmatpush1.msra.mxu0 %v3842
        %5055 = vmatprep.subr.mxu0 %v3853
        %5056 = vmatpush1.msra.mxu0 %v3852
        %5057 = vmatprep.subr.mxu0 %v3863
        %5058 = vmatpush1.msra.mxu0 %v3862
        %5059 = vmatprep.subr.mxu0 %v3873
        %5060 = vmatpush1.msra.mxu0 %v3872
        %5061 = vmatprep.subr.mxu0 %v3883
        %5062 = vmatpush1.msra.mxu0 %v3882
        %5063 = vmatprep.subr.mxu0 %v3893
        %5064 = vmatpush1.msra.mxu0 %v3892
        %5065 = vmatprep.subr.mxu0 %v3903
        %5066 = vmatpush1.msra.mxu0 %v3902
        %5067 = vmatprep.subr.mxu0 %v3913
        %5068 = vmatpush1.msra.mxu0 %v3912
        %5069 = vmatprep.subr.mxu0 %v3923
        %5070 = vmatpush1.msra.mxu0 %v3922
        %5071 = vmatprep.subr.mxu0 %v3933
        %5072 = vmatpush1.msra.mxu0 %v3932
        %5073 = vmatprep.subr.mxu0 %v3943
        %5074 = vmatpush1.msra.mxu0 %v3942
        %5075 = vmatprep.subr.mxu0 %v3953
        %5076 = vmatpush1.msra.mxu0 %v3952
        %5077 = vmatprep.subr.mxu0 %v3963
        %5078 = vmatpush1.msra.mxu0 %v3962
        %5079 = vmatprep.subr.mxu0 %v3973
        %5080 = vmatpush1.msra.mxu0 %v3972
        %5081 = vmatprep.subr.mxu0 %v3983
        %5082 = vmatpush1.msra.mxu0 %v3982
        %5083 = vmatprep.subr.mxu0 %v3993
        %5084 = vmatpush1.msra.mxu0 %v3992
        %5085 = vmatprep.subr.mxu0 %v4003
        %5086 = vmatpush1.msra.mxu0 %v4002
        %5087 = vmatprep.subr.mxu0 %v4013
        %5088 = vmatpush1.msra.mxu0 %v4012
        %5089 = vmatprep.subr.mxu0 %v4023
        %5090 = vmatpush1.msra.mxu0 %v4022
        %5091 = vmatprep.subr.mxu0 %v4033
        %5092 = vmatpush1.msra.mxu0 %v4032
        %5093 = vmatprep.subr.mxu0 %v4043
        %5094 = vmatpush1.msra.mxu0 %v4042
        %5095 = vmatprep.subr.mxu0 %v4053
        %5096 = vmatpush1.msra.mxu0 %v4052
        %5097 = vmatprep.subr.mxu0 %v4063
        %5098 = vmatpush1.msra.mxu0 %v4062
        %5099 = vmatprep.subr.mxu0 %v4073
        %5100 = vmatpush1.msra.mxu0 %v4072
        %5101 = vmatprep.subr.mxu0 %v4083
        %5102 = vmatpush1.msra.mxu0 %v4082
        %5103 = vmatprep.subr.mxu0 %v4093
        %5104 = vmatpush1.msra.mxu0 %v4092
        %5105 = vmatprep.subr.mxu0 %v4103
        %5106 = vmatpush1.msra.mxu0 %v4102
        %5107 = vmatprep.mubr.f32.mxu0 %v4569
        %5108 = vmatmul.mubr.f32.gmra.mrb[0].mxu0 %v4568
        %v5109 = vpop.f32.mrb[0].mxu0
        %v5110 = vadd.f32 0.0, %v5109
        %v5111 = vpop.f32.mrb[0].mxu0
        %v5112 = vadd.f32 0.0, %v5111
        %5113 = vmatprep.mubr.f32.mxu0 %v4572
        %5114 = vmatmul.mubr.f32.gmra.mrb[0].mxu0 %v4571
        %v5115 = vpop.f32.mrb[0].mxu0
        %v5116 = vadd.f32 0.0, %v5115
        %v5117 = vpop.f32.mrb[0].mxu0
        %v5118 = vadd.f32 0.0, %v5117
        %5119 = vdwg.mxu0
        %5120 = vmatprep.subr.mxu0 %v4113
        %5121 = vmatpush1.msra.mxu0 %v4112
        %5122 = vmatprep.subr.mxu0 %v4123
        %5123 = vmatpush1.msra.mxu0 %v4122
        %5124 = vmatprep.subr.mxu0 %v4133
        %5125 = vmatpush1.msra.mxu0 %v4132
        %5126 = vmatprep.subr.mxu0 %v4143
        %5127 = vmatpush1.msra.mxu0 %v4142
        %5128 = vmatprep.subr.mxu0 0.0
        %5129 = vmatpush1.msra.mxu0 0.0
        %5130 = vmatprep.subr.mxu0 0.0
        %5131 = vmatpush1.msra.mxu0 0.0
        %5132 = vmatprep.subr.mxu0 0.0
        %5133 = vmatpush1.msra.mxu0 0.0
        %5134 = vmatprep.subr.mxu0 0.0
        %5135 = vmatpush1.msra.mxu0 0.0
        %5136 = vmatprep.subr.mxu0 0.0
        %5137 = vmatpush1.msra.mxu0 0.0
        %5138 = vmatprep.subr.mxu0 0.0
        %5139 = vmatpush1.msra.mxu0 0.0
        %5140 = vmatprep.subr.mxu0 0.0
        %5141 = vmatpush1.msra.mxu0 0.0
        %5142 = vmatprep.subr.mxu0 0.0
        %5143 = vmatpush1.msra.mxu0 0.0
        %5144 = vmatprep.subr.mxu0 0.0
        %5145 = vmatpush1.msra.mxu0 0.0
        %5146 = vmatprep.subr.mxu0 0.0
        %5147 = vmatpush1.msra.mxu0 0.0
        %5148 = vmatprep.subr.mxu0 0.0
        %5149 = vmatpush1.msra.mxu0 0.0
        %5150 = vmatprep.subr.mxu0 0.0
        %5151 = vmatpush1.msra.mxu0 0.0
        %5152 = vmatprep.subr.mxu0 0.0
        %5153 = vmatpush1.msra.mxu0 0.0
        %5154 = vmatprep.subr.mxu0 0.0
        %5155 = vmatpush1.msra.mxu0 0.0
        %5156 = vmatprep.subr.mxu0 0.0
        %5157 = vmatpush1.msra.mxu0 0.0
        %5158 = vmatprep.subr.mxu0 0.0
        %5159 = vmatpush1.msra.mxu0 0.0
        %5160 = vmatprep.subr.mxu0 0.0
        %5161 = vmatpush1.msra.mxu0 0.0
        %5162 = vmatprep.subr.mxu0 0.0
        %5163 = vmatpush1.msra.mxu0 0.0
        %5164 = vmatprep.subr.mxu0 0.0
        %5165 = vmatpush1.msra.mxu0 0.0
        %5166 = vmatprep.subr.mxu0 0.0
        %5167 = vmatpush1.msra.mxu0 0.0
        %5168 = vmatprep.subr.mxu0 0.0
        %5169 = vmatpush1.msra.mxu0 0.0
        %5170 = vmatprep.subr.mxu0 0.0
        %5171 = vmatpush1.msra.mxu0 0.0
        %5172 = vmatprep.subr.mxu0 0.0
        %5173 = vmatpush1.msra.mxu0 0.0
        %5174 = vmatprep.subr.mxu0 0.0
        %5175 = vmatpush1.msra.mxu0 0.0
        %5176 = vmatprep.subr.mxu0 0.0
        %5177 = vmatpush1.msra.mxu0 0.0
        %5178 = vmatprep.subr.mxu0 0.0
        %5179 = vmatpush1.msra.mxu0 0.0
        %5180 = vmatprep.subr.mxu0 0.0
        %5181 = vmatpush1.msra.mxu0 0.0
        %5182 = vmatprep.subr.mxu0 0.0
        %5183 = vmatpush1.msra.mxu0 0.0
        %5184 = vmatprep.mubr.f32.mxu0 0.0
        %5185 = vmatmul.mubr.f32.gmra.mrb[0].mxu0 %v4576
        %v5186 = vpop.f32.mrb[0].mxu0
        %v5187 = vadd.f32 %v5110, %v5186
        %v5188 = vpop.f32.mrb[0].mxu0
        %v5189 = vadd.f32 %v5112, %v5188
        %5190 = vmatprep.mubr.f32.mxu0 0.0
        %5191 = vmatmul.mubr.f32.gmra.mrb[0].mxu0 %v4579
        %v5192 = vpop.f32.mrb[0].mxu0
        %v5193 = vadd.f32 %v5116, %v5192
        %v5194 = vpop.f32.mrb[0].mxu0
        %v5195 = vadd.f32 %v5118, %v5194
        %5196 = vdwg.mxu0
        %5197 = vmatprep.subr.mxu0 %v3795
        %5198 = vmatpush1.msra.mxu0 %v3794
        %5199 = vmatprep.subr.mxu0 %v3805
        %5200 = vmatpush1.msra.mxu0 %v3804
        %5201 = vmatprep.subr.mxu0 %v3815
        %5202 = vmatpush1.msra.mxu0 %v3814
        %5203 = vmatprep.subr.mxu0 %v3825
        %5204 = vmatpush1.msra.mxu0 %v3824
        %5205 = vmatprep.subr.mxu0 %v3835
        %5206 = vmatpush1.msra.mxu0 %v3834
        %5207 = vmatprep.subr.mxu0 %v3845
        %5208 = vmatpush1.msra.mxu0 %v3844
        %5209 = vmatprep.subr.mxu0 %v3855
        %5210 = vmatpush1.msra.mxu0 %v3854
        %5211 = vmatprep.subr.mxu0 %v3865
        %5212 = vmatpush1.msra.mxu0 %v3864
        %5213 = vmatprep.subr.mxu0 %v3875
        %5214 = vmatpush1.msra.mxu0 %v3874
        %5215 = vmatprep.subr.mxu0 %v3885
        %5216 = vmatpush1.msra.mxu0 %v3884
        %5217 = vmatprep.subr.mxu0 %v3895
        %5218 = vmatpush1.msra.mxu0 %v3894
        %5219 = vmatprep.subr.mxu0 %v3905
        %5220 = vmatpush1.msra.mxu0 %v3904
        %5221 = vmatprep.subr.mxu0 %v3915
        %5222 = vmatpush1.msra.mxu0 %v3914
        %5223 = vmatprep.subr.mxu0 %v3925
        %5224 = vmatpush1.msra.mxu0 %v3924
        %5225 = vmatprep.subr.mxu0 %v3935
        %5226 = vmatpush1.msra.mxu0 %v3934
        %5227 = vmatprep.subr.mxu0 %v3945
        %5228 = vmatpush1.msra.mxu0 %v3944
        %5229 = vmatprep.subr.mxu0 %v3955
        %5230 = vmatpush1.msra.mxu0 %v3954
        %5231 = vmatprep.subr.mxu0 %v3965
        %5232 = vmatpush1.msra.mxu0 %v3964
        %5233 = vmatprep.subr.mxu0 %v3975
        %5234 = vmatpush1.msra.mxu0 %v3974
        %5235 = vmatprep.subr.mxu0 %v3985
        %5236 = vmatpush1.msra.mxu0 %v3984
        %5237 = vmatprep.subr.mxu0 %v3995
        %5238 = vmatpush1.msra.mxu0 %v3994
        %5239 = vmatprep.subr.mxu0 %v4005
        %5240 = vmatpush1.msra.mxu0 %v4004
        %5241 = vmatprep.subr.mxu0 %v4015
        %5242 = vmatpush1.msra.mxu0 %v4014
        %5243 = vmatprep.subr.mxu0 %v4025
        %5244 = vmatpush1.msra.mxu0 %v4024
        %5245 = vmatprep.subr.mxu0 %v4035
        %5246 = vmatpush1.msra.mxu0 %v4034
        %5247 = vmatprep.subr.mxu0 %v4045
        %5248 = vmatpush1.msra.mxu0 %v4044
        %5249 = vmatprep.subr.mxu0 %v4055
        %5250 = vmatpush1.msra.mxu0 %v4054
        %5251 = vmatprep.subr.mxu0 %v4065
        %5252 = vmatpush1.msra.mxu0 %v4064
        %5253 = vmatprep.subr.mxu0 %v4075
        %5254 = vmatpush1.msra.mxu0 %v4074
        %5255 = vmatprep.subr.mxu0 %v4085
        %5256 = vmatpush1.msra.mxu0 %v4084
        %5257 = vmatprep.subr.mxu0 %v4095
        %5258 = vmatpush1.msra.mxu0 %v4094
        %5259 = vmatprep.subr.mxu0 %v4105
        %5260 = vmatpush1.msra.mxu0 %v4104
        %5261 = vmatprep.mubr.f32.mxu0 %v4569
        %5262 = vmatmul.mubr.f32.gmra.mrb[0].mxu0 %v4568
        %v5263 = vpop.f32.mrb[0].mxu0
        %v5264 = vadd.f32 0.0, %v5263
        %v5265 = vpop.f32.mrb[0].mxu0
        %v5266 = vadd.f32 0.0, %v5265
        %5267 = vmatprep.mubr.f32.mxu0 %v4572
        %5268 = vmatmul.mubr.f32.gmra.mrb[0].mxu0 %v4571
        %v5269 = vpop.f32.mrb[0].mxu0
        %v5270 = vadd.f32 0.0, %v5269
        %v5271 = vpop.f32.mrb[0].mxu0
        %v5272 = vadd.f32 0.0, %v5271
        %5273 = vdwg.mxu0
        %5274 = vmatprep.subr.mxu0 %v4115
        %5275 = vmatpush1.msra.mxu0 %v4114
        %5276 = vmatprep.subr.mxu0 %v4125
        %5277 = vmatpush1.msra.mxu0 %v4124
        %5278 = vmatprep.subr.mxu0 %v4135
        %5279 = vmatpush1.msra.mxu0 %v4134
        %5280 = vmatprep.subr.mxu0 %v4145
        %5281 = vmatpush1.msra.mxu0 %v4144
        %5282 = vmatprep.subr.mxu0 0.0
        %5283 = vmatpush1.msra.mxu0 0.0
        %5284 = vmatprep.subr.mxu0 0.0
        %5285 = vmatpush1.msra.mxu0 0.0
        %5286 = vmatprep.subr.mxu0 0.0
        %5287 = vmatpush1.msra.mxu0 0.0
        %5288 = vmatprep.subr.mxu0 0.0
        %5289 = vmatpush1.msra.mxu0 0.0
        %5290 = vmatprep.subr.mxu0 0.0
        %5291 = vmatpush1.msra.mxu0 0.0
        %5292 = vmatprep.subr.mxu0 0.0
        %5293 = vmatpush1.msra.mxu0 0.0
        %5294 = vmatprep.subr.mxu0 0.0
        %5295 = vmatpush1.msra.mxu0 0.0
        %5296 = vmatprep.subr.mxu0 0.0
        %5297 = vmatpush1.msra.mxu0 0.0
        %5298 = vmatprep.subr.mxu0 0.0
        %5299 = vmatpush1.msra.mxu0 0.0
        %5300 = vmatprep.subr.mxu0 0.0
        %5301 = vmatpush1.msra.mxu0 0.0
        %5302 = vmatprep.subr.mxu0 0.0
        %5303 = vmatpush1.msra.mxu0 0.0
        %5304 = vmatprep.subr.mxu0 0.0
        %5305 = vmatpush1.msra.mxu0 0.0
        %5306 = vmatprep.subr.mxu0 0.0
        %5307 = vmatpush1.msra.mxu0 0.0
        %5308 = vmatprep.subr.mxu0 0.0
        %5309 = vmatpush1.msra.mxu0 0.0
        %5310 = vmatprep.subr.mxu0 0.0
        %5311 = vmatpush1.msra.mxu0 0.0
        %5312 = vmatprep.subr.mxu0 0.0
        %5313 = vmatpush1.msra.mxu0 0.0
        %5314 = vmatprep.subr.mxu0 0.0
        %5315 = vmatpush1.msra.mxu0 0.0
        %5316 = vmatprep.subr.mxu0 0.0
        %5317 = vmatpush1.msra.mxu0 0.0
        %5318 = vmatprep.subr.mxu0 0.0
        %5319 = vmatpush1.msra.mxu0 0.0
        %5320 = vmatprep.subr.mxu0 0.0
        %5321 = vmatpush1.msra.mxu0 0.0
        %5322 = vmatprep.subr.mxu0 0.0
        %5323 = vmatpush1.msra.mxu0 0.0
        %5324 = vmatprep.subr.mxu0 0.0
        %5325 = vmatpush1.msra.mxu0 0.0
        %5326 = vmatprep.subr.mxu0 0.0
        %5327 = vmatpush1.msra.mxu0 0.0
        %5328 = vmatprep.subr.mxu0 0.0
        %5329 = vmatpush1.msra.mxu0 0.0
        %5330 = vmatprep.subr.mxu0 0.0
        %5331 = vmatpush1.msra.mxu0 0.0
        %5332 = vmatprep.subr.mxu0 0.0
        %5333 = vmatpush1.msra.mxu0 0.0
        %5334 = vmatprep.subr.mxu0 0.0
        %5335 = vmatpush1.msra.mxu0 0.0
        %5336 = vmatprep.subr.mxu0 0.0
        %5337 = vmatpush1.msra.mxu0 0.0
        %5338 = vmatprep.mubr.f32.mxu0 0.0
        %5339 = vmatmul.mubr.f32.gmra.mrb[0].mxu0 %v4576
        %v5340 = vpop.f32.mrb[0].mxu0
        %v5341 = vadd.f32 %v5264, %v5340
        %v5342 = vpop.f32.mrb[0].mxu0
        %v5343 = vadd.f32 %v5266, %v5342
        %5344 = vmatprep.mubr.f32.mxu0 0.0
        %5345 = vmatmul.mubr.f32.gmra.mrb[0].mxu0 %v4579
        %v5346 = vpop.f32.mrb[0].mxu0
        %v5347 = vadd.f32 %v5270, %v5346
        %v5348 = vpop.f32.mrb[0].mxu0
        %v5349 = vadd.f32 %v5272, %v5348
        %5350 = vdwg.mxu0
        %5371 = vrot.lane.b32.xlu0 %v4725, 1
        %v5372 = vpop.permute.xlu0 %5371
        %5373 = vrot.lane.b32.xlu0 %v4727, 1
        %v5374 = vpop.permute.xlu0 %5373
        %5375 = vrot.lane.b32.xlu0 %v4879, 1
        %v5376 = vpop.permute.xlu0 %5375
        %5377 = vrot.lane.b32.xlu0 %v4881, 1
        %v5378 = vpop.permute.xlu0 %5377
        %5379 = vrot.lane.b32.xlu0 %v5033, 1
        %v5380 = vpop.permute.xlu0 %5379
        %5381 = vrot.lane.b32.xlu0 %v5035, 1
        %v5382 = vpop.permute.xlu0 %5381
        %5383 = vrot.lane.b32.xlu0 %v5187, 1
        %v5384 = vpop.permute.xlu0 %5383
        %5385 = vrot.lane.b32.xlu0 %v5189, 1
        %v5386 = vpop.permute.xlu0 %5385
        %5387 = vrot.lane.b32.xlu0 %v5341, 1
        %v5388 = vpop.permute.xlu0 %5387
        %5389 = vrot.lane.b32.xlu0 %v5343, 1
        %v5390 = vpop.permute.xlu0 %5389
        %5391 = vrot.lane.b32.xlu0 %v4731, 1
        %v5392 = vpop.permute.xlu0 %5391
        %5393 = vrot.lane.b32.xlu0 %v4733, 1
        %v5394 = vpop.permute.xlu0 %5393
        %5395 = vrot.lane.b32.xlu0 %v4885, 1
        %v5396 = vpop.permute.xlu0 %5395
        %5397 = vrot.lane.b32.xlu0 %v4887, 1
        %v5398 = vpop.permute.xlu0 %5397
        %5399 = vrot.lane.b32.xlu0 %v5039, 1
        %v5400 = vpop.permute.xlu0 %5399
        %5401 = vrot.lane.b32.xlu0 %v5041, 1
        %v5402 = vpop.permute.xlu0 %5401
        %5403 = vrot.lane.b32.xlu0 %v5193, 1
        %v5404 = vpop.permute.xlu0 %5403
        %5405 = vrot.lane.b32.xlu0 %v5195, 1
        %v5406 = vpop.permute.xlu0 %5405
        %5407 = vrot.lane.b32.xlu0 %v5347, 1
        %v5408 = vpop.permute.xlu0 %5407
        %5409 = vrot.lane.b32.xlu0 %v5349, 1
        %v5410 = vpop.permute.xlu0 %5409
        %v5411 = vsel %vm1426, %v5372, %v5374
        %v5412 = vsel %vm1426, %v5374, %v5376
        %v5413 = vsel %vm1426, %v5376, %v5378
        %v5414 = vsel %vm1426, %v5378, %v5380
        %v5415 = vsel %vm1426, %v5380, %v5382
        %v5416 = vsel %vm1426, %v5382, %v5384
        %v5417 = vsel %vm1426, %v5384, %v5386
        %v5418 = vsel %vm1426, %v5386, %v5388
        %v5419 = vsel %vm1426, %v5388, %v5390
        %v5420 = vsel %vm1426, %v5392, %v5394
        %v5421 = vsel %vm1426, %v5394, %v5396
        %v5422 = vsel %vm1426, %v5396, %v5398
        %v5423 = vsel %vm1426, %v5398, %v5400
        %v5424 = vsel %vm1426, %v5400, %v5402
        %v5425 = vsel %vm1426, %v5402, %v5404
        %v5426 = vsel %vm1426, %v5404, %v5406
        %v5427 = vsel %vm1426, %v5406, %v5408
        %v5428 = vsel %vm1426, %v5408, %v5410
        %v5449 = vsel %vm1426, 0.0, %v5372
        %v5450 = vsel %vm1426, 0.0, %v5392
        %v5452 = vsel %vm4574, %v4364, 0
        %v5455 = vsel %vm4574, %v4367, 0
        %5457 = vmatprep.subr.mxu0 %v3787
        %5458 = vmatpush1.msra.mxu0 %v3786
        %5459 = vmatprep.subr.mxu0 %v3797
        %5460 = vmatpush1.msra.mxu0 %v3796
        %5461 = vmatprep.subr.mxu0 %v3807
        %5462 = vmatpush1.msra.mxu0 %v3806
        %5463 = vmatprep.subr.mxu0 %v3817
        %5464 = vmatpush1.msra.mxu0 %v3816
        %5465 = vmatprep.subr.mxu0 %v3827
        %5466 = vmatpush1.msra.mxu0 %v3826
        %5467 = vmatprep.subr.mxu0 %v3837
        %5468 = vmatpush1.msra.mxu0 %v3836
        %5469 = vmatprep.subr.mxu0 %v3847
        %5470 = vmatpush1.msra.mxu0 %v3846
        %5471 = vmatprep.subr.mxu0 %v3857
        %5472 = vmatpush1.msra.mxu0 %v3856
        %5473 = vmatprep.subr.mxu0 %v3867
        %5474 = vmatpush1.msra.mxu0 %v3866
        %5475 = vmatprep.subr.mxu0 %v3877
        %5476 = vmatpush1.msra.mxu0 %v3876
        %5477 = vmatprep.subr.mxu0 %v3887
        %5478 = vmatpush1.msra.mxu0 %v3886
        %5479 = vmatprep.subr.mxu0 %v3897
        %5480 = vmatpush1.msra.mxu0 %v3896
        %5481 = vmatprep.subr.mxu0 %v3907
        %5482 = vmatpush1.msra.mxu0 %v3906
        %5483 = vmatprep.subr.mxu0 %v3917
        %5484 = vmatpush1.msra.mxu0 %v3916
        %5485 = vmatprep.subr.mxu0 %v3927
        %5486 = vmatpush1.msra.mxu0 %v3926
        %5487 = vmatprep.subr.mxu0 %v3937
        %5488 = vmatpush1.msra.mxu0 %v3936
        %5489 = vmatprep.subr.mxu0 %v3947
        %5490 = vmatpush1.msra.mxu0 %v3946
        %5491 = vmatprep.subr.mxu0 %v3957
        %5492 = vmatpush1.msra.mxu0 %v3956
        %5493 = vmatprep.subr.mxu0 %v3967
        %5494 = vmatpush1.msra.mxu0 %v3966
        %5495 = vmatprep.subr.mxu0 %v3977
        %5496 = vmatpush1.msra.mxu0 %v3976
        %5497 = vmatprep.subr.mxu0 %v3987
        %5498 = vmatpush1.msra.mxu0 %v3986
        %5499 = vmatprep.subr.mxu0 %v3997
        %5500 = vmatpush1.msra.mxu0 %v3996
        %5501 = vmatprep.subr.mxu0 %v4007
        %5502 = vmatpush1.msra.mxu0 %v4006
        %5503 = vmatprep.subr.mxu0 %v4017
        %5504 = vmatpush1.msra.mxu0 %v4016
        %5505 = vmatprep.subr.mxu0 %v4027
        %5506 = vmatpush1.msra.mxu0 %v4026
        %5507 = vmatprep.subr.mxu0 %v4037
        %5508 = vmatpush1.msra.mxu0 %v4036
        %5509 = vmatprep.subr.mxu0 %v4047
        %5510 = vmatpush1.msra.mxu0 %v4046
        %5511 = vmatprep.subr.mxu0 %v4057
        %5512 = vmatpush1.msra.mxu0 %v4056
        %5513 = vmatprep.subr.mxu0 %v4067
        %5514 = vmatpush1.msra.mxu0 %v4066
        %5515 = vmatprep.subr.mxu0 %v4077
        %5516 = vmatpush1.msra.mxu0 %v4076
        %5517 = vmatprep.subr.mxu0 %v4087
        %5518 = vmatpush1.msra.mxu0 %v4086
        %5519 = vmatprep.subr.mxu0 %v4097
        %5520 = vmatpush1.msra.mxu0 %v4096
        %5521 = vmatprep.mubr.f32.mxu0 %v4363
        %5522 = vmatmul.mubr.f32.gmra.mrb[0].mxu0 %v4362
        %v5523 = vpop.f32.mrb[0].mxu0
        %v5524 = vadd.f32 %v5449, %v5523
        %v5525 = vpop.f32.mrb[0].mxu0
        %v5526 = vadd.f32 %v5411, %v5525
        %5527 = vmatprep.mubr.f32.mxu0 %v4366
        %5528 = vmatmul.mubr.f32.gmra.mrb[0].mxu0 %v4365
        %v5529 = vpop.f32.mrb[0].mxu0
        %v5530 = vadd.f32 %v5450, %v5529
        %v5531 = vpop.f32.mrb[0].mxu0
        %v5532 = vadd.f32 %v5420, %v5531
        %5533 = vdwg.mxu0
        %5534 = vmatprep.subr.mxu0 %v4107
        %5535 = vmatpush1.msra.mxu0 %v4106
        %5536 = vmatprep.subr.mxu0 %v4117
        %5537 = vmatpush1.msra.mxu0 %v4116
        %5538 = vmatprep.subr.mxu0 %v4127
        %5539 = vmatpush1.msra.mxu0 %v4126
        %5540 = vmatprep.subr.mxu0 %v4137
        %5541 = vmatpush1.msra.mxu0 %v4136
        %5542 = vmatprep.subr.mxu0 0.0
        %5543 = vmatpush1.msra.mxu0 0.0
        %5544 = vmatprep.subr.mxu0 0.0
        %5545 = vmatpush1.msra.mxu0 0.0
        %5546 = vmatprep.subr.mxu0 0.0
        %5547 = vmatpush1.msra.mxu0 0.0
        %5548 = vmatprep.subr.mxu0 0.0
        %5549 = vmatpush1.msra.mxu0 0.0
        %5550 = vmatprep.subr.mxu0 0.0
        %5551 = vmatpush1.msra.mxu0 0.0
        %5552 = vmatprep.subr.mxu0 0.0
        %5553 = vmatpush1.msra.mxu0 0.0
        %5554 = vmatprep.subr.mxu0 0.0
        %5555 = vmatpush1.msra.mxu0 0.0
        %5556 = vmatprep.subr.mxu0 0.0
        %5557 = vmatpush1.msra.mxu0 0.0
        %5558 = vmatprep.subr.mxu0 0.0
        %5559 = vmatpush1.msra.mxu0 0.0
        %5560 = vmatprep.subr.mxu0 0.0
        %5561 = vmatpush1.msra.mxu0 0.0
        %5562 = vmatprep.subr.mxu0 0.0
        %5563 = vmatpush1.msra.mxu0 0.0
        %5564 = vmatprep.subr.mxu0 0.0
        %5565 = vmatpush1.msra.mxu0 0.0
        %5566 = vmatprep.subr.mxu0 0.0
        %5567 = vmatpush1.msra.mxu0 0.0
        %5568 = vmatprep.subr.mxu0 0.0
        %5569 = vmatpush1.msra.mxu0 0.0
        %5570 = vmatprep.subr.mxu0 0.0
        %5571 = vmatpush1.msra.mxu0 0.0
        %5572 = vmatprep.subr.mxu0 0.0
        %5573 = vmatpush1.msra.mxu0 0.0
        %5574 = vmatprep.subr.mxu0 0.0
        %5575 = vmatpush1.msra.mxu0 0.0
        %5576 = vmatprep.subr.mxu0 0.0
        %5577 = vmatpush1.msra.mxu0 0.0
        %5578 = vmatprep.subr.mxu0 0.0
        %5579 = vmatpush1.msra.mxu0 0.0
        %5580 = vmatprep.subr.mxu0 0.0
        %5581 = vmatpush1.msra.mxu0 0.0
        %5582 = vmatprep.subr.mxu0 0.0
        %5583 = vmatpush1.msra.mxu0 0.0
        %5584 = vmatprep.subr.mxu0 0.0
        %5585 = vmatpush1.msra.mxu0 0.0
        %5586 = vmatprep.subr.mxu0 0.0
        %5587 = vmatpush1.msra.mxu0 0.0
        %5588 = vmatprep.subr.mxu0 0.0
        %5589 = vmatpush1.msra.mxu0 0.0
        %5590 = vmatprep.subr.mxu0 0.0
        %5591 = vmatpush1.msra.mxu0 0.0
        %5592 = vmatprep.subr.mxu0 0.0
        %5593 = vmatpush1.msra.mxu0 0.0
        %5594 = vmatprep.subr.mxu0 0.0
        %5595 = vmatpush1.msra.mxu0 0.0
        %5596 = vmatprep.subr.mxu0 0.0
        %5597 = vmatpush1.msra.mxu0 0.0
        %5598 = vmatprep.mubr.f32.mxu0 0.0
        %5599 = vmatmul.mubr.f32.gmra.mrb[0].mxu0 %v5452
        %v5600 = vpop.f32.mrb[0].mxu0
        %v5601 = vadd.f32 %v5524, %v5600
        %v5602 = vpop.f32.mrb[0].mxu0
        %v5603 = vadd.f32 %v5526, %v5602
        %5604 = vmatprep.mubr.f32.mxu0 0.0
        %5605 = vmatmul.mubr.f32.gmra.mrb[0].mxu0 %v5455
        %v5606 = vpop.f32.mrb[0].mxu0
        %v5607 = vadd.f32 %v5530, %v5606
        %v5608 = vpop.f32.mrb[0].mxu0
        %v5609 = vadd.f32 %v5532, %v5608
        %5610 = vdwg.mxu0
        %5611 = vmatprep.subr.mxu0 %v3789
        %5612 = vmatpush1.msra.mxu0 %v3788
        %5613 = vmatprep.subr.mxu0 %v3799
        %5614 = vmatpush1.msra.mxu0 %v3798
        %5615 = vmatprep.subr.mxu0 %v3809
        %5616 = vmatpush1.msra.mxu0 %v3808
        %5617 = vmatprep.subr.mxu0 %v3819
        %5618 = vmatpush1.msra.mxu0 %v3818
        %5619 = vmatprep.subr.mxu0 %v3829
        %5620 = vmatpush1.msra.mxu0 %v3828
        %5621 = vmatprep.subr.mxu0 %v3839
        %5622 = vmatpush1.msra.mxu0 %v3838
        %5623 = vmatprep.subr.mxu0 %v3849
        %5624 = vmatpush1.msra.mxu0 %v3848
        %5625 = vmatprep.subr.mxu0 %v3859
        %5626 = vmatpush1.msra.mxu0 %v3858
        %5627 = vmatprep.subr.mxu0 %v3869
        %5628 = vmatpush1.msra.mxu0 %v3868
        %5629 = vmatprep.subr.mxu0 %v3879
        %5630 = vmatpush1.msra.mxu0 %v3878
        %5631 = vmatprep.subr.mxu0 %v3889
        %5632 = vmatpush1.msra.mxu0 %v3888
        %5633 = vmatprep.subr.mxu0 %v3899
        %5634 = vmatpush1.msra.mxu0 %v3898
        %5635 = vmatprep.subr.mxu0 %v3909
        %5636 = vmatpush1.msra.mxu0 %v3908
        %5637 = vmatprep.subr.mxu0 %v3919
        %5638 = vmatpush1.msra.mxu0 %v3918
        %5639 = vmatprep.subr.mxu0 %v3929
        %5640 = vmatpush1.msra.mxu0 %v3928
        %5641 = vmatprep.subr.mxu0 %v3939
        %5642 = vmatpush1.msra.mxu0 %v3938
        %5643 = vmatprep.subr.mxu0 %v3949
        %5644 = vmatpush1.msra.mxu0 %v3948
        %5645 = vmatprep.subr.mxu0 %v3959
        %5646 = vmatpush1.msra.mxu0 %v3958
        %5647 = vmatprep.subr.mxu0 %v3969
        %5648 = vmatpush1.msra.mxu0 %v3968
        %5649 = vmatprep.subr.mxu0 %v3979
        %5650 = vmatpush1.msra.mxu0 %v3978
        %5651 = vmatprep.subr.mxu0 %v3989
        %5652 = vmatpush1.msra.mxu0 %v3988
        %5653 = vmatprep.subr.mxu0 %v3999
        %5654 = vmatpush1.msra.mxu0 %v3998
        %5655 = vmatprep.subr.mxu0 %v4009
        %5656 = vmatpush1.msra.mxu0 %v4008
        %5657 = vmatprep.subr.mxu0 %v4019
        %5658 = vmatpush1.msra.mxu0 %v4018
        %5659 = vmatprep.subr.mxu0 %v4029
        %5660 = vmatpush1.msra.mxu0 %v4028
        %5661 = vmatprep.subr.mxu0 %v4039
        %5662 = vmatpush1.msra.mxu0 %v4038
        %5663 = vmatprep.subr.mxu0 %v4049
        %5664 = vmatpush1.msra.mxu0 %v4048
        %5665 = vmatprep.subr.mxu0 %v4059
        %5666 = vmatpush1.msra.mxu0 %v4058
        %5667 = vmatprep.subr.mxu0 %v4069
        %5668 = vmatpush1.msra.mxu0 %v4068
        %5669 = vmatprep.subr.mxu0 %v4079
        %5670 = vmatpush1.msra.mxu0 %v4078
        %5671 = vmatprep.subr.mxu0 %v4089
        %5672 = vmatpush1.msra.mxu0 %v4088
        %5673 = vmatprep.subr.mxu0 %v4099
        %5674 = vmatpush1.msra.mxu0 %v4098
        %5675 = vmatprep.mubr.f32.mxu0 %v4363
        %5676 = vmatmul.mubr.f32.gmra.mrb[0].mxu0 %v4362
        %v5677 = vpop.f32.mrb[0].mxu0
        %v5678 = vadd.f32 %v5412, %v5677
        %v5679 = vpop.f32.mrb[0].mxu0
        %v5680 = vadd.f32 %v5413, %v5679
        %5681 = vmatprep.mubr.f32.mxu0 %v4366
        %5682 = vmatmul.mubr.f32.gmra.mrb[0].mxu0 %v4365
        %v5683 = vpop.f32.mrb[0].mxu0
        %v5684 = vadd.f32 %v5421, %v5683
        %v5685 = vpop.f32.mrb[0].mxu0
        %v5686 = vadd.f32 %v5422, %v5685
        %5687 = vdwg.mxu0
        %5688 = vmatprep.subr.mxu0 %v4109
        %5689 = vmatpush1.msra.mxu0 %v4108
        %5690 = vmatprep.subr.mxu0 %v4119
        %5691 = vmatpush1.msra.mxu0 %v4118
        %5692 = vmatprep.subr.mxu0 %v4129
        %5693 = vmatpush1.msra.mxu0 %v4128
        %5694 = vmatprep.subr.mxu0 %v4139
        %5695 = vmatpush1.msra.mxu0 %v4138
        %5696 = vmatprep.subr.mxu0 0.0
        %5697 = vmatpush1.msra.mxu0 0.0
        %5698 = vmatprep.subr.mxu0 0.0
        %5699 = vmatpush1.msra.mxu0 0.0
        %5700 = vmatprep.subr.mxu0 0.0
        %5701 = vmatpush1.msra.mxu0 0.0
        %5702 = vmatprep.subr.mxu0 0.0
        %5703 = vmatpush1.msra.mxu0 0.0
        %5704 = vmatprep.subr.mxu0 0.0
        %5705 = vmatpush1.msra.mxu0 0.0
        %5706 = vmatprep.subr.mxu0 0.0
        %5707 = vmatpush1.msra.mxu0 0.0
        %5708 = vmatprep.subr.mxu0 0.0
        %5709 = vmatpush1.msra.mxu0 0.0
        %5710 = vmatprep.subr.mxu0 0.0
        %5711 = vmatpush1.msra.mxu0 0.0
        %5712 = vmatprep.subr.mxu0 0.0
        %5713 = vmatpush1.msra.mxu0 0.0
        %5714 = vmatprep.subr.mxu0 0.0
        %5715 = vmatpush1.msra.mxu0 0.0
        %5716 = vmatprep.subr.mxu0 0.0
        %5717 = vmatpush1.msra.mxu0 0.0
        %5718 = vmatprep.subr.mxu0 0.0
        %5719 = vmatpush1.msra.mxu0 0.0
        %5720 = vmatprep.subr.mxu0 0.0
        %5721 = vmatpush1.msra.mxu0 0.0
        %5722 = vmatprep.subr.mxu0 0.0
        %5723 = vmatpush1.msra.mxu0 0.0
        %5724 = vmatprep.subr.mxu0 0.0
        %5725 = vmatpush1.msra.mxu0 0.0
        %5726 = vmatprep.subr.mxu0 0.0
        %5727 = vmatpush1.msra.mxu0 0.0
        %5728 = vmatprep.subr.mxu0 0.0
        %5729 = vmatpush1.msra.mxu0 0.0
        %5730 = vmatprep.subr.mxu0 0.0
        %5731 = vmatpush1.msra.mxu0 0.0
        %5732 = vmatprep.subr.mxu0 0.0
        %5733 = vmatpush1.msra.mxu0 0.0
        %5734 = vmatprep.subr.mxu0 0.0
        %5735 = vmatpush1.msra.mxu0 0.0
        %5736 = vmatprep.subr.mxu0 0.0
        %5737 = vmatpush1.msra.mxu0 0.0
        %5738 = vmatprep.subr.mxu0 0.0
        %5739 = vmatpush1.msra.mxu0 0.0
        %5740 = vmatprep.subr.mxu0 0.0
        %5741 = vmatpush1.msra.mxu0 0.0
        %5742 = vmatprep.subr.mxu0 0.0
        %5743 = vmatpush1.msra.mxu0 0.0
        %5744 = vmatprep.subr.mxu0 0.0
        %5745 = vmatpush1.msra.mxu0 0.0
        %5746 = vmatprep.subr.mxu0 0.0
        %5747 = vmatpush1.msra.mxu0 0.0
        %5748 = vmatprep.subr.mxu0 0.0
        %5749 = vmatpush1.msra.mxu0 0.0
        %5750 = vmatprep.subr.mxu0 0.0
        %5751 = vmatpush1.msra.mxu0 0.0
        %5752 = vmatprep.mubr.f32.mxu0 0.0
        %5753 = vmatmul.mubr.f32.gmra.mrb[0].mxu0 %v5452
        %v5754 = vpop.f32.mrb[0].mxu0
        %v5755 = vadd.f32 %v5678, %v5754
        %v5756 = vpop.f32.mrb[0].mxu0
        %v5757 = vadd.f32 %v5680, %v5756
        %5758 = vmatprep.mubr.f32.mxu0 0.0
        %5759 = vmatmul.mubr.f32.gmra.mrb[0].mxu0 %v5455
        %v5760 = vpop.f32.mrb[0].mxu0
        %v5761 = vadd.f32 %v5684, %v5760
        %v5762 = vpop.f32.mrb[0].mxu0
        %v5763 = vadd.f32 %v5686, %v5762
        %5764 = vdwg.mxu0
        %5765 = vmatprep.subr.mxu0 %v3791
        %5766 = vmatpush1.msra.mxu0 %v3790
        %5767 = vmatprep.subr.mxu0 %v3801
        %5768 = vmatpush1.msra.mxu0 %v3800
        %5769 = vmatprep.subr.mxu0 %v3811
        %5770 = vmatpush1.msra.mxu0 %v3810
        %5771 = vmatprep.subr.mxu0 %v3821
        %5772 = vmatpush1.msra.mxu0 %v3820
        %5773 = vmatprep.subr.mxu0 %v3831
        %5774 = vmatpush1.msra.mxu0 %v3830
        %5775 = vmatprep.subr.mxu0 %v3841
        %5776 = vmatpush1.msra.mxu0 %v3840
        %5777 = vmatprep.subr.mxu0 %v3851
        %5778 = vmatpush1.msra.mxu0 %v3850
        %5779 = vmatprep.subr.mxu0 %v3861
        %5780 = vmatpush1.msra.mxu0 %v3860
        %5781 = vmatprep.subr.mxu0 %v3871
        %5782 = vmatpush1.msra.mxu0 %v3870
        %5783 = vmatprep.subr.mxu0 %v3881
        %5784 = vmatpush1.msra.mxu0 %v3880
        %5785 = vmatprep.subr.mxu0 %v3891
        %5786 = vmatpush1.msra.mxu0 %v3890
        %5787 = vmatprep.subr.mxu0 %v3901
        %5788 = vmatpush1.msra.mxu0 %v3900
        %5789 = vmatprep.subr.mxu0 %v3911
        %5790 = vmatpush1.msra.mxu0 %v3910
        %5791 = vmatprep.subr.mxu0 %v3921
        %5792 = vmatpush1.msra.mxu0 %v3920
        %5793 = vmatprep.subr.mxu0 %v3931
        %5794 = vmatpush1.msra.mxu0 %v3930
        %5795 = vmatprep.subr.mxu0 %v3941
        %5796 = vmatpush1.msra.mxu0 %v3940
        %5797 = vmatprep.subr.mxu0 %v3951
        %5798 = vmatpush1.msra.mxu0 %v3950
        %5799 = vmatprep.subr.mxu0 %v3961
        %5800 = vmatpush1.msra.mxu0 %v3960
        %5801 = vmatprep.subr.mxu0 %v3971
        %5802 = vmatpush1.msra.mxu0 %v3970
        %5803 = vmatprep.subr.mxu0 %v3981
        %5804 = vmatpush1.msra.mxu0 %v3980
        %5805 = vmatprep.subr.mxu0 %v3991
        %5806 = vmatpush1.msra.mxu0 %v3990
        %5807 = vmatprep.subr.mxu0 %v4001
        %5808 = vmatpush1.msra.mxu0 %v4000
        %5809 = vmatprep.subr.mxu0 %v4011
        %5810 = vmatpush1.msra.mxu0 %v4010
        %5811 = vmatprep.subr.mxu0 %v4021
        %5812 = vmatpush1.msra.mxu0 %v4020
        %5813 = vmatprep.subr.mxu0 %v4031
        %5814 = vmatpush1.msra.mxu0 %v4030
        %5815 = vmatprep.subr.mxu0 %v4041
        %5816 = vmatpush1.msra.mxu0 %v4040
        %5817 = vmatprep.subr.mxu0 %v4051
        %5818 = vmatpush1.msra.mxu0 %v4050
        %5819 = vmatprep.subr.mxu0 %v4061
        %5820 = vmatpush1.msra.mxu0 %v4060
        %5821 = vmatprep.subr.mxu0 %v4071
        %5822 = vmatpush1.msra.mxu0 %v4070
        %5823 = vmatprep.subr.mxu0 %v4081
        %5824 = vmatpush1.msra.mxu0 %v4080
        %5825 = vmatprep.subr.mxu0 %v4091
        %5826 = vmatpush1.msra.mxu0 %v4090
        %5827 = vmatprep.subr.mxu0 %v4101
        %5828 = vmatpush1.msra.mxu0 %v4100
        %5829 = vmatprep.mubr.f32.mxu0 %v4363
        %5830 = vmatmul.mubr.f32.gmra.mrb[0].mxu0 %v4362
        %v5831 = vpop.f32.mrb[0].mxu0
        %v5832 = vadd.f32 %v5414, %v5831
        %v5833 = vpop.f32.mrb[0].mxu0
        %v5834 = vadd.f32 %v5415, %v5833
        %5835 = vmatprep.mubr.f32.mxu0 %v4366
        %5836 = vmatmul.mubr.f32.gmra.mrb[0].mxu0 %v4365
        %v5837 = vpop.f32.mrb[0].mxu0
        %v5838 = vadd.f32 %v5423, %v5837
        %v5839 = vpop.f32.mrb[0].mxu0
        %v5840 = vadd.f32 %v5424, %v5839
        %5841 = vdwg.mxu0
        %5842 = vmatprep.subr.mxu0 %v4111
        %5843 = vmatpush1.msra.mxu0 %v4110
        %5844 = vmatprep.subr.mxu0 %v4121
        %5845 = vmatpush1.msra.mxu0 %v4120
        %5846 = vmatprep.subr.mxu0 %v4131
        %5847 = vmatpush1.msra.mxu0 %v4130
        %5848 = vmatprep.subr.mxu0 %v4141
        %5849 = vmatpush1.msra.mxu0 %v4140
        %5850 = vmatprep.subr.mxu0 0.0
        %5851 = vmatpush1.msra.mxu0 0.0
        %5852 = vmatprep.subr.mxu0 0.0
        %5853 = vmatpush1.msra.mxu0 0.0
        %5854 = vmatprep.subr.mxu0 0.0
        %5855 = vmatpush1.msra.mxu0 0.0
        %5856 = vmatprep.subr.mxu0 0.0
        %5857 = vmatpush1.msra.mxu0 0.0
        %5858 = vmatprep.subr.mxu0 0.0
        %5859 = vmatpush1.msra.mxu0 0.0
        %5860 = vmatprep.subr.mxu0 0.0
        %5861 = vmatpush1.msra.mxu0 0.0
        %5862 = vmatprep.subr.mxu0 0.0
        %5863 = vmatpush1.msra.mxu0 0.0
        %5864 = vmatprep.subr.mxu0 0.0
        %5865 = vmatpush1.msra.mxu0 0.0
        %5866 = vmatprep.subr.mxu0 0.0
        %5867 = vmatpush1.msra.mxu0 0.0
        %5868 = vmatprep.subr.mxu0 0.0
        %5869 = vmatpush1.msra.mxu0 0.0
        %5870 = vmatprep.subr.mxu0 0.0
        %5871 = vmatpush1.msra.mxu0 0.0
        %5872 = vmatprep.subr.mxu0 0.0
        %5873 = vmatpush1.msra.mxu0 0.0
        %5874 = vmatprep.subr.mxu0 0.0
        %5875 = vmatpush1.msra.mxu0 0.0
        %5876 = vmatprep.subr.mxu0 0.0
        %5877 = vmatpush1.msra.mxu0 0.0
        %5878 = vmatprep.subr.mxu0 0.0
        %5879 = vmatpush1.msra.mxu0 0.0
        %5880 = vmatprep.subr.mxu0 0.0
        %5881 = vmatpush1.msra.mxu0 0.0
        %5882 = vmatprep.subr.mxu0 0.0
        %5883 = vmatpush1.msra.mxu0 0.0
        %5884 = vmatprep.subr.mxu0 0.0
        %5885 = vmatpush1.msra.mxu0 0.0
        %5886 = vmatprep.subr.mxu0 0.0
        %5887 = vmatpush1.msra.mxu0 0.0
        %5888 = vmatprep.subr.mxu0 0.0
        %5889 = vmatpush1.msra.mxu0 0.0
        %5890 = vmatprep.subr.mxu0 0.0
        %5891 = vmatpush1.msra.mxu0 0.0
        %5892 = vmatprep.subr.mxu0 0.0
        %5893 = vmatpush1.msra.mxu0 0.0
        %5894 = vmatprep.subr.mxu0 0.0
        %5895 = vmatpush1.msra.mxu0 0.0
        %5896 = vmatprep.subr.mxu0 0.0
        %5897 = vmatpush1.msra.mxu0 0.0
        %5898 = vmatprep.subr.mxu0 0.0
        %5899 = vmatpush1.msra.mxu0 0.0
        %5900 = vmatprep.subr.mxu0 0.0
        %5901 = vmatpush1.msra.mxu0 0.0
        %5902 = vmatprep.subr.mxu0 0.0
        %5903 = vmatpush1.msra.mxu0 0.0
        %5904 = vmatprep.subr.mxu0 0.0
        %5905 = vmatpush1.msra.mxu0 0.0
        %5906 = vmatprep.mubr.f32.mxu0 0.0
        %5907 = vmatmul.mubr.f32.gmra.mrb[0].mxu0 %v5452
        %v5908 = vpop.f32.mrb[0].mxu0
        %v5909 = vadd.f32 %v5832, %v5908
        %v5910 = vpop.f32.mrb[0].mxu0
        %v5911 = vadd.f32 %v5834, %v5910
        %5912 = vmatprep.mubr.f32.mxu0 0.0
        %5913 = vmatmul.mubr.f32.gmra.mrb[0].mxu0 %v5455
        %v5914 = vpop.f32.mrb[0].mxu0
        %v5915 = vadd.f32 %v5838, %v5914
        %v5916 = vpop.f32.mrb[0].mxu0
        %v5917 = vadd.f32 %v5840, %v5916
        %5918 = vdwg.mxu0
        %5919 = vmatprep.subr.mxu0 %v3793
        %5920 = vmatpush1.msra.mxu0 %v3792
        %5921 = vmatprep.subr.mxu0 %v3803
        %5922 = vmatpush1.msra.mxu0 %v3802
        %5923 = vmatprep.subr.mxu0 %v3813
        %5924 = vmatpush1.msra.mxu0 %v3812
        %5925 = vmatprep.subr.mxu0 %v3823
        %5926 = vmatpush1.msra.mxu0 %v3822
        %5927 = vmatprep.subr.mxu0 %v3833
        %5928 = vmatpush1.msra.mxu0 %v3832
        %5929 = vmatprep.subr.mxu0 %v3843
        %5930 = vmatpush1.msra.mxu0 %v3842
        %5931 = vmatprep.subr.mxu0 %v3853
        %5932 = vmatpush1.msra.mxu0 %v3852
        %5933 = vmatprep.subr.mxu0 %v3863
        %5934 = vmatpush1.msra.mxu0 %v3862
        %5935 = vmatprep.subr.mxu0 %v3873
        %5936 = vmatpush1.msra.mxu0 %v3872
        %5937 = vmatprep.subr.mxu0 %v3883
        %5938 = vmatpush1.msra.mxu0 %v3882
        %5939 = vmatprep.subr.mxu0 %v3893
        %5940 = vmatpush1.msra.mxu0 %v3892
        %5941 = vmatprep.subr.mxu0 %v3903
        %5942 = vmatpush1.msra.mxu0 %v3902
        %5943 = vmatprep.subr.mxu0 %v3913
        %5944 = vmatpush1.msra.mxu0 %v3912
        %5945 = vmatprep.subr.mxu0 %v3923
        %5946 = vmatpush1.msra.mxu0 %v3922
        %5947 = vmatprep.subr.mxu0 %v3933
        %5948 = vmatpush1.msra.mxu0 %v3932
        %5949 = vmatprep.subr.mxu0 %v3943
        %5950 = vmatpush1.msra.mxu0 %v3942
        %5951 = vmatprep.subr.mxu0 %v3953
        %5952 = vmatpush1.msra.mxu0 %v3952
        %5953 = vmatprep.subr.mxu0 %v3963
        %5954 = vmatpush1.msra.mxu0 %v3962
        %5955 = vmatprep.subr.mxu0 %v3973
        %5956 = vmatpush1.msra.mxu0 %v3972
        %5957 = vmatprep.subr.mxu0 %v3983
        %5958 = vmatpush1.msra.mxu0 %v3982
        %5959 = vmatprep.subr.mxu0 %v3993
        %5960 = vmatpush1.msra.mxu0 %v3992
        %5961 = vmatprep.subr.mxu0 %v4003
        %5962 = vmatpush1.msra.mxu0 %v4002
        %5963 = vmatprep.subr.mxu0 %v4013
        %5964 = vmatpush1.msra.mxu0 %v4012
        %5965 = vmatprep.subr.mxu0 %v4023
        %5966 = vmatpush1.msra.mxu0 %v4022
        %5967 = vmatprep.subr.mxu0 %v4033
        %5968 = vmatpush1.msra.mxu0 %v4032
        %5969 = vmatprep.subr.mxu0 %v4043
        %5970 = vmatpush1.msra.mxu0 %v4042
        %5971 = vmatprep.subr.mxu0 %v4053
        %5972 = vmatpush1.msra.mxu0 %v4052
        %5973 = vmatprep.subr.mxu0 %v4063
        %5974 = vmatpush1.msra.mxu0 %v4062
        %5975 = vmatprep.subr.mxu0 %v4073
        %5976 = vmatpush1.msra.mxu0 %v4072
        %5977 = vmatprep.subr.mxu0 %v4083
        %5978 = vmatpush1.msra.mxu0 %v4082
        %5979 = vmatprep.subr.mxu0 %v4093
        %5980 = vmatpush1.msra.mxu0 %v4092
        %5981 = vmatprep.subr.mxu0 %v4103
        %5982 = vmatpush1.msra.mxu0 %v4102
        %5983 = vmatprep.mubr.f32.mxu0 %v4363
        %5984 = vmatmul.mubr.f32.gmra.mrb[0].mxu0 %v4362
        %v5985 = vpop.f32.mrb[0].mxu0
        %v5986 = vadd.f32 %v5416, %v5985
        %v5987 = vpop.f32.mrb[0].mxu0
        %v5988 = vadd.f32 %v5417, %v5987
        %5989 = vmatprep.mubr.f32.mxu0 %v4366
        %5990 = vmatmul.mubr.f32.gmra.mrb[0].mxu0 %v4365
        %v5991 = vpop.f32.mrb[0].mxu0
        %v5992 = vadd.f32 %v5425, %v5991
        %v5993 = vpop.f32.mrb[0].mxu0
        %v5994 = vadd.f32 %v5426, %v5993
        %5995 = vdwg.mxu0
        %5996 = vmatprep.subr.mxu0 %v4113
        %5997 = vmatpush1.msra.mxu0 %v4112
        %5998 = vmatprep.subr.mxu0 %v4123
        %5999 = vmatpush1.msra.mxu0 %v4122
        %6000 = vmatprep.subr.mxu0 %v4133
        %6001 = vmatpush1.msra.mxu0 %v4132
        %6002 = vmatprep.subr.mxu0 %v4143
        %6003 = vmatpush1.msra.mxu0 %v4142
        %6004 = vmatprep.subr.mxu0 0.0
        %6005 = vmatpush1.msra.mxu0 0.0
        %6006 = vmatprep.subr.mxu0 0.0
        %6007 = vmatpush1.msra.mxu0 0.0
        %6008 = vmatprep.subr.mxu0 0.0
        %6009 = vmatpush1.msra.mxu0 0.0
        %6010 = vmatprep.subr.mxu0 0.0
        %6011 = vmatpush1.msra.mxu0 0.0
        %6012 = vmatprep.subr.mxu0 0.0
        %6013 = vmatpush1.msra.mxu0 0.0
        %6014 = vmatprep.subr.mxu0 0.0
        %6015 = vmatpush1.msra.mxu0 0.0
        %6016 = vmatprep.subr.mxu0 0.0
        %6017 = vmatpush1.msra.mxu0 0.0
        %6018 = vmatprep.subr.mxu0 0.0
        %6019 = vmatpush1.msra.mxu0 0.0
        %6020 = vmatprep.subr.mxu0 0.0
        %6021 = vmatpush1.msra.mxu0 0.0
        %6022 = vmatprep.subr.mxu0 0.0
        %6023 = vmatpush1.msra.mxu0 0.0
        %6024 = vmatprep.subr.mxu0 0.0
        %6025 = vmatpush1.msra.mxu0 0.0
        %6026 = vmatprep.subr.mxu0 0.0
        %6027 = vmatpush1.msra.mxu0 0.0
        %6028 = vmatprep.subr.mxu0 0.0
        %6029 = vmatpush1.msra.mxu0 0.0
        %6030 = vmatprep.subr.mxu0 0.0
        %6031 = vmatpush1.msra.mxu0 0.0
        %6032 = vmatprep.subr.mxu0 0.0
        %6033 = vmatpush1.msra.mxu0 0.0
        %6034 = vmatprep.subr.mxu0 0.0
        %6035 = vmatpush1.msra.mxu0 0.0
        %6036 = vmatprep.subr.mxu0 0.0
        %6037 = vmatpush1.msra.mxu0 0.0
        %6038 = vmatprep.subr.mxu0 0.0
        %6039 = vmatpush1.msra.mxu0 0.0
        %6040 = vmatprep.subr.mxu0 0.0
        %6041 = vmatpush1.msra.mxu0 0.0
        %6042 = vmatprep.subr.mxu0 0.0
        %6043 = vmatpush1.msra.mxu0 0.0
        %6044 = vmatprep.subr.mxu0 0.0
        %6045 = vmatpush1.msra.mxu0 0.0
        %6046 = vmatprep.subr.mxu0 0.0
        %6047 = vmatpush1.msra.mxu0 0.0
        %6048 = vmatprep.subr.mxu0 0.0
        %6049 = vmatpush1.msra.mxu0 0.0
        %6050 = vmatprep.subr.mxu0 0.0
        %6051 = vmatpush1.msra.mxu0 0.0
        %6052 = vmatprep.subr.mxu0 0.0
        %6053 = vmatpush1.msra.mxu0 0.0
        %6054 = vmatprep.subr.mxu0 0.0
        %6055 = vmatpush1.msra.mxu0 0.0
        %6056 = vmatprep.subr.mxu0 0.0
        %6057 = vmatpush1.msra.mxu0 0.0
        %6058 = vmatprep.subr.mxu0 0.0
        %6059 = vmatpush1.msra.mxu0 0.0
        %6060 = vmatprep.mubr.f32.mxu0 0.0
        %6061 = vmatmul.mubr.f32.gmra.mrb[0].mxu0 %v5452
        %v6062 = vpop.f32.mrb[0].mxu0
        %v6063 = vadd.f32 %v5986, %v6062
        %v6064 = vpop.f32.mrb[0].mxu0
        %v6065 = vadd.f32 %v5988, %v6064
        %6066 = vmatprep.mubr.f32.mxu0 0.0
        %6067 = vmatmul.mubr.f32.gmra.mrb[0].mxu0 %v5455
        %v6068 = vpop.f32.mrb[0].mxu0
        %v6069 = vadd.f32 %v5992, %v6068
        %v6070 = vpop.f32.mrb[0].mxu0
        %v6071 = vadd.f32 %v5994, %v6070
        %6072 = vdwg.mxu0
        %6073 = vmatprep.subr.mxu0 %v3795
        %6074 = vmatpush1.msra.mxu0 %v3794
        %6075 = vmatprep.subr.mxu0 %v3805
        %6076 = vmatpush1.msra.mxu0 %v3804
        %6077 = vmatprep.subr.mxu0 %v3815
        %6078 = vmatpush1.msra.mxu0 %v3814
        %6079 = vmatprep.subr.mxu0 %v3825
        %6080 = vmatpush1.msra.mxu0 %v3824
        %6081 = vmatprep.subr.mxu0 %v3835
        %6082 = vmatpush1.msra.mxu0 %v3834
        %6083 = vmatprep.subr.mxu0 %v3845
        %6084 = vmatpush1.msra.mxu0 %v3844
        %6085 = vmatprep.subr.mxu0 %v3855
        %6086 = vmatpush1.msra.mxu0 %v3854
        %6087 = vmatprep.subr.mxu0 %v3865
        %6088 = vmatpush1.msra.mxu0 %v3864
        %6089 = vmatprep.subr.mxu0 %v3875
        %6090 = vmatpush1.msra.mxu0 %v3874
        %6091 = vmatprep.subr.mxu0 %v3885
        %6092 = vmatpush1.msra.mxu0 %v3884
        %6093 = vmatprep.subr.mxu0 %v3895
        %6094 = vmatpush1.msra.mxu0 %v3894
        %6095 = vmatprep.subr.mxu0 %v3905
        %6096 = vmatpush1.msra.mxu0 %v3904
        %6097 = vmatprep.subr.mxu0 %v3915
        %6098 = vmatpush1.msra.mxu0 %v3914
        %6099 = vmatprep.subr.mxu0 %v3925
        %6100 = vmatpush1.msra.mxu0 %v3924
        %6101 = vmatprep.subr.mxu0 %v3935
        %6102 = vmatpush1.msra.mxu0 %v3934
        %6103 = vmatprep.subr.mxu0 %v3945
        %6104 = vmatpush1.msra.mxu0 %v3944
        %6105 = vmatprep.subr.mxu0 %v3955
        %6106 = vmatpush1.msra.mxu0 %v3954
        %6107 = vmatprep.subr.mxu0 %v3965
        %6108 = vmatpush1.msra.mxu0 %v3964
        %6109 = vmatprep.subr.mxu0 %v3975
        %6110 = vmatpush1.msra.mxu0 %v3974
        %6111 = vmatprep.subr.mxu0 %v3985
        %6112 = vmatpush1.msra.mxu0 %v3984
        %6113 = vmatprep.subr.mxu0 %v3995
        %6114 = vmatpush1.msra.mxu0 %v3994
        %6115 = vmatprep.subr.mxu0 %v4005
        %6116 = vmatpush1.msra.mxu0 %v4004
        %6117 = vmatprep.subr.mxu0 %v4015
        %6118 = vmatpush1.msra.mxu0 %v4014
        %6119 = vmatprep.subr.mxu0 %v4025
        %6120 = vmatpush1.msra.mxu0 %v4024
        %6121 = vmatprep.subr.mxu0 %v4035
        %6122 = vmatpush1.msra.mxu0 %v4034
        %6123 = vmatprep.subr.mxu0 %v4045
        %6124 = vmatpush1.msra.mxu0 %v4044
        %6125 = vmatprep.subr.mxu0 %v4055
        %6126 = vmatpush1.msra.mxu0 %v4054
        %6127 = vmatprep.subr.mxu0 %v4065
        %6128 = vmatpush1.msra.mxu0 %v4064
        %6129 = vmatprep.subr.mxu0 %v4075
        %6130 = vmatpush1.msra.mxu0 %v4074
        %6131 = vmatprep.subr.mxu0 %v4085
        %6132 = vmatpush1.msra.mxu0 %v4084
        %6133 = vmatprep.subr.mxu0 %v4095
        %6134 = vmatpush1.msra.mxu0 %v4094
        %6135 = vmatprep.subr.mxu0 %v4105
        %6136 = vmatpush1.msra.mxu0 %v4104
        %6137 = vmatprep.mubr.f32.mxu0 %v4363
        %6138 = vmatmul.mubr.f32.gmra.mrb[0].mxu0 %v4362
        %v6139 = vpop.f32.mrb[0].mxu0
        %v6140 = vadd.f32 %v5418, %v6139
        %v6141 = vpop.f32.mrb[0].mxu0
        %v6142 = vadd.f32 %v5419, %v6141
        %6143 = vmatprep.mubr.f32.mxu0 %v4366
        %6144 = vmatmul.mubr.f32.gmra.mrb[0].mxu0 %v4365
        %v6145 = vpop.f32.mrb[0].mxu0
        %v6146 = vadd.f32 %v5427, %v6145
        %v6147 = vpop.f32.mrb[0].mxu0
        %v6148 = vadd.f32 %v5428, %v6147
        %6149 = vdwg.mxu0
        %6150 = vmatprep.subr.mxu0 %v4115
        %6151 = vmatpush1.msra.mxu0 %v4114
        %6152 = vmatprep.subr.mxu0 %v4125
        %6153 = vmatpush1.msra.mxu0 %v4124
        %6154 = vmatprep.subr.mxu0 %v4135
        %6155 = vmatpush1.msra.mxu0 %v4134
        %6156 = vmatprep.subr.mxu0 %v4145
        %6157 = vmatpush1.msra.mxu0 %v4144
        %6158 = vmatprep.subr.mxu0 0.0
        %6159 = vmatpush1.msra.mxu0 0.0
        %6160 = vmatprep.subr.mxu0 0.0
        %6161 = vmatpush1.msra.mxu0 0.0
        %6162 = vmatprep.subr.mxu0 0.0
        %6163 = vmatpush1.msra.mxu0 0.0
        %6164 = vmatprep.subr.mxu0 0.0
        %6165 = vmatpush1.msra.mxu0 0.0
        %6166 = vmatprep.subr.mxu0 0.0
        %6167 = vmatpush1.msra.mxu0 0.0
        %6168 = vmatprep.subr.mxu0 0.0
        %6169 = vmatpush1.msra.mxu0 0.0
        %6170 = vmatprep.subr.mxu0 0.0
        %6171 = vmatpush1.msra.mxu0 0.0
        %6172 = vmatprep.subr.mxu0 0.0
        %6173 = vmatpush1.msra.mxu0 0.0
        %6174 = vmatprep.subr.mxu0 0.0
        %6175 = vmatpush1.msra.mxu0 0.0
        %6176 = vmatprep.subr.mxu0 0.0
        %6177 = vmatpush1.msra.mxu0 0.0
        %6178 = vmatprep.subr.mxu0 0.0
        %6179 = vmatpush1.msra.mxu0 0.0
        %6180 = vmatprep.subr.mxu0 0.0
        %6181 = vmatpush1.msra.mxu0 0.0
        %6182 = vmatprep.subr.mxu0 0.0
        %6183 = vmatpush1.msra.mxu0 0.0
        %6184 = vmatprep.subr.mxu0 0.0
        %6185 = vmatpush1.msra.mxu0 0.0
        %6186 = vmatprep.subr.mxu0 0.0
        %6187 = vmatpush1.msra.mxu0 0.0
        %6188 = vmatprep.subr.mxu0 0.0
        %6189 = vmatpush1.msra.mxu0 0.0
        %6190 = vmatprep.subr.mxu0 0.0
        %6191 = vmatpush1.msra.mxu0 0.0
        %6192 = vmatprep.subr.mxu0 0.0
        %6193 = vmatpush1.msra.mxu0 0.0
        %6194 = vmatprep.subr.mxu0 0.0
        %6195 = vmatpush1.msra.mxu0 0.0
        %6196 = vmatprep.subr.mxu0 0.0
        %6197 = vmatpush1.msra.mxu0 0.0
        %6198 = vmatprep.subr.mxu0 0.0
        %6199 = vmatpush1.msra.mxu0 0.0
        %6200 = vmatprep.subr.mxu0 0.0
        %6201 = vmatpush1.msra.mxu0 0.0
        %6202 = vmatprep.subr.mxu0 0.0
        %6203 = vmatpush1.msra.mxu0 0.0
        %6204 = vmatprep.subr.mxu0 0.0
        %6205 = vmatpush1.msra.mxu0 0.0
        %6206 = vmatprep.subr.mxu0 0.0
        %6207 = vmatpush1.msra.mxu0 0.0
        %6208 = vmatprep.subr.mxu0 0.0
        %6209 = vmatpush1.msra.mxu0 0.0
        %6210 = vmatprep.subr.mxu0 0.0
        %6211 = vmatpush1.msra.mxu0 0.0
        %6212 = vmatprep.subr.mxu0 0.0
        %6213 = vmatpush1.msra.mxu0 0.0
        %6214 = vmatprep.mubr.f32.mxu0 0.0
        %6215 = vmatmul.mubr.f32.gmra.mrb[0].mxu0 %v5452
        %v6216 = vpop.f32.mrb[0].mxu0
        %v6217 = vadd.f32 %v6140, %v6216
        %v6218 = vpop.f32.mrb[0].mxu0
        %v6219 = vadd.f32 %v6142, %v6218
        %6220 = vmatprep.mubr.f32.mxu0 0.0
        %6221 = vmatmul.mubr.f32.gmra.mrb[0].mxu0 %v5455
        %v6222 = vpop.f32.mrb[0].mxu0
        %v6223 = vadd.f32 %v6146, %v6222
        %v6224 = vpop.f32.mrb[0].mxu0
        %v6225 = vadd.f32 %v6148, %v6224
        %6226 = vdwg.mxu0
        %v6227 = vmul.f32 %v3655, %v3655
        %v6228 = vmul.f32 %v3657, %v3657
        %v6229 = vmul.f32 %v3764, %v3764
        %v6230 = vmul.f32 %v3661, %v3661
        %v6231 = vmul.f32 %v3663, %v3663
        %v6232 = vmul.f32 %v3769, %v3769
        %6233 = vmatprep.subr.mxu0 %v6228
        %6234 = vmatpush1.msra.mxu0 %v6227
        %6235 = vmatprep.subr.mxu0 %v6231
        %6236 = vmatpush1.msra.mxu0 %v6230
        %6237 = vmatprep.subr.mxu0 0.0
        %6238 = vmatpush1.msra.mxu0 0.0
        %6239 = vmatprep.subr.mxu0 0.0
        %6240 = vmatpush1.msra.mxu0 0.0
        %6241 = vmatprep.subr.mxu0 0.0
        %6242 = vmatpush1.msra.mxu0 0.0
        %6243 = vmatprep.subr.mxu0 0.0
        %6244 = vmatpush1.msra.mxu0 0.0
        %6245 = vmatprep.subr.mxu0 0.0
        %6246 = vmatpush1.msra.mxu0 0.0
        %6247 = vmatprep.subr.mxu0 0.0
        %6248 = vmatpush1.msra.mxu0 0.0
        %6249 = vmatprep.subr.mxu0 0.0
        %6250 = vmatpush1.msra.mxu0 0.0
        %6251 = vmatprep.subr.mxu0 0.0
        %6252 = vmatpush1.msra.mxu0 0.0
        %6253 = vmatprep.subr.mxu0 0.0
        %6254 = vmatpush1.msra.mxu0 0.0
        %6255 = vmatprep.subr.mxu0 0.0
        %6256 = vmatpush1.msra.mxu0 0.0
        %6257 = vmatprep.subr.mxu0 0.0
        %6258 = vmatpush1.msra.mxu0 0.0
        %6259 = vmatprep.subr.mxu0 0.0
        %6260 = vmatpush1.msra.mxu0 0.0
        %6261 = vmatprep.subr.mxu0 0.0
        %6262 = vmatpush1.msra.mxu0 0.0
        %6263 = vmatprep.subr.mxu0 0.0
        %6264 = vmatpush1.msra.mxu0 0.0
        %6265 = vmatprep.subr.mxu0 0.0
        %6266 = vmatpush1.msra.mxu0 0.0
        %6267 = vmatprep.subr.mxu0 0.0
        %6268 = vmatpush1.msra.mxu0 0.0
        %6269 = vmatprep.subr.mxu0 0.0
        %6270 = vmatpush1.msra.mxu0 0.0
        %6271 = vmatprep.subr.mxu0 0.0
        %6272 = vmatpush1.msra.mxu0 0.0
        %6273 = vmatprep.subr.mxu0 0.0
        %6274 = vmatpush1.msra.mxu0 0.0
        %6275 = vmatprep.subr.mxu0 0.0
        %6276 = vmatpush1.msra.mxu0 0.0
        %6277 = vmatprep.subr.mxu0 0.0
        %6278 = vmatpush1.msra.mxu0 0.0
        %6279 = vmatprep.subr.mxu0 0.0
        %6280 = vmatpush1.msra.mxu0 0.0
        %6281 = vmatprep.subr.mxu0 0.0
        %6282 = vmatpush1.msra.mxu0 0.0
        %6283 = vmatprep.subr.mxu0 0.0
        %6284 = vmatpush1.msra.mxu0 0.0
        %6285 = vmatprep.subr.mxu0 0.0
        %6286 = vmatpush1.msra.mxu0 0.0
        %6287 = vmatprep.subr.mxu0 0.0
        %6288 = vmatpush1.msra.mxu0 0.0
        %6289 = vmatprep.subr.mxu0 0.0
        %6290 = vmatpush1.msra.mxu0 0.0
        %6291 = vmatprep.subr.mxu0 0.0
        %6292 = vmatpush1.msra.mxu0 0.0
        %6293 = vmatprep.subr.mxu0 0.0
        %6294 = vmatpush1.msra.mxu0 0.0
        %6295 = vmatprep.subr.mxu0 0.0
        %6296 = vmatpush1.msra.mxu0 0.0
        %6297 = vmatprep.mubr.f32.mxu0 0.0
        %6298 = vmatmul.mubr.f32.gmra.mrb[0].mxu0 %v4163
        %v6299 = vpop.f32.mrb[0].mxu0
        %v6300 = vadd.f32 %v4155, %v6299
        %v6301 = vpop.f32.mrb[0].mxu0
        %v6302 = vadd.f32 %v4155, %v6301
        %6303 = vmatprep.mubr.f32.mxu0 0.0
        %6304 = vmatmul.mubr.f32.gmra.mrb[0].mxu0 %v4166
        %v6305 = vpop.f32.mrb[0].mxu0
        %v6306 = vadd.f32 %v4160, %v6305
        %v6307 = vpop.f32.mrb[0].mxu0
        %v6308 = vadd.f32 %v4160, %v6307
        %6309 = vdwg.mxu0
        %6310 = vmatprep.subr.mxu0 0.0
        %6311 = vmatpush1.msra.mxu0 %v6229
        %6312 = vmatprep.subr.mxu0 0.0
        %6313 = vmatpush1.msra.mxu0 %v6232
        %6314 = vmatprep.subr.mxu0 0.0
        %6315 = vmatpush1.msra.mxu0 0.0
        %6316 = vmatprep.subr.mxu0 0.0
        %6317 = vmatpush1.msra.mxu0 0.0
        %6318 = vmatprep.subr.mxu0 0.0
        %6319 = vmatpush1.msra.mxu0 0.0
        %6320 = vmatprep.subr.mxu0 0.0
        %6321 = vmatpush1.msra.mxu0 0.0
        %6322 = vmatprep.subr.mxu0 0.0
        %6323 = vmatpush1.msra.mxu0 0.0
        %6324 = vmatprep.subr.mxu0 0.0
        %6325 = vmatpush1.msra.mxu0 0.0
        %6326 = vmatprep.subr.mxu0 0.0
        %6327 = vmatpush1.msra.mxu0 0.0
        %6328 = vmatprep.subr.mxu0 0.0
        %6329 = vmatpush1.msra.mxu0 0.0
        %6330 = vmatprep.subr.mxu0 0.0
        %6331 = vmatpush1.msra.mxu0 0.0
        %6332 = vmatprep.subr.mxu0 0.0
        %6333 = vmatpush1.msra.mxu0 0.0
        %6334 = vmatprep.subr.mxu0 0.0
        %6335 = vmatpush1.msra.mxu0 0.0
        %6336 = vmatprep.subr.mxu0 0.0
        %6337 = vmatpush1.msra.mxu0 0.0
        %6338 = vmatprep.subr.mxu0 0.0
        %6339 = vmatpush1.msra.mxu0 0.0
        %6340 = vmatprep.subr.mxu0 0.0
        %6341 = vmatpush1.msra.mxu0 0.0
        %6342 = vmatprep.subr.mxu0 0.0
        %6343 = vmatpush1.msra.mxu0 0.0
        %6344 = vmatprep.subr.mxu0 0.0
        %6345 = vmatpush1.msra.mxu0 0.0
        %6346 = vmatprep.subr.mxu0 0.0
        %6347 = vmatpush1.msra.mxu0 0.0
        %6348 = vmatprep.subr.mxu0 0.0
        %6349 = vmatpush1.msra.mxu0 0.0
        %6350 = vmatprep.subr.mxu0 0.0
        %6351 = vmatpush1.msra.mxu0 0.0
        %6352 = vmatprep.subr.mxu0 0.0
        %6353 = vmatpush1.msra.mxu0 0.0
        %6354 = vmatprep.subr.mxu0 0.0
        %6355 = vmatpush1.msra.mxu0 0.0
        %6356 = vmatprep.subr.mxu0 0.0
        %6357 = vmatpush1.msra.mxu0 0.0
        %6358 = vmatprep.subr.mxu0 0.0
        %6359 = vmatpush1.msra.mxu0 0.0
        %6360 = vmatprep.subr.mxu0 0.0
        %6361 = vmatpush1.msra.mxu0 0.0
        %6362 = vmatprep.subr.mxu0 0.0
        %6363 = vmatpush1.msra.mxu0 0.0
        %6364 = vmatprep.subr.mxu0 0.0
        %6365 = vmatpush1.msra.mxu0 0.0
        %6366 = vmatprep.subr.mxu0 0.0
        %6367 = vmatpush1.msra.mxu0 0.0
        %6368 = vmatprep.subr.mxu0 0.0
        %6369 = vmatpush1.msra.mxu0 0.0
        %6370 = vmatprep.subr.mxu0 0.0
        %6371 = vmatpush1.msra.mxu0 0.0
        %6372 = vmatprep.subr.mxu0 0.0
        %6373 = vmatpush1.msra.mxu0 0.0
        %6374 = vmatprep.mubr.f32.mxu0 0.0
        %6375 = vmatmul.mubr.f32.gmra.mrb[0].mxu0 %v4163
        %v6376 = vpop.f32.mrb[0].mxu0
        %v6377 = vadd.f32 %v4155, %v6376
        %v6378 = vpop.f32.mrb[0].mxu0
        %6379 = vmatprep.mubr.f32.mxu0 0.0
        %6380 = vmatmul.mubr.f32.gmra.mrb[0].mxu0 %v4166
        %v6381 = vpop.f32.mrb[0].mxu0
        %v6382 = vadd.f32 %v4160, %v6381
        %v6383 = vpop.f32.mrb[0].mxu0
        %6384 = vdwg.mxu0
        %v6385 = vrsqrt.pop %v6300
        %v6386 = vmul.f32 %v6300, %v6385
        %vm6387 = vcmp.eq.f32.partialorder %v6300, inf
        %v6388 = vsel %vm6387, %v6300, %v6386
        %vm6389 = vcmp.eq.f32.partialorder %v6300, 0.0
        %v6390 = vand.u32 %v6300, 2147483648
        %v6391 = vsel %vm6389, %v6390, %v6388
        %v6392 = vrsqrt.pop %v6302
        %v6393 = vmul.f32 %v6302, %v6392
        %vm6394 = vcmp.eq.f32.partialorder %v6302, inf
        %v6395 = vsel %vm6394, %v6302, %v6393
        %vm6396 = vcmp.eq.f32.partialorder %v6302, 0.0
        %v6397 = vand.u32 %v6302, 2147483648
        %v6398 = vsel %vm6396, %v6397, %v6395
        %v6399 = vrsqrt.pop %v6377
        %v6400 = vmul.f32 %v6377, %v6399
        %vm6401 = vcmp.eq.f32.partialorder %v6377, inf
        %v6402 = vsel %vm6401, %v6377, %v6400
        %vm6403 = vcmp.eq.f32.partialorder %v6377, 0.0
        %v6404 = vand.u32 %v6377, 2147483648
        %v6405 = vsel %vm6403, %v6404, %v6402
        %v6406 = vrsqrt.pop %v6306
        %v6407 = vmul.f32 %v6306, %v6406
        %vm6408 = vcmp.eq.f32.partialorder %v6306, inf
        %v6409 = vsel %vm6408, %v6306, %v6407
        %vm6410 = vcmp.eq.f32.partialorder %v6306, 0.0
        %v6411 = vand.u32 %v6306, 2147483648
        %v6412 = vsel %vm6410, %v6411, %v6409
        %v6413 = vrsqrt.pop %v6308
        %v6414 = vmul.f32 %v6308, %v6413
        %vm6415 = vcmp.eq.f32.partialorder %v6308, inf
        %v6416 = vsel %vm6415, %v6308, %v6414
        %vm6417 = vcmp.eq.f32.partialorder %v6308, 0.0
        %v6418 = vand.u32 %v6308, 2147483648
        %v6419 = vsel %vm6417, %v6418, %v6416
        %v6420 = vrsqrt.pop %v6382
        %v6421 = vmul.f32 %v6382, %v6420
        %vm6422 = vcmp.eq.f32.partialorder %v6382, inf
        %v6423 = vsel %vm6422, %v6382, %v6421
        %vm6424 = vcmp.eq.f32.partialorder %v6382, 0.0
        %v6425 = vand.u32 %v6382, 2147483648
        %v6426 = vsel %vm6424, %v6425, %v6423
        %v6427 = vmul.f32 %v3655, %v6391
        %v6428 = vmul.f32 %v3657, %v6398
        %v6429 = vmul.f32 %v3764, %v6405
        %v6430 = vmul.f32 %v3661, %v6412
        %v6431 = vmul.f32 %v3663, %v6419
        %v6432 = vmul.f32 %v3769, %v6426
        %v6434 = vsel %vm4574, %v6429, 0
        %v6437 = vsel %vm4574, %v6432, 0
        %6439 = vmatprep.subr.mxu0 %v3787
        %6440 = vmatpush1.msra.mxu0 %v3786
        %6441 = vmatprep.subr.mxu0 %v3797
        %6442 = vmatpush1.msra.mxu0 %v3796
        %6443 = vmatprep.subr.mxu0 %v3807
        %6444 = vmatpush1.msra.mxu0 %v3806
        %6445 = vmatprep.subr.mxu0 %v3817
        %6446 = vmatpush1.msra.mxu0 %v3816
        %6447 = vmatprep.subr.mxu0 %v3827
        %6448 = vmatpush1.msra.mxu0 %v3826
        %6449 = vmatprep.subr.mxu0 %v3837
        %6450 = vmatpush1.msra.mxu0 %v3836
        %6451 = vmatprep.subr.mxu0 %v3847
        %6452 = vmatpush1.msra.mxu0 %v3846
        %6453 = vmatprep.subr.mxu0 %v3857
        %6454 = vmatpush1.msra.mxu0 %v3856
        %6455 = vmatprep.subr.mxu0 %v3867
        %6456 = vmatpush1.msra.mxu0 %v3866
        %6457 = vmatprep.subr.mxu0 %v3877
        %6458 = vmatpush1.msra.mxu0 %v3876
        %6459 = vmatprep.subr.mxu0 %v3887
        %6460 = vmatpush1.msra.mxu0 %v3886
        %6461 = vmatprep.subr.mxu0 %v3897
        %6462 = vmatpush1.msra.mxu0 %v3896
        %6463 = vmatprep.subr.mxu0 %v3907
        %6464 = vmatpush1.msra.mxu0 %v3906
        %6465 = vmatprep.subr.mxu0 %v3917
        %6466 = vmatpush1.msra.mxu0 %v3916
        %6467 = vmatprep.subr.mxu0 %v3927
        %6468 = vmatpush1.msra.mxu0 %v3926
        %6469 = vmatprep.subr.mxu0 %v3937
        %6470 = vmatpush1.msra.mxu0 %v3936
        %6471 = vmatprep.subr.mxu0 %v3947
        %6472 = vmatpush1.msra.mxu0 %v3946
        %6473 = vmatprep.subr.mxu0 %v3957
        %6474 = vmatpush1.msra.mxu0 %v3956
        %6475 = vmatprep.subr.mxu0 %v3967
        %6476 = vmatpush1.msra.mxu0 %v3966
        %6477 = vmatprep.subr.mxu0 %v3977
        %6478 = vmatpush1.msra.mxu0 %v3976
        %6479 = vmatprep.subr.mxu0 %v3987
        %6480 = vmatpush1.msra.mxu0 %v3986
        %6481 = vmatprep.subr.mxu0 %v3997
        %6482 = vmatpush1.msra.mxu0 %v3996
        %6483 = vmatprep.subr.mxu0 %v4007
        %6484 = vmatpush1.msra.mxu0 %v4006
        %6485 = vmatprep.subr.mxu0 %v4017
        %6486 = vmatpush1.msra.mxu0 %v4016
        %6487 = vmatprep.subr.mxu0 %v4027
        %6488 = vmatpush1.msra.mxu0 %v4026
        %6489 = vmatprep.subr.mxu0 %v4037
        %6490 = vmatpush1.msra.mxu0 %v4036
        %6491 = vmatprep.subr.mxu0 %v4047
        %6492 = vmatpush1.msra.mxu0 %v4046
        %6493 = vmatprep.subr.mxu0 %v4057
        %6494 = vmatpush1.msra.mxu0 %v4056
        %6495 = vmatprep.subr.mxu0 %v4067
        %6496 = vmatpush1.msra.mxu0 %v4066
        %6497 = vmatprep.subr.mxu0 %v4077
        %6498 = vmatpush1.msra.mxu0 %v4076
        %6499 = vmatprep.subr.mxu0 %v4087
        %6500 = vmatpush1.msra.mxu0 %v4086
        %6501 = vmatprep.subr.mxu0 %v4097
        %6502 = vmatpush1.msra.mxu0 %v4096
        %6503 = vmatprep.mubr.f32.mxu0 %v6428
        %6504 = vmatmul.mubr.f32.gmra.mrb[0].mxu0 %v6427
        %v6505 = vpop.f32.mrb[0].mxu0
        %v6506 = vadd.f32 0.0, %v6505
        %v6507 = vpop.f32.mrb[0].mxu0
        %v6508 = vadd.f32 0.0, %v6507
        %6509 = vmatprep.mubr.f32.mxu0 %v6431
        %6510 = vmatmul.mubr.f32.gmra.mrb[0].mxu0 %v6430
        %v6511 = vpop.f32.mrb[0].mxu0
        %v6512 = vadd.f32 0.0, %v6511
        %v6513 = vpop.f32.mrb[0].mxu0
        %v6514 = vadd.f32 0.0, %v6513
        %6515 = vdwg.mxu0
        %6516 = vmatprep.subr.mxu0 %v4107
        %6517 = vmatpush1.msra.mxu0 %v4106
        %6518 = vmatprep.subr.mxu0 %v4117
        %6519 = vmatpush1.msra.mxu0 %v4116
        %6520 = vmatprep.subr.mxu0 %v4127
        %6521 = vmatpush1.msra.mxu0 %v4126
        %6522 = vmatprep.subr.mxu0 %v4137
        %6523 = vmatpush1.msra.mxu0 %v4136
        %6524 = vmatprep.subr.mxu0 0.0
        %6525 = vmatpush1.msra.mxu0 0.0
        %6526 = vmatprep.subr.mxu0 0.0
        %6527 = vmatpush1.msra.mxu0 0.0
        %6528 = vmatprep.subr.mxu0 0.0
        %6529 = vmatpush1.msra.mxu0 0.0
        %6530 = vmatprep.subr.mxu0 0.0
        %6531 = vmatpush1.msra.mxu0 0.0
        %6532 = vmatprep.subr.mxu0 0.0
        %6533 = vmatpush1.msra.mxu0 0.0
        %6534 = vmatprep.subr.mxu0 0.0
        %6535 = vmatpush1.msra.mxu0 0.0
        %6536 = vmatprep.subr.mxu0 0.0
        %6537 = vmatpush1.msra.mxu0 0.0
        %6538 = vmatprep.subr.mxu0 0.0
        %6539 = vmatpush1.msra.mxu0 0.0
        %6540 = vmatprep.subr.mxu0 0.0
        %6541 = vmatpush1.msra.mxu0 0.0
        %6542 = vmatprep.subr.mxu0 0.0
        %6543 = vmatpush1.msra.mxu0 0.0
        %6544 = vmatprep.subr.mxu0 0.0
        %6545 = vmatpush1.msra.mxu0 0.0
        %6546 = vmatprep.subr.mxu0 0.0
        %6547 = vmatpush1.msra.mxu0 0.0
        %6548 = vmatprep.subr.mxu0 0.0
        %6549 = vmatpush1.msra.mxu0 0.0
        %6550 = vmatprep.subr.mxu0 0.0
        %6551 = vmatpush1.msra.mxu0 0.0
        %6552 = vmatprep.subr.mxu0 0.0
        %6553 = vmatpush1.msra.mxu0 0.0
        %6554 = vmatprep.subr.mxu0 0.0
        %6555 = vmatpush1.msra.mxu0 0.0
        %6556 = vmatprep.subr.mxu0 0.0
        %6557 = vmatpush1.msra.mxu0 0.0
        %6558 = vmatprep.subr.mxu0 0.0
        %6559 = vmatpush1.msra.mxu0 0.0
        %6560 = vmatprep.subr.mxu0 0.0
        %6561 = vmatpush1.msra.mxu0 0.0
        %6562 = vmatprep.subr.mxu0 0.0
        %6563 = vmatpush1.msra.mxu0 0.0
        %6564 = vmatprep.subr.mxu0 0.0
        %6565 = vmatpush1.msra.mxu0 0.0
        %6566 = vmatprep.subr.mxu0 0.0
        %6567 = vmatpush1.msra.mxu0 0.0
        %6568 = vmatprep.subr.mxu0 0.0
        %6569 = vmatpush1.msra.mxu0 0.0
        %6570 = vmatprep.subr.mxu0 0.0
        %6571 = vmatpush1.msra.mxu0 0.0
        %6572 = vmatprep.subr.mxu0 0.0
        %6573 = vmatpush1.msra.mxu0 0.0
        %6574 = vmatprep.subr.mxu0 0.0
        %6575 = vmatpush1.msra.mxu0 0.0
        %6576 = vmatprep.subr.mxu0 0.0
        %6577 = vmatpush1.msra.mxu0 0.0
        %6578 = vmatprep.subr.mxu0 0.0
        %6579 = vmatpush1.msra.mxu0 0.0
        %6580 = vmatprep.mubr.f32.mxu0 0.0
        %6581 = vmatmul.mubr.f32.gmra.mrb[0].mxu0 %v6434
        %v6582 = vpop.f32.mrb[0].mxu0
        %v6583 = vadd.f32 %v6506, %v6582
        %v6584 = vpop.f32.mrb[0].mxu0
        %v6585 = vadd.f32 %v6508, %v6584
        %6586 = vmatprep.mubr.f32.mxu0 0.0
        %6587 = vmatmul.mubr.f32.gmra.mrb[0].mxu0 %v6437
        %v6588 = vpop.f32.mrb[0].mxu0
        %v6589 = vadd.f32 %v6512, %v6588
        %v6590 = vpop.f32.mrb[0].mxu0
        %v6591 = vadd.f32 %v6514, %v6590
        %6592 = vdwg.mxu0
        %6593 = vmatprep.subr.mxu0 %v3789
        %6594 = vmatpush1.msra.mxu0 %v3788
        %6595 = vmatprep.subr.mxu0 %v3799
        %6596 = vmatpush1.msra.mxu0 %v3798
        %6597 = vmatprep.subr.mxu0 %v3809
        %6598 = vmatpush1.msra.mxu0 %v3808
        %6599 = vmatprep.subr.mxu0 %v3819
        %6600 = vmatpush1.msra.mxu0 %v3818
        %6601 = vmatprep.subr.mxu0 %v3829
        %6602 = vmatpush1.msra.mxu0 %v3828
        %6603 = vmatprep.subr.mxu0 %v3839
        %6604 = vmatpush1.msra.mxu0 %v3838
        %6605 = vmatprep.subr.mxu0 %v3849
        %6606 = vmatpush1.msra.mxu0 %v3848
        %6607 = vmatprep.subr.mxu0 %v3859
        %6608 = vmatpush1.msra.mxu0 %v3858
        %6609 = vmatprep.subr.mxu0 %v3869
        %6610 = vmatpush1.msra.mxu0 %v3868
        %6611 = vmatprep.subr.mxu0 %v3879
        %6612 = vmatpush1.msra.mxu0 %v3878
        %6613 = vmatprep.subr.mxu0 %v3889
        %6614 = vmatpush1.msra.mxu0 %v3888
        %6615 = vmatprep.subr.mxu0 %v3899
        %6616 = vmatpush1.msra.mxu0 %v3898
        %6617 = vmatprep.subr.mxu0 %v3909
        %6618 = vmatpush1.msra.mxu0 %v3908
        %6619 = vmatprep.subr.mxu0 %v3919
        %6620 = vmatpush1.msra.mxu0 %v3918
        %6621 = vmatprep.subr.mxu0 %v3929
        %6622 = vmatpush1.msra.mxu0 %v3928
        %6623 = vmatprep.subr.mxu0 %v3939
        %6624 = vmatpush1.msra.mxu0 %v3938
        %6625 = vmatprep.subr.mxu0 %v3949
        %6626 = vmatpush1.msra.mxu0 %v3948
        %6627 = vmatprep.subr.mxu0 %v3959
        %6628 = vmatpush1.msra.mxu0 %v3958
        %6629 = vmatprep.subr.mxu0 %v3969
        %6630 = vmatpush1.msra.mxu0 %v3968
        %6631 = vmatprep.subr.mxu0 %v3979
        %6632 = vmatpush1.msra.mxu0 %v3978
        %6633 = vmatprep.subr.mxu0 %v3989
        %6634 = vmatpush1.msra.mxu0 %v3988
        %6635 = vmatprep.subr.mxu0 %v3999
        %6636 = vmatpush1.msra.mxu0 %v3998
        %6637 = vmatprep.subr.mxu0 %v4009
        %6638 = vmatpush1.msra.mxu0 %v4008
        %6639 = vmatprep.subr.mxu0 %v4019
        %6640 = vmatpush1.msra.mxu0 %v4018
        %6641 = vmatprep.subr.mxu0 %v4029
        %6642 = vmatpush1.msra.mxu0 %v4028
        %6643 = vmatprep.subr.mxu0 %v4039
        %6644 = vmatpush1.msra.mxu0 %v4038
        %6645 = vmatprep.subr.mxu0 %v4049
        %6646 = vmatpush1.msra.mxu0 %v4048
        %6647 = vmatprep.subr.mxu0 %v4059
        %6648 = vmatpush1.msra.mxu0 %v4058
        %6649 = vmatprep.subr.mxu0 %v4069
        %6650 = vmatpush1.msra.mxu0 %v4068
        %6651 = vmatprep.subr.mxu0 %v4079
        %6652 = vmatpush1.msra.mxu0 %v4078
        %6653 = vmatprep.subr.mxu0 %v4089
        %6654 = vmatpush1.msra.mxu0 %v4088
        %6655 = vmatprep.subr.mxu0 %v4099
        %6656 = vmatpush1.msra.mxu0 %v4098
        %6657 = vmatprep.mubr.f32.mxu0 %v6428
        %6658 = vmatmul.mubr.f32.gmra.mrb[0].mxu0 %v6427
        %v6659 = vpop.f32.mrb[0].mxu0
        %v6660 = vadd.f32 0.0, %v6659
        %v6661 = vpop.f32.mrb[0].mxu0
        %v6662 = vadd.f32 0.0, %v6661
        %6663 = vmatprep.mubr.f32.mxu0 %v6431
        %6664 = vmatmul.mubr.f32.gmra.mrb[0].mxu0 %v6430
        %v6665 = vpop.f32.mrb[0].mxu0
        %v6666 = vadd.f32 0.0, %v6665
        %v6667 = vpop.f32.mrb[0].mxu0
        %v6668 = vadd.f32 0.0, %v6667
        %6669 = vdwg.mxu0
        %6670 = vmatprep.subr.mxu0 %v4109
        %6671 = vmatpush1.msra.mxu0 %v4108
        %6672 = vmatprep.subr.mxu0 %v4119
        %6673 = vmatpush1.msra.mxu0 %v4118
        %6674 = vmatprep.subr.mxu0 %v4129
        %6675 = vmatpush1.msra.mxu0 %v4128
        %6676 = vmatprep.subr.mxu0 %v4139
        %6677 = vmatpush1.msra.mxu0 %v4138
        %6678 = vmatprep.subr.mxu0 0.0
        %6679 = vmatpush1.msra.mxu0 0.0
        %6680 = vmatprep.subr.mxu0 0.0
        %6681 = vmatpush1.msra.mxu0 0.0
        %6682 = vmatprep.subr.mxu0 0.0
        %6683 = vmatpush1.msra.mxu0 0.0
        %6684 = vmatprep.subr.mxu0 0.0
        %6685 = vmatpush1.msra.mxu0 0.0
        %6686 = vmatprep.subr.mxu0 0.0
        %6687 = vmatpush1.msra.mxu0 0.0
        %6688 = vmatprep.subr.mxu0 0.0
        %6689 = vmatpush1.msra.mxu0 0.0
        %6690 = vmatprep.subr.mxu0 0.0
        %6691 = vmatpush1.msra.mxu0 0.0
        %6692 = vmatprep.subr.mxu0 0.0
        %6693 = vmatpush1.msra.mxu0 0.0
        %6694 = vmatprep.subr.mxu0 0.0
        %6695 = vmatpush1.msra.mxu0 0.0
        %6696 = vmatprep.subr.mxu0 0.0
        %6697 = vmatpush1.msra.mxu0 0.0
        %6698 = vmatprep.subr.mxu0 0.0
        %6699 = vmatpush1.msra.mxu0 0.0
        %6700 = vmatprep.subr.mxu0 0.0
        %6701 = vmatpush1.msra.mxu0 0.0
        %6702 = vmatprep.subr.mxu0 0.0
        %6703 = vmatpush1.msra.mxu0 0.0
        %6704 = vmatprep.subr.mxu0 0.0
        %6705 = vmatpush1.msra.mxu0 0.0
        %6706 = vmatprep.subr.mxu0 0.0
        %6707 = vmatpush1.msra.mxu0 0.0
        %6708 = vmatprep.subr.mxu0 0.0
        %6709 = vmatpush1.msra.mxu0 0.0
        %6710 = vmatprep.subr.mxu0 0.0
        %6711 = vmatpush1.msra.mxu0 0.0
        %6712 = vmatprep.subr.mxu0 0.0
        %6713 = vmatpush1.msra.mxu0 0.0
        %6714 = vmatprep.subr.mxu0 0.0
        %6715 = vmatpush1.msra.mxu0 0.0
        %6716 = vmatprep.subr.mxu0 0.0
        %6717 = vmatpush1.msra.mxu0 0.0
        %6718 = vmatprep.subr.mxu0 0.0
        %6719 = vmatpush1.msra.mxu0 0.0
        %6720 = vmatprep.subr.mxu0 0.0
        %6721 = vmatpush1.msra.mxu0 0.0
        %6722 = vmatprep.subr.mxu0 0.0
        %6723 = vmatpush1.msra.mxu0 0.0
        %6724 = vmatprep.subr.mxu0 0.0
        %6725 = vmatpush1.msra.mxu0 0.0
        %6726 = vmatprep.subr.mxu0 0.0
        %6727 = vmatpush1.msra.mxu0 0.0
        %6728 = vmatprep.subr.mxu0 0.0
        %6729 = vmatpush1.msra.mxu0 0.0
        %6730 = vmatprep.subr.mxu0 0.0
        %6731 = vmatpush1.msra.mxu0 0.0
        %6732 = vmatprep.subr.mxu0 0.0
        %6733 = vmatpush1.msra.mxu0 0.0
        %6734 = vmatprep.mubr.f32.mxu0 0.0
        %6735 = vmatmul.mubr.f32.gmra.mrb[0].mxu0 %v6434
        %v6736 = vpop.f32.mrb[0].mxu0
        %v6737 = vadd.f32 %v6660, %v6736
        %v6738 = vpop.f32.mrb[0].mxu0
        %v6739 = vadd.f32 %v6662, %v6738
        %6740 = vmatprep.mubr.f32.mxu0 0.0
        %6741 = vmatmul.mubr.f32.gmra.mrb[0].mxu0 %v6437
        %v6742 = vpop.f32.mrb[0].mxu0
        %v6743 = vadd.f32 %v6666, %v6742
        %v6744 = vpop.f32.mrb[0].mxu0
        %v6745 = vadd.f32 %v6668, %v6744
        %6746 = vdwg.mxu0
        %6747 = vmatprep.subr.mxu0 %v3791
        %6748 = vmatpush1.msra.mxu0 %v3790
        %6749 = vmatprep.subr.mxu0 %v3801
        %6750 = vmatpush1.msra.mxu0 %v3800
        %6751 = vmatprep.subr.mxu0 %v3811
        %6752 = vmatpush1.msra.mxu0 %v3810
        %6753 = vmatprep.subr.mxu0 %v3821
        %6754 = vmatpush1.msra.mxu0 %v3820
        %6755 = vmatprep.subr.mxu0 %v3831
        %6756 = vmatpush1.msra.mxu0 %v3830
        %6757 = vmatprep.subr.mxu0 %v3841
        %6758 = vmatpush1.msra.mxu0 %v3840
        %6759 = vmatprep.subr.mxu0 %v3851
        %6760 = vmatpush1.msra.mxu0 %v3850
        %6761 = vmatprep.subr.mxu0 %v3861
        %6762 = vmatpush1.msra.mxu0 %v3860
        %6763 = vmatprep.subr.mxu0 %v3871
        %6764 = vmatpush1.msra.mxu0 %v3870
        %6765 = vmatprep.subr.mxu0 %v3881
        %6766 = vmatpush1.msra.mxu0 %v3880
        %6767 = vmatprep.subr.mxu0 %v3891
        %6768 = vmatpush1.msra.mxu0 %v3890
        %6769 = vmatprep.subr.mxu0 %v3901
        %6770 = vmatpush1.msra.mxu0 %v3900
        %6771 = vmatprep.subr.mxu0 %v3911
        %6772 = vmatpush1.msra.mxu0 %v3910
        %6773 = vmatprep.subr.mxu0 %v3921
        %6774 = vmatpush1.msra.mxu0 %v3920
        %6775 = vmatprep.subr.mxu0 %v3931
        %6776 = vmatpush1.msra.mxu0 %v3930
        %6777 = vmatprep.subr.mxu0 %v3941
        %6778 = vmatpush1.msra.mxu0 %v3940
        %6779 = vmatprep.subr.mxu0 %v3951
        %6780 = vmatpush1.msra.mxu0 %v3950
        %6781 = vmatprep.subr.mxu0 %v3961
        %6782 = vmatpush1.msra.mxu0 %v3960
        %6783 = vmatprep.subr.mxu0 %v3971
        %6784 = vmatpush1.msra.mxu0 %v3970
        %6785 = vmatprep.subr.mxu0 %v3981
        %6786 = vmatpush1.msra.mxu0 %v3980
        %6787 = vmatprep.subr.mxu0 %v3991
        %6788 = vmatpush1.msra.mxu0 %v3990
        %6789 = vmatprep.subr.mxu0 %v4001
        %6790 = vmatpush1.msra.mxu0 %v4000
        %6791 = vmatprep.subr.mxu0 %v4011
        %6792 = vmatpush1.msra.mxu0 %v4010
        %6793 = vmatprep.subr.mxu0 %v4021
        %6794 = vmatpush1.msra.mxu0 %v4020
        %6795 = vmatprep.subr.mxu0 %v4031
        %6796 = vmatpush1.msra.mxu0 %v4030
        %6797 = vmatprep.subr.mxu0 %v4041
        %6798 = vmatpush1.msra.mxu0 %v4040
        %6799 = vmatprep.subr.mxu0 %v4051
        %6800 = vmatpush1.msra.mxu0 %v4050
        %6801 = vmatprep.subr.mxu0 %v4061
        %6802 = vmatpush1.msra.mxu0 %v4060
        %6803 = vmatprep.subr.mxu0 %v4071
        %6804 = vmatpush1.msra.mxu0 %v4070
        %6805 = vmatprep.subr.mxu0 %v4081
        %6806 = vmatpush1.msra.mxu0 %v4080
        %6807 = vmatprep.subr.mxu0 %v4091
        %6808 = vmatpush1.msra.mxu0 %v4090
        %6809 = vmatprep.subr.mxu0 %v4101
        %6810 = vmatpush1.msra.mxu0 %v4100
        %6811 = vmatprep.mubr.f32.mxu0 %v6428
        %6812 = vmatmul.mubr.f32.gmra.mrb[0].mxu0 %v6427
        %v6813 = vpop.f32.mrb[0].mxu0
        %v6814 = vadd.f32 0.0, %v6813
        %v6815 = vpop.f32.mrb[0].mxu0
        %v6816 = vadd.f32 0.0, %v6815
        %6817 = vmatprep.mubr.f32.mxu0 %v6431
        %6818 = vmatmul.mubr.f32.gmra.mrb[0].mxu0 %v6430
        %v6819 = vpop.f32.mrb[0].mxu0
        %v6820 = vadd.f32 0.0, %v6819
        %v6821 = vpop.f32.mrb[0].mxu0
        %v6822 = vadd.f32 0.0, %v6821
        %6823 = vdwg.mxu0
        %6824 = vmatprep.subr.mxu0 %v4111
        %6825 = vmatpush1.msra.mxu0 %v4110
        %6826 = vmatprep.subr.mxu0 %v4121
        %6827 = vmatpush1.msra.mxu0 %v4120
        %6828 = vmatprep.subr.mxu0 %v4131
        %6829 = vmatpush1.msra.mxu0 %v4130
        %6830 = vmatprep.subr.mxu0 %v4141
        %6831 = vmatpush1.msra.mxu0 %v4140
        %6832 = vmatprep.subr.mxu0 0.0
        %6833 = vmatpush1.msra.mxu0 0.0
        %6834 = vmatprep.subr.mxu0 0.0
        %6835 = vmatpush1.msra.mxu0 0.0
        %6836 = vmatprep.subr.mxu0 0.0
        %6837 = vmatpush1.msra.mxu0 0.0
        %6838 = vmatprep.subr.mxu0 0.0
        %6839 = vmatpush1.msra.mxu0 0.0
        %6840 = vmatprep.subr.mxu0 0.0
        %6841 = vmatpush1.msra.mxu0 0.0
        %6842 = vmatprep.subr.mxu0 0.0
        %6843 = vmatpush1.msra.mxu0 0.0
        %6844 = vmatprep.subr.mxu0 0.0
        %6845 = vmatpush1.msra.mxu0 0.0
        %6846 = vmatprep.subr.mxu0 0.0
        %6847 = vmatpush1.msra.mxu0 0.0
        %6848 = vmatprep.subr.mxu0 0.0
        %6849 = vmatpush1.msra.mxu0 0.0
        %6850 = vmatprep.subr.mxu0 0.0
        %6851 = vmatpush1.msra.mxu0 0.0
        %6852 = vmatprep.subr.mxu0 0.0
        %6853 = vmatpush1.msra.mxu0 0.0
        %6854 = vmatprep.subr.mxu0 0.0
        %6855 = vmatpush1.msra.mxu0 0.0
        %6856 = vmatprep.subr.mxu0 0.0
        %6857 = vmatpush1.msra.mxu0 0.0
        %6858 = vmatprep.subr.mxu0 0.0
        %6859 = vmatpush1.msra.mxu0 0.0
        %6860 = vmatprep.subr.mxu0 0.0
        %6861 = vmatpush1.msra.mxu0 0.0
        %6862 = vmatprep.subr.mxu0 0.0
        %6863 = vmatpush1.msra.mxu0 0.0
        %6864 = vmatprep.subr.mxu0 0.0
        %6865 = vmatpush1.msra.mxu0 0.0
        %6866 = vmatprep.subr.mxu0 0.0
        %6867 = vmatpush1.msra.mxu0 0.0
        %6868 = vmatprep.subr.mxu0 0.0
        %6869 = vmatpush1.msra.mxu0 0.0
        %6870 = vmatprep.subr.mxu0 0.0
        %6871 = vmatpush1.msra.mxu0 0.0
        %6872 = vmatprep.subr.mxu0 0.0
        %6873 = vmatpush1.msra.mxu0 0.0
        %6874 = vmatprep.subr.mxu0 0.0
        %6875 = vmatpush1.msra.mxu0 0.0
        %6876 = vmatprep.subr.mxu0 0.0
        %6877 = vmatpush1.msra.mxu0 0.0
        %6878 = vmatprep.subr.mxu0 0.0
        %6879 = vmatpush1.msra.mxu0 0.0
        %6880 = vmatprep.subr.mxu0 0.0
        %6881 = vmatpush1.msra.mxu0 0.0
        %6882 = vmatprep.subr.mxu0 0.0
        %6883 = vmatpush1.msra.mxu0 0.0
        %6884 = vmatprep.subr.mxu0 0.0
        %6885 = vmatpush1.msra.mxu0 0.0
        %6886 = vmatprep.subr.mxu0 0.0
        %6887 = vmatpush1.msra.mxu0 0.0
        %6888 = vmatprep.mubr.f32.mxu0 0.0
        %6889 = vmatmul.mubr.f32.gmra.mrb[0].mxu0 %v6434
        %v6890 = vpop.f32.mrb[0].mxu0
        %v6891 = vadd.f32 %v6814, %v6890
        %v6892 = vpop.f32.mrb[0].mxu0
        %v6893 = vadd.f32 %v6816, %v6892
        %6894 = vmatprep.mubr.f32.mxu0 0.0
        %6895 = vmatmul.mubr.f32.gmra.mrb[0].mxu0 %v6437
        %v6896 = vpop.f32.mrb[0].mxu0
        %v6897 = vadd.f32 %v6820, %v6896
        %v6898 = vpop.f32.mrb[0].mxu0
        %v6899 = vadd.f32 %v6822, %v6898
        %6900 = vdwg.mxu0
        %6901 = vmatprep.subr.mxu0 %v3793
        %6902 = vmatpush1.msra.mxu0 %v3792
        %6903 = vmatprep.subr.mxu0 %v3803
        %6904 = vmatpush1.msra.mxu0 %v3802
        %6905 = vmatprep.subr.mxu0 %v3813
        %6906 = vmatpush1.msra.mxu0 %v3812
        %6907 = vmatprep.subr.mxu0 %v3823
        %6908 = vmatpush1.msra.mxu0 %v3822
        %6909 = vmatprep.subr.mxu0 %v3833
        %6910 = vmatpush1.msra.mxu0 %v3832
        %6911 = vmatprep.subr.mxu0 %v3843
        %6912 = vmatpush1.msra.mxu0 %v3842
        %6913 = vmatprep.subr.mxu0 %v3853
        %6914 = vmatpush1.msra.mxu0 %v3852
        %6915 = vmatprep.subr.mxu0 %v3863
        %6916 = vmatpush1.msra.mxu0 %v3862
        %6917 = vmatprep.subr.mxu0 %v3873
        %6918 = vmatpush1.msra.mxu0 %v3872
        %6919 = vmatprep.subr.mxu0 %v3883
        %6920 = vmatpush1.msra.mxu0 %v3882
        %6921 = vmatprep.subr.mxu0 %v3893
        %6922 = vmatpush1.msra.mxu0 %v3892
        %6923 = vmatprep.subr.mxu0 %v3903
        %6924 = vmatpush1.msra.mxu0 %v3902
        %6925 = vmatprep.subr.mxu0 %v3913
        %6926 = vmatpush1.msra.mxu0 %v3912
        %6927 = vmatprep.subr.mxu0 %v3923
        %6928 = vmatpush1.msra.mxu0 %v3922
        %6929 = vmatprep.subr.mxu0 %v3933
        %6930 = vmatpush1.msra.mxu0 %v3932
        %6931 = vmatprep.subr.mxu0 %v3943
        %6932 = vmatpush1.msra.mxu0 %v3942
        %6933 = vmatprep.subr.mxu0 %v3953
        %6934 = vmatpush1.msra.mxu0 %v3952
        %6935 = vmatprep.subr.mxu0 %v3963
        %6936 = vmatpush1.msra.mxu0 %v3962
        %6937 = vmatprep.subr.mxu0 %v3973
        %6938 = vmatpush1.msra.mxu0 %v3972
        %6939 = vmatprep.subr.mxu0 %v3983
        %6940 = vmatpush1.msra.mxu0 %v3982
        %6941 = vmatprep.subr.mxu0 %v3993
        %6942 = vmatpush1.msra.mxu0 %v3992
        %6943 = vmatprep.subr.mxu0 %v4003
        %6944 = vmatpush1.msra.mxu0 %v4002
        %6945 = vmatprep.subr.mxu0 %v4013
        %6946 = vmatpush1.msra.mxu0 %v4012
        %6947 = vmatprep.subr.mxu0 %v4023
        %6948 = vmatpush1.msra.mxu0 %v4022
        %6949 = vmatprep.subr.mxu0 %v4033
        %6950 = vmatpush1.msra.mxu0 %v4032
        %6951 = vmatprep.subr.mxu0 %v4043
        %6952 = vmatpush1.msra.mxu0 %v4042
        %6953 = vmatprep.subr.mxu0 %v4053
        %6954 = vmatpush1.msra.mxu0 %v4052
        %6955 = vmatprep.subr.mxu0 %v4063
        %6956 = vmatpush1.msra.mxu0 %v4062
        %6957 = vmatprep.subr.mxu0 %v4073
        %6958 = vmatpush1.msra.mxu0 %v4072
        %6959 = vmatprep.subr.mxu0 %v4083
        %6960 = vmatpush1.msra.mxu0 %v4082
        %6961 = vmatprep.subr.mxu0 %v4093
        %6962 = vmatpush1.msra.mxu0 %v4092
        %6963 = vmatprep.subr.mxu0 %v4103
        %6964 = vmatpush1.msra.mxu0 %v4102
        %6965 = vmatprep.mubr.f32.mxu0 %v6428
        %6966 = vmatmul.mubr.f32.gmra.mrb[0].mxu0 %v6427
        %v6967 = vpop.f32.mrb[0].mxu0
        %v6968 = vadd.f32 0.0, %v6967
        %v6969 = vpop.f32.mrb[0].mxu0
        %v6970 = vadd.f32 0.0, %v6969
        %6971 = vmatprep.mubr.f32.mxu0 %v6431
        %6972 = vmatmul.mubr.f32.gmra.mrb[0].mxu0 %v6430
        %v6973 = vpop.f32.mrb[0].mxu0
        %v6974 = vadd.f32 0.0, %v6973
        %v6975 = vpop.f32.mrb[0].mxu0
        %v6976 = vadd.f32 0.0, %v6975
        %6977 = vdwg.mxu0
        %6978 = vmatprep.subr.mxu0 %v4113
        %6979 = vmatpush1.msra.mxu0 %v4112
        %6980 = vmatprep.subr.mxu0 %v4123
        %6981 = vmatpush1.msra.mxu0 %v4122
        %6982 = vmatprep.subr.mxu0 %v4133
        %6983 = vmatpush1.msra.mxu0 %v4132
        %6984 = vmatprep.subr.mxu0 %v4143
        %6985 = vmatpush1.msra.mxu0 %v4142
        %6986 = vmatprep.subr.mxu0 0.0
        %6987 = vmatpush1.msra.mxu0 0.0
        %6988 = vmatprep.subr.mxu0 0.0
        %6989 = vmatpush1.msra.mxu0 0.0
        %6990 = vmatprep.subr.mxu0 0.0
        %6991 = vmatpush1.msra.mxu0 0.0
        %6992 = vmatprep.subr.mxu0 0.0
        %6993 = vmatpush1.msra.mxu0 0.0
        %6994 = vmatprep.subr.mxu0 0.0
        %6995 = vmatpush1.msra.mxu0 0.0
        %6996 = vmatprep.subr.mxu0 0.0
        %6997 = vmatpush1.msra.mxu0 0.0
        %6998 = vmatprep.subr.mxu0 0.0
        %6999 = vmatpush1.msra.mxu0 0.0
        %7000 = vmatprep.subr.mxu0 0.0
        %7001 = vmatpush1.msra.mxu0 0.0
        %7002 = vmatprep.subr.mxu0 0.0
        %7003 = vmatpush1.msra.mxu0 0.0
        %7004 = vmatprep.subr.mxu0 0.0
        %7005 = vmatpush1.msra.mxu0 0.0
        %7006 = vmatprep.subr.mxu0 0.0
        %7007 = vmatpush1.msra.mxu0 0.0
        %7008 = vmatprep.subr.mxu0 0.0
        %7009 = vmatpush1.msra.mxu0 0.0
        %7010 = vmatprep.subr.mxu0 0.0
        %7011 = vmatpush1.msra.mxu0 0.0
        %7012 = vmatprep.subr.mxu0 0.0
        %7013 = vmatpush1.msra.mxu0 0.0
        %7014 = vmatprep.subr.mxu0 0.0
        %7015 = vmatpush1.msra.mxu0 0.0
        %7016 = vmatprep.subr.mxu0 0.0
        %7017 = vmatpush1.msra.mxu0 0.0
        %7018 = vmatprep.subr.mxu0 0.0
        %7019 = vmatpush1.msra.mxu0 0.0
        %7020 = vmatprep.subr.mxu0 0.0
        %7021 = vmatpush1.msra.mxu0 0.0
        %7022 = vmatprep.subr.mxu0 0.0
        %7023 = vmatpush1.msra.mxu0 0.0
        %7024 = vmatprep.subr.mxu0 0.0
        %7025 = vmatpush1.msra.mxu0 0.0
        %7026 = vmatprep.subr.mxu0 0.0
        %7027 = vmatpush1.msra.mxu0 0.0
        %7028 = vmatprep.subr.mxu0 0.0
        %7029 = vmatpush1.msra.mxu0 0.0
        %7030 = vmatprep.subr.mxu0 0.0
        %7031 = vmatpush1.msra.mxu0 0.0
        %7032 = vmatprep.subr.mxu0 0.0
        %7033 = vmatpush1.msra.mxu0 0.0
        %7034 = vmatprep.subr.mxu0 0.0
        %7035 = vmatpush1.msra.mxu0 0.0
        %7036 = vmatprep.subr.mxu0 0.0
        %7037 = vmatpush1.msra.mxu0 0.0
        %7038 = vmatprep.subr.mxu0 0.0
        %7039 = vmatpush1.msra.mxu0 0.0
        %7040 = vmatprep.subr.mxu0 0.0
        %7041 = vmatpush1.msra.mxu0 0.0
        %7042 = vmatprep.mubr.f32.mxu0 0.0
        %7043 = vmatmul.mubr.f32.gmra.mrb[0].mxu0 %v6434
        %v7044 = vpop.f32.mrb[0].mxu0
        %v7045 = vadd.f32 %v6968, %v7044
        %v7046 = vpop.f32.mrb[0].mxu0
        %v7047 = vadd.f32 %v6970, %v7046
        %7048 = vmatprep.mubr.f32.mxu0 0.0
        %7049 = vmatmul.mubr.f32.gmra.mrb[0].mxu0 %v6437
        %v7050 = vpop.f32.mrb[0].mxu0
        %v7051 = vadd.f32 %v6974, %v7050
        %v7052 = vpop.f32.mrb[0].mxu0
        %v7053 = vadd.f32 %v6976, %v7052
        %7054 = vdwg.mxu0
        %7055 = vmatprep.subr.mxu0 %v3795
        %7056 = vmatpush1.msra.mxu0 %v3794
        %7057 = vmatprep.subr.mxu0 %v3805
        %7058 = vmatpush1.msra.mxu0 %v3804
        %7059 = vmatprep.subr.mxu0 %v3815
        %7060 = vmatpush1.msra.mxu0 %v3814
        %7061 = vmatprep.subr.mxu0 %v3825
        %7062 = vmatpush1.msra.mxu0 %v3824
        %7063 = vmatprep.subr.mxu0 %v3835
        %7064 = vmatpush1.msra.mxu0 %v3834
        %7065 = vmatprep.subr.mxu0 %v3845
        %7066 = vmatpush1.msra.mxu0 %v3844
        %7067 = vmatprep.subr.mxu0 %v3855
        %7068 = vmatpush1.msra.mxu0 %v3854
        %7069 = vmatprep.subr.mxu0 %v3865
        %7070 = vmatpush1.msra.mxu0 %v3864
        %7071 = vmatprep.subr.mxu0 %v3875
        %7072 = vmatpush1.msra.mxu0 %v3874
        %7073 = vmatprep.subr.mxu0 %v3885
        %7074 = vmatpush1.msra.mxu0 %v3884
        %7075 = vmatprep.subr.mxu0 %v3895
        %7076 = vmatpush1.msra.mxu0 %v3894
        %7077 = vmatprep.subr.mxu0 %v3905
        %7078 = vmatpush1.msra.mxu0 %v3904
        %7079 = vmatprep.subr.mxu0 %v3915
        %7080 = vmatpush1.msra.mxu0 %v3914
        %7081 = vmatprep.subr.mxu0 %v3925
        %7082 = vmatpush1.msra.mxu0 %v3924
        %7083 = vmatprep.subr.mxu0 %v3935
        %7084 = vmatpush1.msra.mxu0 %v3934
        %7085 = vmatprep.subr.mxu0 %v3945
        %7086 = vmatpush1.msra.mxu0 %v3944
        %7087 = vmatprep.subr.mxu0 %v3955
        %7088 = vmatpush1.msra.mxu0 %v3954
        %7089 = vmatprep.subr.mxu0 %v3965
        %7090 = vmatpush1.msra.mxu0 %v3964
        %7091 = vmatprep.subr.mxu0 %v3975
        %7092 = vmatpush1.msra.mxu0 %v3974
        %7093 = vmatprep.subr.mxu0 %v3985
        %7094 = vmatpush1.msra.mxu0 %v3984
        %7095 = vmatprep.subr.mxu0 %v3995
        %7096 = vmatpush1.msra.mxu0 %v3994
        %7097 = vmatprep.subr.mxu0 %v4005
        %7098 = vmatpush1.msra.mxu0 %v4004
        %7099 = vmatprep.subr.mxu0 %v4015
        %7100 = vmatpush1.msra.mxu0 %v4014
        %7101 = vmatprep.subr.mxu0 %v4025
        %7102 = vmatpush1.msra.mxu0 %v4024
        %7103 = vmatprep.subr.mxu0 %v4035
        %7104 = vmatpush1.msra.mxu0 %v4034
        %7105 = vmatprep.subr.mxu0 %v4045
        %7106 = vmatpush1.msra.mxu0 %v4044
        %7107 = vmatprep.subr.mxu0 %v4055
        %7108 = vmatpush1.msra.mxu0 %v4054
        %7109 = vmatprep.subr.mxu0 %v4065
        %7110 = vmatpush1.msra.mxu0 %v4064
        %7111 = vmatprep.subr.mxu0 %v4075
        %7112 = vmatpush1.msra.mxu0 %v4074
        %7113 = vmatprep.subr.mxu0 %v4085
        %7114 = vmatpush1.msra.mxu0 %v4084
        %7115 = vmatprep.subr.mxu0 %v4095
        %7116 = vmatpush1.msra.mxu0 %v4094
        %7117 = vmatprep.subr.mxu0 %v4105
        %7118 = vmatpush1.msra.mxu0 %v4104
        %7119 = vmatprep.mubr.f32.mxu0 %v6428
        %7120 = vmatmul.mubr.f32.gmra.mrb[0].mxu0 %v6427
        %v7121 = vpop.f32.mrb[0].mxu0
        %v7122 = vadd.f32 0.0, %v7121
        %v7123 = vpop.f32.mrb[0].mxu0
        %7124 = vmatprep.mubr.f32.mxu0 %v6431
        %7125 = vmatmul.mubr.f32.gmra.mrb[0].mxu0 %v6430
        %v7126 = vpop.f32.mrb[0].mxu0
        %v7127 = vadd.f32 0.0, %v7126
        %v7128 = vpop.f32.mrb[0].mxu0
        %7129 = vdwg.mxu0
        %7130 = vmatprep.subr.mxu0 %v4115
        %7131 = vmatpush1.msra.mxu0 %v4114
        %7132 = vmatprep.subr.mxu0 %v4125
        %7133 = vmatpush1.msra.mxu0 %v4124
        %7134 = vmatprep.subr.mxu0 %v4135
        %7135 = vmatpush1.msra.mxu0 %v4134
        %7136 = vmatprep.subr.mxu0 %v4145
        %7137 = vmatpush1.msra.mxu0 %v4144
        %7138 = vmatprep.subr.mxu0 0.0
        %7139 = vmatpush1.msra.mxu0 0.0
        %7140 = vmatprep.subr.mxu0 0.0
        %7141 = vmatpush1.msra.mxu0 0.0
        %7142 = vmatprep.subr.mxu0 0.0
        %7143 = vmatpush1.msra.mxu0 0.0
        %7144 = vmatprep.subr.mxu0 0.0
        %7145 = vmatpush1.msra.mxu0 0.0
        %7146 = vmatprep.subr.mxu0 0.0
        %7147 = vmatpush1.msra.mxu0 0.0
        %7148 = vmatprep.subr.mxu0 0.0
        %7149 = vmatpush1.msra.mxu0 0.0
        %7150 = vmatprep.subr.mxu0 0.0
        %7151 = vmatpush1.msra.mxu0 0.0
        %7152 = vmatprep.subr.mxu0 0.0
        %7153 = vmatpush1.msra.mxu0 0.0
        %7154 = vmatprep.subr.mxu0 0.0
        %7155 = vmatpush1.msra.mxu0 0.0
        %7156 = vmatprep.subr.mxu0 0.0
        %7157 = vmatpush1.msra.mxu0 0.0
        %7158 = vmatprep.subr.mxu0 0.0
        %7159 = vmatpush1.msra.mxu0 0.0
        %7160 = vmatprep.subr.mxu0 0.0
        %7161 = vmatpush1.msra.mxu0 0.0
        %7162 = vmatprep.subr.mxu0 0.0
        %7163 = vmatpush1.msra.mxu0 0.0
        %7164 = vmatprep.subr.mxu0 0.0
        %7165 = vmatpush1.msra.mxu0 0.0
        %7166 = vmatprep.subr.mxu0 0.0
        %7167 = vmatpush1.msra.mxu0 0.0
        %7168 = vmatprep.subr.mxu0 0.0
        %7169 = vmatpush1.msra.mxu0 0.0
        %7170 = vmatprep.subr.mxu0 0.0
        %7171 = vmatpush1.msra.mxu0 0.0
        %7172 = vmatprep.subr.mxu0 0.0
        %7173 = vmatpush1.msra.mxu0 0.0
        %7174 = vmatprep.subr.mxu0 0.0
        %7175 = vmatpush1.msra.mxu0 0.0
        %7176 = vmatprep.subr.mxu0 0.0
        %7177 = vmatpush1.msra.mxu0 0.0
        %7178 = vmatprep.subr.mxu0 0.0
        %7179 = vmatpush1.msra.mxu0 0.0
        %7180 = vmatprep.subr.mxu0 0.0
        %7181 = vmatpush1.msra.mxu0 0.0
        %7182 = vmatprep.subr.mxu0 0.0
        %7183 = vmatpush1.msra.mxu0 0.0
        %7184 = vmatprep.subr.mxu0 0.0
        %7185 = vmatpush1.msra.mxu0 0.0
        %7186 = vmatprep.subr.mxu0 0.0
        %7187 = vmatpush1.msra.mxu0 0.0
        %7188 = vmatprep.subr.mxu0 0.0
        %7189 = vmatpush1.msra.mxu0 0.0
        %7190 = vmatprep.subr.mxu0 0.0
        %7191 = vmatpush1.msra.mxu0 0.0
        %7192 = vmatprep.subr.mxu0 0.0
        %7193 = vmatpush1.msra.mxu0 0.0
        %7194 = vmatprep.mubr.f32.mxu0 0.0
        %7195 = vmatmul.mubr.f32.gmra.mrb[0].mxu0 %v6434
        %v7196 = vpop.f32.mrb[0].mxu0
        %v7197 = vadd.f32 %v7122, %v7196
        %v7198 = vpop.f32.mrb[0].mxu0
        %7199 = vmatprep.mubr.f32.mxu0 0.0
        %7200 = vmatmul.mubr.f32.gmra.mrb[0].mxu0 %v6437
        %v7201 = vpop.f32.mrb[0].mxu0
        %v7202 = vadd.f32 %v7127, %v7201
        %v7203 = vpop.f32.mrb[0].mxu0
        %7204 = vdwg.mxu0
        %7223 = vrot.lane.b32.xlu0 %v6583, 34
        %v7224 = vpop.permute.xlu0 %7223
        %7225 = vrot.lane.b32.xlu0 %v6585, 34
        %v7226 = vpop.permute.xlu0 %7225
        %7227 = vrot.lane.b32.xlu0 %v6737, 34
        %v7228 = vpop.permute.xlu0 %7227
        %7229 = vrot.lane.b32.xlu0 %v6739, 34
        %v7230 = vpop.permute.xlu0 %7229
        %7231 = vrot.lane.b32.xlu0 %v6891, 34
        %v7232 = vpop.permute.xlu0 %7231
        %7233 = vrot.lane.b32.xlu0 %v6893, 34
        %v7234 = vpop.permute.xlu0 %7233
        %7235 = vrot.lane.b32.xlu0 %v7045, 34
        %v7236 = vpop.permute.xlu0 %7235
        %7237 = vrot.lane.b32.xlu0 %v7047, 34
        %v7238 = vpop.permute.xlu0 %7237
        %7239 = vrot.lane.b32.xlu0 %v7197, 34
        %v7240 = vpop.permute.xlu0 %7239
        %7241 = vrot.lane.b32.xlu0 %v6589, 34
        %v7242 = vpop.permute.xlu0 %7241
        %7243 = vrot.lane.b32.xlu0 %v6591, 34
        %v7244 = vpop.permute.xlu0 %7243
        %7245 = vrot.lane.b32.xlu0 %v6743, 34
        %v7246 = vpop.permute.xlu0 %7245
        %7247 = vrot.lane.b32.xlu0 %v6745, 34
        %v7248 = vpop.permute.xlu0 %7247
        %7249 = vrot.lane.b32.xlu0 %v6897, 34
        %v7250 = vpop.permute.xlu0 %7249
        %7251 = vrot.lane.b32.xlu0 %v6899, 34
        %v7252 = vpop.permute.xlu0 %7251
        %7253 = vrot.lane.b32.xlu0 %v7051, 34
        %v7254 = vpop.permute.xlu0 %7253
        %7255 = vrot.lane.b32.xlu0 %v7053, 34
        %v7256 = vpop.permute.xlu0 %7255
        %7257 = vrot.lane.b32.xlu0 %v7202, 34
        %v7258 = vpop.permute.xlu0 %7257
        %vm7259 = vcmask 277504
        %v7260 = vsel %vm7259, %v7224, %v7226
        %v7261 = vsel %vm7259, %v7226, %v7228
        %v7262 = vsel %vm7259, %v7228, %v7230
        %v7263 = vsel %vm7259, %v7230, %v7232
        %v7264 = vsel %vm7259, %v7232, %v7234
        %v7265 = vsel %vm7259, %v7234, %v7236
        %v7266 = vsel %vm7259, %v7236, %v7238
        %v7267 = vsel %vm7259, %v7238, %v7240
        %v7268 = vsel %vm7259, %v7242, %v7244
        %v7269 = vsel %vm7259, %v7244, %v7246
        %v7270 = vsel %vm7259, %v7246, %v7248
        %v7271 = vsel %vm7259, %v7248, %v7250
        %v7272 = vsel %vm7259, %v7250, %v7252
        %v7273 = vsel %vm7259, %v7252, %v7254
        %v7274 = vsel %vm7259, %v7254, %v7256
        %v7275 = vsel %vm7259, %v7256, %v7258
        %v7296 = vsel %vm7259, 0.0, %v7224
        %v7297 = vsel %vm7259, 0.0, %v7242
        %v7298 = vadd.f32 %v5601, %v7296
        %v7299 = vadd.f32 %v5603, %v7260
        %v7300 = vadd.f32 %v5755, %v7261
        %v7301 = vadd.f32 %v5757, %v7262
        %v7302 = vadd.f32 %v5909, %v7263
        %v7303 = vadd.f32 %v5911, %v7264
        %v7304 = vadd.f32 %v6063, %v7265
        %v7305 = vadd.f32 %v6065, %v7266
        %v7306 = vadd.f32 %v6217, %v7267
        %v7307 = vadd.f32 %v6219, %v7240
        %v7308 = vadd.f32 %v5607, %v7297
        %v7309 = vadd.f32 %v5609, %v7268
        %v7310 = vadd.f32 %v5761, %v7269
        %v7311 = vadd.f32 %v5763, %v7270
        %v7312 = vadd.f32 %v5915, %v7271
        %v7313 = vadd.f32 %v5917, %v7272
        %v7314 = vadd.f32 %v6069, %v7273
        %v7315 = vadd.f32 %v6071, %v7274
        %v7316 = vadd.f32 %v6223, %v7275
        %v7317 = vadd.f32 %v6225, %v7258
        %v7318 = vmul.f32 %v3667, %v3667
        %v7319 = vmul.f32 %v3669, %v3669
        %v7320 = vmul.f32 %v3774, %v3774
        %v7321 = vmul.f32 %v3673, %v3673
        %v7322 = vmul.f32 %v3675, %v3675
        %v7323 = vmul.f32 %v3779, %v3779
        %7324 = vmatprep.subr.mxu0 %v7319
        %7325 = vmatpush1.msra.mxu0 %v7318
        %7326 = vmatprep.subr.mxu0 %v7322
        %7327 = vmatpush1.msra.mxu0 %v7321
        %7328 = vmatprep.subr.mxu0 0.0
        %7329 = vmatpush1.msra.mxu0 0.0
        %7330 = vmatprep.subr.mxu0 0.0
        %7331 = vmatpush1.msra.mxu0 0.0
        %7332 = vmatprep.subr.mxu0 0.0
        %7333 = vmatpush1.msra.mxu0 0.0
        %7334 = vmatprep.subr.mxu0 0.0
        %7335 = vmatpush1.msra.mxu0 0.0
        %7336 = vmatprep.subr.mxu0 0.0
        %7337 = vmatpush1.msra.mxu0 0.0
        %7338 = vmatprep.subr.mxu0 0.0
        %7339 = vmatpush1.msra.mxu0 0.0
        %7340 = vmatprep.subr.mxu0 0.0
        %7341 = vmatpush1.msra.mxu0 0.0
        %7342 = vmatprep.subr.mxu0 0.0
        %7343 = vmatpush1.msra.mxu0 0.0
        %7344 = vmatprep.subr.mxu0 0.0
        %7345 = vmatpush1.msra.mxu0 0.0
        %7346 = vmatprep.subr.mxu0 0.0
        %7347 = vmatpush1.msra.mxu0 0.0
        %7348 = vmatprep.subr.mxu0 0.0
        %7349 = vmatpush1.msra.mxu0 0.0
        %7350 = vmatprep.subr.mxu0 0.0
        %7351 = vmatpush1.msra.mxu0 0.0
        %7352 = vmatprep.subr.mxu0 0.0
        %7353 = vmatpush1.msra.mxu0 0.0
        %7354 = vmatprep.subr.mxu0 0.0
        %7355 = vmatpush1.msra.mxu0 0.0
        %7356 = vmatprep.subr.mxu0 0.0
        %7357 = vmatpush1.msra.mxu0 0.0
        %7358 = vmatprep.subr.mxu0 0.0
        %7359 = vmatpush1.msra.mxu0 0.0
        %7360 = vmatprep.subr.mxu0 0.0
        %7361 = vmatpush1.msra.mxu0 0.0
        %7362 = vmatprep.subr.mxu0 0.0
        %7363 = vmatpush1.msra.mxu0 0.0
        %7364 = vmatprep.subr.mxu0 0.0
        %7365 = vmatpush1.msra.mxu0 0.0
        %7366 = vmatprep.subr.mxu0 0.0
        %7367 = vmatpush1.msra.mxu0 0.0
        %7368 = vmatprep.subr.mxu0 0.0
        %7369 = vmatpush1.msra.mxu0 0.0
        %7370 = vmatprep.subr.mxu0 0.0
        %7371 = vmatpush1.msra.mxu0 0.0
        %7372 = vmatprep.subr.mxu0 0.0
        %7373 = vmatpush1.msra.mxu0 0.0
        %7374 = vmatprep.subr.mxu0 0.0
        %7375 = vmatpush1.msra.mxu0 0.0
        %7376 = vmatprep.subr.mxu0 0.0
        %7377 = vmatpush1.msra.mxu0 0.0
        %7378 = vmatprep.subr.mxu0 0.0
        %7379 = vmatpush1.msra.mxu0 0.0
        %7380 = vmatprep.subr.mxu0 0.0
        %7381 = vmatpush1.msra.mxu0 0.0
        %7382 = vmatprep.subr.mxu0 0.0
        %7383 = vmatpush1.msra.mxu0 0.0
        %7384 = vmatprep.subr.mxu0 0.0
        %7385 = vmatpush1.msra.mxu0 0.0
        %7386 = vmatprep.subr.mxu0 0.0
        %7387 = vmatpush1.msra.mxu0 0.0
        %7388 = vmatprep.mubr.f32.mxu0 0.0
        %7389 = vmatmul.mubr.f32.gmra.mrb[0].mxu0 %v4163
        %v7390 = vpop.f32.mrb[0].mxu0
        %v7391 = vadd.f32 %v4155, %v7390
        %v7392 = vpop.f32.mrb[0].mxu0
        %v7393 = vadd.f32 %v4155, %v7392
        %7394 = vmatprep.mubr.f32.mxu0 0.0
        %7395 = vmatmul.mubr.f32.gmra.mrb[0].mxu0 %v4166
        %v7396 = vpop.f32.mrb[0].mxu0
        %v7397 = vadd.f32 %v4160, %v7396
        %v7398 = vpop.f32.mrb[0].mxu0
        %v7399 = vadd.f32 %v4160, %v7398
        %7400 = vdwg.mxu0
        %7401 = vmatprep.subr.mxu0 0.0
        %7402 = vmatpush1.msra.mxu0 %v7320
        %7403 = vmatprep.subr.mxu0 0.0
        %7404 = vmatpush1.msra.mxu0 %v7323
        %7405 = vmatprep.subr.mxu0 0.0
        %7406 = vmatpush1.msra.mxu0 0.0
        %7407 = vmatprep.subr.mxu0 0.0
        %7408 = vmatpush1.msra.mxu0 0.0
        %7409 = vmatprep.subr.mxu0 0.0
        %7410 = vmatpush1.msra.mxu0 0.0
        %7411 = vmatprep.subr.mxu0 0.0
        %7412 = vmatpush1.msra.mxu0 0.0
        %7413 = vmatprep.subr.mxu0 0.0
        %7414 = vmatpush1.msra.mxu0 0.0
        %7415 = vmatprep.subr.mxu0 0.0
        %7416 = vmatpush1.msra.mxu0 0.0
        %7417 = vmatprep.subr.mxu0 0.0
        %7418 = vmatpush1.msra.mxu0 0.0
        %7419 = vmatprep.subr.mxu0 0.0
        %7420 = vmatpush1.msra.mxu0 0.0
        %7421 = vmatprep.subr.mxu0 0.0
        %7422 = vmatpush1.msra.mxu0 0.0
        %7423 = vmatprep.subr.mxu0 0.0
        %7424 = vmatpush1.msra.mxu0 0.0
        %7425 = vmatprep.subr.mxu0 0.0
        %7426 = vmatpush1.msra.mxu0 0.0
        %7427 = vmatprep.subr.mxu0 0.0
        %7428 = vmatpush1.msra.mxu0 0.0
        %7429 = vmatprep.subr.mxu0 0.0
        %7430 = vmatpush1.msra.mxu0 0.0
        %7431 = vmatprep.subr.mxu0 0.0
        %7432 = vmatpush1.msra.mxu0 0.0
        %7433 = vmatprep.subr.mxu0 0.0
        %7434 = vmatpush1.msra.mxu0 0.0
        %7435 = vmatprep.subr.mxu0 0.0
        %7436 = vmatpush1.msra.mxu0 0.0
        %7437 = vmatprep.subr.mxu0 0.0
        %7438 = vmatpush1.msra.mxu0 0.0
        %7439 = vmatprep.subr.mxu0 0.0
        %7440 = vmatpush1.msra.mxu0 0.0
        %7441 = vmatprep.subr.mxu0 0.0
        %7442 = vmatpush1.msra.mxu0 0.0
        %7443 = vmatprep.subr.mxu0 0.0
        %7444 = vmatpush1.msra.mxu0 0.0
        %7445 = vmatprep.subr.mxu0 0.0
        %7446 = vmatpush1.msra.mxu0 0.0
        %7447 = vmatprep.subr.mxu0 0.0
        %7448 = vmatpush1.msra.mxu0 0.0
        %7449 = vmatprep.subr.mxu0 0.0
        %7450 = vmatpush1.msra.mxu0 0.0
        %7451 = vmatprep.subr.mxu0 0.0
        %7452 = vmatpush1.msra.mxu0 0.0
        %7453 = vmatprep.subr.mxu0 0.0
        %7454 = vmatpush1.msra.mxu0 0.0
        %7455 = vmatprep.subr.mxu0 0.0
        %7456 = vmatpush1.msra.mxu0 0.0
        %7457 = vmatprep.subr.mxu0 0.0
        %7458 = vmatpush1.msra.mxu0 0.0
        %7459 = vmatprep.subr.mxu0 0.0
        %7460 = vmatpush1.msra.mxu0 0.0
        %7461 = vmatprep.subr.mxu0 0.0
        %7462 = vmatpush1.msra.mxu0 0.0
        %7463 = vmatprep.subr.mxu0 0.0
        %7464 = vmatpush1.msra.mxu0 0.0
        %7465 = vmatprep.mubr.f32.mxu0 0.0
        %7466 = vmatmul.mubr.f32.gmra.mrb[0].mxu0 %v4163
        %v7467 = vpop.f32.mrb[0].mxu0
        %v7468 = vadd.f32 %v4155, %v7467
        %v7469 = vpop.f32.mrb[0].mxu0
        %7470 = vmatprep.mubr.f32.mxu0 0.0
        %7471 = vmatmul.mubr.f32.gmra.mrb[0].mxu0 %v4166
        %v7472 = vpop.f32.mrb[0].mxu0
        %v7473 = vadd.f32 %v4160, %v7472
        %v7474 = vpop.f32.mrb[0].mxu0
        %7475 = vdwg.mxu0
        %v7476 = vrsqrt.pop %v7391
        %v7477 = vmul.f32 %v7391, %v7476
        %vm7478 = vcmp.eq.f32.partialorder %v7391, inf
        %v7479 = vsel %vm7478, %v7391, %v7477
        %vm7480 = vcmp.eq.f32.partialorder %v7391, 0.0
        %v7481 = vand.u32 %v7391, 2147483648
        %v7482 = vsel %vm7480, %v7481, %v7479
        %v7483 = vrsqrt.pop %v7393
        %v7484 = vmul.f32 %v7393, %v7483
        %vm7485 = vcmp.eq.f32.partialorder %v7393, inf
        %v7486 = vsel %vm7485, %v7393, %v7484
        %vm7487 = vcmp.eq.f32.partialorder %v7393, 0.0
        %v7488 = vand.u32 %v7393, 2147483648
        %v7489 = vsel %vm7487, %v7488, %v7486
        %v7490 = vrsqrt.pop %v7468
        %v7491 = vmul.f32 %v7468, %v7490
        %vm7492 = vcmp.eq.f32.partialorder %v7468, inf
        %v7493 = vsel %vm7492, %v7468, %v7491
        %vm7494 = vcmp.eq.f32.partialorder %v7468, 0.0
        %v7495 = vand.u32 %v7468, 2147483648
        %v7496 = vsel %vm7494, %v7495, %v7493
        %v7497 = vrsqrt.pop %v7397
        %v7498 = vmul.f32 %v7397, %v7497
        %vm7499 = vcmp.eq.f32.partialorder %v7397, inf
        %v7500 = vsel %vm7499, %v7397, %v7498
        %vm7501 = vcmp.eq.f32.partialorder %v7397, 0.0
        %v7502 = vand.u32 %v7397, 2147483648
        %v7503 = vsel %vm7501, %v7502, %v7500
        %v7504 = vrsqrt.pop %v7399
        %v7505 = vmul.f32 %v7399, %v7504
        %vm7506 = vcmp.eq.f32.partialorder %v7399, inf
        %v7507 = vsel %vm7506, %v7399, %v7505
        %vm7508 = vcmp.eq.f32.partialorder %v7399, 0.0
        %v7509 = vand.u32 %v7399, 2147483648
        %v7510 = vsel %vm7508, %v7509, %v7507
        %v7511 = vrsqrt.pop %v7473
        %v7512 = vmul.f32 %v7473, %v7511
        %vm7513 = vcmp.eq.f32.partialorder %v7473, inf
        %v7514 = vsel %vm7513, %v7473, %v7512
        %vm7515 = vcmp.eq.f32.partialorder %v7473, 0.0
        %v7516 = vand.u32 %v7473, 2147483648
        %v7517 = vsel %vm7515, %v7516, %v7514
        %v7518 = vmul.f32 %v3667, %v7482
        %v7519 = vmul.f32 %v3669, %v7489
        %v7520 = vmul.f32 %v3774, %v7496
        %v7521 = vmul.f32 %v3673, %v7503
        %v7522 = vmul.f32 %v3675, %v7510
        %v7523 = vmul.f32 %v3779, %v7517
        %v7525 = vsel %vm4574, %v7520, 0
        %v7528 = vsel %vm4574, %v7523, 0
        %7530 = vmatprep.subr.mxu0 %v3787
        %7531 = vmatpush1.msra.mxu0 %v3786
        %7532 = vmatprep.subr.mxu0 %v3797
        %7533 = vmatpush1.msra.mxu0 %v3796
        %7534 = vmatprep.subr.mxu0 %v3807
        %7535 = vmatpush1.msra.mxu0 %v3806
        %7536 = vmatprep.subr.mxu0 %v3817
        %7537 = vmatpush1.msra.mxu0 %v3816
        %7538 = vmatprep.subr.mxu0 %v3827
        %7539 = vmatpush1.msra.mxu0 %v3826
        %7540 = vmatprep.subr.mxu0 %v3837
        %7541 = vmatpush1.msra.mxu0 %v3836
        %7542 = vmatprep.subr.mxu0 %v3847
        %7543 = vmatpush1.msra.mxu0 %v3846
        %7544 = vmatprep.subr.mxu0 %v3857
        %7545 = vmatpush1.msra.mxu0 %v3856
        %7546 = vmatprep.subr.mxu0 %v3867
        %7547 = vmatpush1.msra.mxu0 %v3866
        %7548 = vmatprep.subr.mxu0 %v3877
        %7549 = vmatpush1.msra.mxu0 %v3876
        %7550 = vmatprep.subr.mxu0 %v3887
        %7551 = vmatpush1.msra.mxu0 %v3886
        %7552 = vmatprep.subr.mxu0 %v3897
        %7553 = vmatpush1.msra.mxu0 %v3896
        %7554 = vmatprep.subr.mxu0 %v3907
        %7555 = vmatpush1.msra.mxu0 %v3906
        %7556 = vmatprep.subr.mxu0 %v3917
        %7557 = vmatpush1.msra.mxu0 %v3916
        %7558 = vmatprep.subr.mxu0 %v3927
        %7559 = vmatpush1.msra.mxu0 %v3926
        %7560 = vmatprep.subr.mxu0 %v3937
        %7561 = vmatpush1.msra.mxu0 %v3936
        %7562 = vmatprep.subr.mxu0 %v3947
        %7563 = vmatpush1.msra.mxu0 %v3946
        %7564 = vmatprep.subr.mxu0 %v3957
        %7565 = vmatpush1.msra.mxu0 %v3956
        %7566 = vmatprep.subr.mxu0 %v3967
        %7567 = vmatpush1.msra.mxu0 %v3966
        %7568 = vmatprep.subr.mxu0 %v3977
        %7569 = vmatpush1.msra.mxu0 %v3976
        %7570 = vmatprep.subr.mxu0 %v3987
        %7571 = vmatpush1.msra.mxu0 %v3986
        %7572 = vmatprep.subr.mxu0 %v3997
        %7573 = vmatpush1.msra.mxu0 %v3996
        %7574 = vmatprep.subr.mxu0 %v4007
        %7575 = vmatpush1.msra.mxu0 %v4006
        %7576 = vmatprep.subr.mxu0 %v4017
        %7577 = vmatpush1.msra.mxu0 %v4016
        %7578 = vmatprep.subr.mxu0 %v4027
        %7579 = vmatpush1.msra.mxu0 %v4026
        %7580 = vmatprep.subr.mxu0 %v4037
        %7581 = vmatpush1.msra.mxu0 %v4036
        %7582 = vmatprep.subr.mxu0 %v4047
        %7583 = vmatpush1.msra.mxu0 %v4046
        %7584 = vmatprep.subr.mxu0 %v4057
        %7585 = vmatpush1.msra.mxu0 %v4056
        %7586 = vmatprep.subr.mxu0 %v4067
        %7587 = vmatpush1.msra.mxu0 %v4066
        %7588 = vmatprep.subr.mxu0 %v4077
        %7589 = vmatpush1.msra.mxu0 %v4076
        %7590 = vmatprep.subr.mxu0 %v4087
        %7591 = vmatpush1.msra.mxu0 %v4086
        %7592 = vmatprep.subr.mxu0 %v4097
        %7593 = vmatpush1.msra.mxu0 %v4096
        %7594 = vmatprep.mubr.f32.mxu0 %v7519
        %7595 = vmatmul.mubr.f32.gmra.mrb[0].mxu0 %v7518
        %v7596 = vpop.f32.mrb[0].mxu0
        %v7597 = vadd.f32 0.0, %v7596
        %v7598 = vpop.f32.mrb[0].mxu0
        %v7599 = vadd.f32 0.0, %v7598
        %7600 = vmatprep.mubr.f32.mxu0 %v7522
        %7601 = vmatmul.mubr.f32.gmra.mrb[0].mxu0 %v7521
        %v7602 = vpop.f32.mrb[0].mxu0
        %v7603 = vadd.f32 0.0, %v7602
        %v7604 = vpop.f32.mrb[0].mxu0
        %v7605 = vadd.f32 0.0, %v7604
        %7606 = vdwg.mxu0
        %7607 = vmatprep.subr.mxu0 %v4107
        %7608 = vmatpush1.msra.mxu0 %v4106
        %7609 = vmatprep.subr.mxu0 %v4117
        %7610 = vmatpush1.msra.mxu0 %v4116
        %7611 = vmatprep.subr.mxu0 %v4127
        %7612 = vmatpush1.msra.mxu0 %v4126
        %7613 = vmatprep.subr.mxu0 %v4137
        %7614 = vmatpush1.msra.mxu0 %v4136
        %7615 = vmatprep.subr.mxu0 0.0
        %7616 = vmatpush1.msra.mxu0 0.0
        %7617 = vmatprep.subr.mxu0 0.0
        %7618 = vmatpush1.msra.mxu0 0.0
        %7619 = vmatprep.subr.mxu0 0.0
        %7620 = vmatpush1.msra.mxu0 0.0
        %7621 = vmatprep.subr.mxu0 0.0
        %7622 = vmatpush1.msra.mxu0 0.0
        %7623 = vmatprep.subr.mxu0 0.0
        %7624 = vmatpush1.msra.mxu0 0.0
        %7625 = vmatprep.subr.mxu0 0.0
        %7626 = vmatpush1.msra.mxu0 0.0
        %7627 = vmatprep.subr.mxu0 0.0
        %7628 = vmatpush1.msra.mxu0 0.0
        %7629 = vmatprep.subr.mxu0 0.0
        %7630 = vmatpush1.msra.mxu0 0.0
        %7631 = vmatprep.subr.mxu0 0.0
        %7632 = vmatpush1.msra.mxu0 0.0
        %7633 = vmatprep.subr.mxu0 0.0
        %7634 = vmatpush1.msra.mxu0 0.0
        %7635 = vmatprep.subr.mxu0 0.0
        %7636 = vmatpush1.msra.mxu0 0.0
        %7637 = vmatprep.subr.mxu0 0.0
        %7638 = vmatpush1.msra.mxu0 0.0
        %7639 = vmatprep.subr.mxu0 0.0
        %7640 = vmatpush1.msra.mxu0 0.0
        %7641 = vmatprep.subr.mxu0 0.0
        %7642 = vmatpush1.msra.mxu0 0.0
        %7643 = vmatprep.subr.mxu0 0.0
        %7644 = vmatpush1.msra.mxu0 0.0
        %7645 = vmatprep.subr.mxu0 0.0
        %7646 = vmatpush1.msra.mxu0 0.0
        %7647 = vmatprep.subr.mxu0 0.0
        %7648 = vmatpush1.msra.mxu0 0.0
        %7649 = vmatprep.subr.mxu0 0.0
        %7650 = vmatpush1.msra.mxu0 0.0
        %7651 = vmatprep.subr.mxu0 0.0
        %7652 = vmatpush1.msra.mxu0 0.0
        %7653 = vmatprep.subr.mxu0 0.0
        %7654 = vmatpush1.msra.mxu0 0.0
        %7655 = vmatprep.subr.mxu0 0.0
        %7656 = vmatpush1.msra.mxu0 0.0
        %7657 = vmatprep.subr.mxu0 0.0
        %7658 = vmatpush1.msra.mxu0 0.0
        %7659 = vmatprep.subr.mxu0 0.0
        %7660 = vmatpush1.msra.mxu0 0.0
        %7661 = vmatprep.subr.mxu0 0.0
        %7662 = vmatpush1.msra.mxu0 0.0
        %7663 = vmatprep.subr.mxu0 0.0
        %7664 = vmatpush1.msra.mxu0 0.0
        %7665 = vmatprep.subr.mxu0 0.0
        %7666 = vmatpush1.msra.mxu0 0.0
        %7667 = vmatprep.subr.mxu0 0.0
        %7668 = vmatpush1.msra.mxu0 0.0
        %7669 = vmatprep.subr.mxu0 0.0
        %7670 = vmatpush1.msra.mxu0 0.0
        %7671 = vmatprep.mubr.f32.mxu0 0.0
        %7672 = vmatmul.mubr.f32.gmra.mrb[0].mxu0 %v7525
        %v7673 = vpop.f32.mrb[0].mxu0
        %v7674 = vadd.f32 %v7597, %v7673
        %v7675 = vpop.f32.mrb[0].mxu0
        %v7676 = vadd.f32 %v7599, %v7675
        %7677 = vmatprep.mubr.f32.mxu0 0.0
        %7678 = vmatmul.mubr.f32.gmra.mrb[0].mxu0 %v7528
        %v7679 = vpop.f32.mrb[0].mxu0
        %v7680 = vadd.f32 %v7603, %v7679
        %v7681 = vpop.f32.mrb[0].mxu0
        %v7682 = vadd.f32 %v7605, %v7681
        %7683 = vdwg.mxu0
        %7684 = vmatprep.subr.mxu0 %v3789
        %7685 = vmatpush1.msra.mxu0 %v3788
        %7686 = vmatprep.subr.mxu0 %v3799
        %7687 = vmatpush1.msra.mxu0 %v3798
        %7688 = vmatprep.subr.mxu0 %v3809
        %7689 = vmatpush1.msra.mxu0 %v3808
        %7690 = vmatprep.subr.mxu0 %v3819
        %7691 = vmatpush1.msra.mxu0 %v3818
        %7692 = vmatprep.subr.mxu0 %v3829
        %7693 = vmatpush1.msra.mxu0 %v3828
        %7694 = vmatprep.subr.mxu0 %v3839
        %7695 = vmatpush1.msra.mxu0 %v3838
        %7696 = vmatprep.subr.mxu0 %v3849
        %7697 = vmatpush1.msra.mxu0 %v3848
        %7698 = vmatprep.subr.mxu0 %v3859
        %7699 = vmatpush1.msra.mxu0 %v3858
        %7700 = vmatprep.subr.mxu0 %v3869
        %7701 = vmatpush1.msra.mxu0 %v3868
        %7702 = vmatprep.subr.mxu0 %v3879
        %7703 = vmatpush1.msra.mxu0 %v3878
        %7704 = vmatprep.subr.mxu0 %v3889
        %7705 = vmatpush1.msra.mxu0 %v3888
        %7706 = vmatprep.subr.mxu0 %v3899
        %7707 = vmatpush1.msra.mxu0 %v3898
        %7708 = vmatprep.subr.mxu0 %v3909
        %7709 = vmatpush1.msra.mxu0 %v3908
        %7710 = vmatprep.subr.mxu0 %v3919
        %7711 = vmatpush1.msra.mxu0 %v3918
        %7712 = vmatprep.subr.mxu0 %v3929
        %7713 = vmatpush1.msra.mxu0 %v3928
        %7714 = vmatprep.subr.mxu0 %v3939
        %7715 = vmatpush1.msra.mxu0 %v3938
        %7716 = vmatprep.subr.mxu0 %v3949
        %7717 = vmatpush1.msra.mxu0 %v3948
        %7718 = vmatprep.subr.mxu0 %v3959
        %7719 = vmatpush1.msra.mxu0 %v3958
        %7720 = vmatprep.subr.mxu0 %v3969
        %7721 = vmatpush1.msra.mxu0 %v3968
        %7722 = vmatprep.subr.mxu0 %v3979
        %7723 = vmatpush1.msra.mxu0 %v3978
        %7724 = vmatprep.subr.mxu0 %v3989
        %7725 = vmatpush1.msra.mxu0 %v3988
        %7726 = vmatprep.subr.mxu0 %v3999
        %7727 = vmatpush1.msra.mxu0 %v3998
        %7728 = vmatprep.subr.mxu0 %v4009
        %7729 = vmatpush1.msra.mxu0 %v4008
        %7730 = vmatprep.subr.mxu0 %v4019
        %7731 = vmatpush1.msra.mxu0 %v4018
        %7732 = vmatprep.subr.mxu0 %v4029
        %7733 = vmatpush1.msra.mxu0 %v4028
        %7734 = vmatprep.subr.mxu0 %v4039
        %7735 = vmatpush1.msra.mxu0 %v4038
        %7736 = vmatprep.subr.mxu0 %v4049
        %7737 = vmatpush1.msra.mxu0 %v4048
        %7738 = vmatprep.subr.mxu0 %v4059
        %7739 = vmatpush1.msra.mxu0 %v4058
        %7740 = vmatprep.subr.mxu0 %v4069
        %7741 = vmatpush1.msra.mxu0 %v4068
        %7742 = vmatprep.subr.mxu0 %v4079
        %7743 = vmatpush1.msra.mxu0 %v4078
        %7744 = vmatprep.subr.mxu0 %v4089
        %7745 = vmatpush1.msra.mxu0 %v4088
        %7746 = vmatprep.subr.mxu0 %v4099
        %7747 = vmatpush1.msra.mxu0 %v4098
        %7748 = vmatprep.mubr.f32.mxu0 %v7519
        %7749 = vmatmul.mubr.f32.gmra.mrb[0].mxu0 %v7518
        %v7750 = vpop.f32.mrb[0].mxu0
        %v7751 = vadd.f32 0.0, %v7750
        %v7752 = vpop.f32.mrb[0].mxu0
        %v7753 = vadd.f32 0.0, %v7752
        %7754 = vmatprep.mubr.f32.mxu0 %v7522
        %7755 = vmatmul.mubr.f32.gmra.mrb[0].mxu0 %v7521
        %v7756 = vpop.f32.mrb[0].mxu0
        %v7757 = vadd.f32 0.0, %v7756
        %v7758 = vpop.f32.mrb[0].mxu0
        %v7759 = vadd.f32 0.0, %v7758
        %7760 = vdwg.mxu0
        %7761 = vmatprep.subr.mxu0 %v4109
        %7762 = vmatpush1.msra.mxu0 %v4108
        %7763 = vmatprep.subr.mxu0 %v4119
        %7764 = vmatpush1.msra.mxu0 %v4118
        %7765 = vmatprep.subr.mxu0 %v4129
        %7766 = vmatpush1.msra.mxu0 %v4128
        %7767 = vmatprep.subr.mxu0 %v4139
        %7768 = vmatpush1.msra.mxu0 %v4138
        %7769 = vmatprep.subr.mxu0 0.0
        %7770 = vmatpush1.msra.mxu0 0.0
        %7771 = vmatprep.subr.mxu0 0.0
        %7772 = vmatpush1.msra.mxu0 0.0
        %7773 = vmatprep.subr.mxu0 0.0
        %7774 = vmatpush1.msra.mxu0 0.0
        %7775 = vmatprep.subr.mxu0 0.0
        %7776 = vmatpush1.msra.mxu0 0.0
        %7777 = vmatprep.subr.mxu0 0.0
        %7778 = vmatpush1.msra.mxu0 0.0
        %7779 = vmatprep.subr.mxu0 0.0
        %7780 = vmatpush1.msra.mxu0 0.0
        %7781 = vmatprep.subr.mxu0 0.0
        %7782 = vmatpush1.msra.mxu0 0.0
        %7783 = vmatprep.subr.mxu0 0.0
        %7784 = vmatpush1.msra.mxu0 0.0
        %7785 = vmatprep.subr.mxu0 0.0
        %7786 = vmatpush1.msra.mxu0 0.0
        %7787 = vmatprep.subr.mxu0 0.0
        %7788 = vmatpush1.msra.mxu0 0.0
        %7789 = vmatprep.subr.mxu0 0.0
        %7790 = vmatpush1.msra.mxu0 0.0
        %7791 = vmatprep.subr.mxu0 0.0
        %7792 = vmatpush1.msra.mxu0 0.0
        %7793 = vmatprep.subr.mxu0 0.0
        %7794 = vmatpush1.msra.mxu0 0.0
        %7795 = vmatprep.subr.mxu0 0.0
        %7796 = vmatpush1.msra.mxu0 0.0
        %7797 = vmatprep.subr.mxu0 0.0
        %7798 = vmatpush1.msra.mxu0 0.0
        %7799 = vmatprep.subr.mxu0 0.0
        %7800 = vmatpush1.msra.mxu0 0.0
        %7801 = vmatprep.subr.mxu0 0.0
        %7802 = vmatpush1.msra.mxu0 0.0
        %7803 = vmatprep.subr.mxu0 0.0
        %7804 = vmatpush1.msra.mxu0 0.0
        %7805 = vmatprep.subr.mxu0 0.0
        %7806 = vmatpush1.msra.mxu0 0.0
        %7807 = vmatprep.subr.mxu0 0.0
        %7808 = vmatpush1.msra.mxu0 0.0
        %7809 = vmatprep.subr.mxu0 0.0
        %7810 = vmatpush1.msra.mxu0 0.0
        %7811 = vmatprep.subr.mxu0 0.0
        %7812 = vmatpush1.msra.mxu0 0.0
        %7813 = vmatprep.subr.mxu0 0.0
        %7814 = vmatpush1.msra.mxu0 0.0
        %7815 = vmatprep.subr.mxu0 0.0
        %7816 = vmatpush1.msra.mxu0 0.0
        %7817 = vmatprep.subr.mxu0 0.0
        %7818 = vmatpush1.msra.mxu0 0.0
        %7819 = vmatprep.subr.mxu0 0.0
        %7820 = vmatpush1.msra.mxu0 0.0
        %7821 = vmatprep.subr.mxu0 0.0
        %7822 = vmatpush1.msra.mxu0 0.0
        %7823 = vmatprep.subr.mxu0 0.0
        %7824 = vmatpush1.msra.mxu0 0.0
        %7825 = vmatprep.mubr.f32.mxu0 0.0
        %7826 = vmatmul.mubr.f32.gmra.mrb[0].mxu0 %v7525
        %v7827 = vpop.f32.mrb[0].mxu0
        %v7828 = vadd.f32 %v7751, %v7827
        %v7829 = vpop.f32.mrb[0].mxu0
        %v7830 = vadd.f32 %v7753, %v7829
        %7831 = vmatprep.mubr.f32.mxu0 0.0
        %7832 = vmatmul.mubr.f32.gmra.mrb[0].mxu0 %v7528
        %v7833 = vpop.f32.mrb[0].mxu0
        %v7834 = vadd.f32 %v7757, %v7833
        %v7835 = vpop.f32.mrb[0].mxu0
        %v7836 = vadd.f32 %v7759, %v7835
        %7837 = vdwg.mxu0
        %7838 = vmatprep.subr.mxu0 %v3791
        %7839 = vmatpush1.msra.mxu0 %v3790
        %7840 = vmatprep.subr.mxu0 %v3801
        %7841 = vmatpush1.msra.mxu0 %v3800
        %7842 = vmatprep.subr.mxu0 %v3811
        %7843 = vmatpush1.msra.mxu0 %v3810
        %7844 = vmatprep.subr.mxu0 %v3821
        %7845 = vmatpush1.msra.mxu0 %v3820
        %7846 = vmatprep.subr.mxu0 %v3831
        %7847 = vmatpush1.msra.mxu0 %v3830
        %7848 = vmatprep.subr.mxu0 %v3841
        %7849 = vmatpush1.msra.mxu0 %v3840
        %7850 = vmatprep.subr.mxu0 %v3851
        %7851 = vmatpush1.msra.mxu0 %v3850
        %7852 = vmatprep.subr.mxu0 %v3861
        %7853 = vmatpush1.msra.mxu0 %v3860
        %7854 = vmatprep.subr.mxu0 %v3871
        %7855 = vmatpush1.msra.mxu0 %v3870
        %7856 = vmatprep.subr.mxu0 %v3881
        %7857 = vmatpush1.msra.mxu0 %v3880
        %7858 = vmatprep.subr.mxu0 %v3891
        %7859 = vmatpush1.msra.mxu0 %v3890
        %7860 = vmatprep.subr.mxu0 %v3901
        %7861 = vmatpush1.msra.mxu0 %v3900
        %7862 = vmatprep.subr.mxu0 %v3911
        %7863 = vmatpush1.msra.mxu0 %v3910
        %7864 = vmatprep.subr.mxu0 %v3921
        %7865 = vmatpush1.msra.mxu0 %v3920
        %7866 = vmatprep.subr.mxu0 %v3931
        %7867 = vmatpush1.msra.mxu0 %v3930
        %7868 = vmatprep.subr.mxu0 %v3941
        %7869 = vmatpush1.msra.mxu0 %v3940
        %7870 = vmatprep.subr.mxu0 %v3951
        %7871 = vmatpush1.msra.mxu0 %v3950
        %7872 = vmatprep.subr.mxu0 %v3961
        %7873 = vmatpush1.msra.mxu0 %v3960
        %7874 = vmatprep.subr.mxu0 %v3971
        %7875 = vmatpush1.msra.mxu0 %v3970
        %7876 = vmatprep.subr.mxu0 %v3981
        %7877 = vmatpush1.msra.mxu0 %v3980
        %7878 = vmatprep.subr.mxu0 %v3991
        %7879 = vmatpush1.msra.mxu0 %v3990
        %7880 = vmatprep.subr.mxu0 %v4001
        %7881 = vmatpush1.msra.mxu0 %v4000
        %7882 = vmatprep.subr.mxu0 %v4011
        %7883 = vmatpush1.msra.mxu0 %v4010
        %7884 = vmatprep.subr.mxu0 %v4021
        %7885 = vmatpush1.msra.mxu0 %v4020
        %7886 = vmatprep.subr.mxu0 %v4031
        %7887 = vmatpush1.msra.mxu0 %v4030
        %7888 = vmatprep.subr.mxu0 %v4041
        %7889 = vmatpush1.msra.mxu0 %v4040
        %7890 = vmatprep.subr.mxu0 %v4051
        %7891 = vmatpush1.msra.mxu0 %v4050
        %7892 = vmatprep.subr.mxu0 %v4061
        %7893 = vmatpush1.msra.mxu0 %v4060
        %7894 = vmatprep.subr.mxu0 %v4071
        %7895 = vmatpush1.msra.mxu0 %v4070
        %7896 = vmatprep.subr.mxu0 %v4081
        %7897 = vmatpush1.msra.mxu0 %v4080
        %7898 = vmatprep.subr.mxu0 %v4091
        %7899 = vmatpush1.msra.mxu0 %v4090
        %7900 = vmatprep.subr.mxu0 %v4101
        %7901 = vmatpush1.msra.mxu0 %v4100
        %7902 = vmatprep.mubr.f32.mxu0 %v7519
        %7903 = vmatmul.mubr.f32.gmra.mrb[0].mxu0 %v7518
        %v7904 = vpop.f32.mrb[0].mxu0
        %v7905 = vadd.f32 0.0, %v7904
        %v7906 = vpop.f32.mrb[0].mxu0
        %v7907 = vadd.f32 0.0, %v7906
        %7908 = vmatprep.mubr.f32.mxu0 %v7522
        %7909 = vmatmul.mubr.f32.gmra.mrb[0].mxu0 %v7521
        %v7910 = vpop.f32.mrb[0].mxu0
        %v7911 = vadd.f32 0.0, %v7910
        %v7912 = vpop.f32.mrb[0].mxu0
        %v7913 = vadd.f32 0.0, %v7912
        %7914 = vdwg.mxu0
        %7915 = vmatprep.subr.mxu0 %v4111
        %7916 = vmatpush1.msra.mxu0 %v4110
        %7917 = vmatprep.subr.mxu0 %v4121
        %7918 = vmatpush1.msra.mxu0 %v4120
        %7919 = vmatprep.subr.mxu0 %v4131
        %7920 = vmatpush1.msra.mxu0 %v4130
        %7921 = vmatprep.subr.mxu0 %v4141
        %7922 = vmatpush1.msra.mxu0 %v4140
        %7923 = vmatprep.subr.mxu0 0.0
        %7924 = vmatpush1.msra.mxu0 0.0
        %7925 = vmatprep.subr.mxu0 0.0
        %7926 = vmatpush1.msra.mxu0 0.0
        %7927 = vmatprep.subr.mxu0 0.0
        %7928 = vmatpush1.msra.mxu0 0.0
        %7929 = vmatprep.subr.mxu0 0.0
        %7930 = vmatpush1.msra.mxu0 0.0
        %7931 = vmatprep.subr.mxu0 0.0
        %7932 = vmatpush1.msra.mxu0 0.0
        %7933 = vmatprep.subr.mxu0 0.0
        %7934 = vmatpush1.msra.mxu0 0.0
        %7935 = vmatprep.subr.mxu0 0.0
        %7936 = vmatpush1.msra.mxu0 0.0
        %7937 = vmatprep.subr.mxu0 0.0
        %7938 = vmatpush1.msra.mxu0 0.0
        %7939 = vmatprep.subr.mxu0 0.0
        %7940 = vmatpush1.msra.mxu0 0.0
        %7941 = vmatprep.subr.mxu0 0.0
        %7942 = vmatpush1.msra.mxu0 0.0
        %7943 = vmatprep.subr.mxu0 0.0
        %7944 = vmatpush1.msra.mxu0 0.0
        %7945 = vmatprep.subr.mxu0 0.0
        %7946 = vmatpush1.msra.mxu0 0.0
        %7947 = vmatprep.subr.mxu0 0.0
        %7948 = vmatpush1.msra.mxu0 0.0
        %7949 = vmatprep.subr.mxu0 0.0
        %7950 = vmatpush1.msra.mxu0 0.0
        %7951 = vmatprep.subr.mxu0 0.0
        %7952 = vmatpush1.msra.mxu0 0.0
        %7953 = vmatprep.subr.mxu0 0.0
        %7954 = vmatpush1.msra.mxu0 0.0
        %7955 = vmatprep.subr.mxu0 0.0
        %7956 = vmatpush1.msra.mxu0 0.0
        %7957 = vmatprep.subr.mxu0 0.0
        %7958 = vmatpush1.msra.mxu0 0.0
        %7959 = vmatprep.subr.mxu0 0.0
        %7960 = vmatpush1.msra.mxu0 0.0
        %7961 = vmatprep.subr.mxu0 0.0
        %7962 = vmatpush1.msra.mxu0 0.0
        %7963 = vmatprep.subr.mxu0 0.0
        %7964 = vmatpush1.msra.mxu0 0.0
        %7965 = vmatprep.subr.mxu0 0.0
        %7966 = vmatpush1.msra.mxu0 0.0
        %7967 = vmatprep.subr.mxu0 0.0
        %7968 = vmatpush1.msra.mxu0 0.0
        %7969 = vmatprep.subr.mxu0 0.0
        %7970 = vmatpush1.msra.mxu0 0.0
        %7971 = vmatprep.subr.mxu0 0.0
        %7972 = vmatpush1.msra.mxu0 0.0
        %7973 = vmatprep.subr.mxu0 0.0
        %7974 = vmatpush1.msra.mxu0 0.0
        %7975 = vmatprep.subr.mxu0 0.0
        %7976 = vmatpush1.msra.mxu0 0.0
        %7977 = vmatprep.subr.mxu0 0.0
        %7978 = vmatpush1.msra.mxu0 0.0
        %7979 = vmatprep.mubr.f32.mxu0 0.0
        %7980 = vmatmul.mubr.f32.gmra.mrb[0].mxu0 %v7525
        %v7981 = vpop.f32.mrb[0].mxu0
        %v7982 = vadd.f32 %v7905, %v7981
        %v7983 = vpop.f32.mrb[0].mxu0
        %v7984 = vadd.f32 %v7907, %v7983
        %7985 = vmatprep.mubr.f32.mxu0 0.0
        %7986 = vmatmul.mubr.f32.gmra.mrb[0].mxu0 %v7528
        %v7987 = vpop.f32.mrb[0].mxu0
        %v7988 = vadd.f32 %v7911, %v7987
        %v7989 = vpop.f32.mrb[0].mxu0
        %v7990 = vadd.f32 %v7913, %v7989
        %7991 = vdwg.mxu0
        %7992 = vmatprep.subr.mxu0 %v3793
        %7993 = vmatpush1.msra.mxu0 %v3792
        %7994 = vmatprep.subr.mxu0 %v3803
        %7995 = vmatpush1.msra.mxu0 %v3802
        %7996 = vmatprep.subr.mxu0 %v3813
        %7997 = vmatpush1.msra.mxu0 %v3812
        %7998 = vmatprep.subr.mxu0 %v3823
        %7999 = vmatpush1.msra.mxu0 %v3822
        %8000 = vmatprep.subr.mxu0 %v3833
        %8001 = vmatpush1.msra.mxu0 %v3832
        %8002 = vmatprep.subr.mxu0 %v3843
        %8003 = vmatpush1.msra.mxu0 %v3842
        %8004 = vmatprep.subr.mxu0 %v3853
        %8005 = vmatpush1.msra.mxu0 %v3852
        %8006 = vmatprep.subr.mxu0 %v3863
        %8007 = vmatpush1.msra.mxu0 %v3862
        %8008 = vmatprep.subr.mxu0 %v3873
        %8009 = vmatpush1.msra.mxu0 %v3872
        %8010 = vmatprep.subr.mxu0 %v3883
        %8011 = vmatpush1.msra.mxu0 %v3882
        %8012 = vmatprep.subr.mxu0 %v3893
        %8013 = vmatpush1.msra.mxu0 %v3892
        %8014 = vmatprep.subr.mxu0 %v3903
        %8015 = vmatpush1.msra.mxu0 %v3902
        %8016 = vmatprep.subr.mxu0 %v3913
        %8017 = vmatpush1.msra.mxu0 %v3912
        %8018 = vmatprep.subr.mxu0 %v3923
        %8019 = vmatpush1.msra.mxu0 %v3922
        %8020 = vmatprep.subr.mxu0 %v3933
        %8021 = vmatpush1.msra.mxu0 %v3932
        %8022 = vmatprep.subr.mxu0 %v3943
        %8023 = vmatpush1.msra.mxu0 %v3942
        %8024 = vmatprep.subr.mxu0 %v3953
        %8025 = vmatpush1.msra.mxu0 %v3952
        %8026 = vmatprep.subr.mxu0 %v3963
        %8027 = vmatpush1.msra.mxu0 %v3962
        %8028 = vmatprep.subr.mxu0 %v3973
        %8029 = vmatpush1.msra.mxu0 %v3972
        %8030 = vmatprep.subr.mxu0 %v3983
        %8031 = vmatpush1.msra.mxu0 %v3982
        %8032 = vmatprep.subr.mxu0 %v3993
        %8033 = vmatpush1.msra.mxu0 %v3992
        %8034 = vmatprep.subr.mxu0 %v4003
        %8035 = vmatpush1.msra.mxu0 %v4002
        %8036 = vmatprep.subr.mxu0 %v4013
        %8037 = vmatpush1.msra.mxu0 %v4012
        %8038 = vmatprep.subr.mxu0 %v4023
        %8039 = vmatpush1.msra.mxu0 %v4022
        %8040 = vmatprep.subr.mxu0 %v4033
        %8041 = vmatpush1.msra.mxu0 %v4032
        %8042 = vmatprep.subr.mxu0 %v4043
        %8043 = vmatpush1.msra.mxu0 %v4042
        %8044 = vmatprep.subr.mxu0 %v4053
        %8045 = vmatpush1.msra.mxu0 %v4052
        %8046 = vmatprep.subr.mxu0 %v4063
        %8047 = vmatpush1.msra.mxu0 %v4062
        %8048 = vmatprep.subr.mxu0 %v4073
        %8049 = vmatpush1.msra.mxu0 %v4072
        %8050 = vmatprep.subr.mxu0 %v4083
        %8051 = vmatpush1.msra.mxu0 %v4082
        %8052 = vmatprep.subr.mxu0 %v4093
        %8053 = vmatpush1.msra.mxu0 %v4092
        %8054 = vmatprep.subr.mxu0 %v4103
        %8055 = vmatpush1.msra.mxu0 %v4102
        %8056 = vmatprep.mubr.f32.mxu0 %v7519
        %8057 = vmatmul.mubr.f32.gmra.mrb[0].mxu0 %v7518
        %v8058 = vpop.f32.mrb[0].mxu0
        %v8059 = vadd.f32 0.0, %v8058
        %v8060 = vpop.f32.mrb[0].mxu0
        %v8061 = vadd.f32 0.0, %v8060
        %8062 = vmatprep.mubr.f32.mxu0 %v7522
        %8063 = vmatmul.mubr.f32.gmra.mrb[0].mxu0 %v7521
        %v8064 = vpop.f32.mrb[0].mxu0
        %v8065 = vadd.f32 0.0, %v8064
        %v8066 = vpop.f32.mrb[0].mxu0
        %v8067 = vadd.f32 0.0, %v8066
        %8068 = vdwg.mxu0
        %8069 = vmatprep.subr.mxu0 %v4113
        %8070 = vmatpush1.msra.mxu0 %v4112
        %8071 = vmatprep.subr.mxu0 %v4123
        %8072 = vmatpush1.msra.mxu0 %v4122
        %8073 = vmatprep.subr.mxu0 %v4133
        %8074 = vmatpush1.msra.mxu0 %v4132
        %8075 = vmatprep.subr.mxu0 %v4143
        %8076 = vmatpush1.msra.mxu0 %v4142
        %8077 = vmatprep.subr.mxu0 0.0
        %8078 = vmatpush1.msra.mxu0 0.0
        %8079 = vmatprep.subr.mxu0 0.0
        %8080 = vmatpush1.msra.mxu0 0.0
        %8081 = vmatprep.subr.mxu0 0.0
        %8082 = vmatpush1.msra.mxu0 0.0
        %8083 = vmatprep.subr.mxu0 0.0
        %8084 = vmatpush1.msra.mxu0 0.0
        %8085 = vmatprep.subr.mxu0 0.0
        %8086 = vmatpush1.msra.mxu0 0.0
        %8087 = vmatprep.subr.mxu0 0.0
        %8088 = vmatpush1.msra.mxu0 0.0
        %8089 = vmatprep.subr.mxu0 0.0
        %8090 = vmatpush1.msra.mxu0 0.0
        %8091 = vmatprep.subr.mxu0 0.0
        %8092 = vmatpush1.msra.mxu0 0.0
        %8093 = vmatprep.subr.mxu0 0.0
        %8094 = vmatpush1.msra.mxu0 0.0
        %8095 = vmatprep.subr.mxu0 0.0
        %8096 = vmatpush1.msra.mxu0 0.0
        %8097 = vmatprep.subr.mxu0 0.0
        %8098 = vmatpush1.msra.mxu0 0.0
        %8099 = vmatprep.subr.mxu0 0.0
        %8100 = vmatpush1.msra.mxu0 0.0
        %8101 = vmatprep.subr.mxu0 0.0
        %8102 = vmatpush1.msra.mxu0 0.0
        %8103 = vmatprep.subr.mxu0 0.0
        %8104 = vmatpush1.msra.mxu0 0.0
        %8105 = vmatprep.subr.mxu0 0.0
        %8106 = vmatpush1.msra.mxu0 0.0
        %8107 = vmatprep.subr.mxu0 0.0
        %8108 = vmatpush1.msra.mxu0 0.0
        %8109 = vmatprep.subr.mxu0 0.0
        %8110 = vmatpush1.msra.mxu0 0.0
        %8111 = vmatprep.subr.mxu0 0.0
        %8112 = vmatpush1.msra.mxu0 0.0
        %8113 = vmatprep.subr.mxu0 0.0
        %8114 = vmatpush1.msra.mxu0 0.0
        %8115 = vmatprep.subr.mxu0 0.0
        %8116 = vmatpush1.msra.mxu0 0.0
        %8117 = vmatprep.subr.mxu0 0.0
        %8118 = vmatpush1.msra.mxu0 0.0
        %8119 = vmatprep.subr.mxu0 0.0
        %8120 = vmatpush1.msra.mxu0 0.0
        %8121 = vmatprep.subr.mxu0 0.0
        %8122 = vmatpush1.msra.mxu0 0.0
        %8123 = vmatprep.subr.mxu0 0.0
        %8124 = vmatpush1.msra.mxu0 0.0
        %8125 = vmatprep.subr.mxu0 0.0
        %8126 = vmatpush1.msra.mxu0 0.0
        %8127 = vmatprep.subr.mxu0 0.0
        %8128 = vmatpush1.msra.mxu0 0.0
        %8129 = vmatprep.subr.mxu0 0.0
        %8130 = vmatpush1.msra.mxu0 0.0
        %8131 = vmatprep.subr.mxu0 0.0
        %8132 = vmatpush1.msra.mxu0 0.0
        %8133 = vmatprep.mubr.f32.mxu0 0.0
        %8134 = vmatmul.mubr.f32.gmra.mrb[0].mxu0 %v7525
        %v8135 = vpop.f32.mrb[0].mxu0
        %v8136 = vadd.f32 %v8059, %v8135
        %v8137 = vpop.f32.mrb[0].mxu0
        %v8138 = vadd.f32 %v8061, %v8137
        %8139 = vmatprep.mubr.f32.mxu0 0.0
        %8140 = vmatmul.mubr.f32.gmra.mrb[0].mxu0 %v7528
        %v8141 = vpop.f32.mrb[0].mxu0
        %v8142 = vadd.f32 %v8065, %v8141
        %v8143 = vpop.f32.mrb[0].mxu0
        %v8144 = vadd.f32 %v8067, %v8143
        %8145 = vdwg.mxu0
        %8146 = vmatprep.subr.mxu0 %v3795
        %8147 = vmatpush1.msra.mxu0 %v3794
        %8148 = vmatprep.subr.mxu0 %v3805
        %8149 = vmatpush1.msra.mxu0 %v3804
        %8150 = vmatprep.subr.mxu0 %v3815
        %8151 = vmatpush1.msra.mxu0 %v3814
        %8152 = vmatprep.subr.mxu0 %v3825
        %8153 = vmatpush1.msra.mxu0 %v3824
        %8154 = vmatprep.subr.mxu0 %v3835
        %8155 = vmatpush1.msra.mxu0 %v3834
        %8156 = vmatprep.subr.mxu0 %v3845
        %8157 = vmatpush1.msra.mxu0 %v3844
        %8158 = vmatprep.subr.mxu0 %v3855
        %8159 = vmatpush1.msra.mxu0 %v3854
        %8160 = vmatprep.subr.mxu0 %v3865
        %8161 = vmatpush1.msra.mxu0 %v3864
        %8162 = vmatprep.subr.mxu0 %v3875
        %8163 = vmatpush1.msra.mxu0 %v3874
        %8164 = vmatprep.subr.mxu0 %v3885
        %8165 = vmatpush1.msra.mxu0 %v3884
        %8166 = vmatprep.subr.mxu0 %v3895
        %8167 = vmatpush1.msra.mxu0 %v3894
        %8168 = vmatprep.subr.mxu0 %v3905
        %8169 = vmatpush1.msra.mxu0 %v3904
        %8170 = vmatprep.subr.mxu0 %v3915
        %8171 = vmatpush1.msra.mxu0 %v3914
        %8172 = vmatprep.subr.mxu0 %v3925
        %8173 = vmatpush1.msra.mxu0 %v3924
        %8174 = vmatprep.subr.mxu0 %v3935
        %8175 = vmatpush1.msra.mxu0 %v3934
        %8176 = vmatprep.subr.mxu0 %v3945
        %8177 = vmatpush1.msra.mxu0 %v3944
        %8178 = vmatprep.subr.mxu0 %v3955
        %8179 = vmatpush1.msra.mxu0 %v3954
        %8180 = vmatprep.subr.mxu0 %v3965
        %8181 = vmatpush1.msra.mxu0 %v3964
        %8182 = vmatprep.subr.mxu0 %v3975
        %8183 = vmatpush1.msra.mxu0 %v3974
        %8184 = vmatprep.subr.mxu0 %v3985
        %8185 = vmatpush1.msra.mxu0 %v3984
        %8186 = vmatprep.subr.mxu0 %v3995
        %8187 = vmatpush1.msra.mxu0 %v3994
        %8188 = vmatprep.subr.mxu0 %v4005
        %8189 = vmatpush1.msra.mxu0 %v4004
        %8190 = vmatprep.subr.mxu0 %v4015
        %8191 = vmatpush1.msra.mxu0 %v4014
        %8192 = vmatprep.subr.mxu0 %v4025
        %8193 = vmatpush1.msra.mxu0 %v4024
        %8194 = vmatprep.subr.mxu0 %v4035
        %8195 = vmatpush1.msra.mxu0 %v4034
        %8196 = vmatprep.subr.mxu0 %v4045
        %8197 = vmatpush1.msra.mxu0 %v4044
        %8198 = vmatprep.subr.mxu0 %v4055
        %8199 = vmatpush1.msra.mxu0 %v4054
        %8200 = vmatprep.subr.mxu0 %v4065
        %8201 = vmatpush1.msra.mxu0 %v4064
        %8202 = vmatprep.subr.mxu0 %v4075
        %8203 = vmatpush1.msra.mxu0 %v4074
        %8204 = vmatprep.subr.mxu0 %v4085
        %8205 = vmatpush1.msra.mxu0 %v4084
        %8206 = vmatprep.subr.mxu0 %v4095
        %8207 = vmatpush1.msra.mxu0 %v4094
        %8208 = vmatprep.subr.mxu0 %v4105
        %8209 = vmatpush1.msra.mxu0 %v4104
        %8210 = vmatprep.mubr.f32.mxu0 %v7519
        %8211 = vmatmul.mubr.f32.gmra.mrb[0].mxu0 %v7518
        %v8212 = vpop.f32.mrb[0].mxu0
        %v8213 = vadd.f32 0.0, %v8212
        %v8214 = vpop.f32.mrb[0].mxu0
        %8215 = vmatprep.mubr.f32.mxu0 %v7522
        %8216 = vmatmul.mubr.f32.gmra.mrb[0].mxu0 %v7521
        %v8217 = vpop.f32.mrb[0].mxu0
        %v8218 = vadd.f32 0.0, %v8217
        %v8219 = vpop.f32.mrb[0].mxu0
        %8220 = vdwg.mxu0
        %8221 = vmatprep.subr.mxu0 %v4115
        %8222 = vmatpush1.msra.mxu0 %v4114
        %8223 = vmatprep.subr.mxu0 %v4125
        %8224 = vmatpush1.msra.mxu0 %v4124
        %8225 = vmatprep.subr.mxu0 %v4135
        %8226 = vmatpush1.msra.mxu0 %v4134
        %8227 = vmatprep.subr.mxu0 %v4145
        %8228 = vmatpush1.msra.mxu0 %v4144
        %8229 = vmatprep.subr.mxu0 0.0
        %8230 = vmatpush1.msra.mxu0 0.0
        %8231 = vmatprep.subr.mxu0 0.0
        %8232 = vmatpush1.msra.mxu0 0.0
        %8233 = vmatprep.subr.mxu0 0.0
        %8234 = vmatpush1.msra.mxu0 0.0
        %8235 = vmatprep.subr.mxu0 0.0
        %8236 = vmatpush1.msra.mxu0 0.0
        %8237 = vmatprep.subr.mxu0 0.0
        %8238 = vmatpush1.msra.mxu0 0.0
        %8239 = vmatprep.subr.mxu0 0.0
        %8240 = vmatpush1.msra.mxu0 0.0
        %8241 = vmatprep.subr.mxu0 0.0
        %8242 = vmatpush1.msra.mxu0 0.0
        %8243 = vmatprep.subr.mxu0 0.0
        %8244 = vmatpush1.msra.mxu0 0.0
        %8245 = vmatprep.subr.mxu0 0.0
        %8246 = vmatpush1.msra.mxu0 0.0
        %8247 = vmatprep.subr.mxu0 0.0
        %8248 = vmatpush1.msra.mxu0 0.0
        %8249 = vmatprep.subr.mxu0 0.0
        %8250 = vmatpush1.msra.mxu0 0.0
        %8251 = vmatprep.subr.mxu0 0.0
        %8252 = vmatpush1.msra.mxu0 0.0
        %8253 = vmatprep.subr.mxu0 0.0
        %8254 = vmatpush1.msra.mxu0 0.0
        %8255 = vmatprep.subr.mxu0 0.0
        %8256 = vmatpush1.msra.mxu0 0.0
        %8257 = vmatprep.subr.mxu0 0.0
        %8258 = vmatpush1.msra.mxu0 0.0
        %8259 = vmatprep.subr.mxu0 0.0
        %8260 = vmatpush1.msra.mxu0 0.0
        %8261 = vmatprep.subr.mxu0 0.0
        %8262 = vmatpush1.msra.mxu0 0.0
        %8263 = vmatprep.subr.mxu0 0.0
        %8264 = vmatpush1.msra.mxu0 0.0
        %8265 = vmatprep.subr.mxu0 0.0
        %8266 = vmatpush1.msra.mxu0 0.0
        %8267 = vmatprep.subr.mxu0 0.0
        %8268 = vmatpush1.msra.mxu0 0.0
        %8269 = vmatprep.subr.mxu0 0.0
        %8270 = vmatpush1.msra.mxu0 0.0
        %8271 = vmatprep.subr.mxu0 0.0
        %8272 = vmatpush1.msra.mxu0 0.0
        %8273 = vmatprep.subr.mxu0 0.0
        %8274 = vmatpush1.msra.mxu0 0.0
        %8275 = vmatprep.subr.mxu0 0.0
        %8276 = vmatpush1.msra.mxu0 0.0
        %8277 = vmatprep.subr.mxu0 0.0
        %8278 = vmatpush1.msra.mxu0 0.0
        %8279 = vmatprep.subr.mxu0 0.0
        %8280 = vmatpush1.msra.mxu0 0.0
        %8281 = vmatprep.subr.mxu0 0.0
        %8282 = vmatpush1.msra.mxu0 0.0
        %8283 = vmatprep.subr.mxu0 0.0
        %8284 = vmatpush1.msra.mxu0 0.0
        %8285 = vmatprep.mubr.f32.mxu0 0.0
        %8286 = vmatmul.mubr.f32.gmra.mrb[0].mxu0 %v7525
        %v8287 = vpop.f32.mrb[0].mxu0
        %v8288 = vadd.f32 %v8213, %v8287
        %v8289 = vpop.f32.mrb[0].mxu0
        %8290 = vmatprep.mubr.f32.mxu0 0.0
        %8291 = vmatmul.mubr.f32.gmra.mrb[0].mxu0 %v7528
        %v8292 = vpop.f32.mrb[0].mxu0
        %v8293 = vadd.f32 %v8218, %v8292
        %v8294 = vpop.f32.mrb[0].mxu0
        %8295 = vdwg.mxu0
        %8314 = vrot.lane.b32.xlu0 %v7674, 35
        %v8315 = vpop.permute.xlu0 %8314
        %8316 = vrot.lane.b32.xlu0 %v7676, 35
        %v8317 = vpop.permute.xlu0 %8316
        %8318 = vrot.lane.b32.xlu0 %v7828, 35
        %v8319 = vpop.permute.xlu0 %8318
        %8320 = vrot.lane.b32.xlu0 %v7830, 35
        %v8321 = vpop.permute.xlu0 %8320
        %8322 = vrot.lane.b32.xlu0 %v7982, 35
        %v8323 = vpop.permute.xlu0 %8322
        %8324 = vrot.lane.b32.xlu0 %v7984, 35
        %v8325 = vpop.permute.xlu0 %8324
        %8326 = vrot.lane.b32.xlu0 %v8136, 35
        %v8327 = vpop.permute.xlu0 %8326
        %8328 = vrot.lane.b32.xlu0 %v8138, 35
        %v8329 = vpop.permute.xlu0 %8328
        %8330 = vrot.lane.b32.xlu0 %v8288, 35
        %v8331 = vpop.permute.xlu0 %8330
        %8332 = vrot.lane.b32.xlu0 %v7680, 35
        %v8333 = vpop.permute.xlu0 %8332
        %8334 = vrot.lane.b32.xlu0 %v7682, 35
        %v8335 = vpop.permute.xlu0 %8334
        %8336 = vrot.lane.b32.xlu0 %v7834, 35
        %v8337 = vpop.permute.xlu0 %8336
        %8338 = vrot.lane.b32.xlu0 %v7836, 35
        %v8339 = vpop.permute.xlu0 %8338
        %8340 = vrot.lane.b32.xlu0 %v7988, 35
        %v8341 = vpop.permute.xlu0 %8340
        %8342 = vrot.lane.b32.xlu0 %v7990, 35
        %v8343 = vpop.permute.xlu0 %8342
        %8344 = vrot.lane.b32.xlu0 %v8142, 35
        %v8345 = vpop.permute.xlu0 %8344
        %8346 = vrot.lane.b32.xlu0 %v8144, 35
        %v8347 = vpop.permute.xlu0 %8346
        %8348 = vrot.lane.b32.xlu0 %v8293, 35
        %v8349 = vpop.permute.xlu0 %8348
        %vm8350 = vcmask 285696
        %v8351 = vsel %vm8350, %v8315, %v8317
        %v8352 = vsel %vm8350, %v8317, %v8319
        %v8353 = vsel %vm8350, %v8319, %v8321
        %v8354 = vsel %vm8350, %v8321, %v8323
        %v8355 = vsel %vm8350, %v8323, %v8325
        %v8356 = vsel %vm8350, %v8325, %v8327
        %v8357 = vsel %vm8350, %v8327, %v8329
        %v8358 = vsel %vm8350, %v8329, %v8331
        %v8359 = vsel %vm8350, %v8333, %v8335
        %v8360 = vsel %vm8350, %v8335, %v8337
        %v8361 = vsel %vm8350, %v8337, %v8339
        %v8362 = vsel %vm8350, %v8339, %v8341
        %v8363 = vsel %vm8350, %v8341, %v8343
        %v8364 = vsel %vm8350, %v8343, %v8345
        %v8365 = vsel %vm8350, %v8345, %v8347
        %v8366 = vsel %vm8350, %v8347, %v8349
        %v8387 = vsel %vm8350, 0.0, %v8315
        %v8388 = vsel %vm8350, 0.0, %v8333
        %v8389 = vadd.f32 %v7298, %v8387
        %v8390 = vadd.f32 %v7299, %v8351
        %v8391 = vadd.f32 %v7300, %v8352
        %v8392 = vadd.f32 %v7301, %v8353
        %v8393 = vadd.f32 %v7302, %v8354
        %v8394 = vadd.f32 %v7303, %v8355
        %v8395 = vadd.f32 %v7304, %v8356
        %v8396 = vadd.f32 %v7305, %v8357
        %v8397 = vadd.f32 %v7306, %v8358
        %v8398 = vadd.f32 %v7307, %v8331
        %v8399 = vadd.f32 %v7308, %v8388
        %v8400 = vadd.f32 %v7309, %v8359
        %v8401 = vadd.f32 %v7310, %v8360
        %v8402 = vadd.f32 %v7311, %v8361
        %v8403 = vadd.f32 %v7312, %v8362
        %v8404 = vadd.f32 %v7313, %v8363
        %v8405 = vadd.f32 %v7314, %v8364
        %v8406 = vadd.f32 %v7315, %v8365
        %v8407 = vadd.f32 %v7316, %v8366
        %v8408 = vadd.f32 %v7317, %v8349
        %8427 = vrot.lane.b32.xlu0 %v8389, 127
        %v8428 = vpop.permute.xlu0 %8427
        %8429 = vrot.lane.b32.xlu0 %v8390, 127
        %v8430 = vpop.permute.xlu0 %8429
        %8431 = vrot.lane.b32.xlu0 %v8391, 127
        %v8432 = vpop.permute.xlu0 %8431
        %8433 = vrot.lane.b32.xlu0 %v8392, 127
        %v8434 = vpop.permute.xlu0 %8433
        %8435 = vrot.lane.b32.xlu0 %v8393, 127
        %v8436 = vpop.permute.xlu0 %8435
        %8437 = vrot.lane.b32.xlu0 %v8394, 127
        %v8438 = vpop.permute.xlu0 %8437
        %8439 = vrot.lane.b32.xlu0 %v8395, 127
        %v8440 = vpop.permute.xlu0 %8439
        %8441 = vrot.lane.b32.xlu0 %v8396, 127
        %v8442 = vpop.permute.xlu0 %8441
        %8443 = vrot.lane.b32.xlu0 %v8397, 127
        %v8444 = vpop.permute.xlu0 %8443
        %8445 = vrot.lane.b32.xlu0 %v8399, 127
        %v8446 = vpop.permute.xlu0 %8445
        %8447 = vrot.lane.b32.xlu0 %v8400, 127
        %v8448 = vpop.permute.xlu0 %8447
        %8449 = vrot.lane.b32.xlu0 %v8401, 127
        %v8450 = vpop.permute.xlu0 %8449
        %8451 = vrot.lane.b32.xlu0 %v8402, 127
        %v8452 = vpop.permute.xlu0 %8451
        %8453 = vrot.lane.b32.xlu0 %v8403, 127
        %v8454 = vpop.permute.xlu0 %8453
        %8455 = vrot.lane.b32.xlu0 %v8404, 127
        %v8456 = vpop.permute.xlu0 %8455
        %8457 = vrot.lane.b32.xlu0 %v8405, 127
        %v8458 = vpop.permute.xlu0 %8457
        %8459 = vrot.lane.b32.xlu0 %v8406, 127
        %v8460 = vpop.permute.xlu0 %8459
        %8461 = vrot.lane.b32.xlu0 %v8407, 127
        %v8462 = vpop.permute.xlu0 %8461
        %v8463 = vsel %vm3304, %v8428, %v8430
        %v8464 = vsel %vm3304, %v8430, %v8432
        %v8465 = vsel %vm3304, %v8432, %v8434
        %v8466 = vsel %vm3304, %v8434, %v8436
        %v8467 = vsel %vm3304, %v8436, %v8438
        %v8468 = vsel %vm3304, %v8438, %v8440
        %v8469 = vsel %vm3304, %v8440, %v8442
        %v8470 = vsel %vm3304, %v8442, %v8444
        %v8471 = vsel %vm3304, %v8446, %v8448
        %v8472 = vsel %vm3304, %v8448, %v8450
        %v8473 = vsel %vm3304, %v8450, %v8452
        %v8474 = vsel %vm3304, %v8452, %v8454
        %v8475 = vsel %vm3304, %v8454, %v8456
        %v8476 = vsel %vm3304, %v8456, %v8458
        %v8477 = vsel %vm3304, %v8458, %v8460
        %v8478 = vsel %vm3304, %v8460, %v8462
        %8497 = vrot.lane.b32.xlu0 %v8389, 126
        %v8498 = vpop.permute.xlu0 %8497
        %8499 = vrot.lane.b32.xlu0 %v8390, 126
        %v8500 = vpop.permute.xlu0 %8499
        %8501 = vrot.lane.b32.xlu0 %v8391, 126
        %v8502 = vpop.permute.xlu0 %8501
        %8503 = vrot.lane.b32.xlu0 %v8392, 126
        %v8504 = vpop.permute.xlu0 %8503
        %8505 = vrot.lane.b32.xlu0 %v8393, 126
        %v8506 = vpop.permute.xlu0 %8505
        %8507 = vrot.lane.b32.xlu0 %v8394, 126
        %v8508 = vpop.permute.xlu0 %8507
        %8509 = vrot.lane.b32.xlu0 %v8395, 126
        %v8510 = vpop.permute.xlu0 %8509
        %8511 = vrot.lane.b32.xlu0 %v8396, 126
        %v8512 = vpop.permute.xlu0 %8511
        %8513 = vrot.lane.b32.xlu0 %v8397, 126
        %v8514 = vpop.permute.xlu0 %8513
        %8515 = vrot.lane.b32.xlu0 %v8399, 126
        %v8516 = vpop.permute.xlu0 %8515
        %8517 = vrot.lane.b32.xlu0 %v8400, 126
        %v8518 = vpop.permute.xlu0 %8517
        %8519 = vrot.lane.b32.xlu0 %v8401, 126
        %v8520 = vpop.permute.xlu0 %8519
        %8521 = vrot.lane.b32.xlu0 %v8402, 126
        %v8522 = vpop.permute.xlu0 %8521
        %8523 = vrot.lane.b32.xlu0 %v8403, 126
        %v8524 = vpop.permute.xlu0 %8523
        %8525 = vrot.lane.b32.xlu0 %v8404, 126
        %v8526 = vpop.permute.xlu0 %8525
        %8527 = vrot.lane.b32.xlu0 %v8405, 126
        %v8528 = vpop.permute.xlu0 %8527
        %8529 = vrot.lane.b32.xlu0 %v8406, 126
        %v8530 = vpop.permute.xlu0 %8529
        %8531 = vrot.lane.b32.xlu0 %v8407, 126
        %v8532 = vpop.permute.xlu0 %8531
        %v8533 = vsel %vm3327, %v8498, %v8500
        %v8534 = vsel %vm3327, %v8500, %v8502
        %v8535 = vsel %vm3327, %v8502, %v8504
        %v8536 = vsel %vm3327, %v8504, %v8506
        %v8537 = vsel %vm3327, %v8506, %v8508
        %v8538 = vsel %vm3327, %v8508, %v8510
        %v8539 = vsel %vm3327, %v8510, %v8512
        %v8540 = vsel %vm3327, %v8512, %v8514
        %v8541 = vsel %vm3327, %v8516, %v8518
        %v8542 = vsel %vm3327, %v8518, %v8520
        %v8543 = vsel %vm3327, %v8520, %v8522
        %v8544 = vsel %vm3327, %v8522, %v8524
        %v8545 = vsel %vm3327, %v8524, %v8526
        %v8546 = vsel %vm3327, %v8526, %v8528
        %v8547 = vsel %vm3327, %v8528, %v8530
        %v8548 = vsel %vm3327, %v8530, %v8532
        %8567 = vrot.lane.b32.xlu0 %v8389, 94
        %v8568 = vpop.permute.xlu0 %8567
        %8569 = vrot.lane.b32.xlu0 %v8390, 94
        %v8570 = vpop.permute.xlu0 %8569
        %8571 = vrot.lane.b32.xlu0 %v8391, 94
        %v8572 = vpop.permute.xlu0 %8571
        %8573 = vrot.lane.b32.xlu0 %v8392, 94
        %v8574 = vpop.permute.xlu0 %8573
        %8575 = vrot.lane.b32.xlu0 %v8393, 94
        %v8576 = vpop.permute.xlu0 %8575
        %8577 = vrot.lane.b32.xlu0 %v8394, 94
        %v8578 = vpop.permute.xlu0 %8577
        %8579 = vrot.lane.b32.xlu0 %v8395, 94
        %v8580 = vpop.permute.xlu0 %8579
        %8581 = vrot.lane.b32.xlu0 %v8396, 94
        %v8582 = vpop.permute.xlu0 %8581
        %8583 = vrot.lane.b32.xlu0 %v8397, 94
        %v8584 = vpop.permute.xlu0 %8583
        %8585 = vrot.lane.b32.xlu0 %v8399, 94
        %v8586 = vpop.permute.xlu0 %8585
        %8587 = vrot.lane.b32.xlu0 %v8400, 94
        %v8588 = vpop.permute.xlu0 %8587
        %8589 = vrot.lane.b32.xlu0 %v8401, 94
        %v8590 = vpop.permute.xlu0 %8589
        %8591 = vrot.lane.b32.xlu0 %v8402, 94
        %v8592 = vpop.permute.xlu0 %8591
        %8593 = vrot.lane.b32.xlu0 %v8403, 94
        %v8594 = vpop.permute.xlu0 %8593
        %8595 = vrot.lane.b32.xlu0 %v8404, 94
        %v8596 = vpop.permute.xlu0 %8595
        %8597 = vrot.lane.b32.xlu0 %v8405, 94
        %v8598 = vpop.permute.xlu0 %8597
        %8599 = vrot.lane.b32.xlu0 %v8406, 94
        %v8600 = vpop.permute.xlu0 %8599
        %8601 = vrot.lane.b32.xlu0 %v8407, 94
        %v8602 = vpop.permute.xlu0 %8601
        %vm8603 = vcmask 769024
        %v8604 = vsel %vm8603, %v8568, %v8570
        %v8605 = vsel %vm8603, %v8570, %v8572
        %v8606 = vsel %vm8603, %v8572, %v8574
        %v8607 = vsel %vm8603, %v8574, %v8576
        %v8608 = vsel %vm8603, %v8576, %v8578
        %v8609 = vsel %vm8603, %v8578, %v8580
        %v8610 = vsel %vm8603, %v8580, %v8582
        %v8611 = vsel %vm8603, %v8582, %v8584
        %v8612 = vsel %vm8603, %v8586, %v8588
        %v8613 = vsel %vm8603, %v8588, %v8590
        %v8614 = vsel %vm8603, %v8590, %v8592
        %v8615 = vsel %vm8603, %v8592, %v8594
        %v8616 = vsel %vm8603, %v8594, %v8596
        %v8617 = vsel %vm8603, %v8596, %v8598
        %v8618 = vsel %vm8603, %v8598, %v8600
        %v8619 = vsel %vm8603, %v8600, %v8602
        %8638 = vrot.lane.b32.xlu0 %v8389, 93
        %v8639 = vpop.permute.xlu0 %8638
        %8640 = vrot.lane.b32.xlu0 %v8390, 93
        %v8641 = vpop.permute.xlu0 %8640
        %8642 = vrot.lane.b32.xlu0 %v8391, 93
        %v8643 = vpop.permute.xlu0 %8642
        %8644 = vrot.lane.b32.xlu0 %v8392, 93
        %v8645 = vpop.permute.xlu0 %8644
        %8646 = vrot.lane.b32.xlu0 %v8393, 93
        %v8647 = vpop.permute.xlu0 %8646
        %8648 = vrot.lane.b32.xlu0 %v8394, 93
        %v8649 = vpop.permute.xlu0 %8648
        %8650 = vrot.lane.b32.xlu0 %v8395, 93
        %v8651 = vpop.permute.xlu0 %8650
        %8652 = vrot.lane.b32.xlu0 %v8396, 93
        %v8653 = vpop.permute.xlu0 %8652
        %8654 = vrot.lane.b32.xlu0 %v8397, 93
        %v8655 = vpop.permute.xlu0 %8654
        %8656 = vrot.lane.b32.xlu0 %v8399, 93
        %v8657 = vpop.permute.xlu0 %8656
        %8658 = vrot.lane.b32.xlu0 %v8400, 93
        %v8659 = vpop.permute.xlu0 %8658
        %8660 = vrot.lane.b32.xlu0 %v8401, 93
        %v8661 = vpop.permute.xlu0 %8660
        %8662 = vrot.lane.b32.xlu0 %v8402, 93
        %v8663 = vpop.permute.xlu0 %8662
        %8664 = vrot.lane.b32.xlu0 %v8403, 93
        %v8665 = vpop.permute.xlu0 %8664
        %8666 = vrot.lane.b32.xlu0 %v8404, 93
        %v8667 = vpop.permute.xlu0 %8666
        %8668 = vrot.lane.b32.xlu0 %v8405, 93
        %v8669 = vpop.permute.xlu0 %8668
        %8670 = vrot.lane.b32.xlu0 %v8406, 93
        %v8671 = vpop.permute.xlu0 %8670
        %8672 = vrot.lane.b32.xlu0 %v8407, 93
        %v8673 = vpop.permute.xlu0 %8672
        %vm8674 = vcmask 760832
        %v8675 = vsel %vm8674, %v8639, %v8641
        %v8676 = vsel %vm8674, %v8641, %v8643
        %v8677 = vsel %vm8674, %v8643, %v8645
        %v8678 = vsel %vm8674, %v8645, %v8647
        %v8679 = vsel %vm8674, %v8647, %v8649
        %v8680 = vsel %vm8674, %v8649, %v8651
        %v8681 = vsel %vm8674, %v8651, %v8653
        %v8682 = vsel %vm8674, %v8653, %v8655
        %v8683 = vsel %vm8674, %v8657, %v8659
        %v8684 = vsel %vm8674, %v8659, %v8661
        %v8685 = vsel %vm8674, %v8661, %v8663
        %v8686 = vsel %vm8674, %v8663, %v8665
        %v8687 = vsel %vm8674, %v8665, %v8667
        %v8688 = vsel %vm8674, %v8667, %v8669
        %v8689 = vsel %vm8674, %v8669, %v8671
        %v8690 = vsel %vm8674, %v8671, %v8673
        %8709 = vrot.lane.b32.xlu0 %v8389, 92
        %v8710 = vpop.permute.xlu0 %8709
        %8711 = vrot.lane.b32.xlu0 %v8390, 92
        %v8712 = vpop.permute.xlu0 %8711
        %8713 = vrot.lane.b32.xlu0 %v8391, 92
        %v8714 = vpop.permute.xlu0 %8713
        %8715 = vrot.lane.b32.xlu0 %v8392, 92
        %v8716 = vpop.permute.xlu0 %8715
        %8717 = vrot.lane.b32.xlu0 %v8393, 92
        %v8718 = vpop.permute.xlu0 %8717
        %8719 = vrot.lane.b32.xlu0 %v8394, 92
        %v8720 = vpop.permute.xlu0 %8719
        %8721 = vrot.lane.b32.xlu0 %v8395, 92
        %v8722 = vpop.permute.xlu0 %8721
        %8723 = vrot.lane.b32.xlu0 %v8396, 92
        %v8724 = vpop.permute.xlu0 %8723
        %8725 = vrot.lane.b32.xlu0 %v8397, 92
        %v8726 = vpop.permute.xlu0 %8725
        %8727 = vrot.lane.b32.xlu0 %v8399, 92
        %v8728 = vpop.permute.xlu0 %8727
        %8729 = vrot.lane.b32.xlu0 %v8400, 92
        %v8730 = vpop.permute.xlu0 %8729
        %8731 = vrot.lane.b32.xlu0 %v8401, 92
        %v8732 = vpop.permute.xlu0 %8731
        %8733 = vrot.lane.b32.xlu0 %v8402, 92
        %v8734 = vpop.permute.xlu0 %8733
        %8735 = vrot.lane.b32.xlu0 %v8403, 92
        %v8736 = vpop.permute.xlu0 %8735
        %8737 = vrot.lane.b32.xlu0 %v8404, 92
        %v8738 = vpop.permute.xlu0 %8737
        %8739 = vrot.lane.b32.xlu0 %v8405, 92
        %v8740 = vpop.permute.xlu0 %8739
        %8741 = vrot.lane.b32.xlu0 %v8406, 92
        %v8742 = vpop.permute.xlu0 %8741
        %8743 = vrot.lane.b32.xlu0 %v8407, 92
        %v8744 = vpop.permute.xlu0 %8743
        %v8745 = vsel %vm3419, %v8710, %v8712
        %v8746 = vsel %vm3419, %v8712, %v8714
        %v8747 = vsel %vm3419, %v8714, %v8716
        %v8748 = vsel %vm3419, %v8716, %v8718
        %v8749 = vsel %vm3419, %v8718, %v8720
        %v8750 = vsel %vm3419, %v8720, %v8722
        %v8751 = vsel %vm3419, %v8722, %v8724
        %v8752 = vsel %vm3419, %v8724, %v8726
        %v8753 = vsel %vm3419, %v8728, %v8730
        %v8754 = vsel %vm3419, %v8730, %v8732
        %v8755 = vsel %vm3419, %v8732, %v8734
        %v8756 = vsel %vm3419, %v8734, %v8736
        %v8757 = vsel %vm3419, %v8736, %v8738
        %v8758 = vsel %vm3419, %v8738, %v8740
        %v8759 = vsel %vm3419, %v8740, %v8742
        %v8760 = vsel %vm3419, %v8742, %v8744
        %8781 = vrot.lane.b32.xlu0 %v8389, 60
        %v8782 = vpop.permute.xlu0 %8781
        %8783 = vrot.lane.b32.xlu0 %v8390, 60
        %v8784 = vpop.permute.xlu0 %8783
        %8785 = vrot.lane.b32.xlu0 %v8391, 60
        %v8786 = vpop.permute.xlu0 %8785
        %8787 = vrot.lane.b32.xlu0 %v8392, 60
        %v8788 = vpop.permute.xlu0 %8787
        %8789 = vrot.lane.b32.xlu0 %v8393, 60
        %v8790 = vpop.permute.xlu0 %8789
        %8791 = vrot.lane.b32.xlu0 %v8394, 60
        %v8792 = vpop.permute.xlu0 %8791
        %8793 = vrot.lane.b32.xlu0 %v8395, 60
        %v8794 = vpop.permute.xlu0 %8793
        %8795 = vrot.lane.b32.xlu0 %v8396, 60
        %v8796 = vpop.permute.xlu0 %8795
        %8797 = vrot.lane.b32.xlu0 %v8397, 60
        %v8798 = vpop.permute.xlu0 %8797
        %8799 = vrot.lane.b32.xlu0 %v8398, 60
        %v8800 = vpop.permute.xlu0 %8799
        %8801 = vrot.lane.b32.xlu0 %v8399, 60
        %v8802 = vpop.permute.xlu0 %8801
        %8803 = vrot.lane.b32.xlu0 %v8400, 60
        %v8804 = vpop.permute.xlu0 %8803
        %8805 = vrot.lane.b32.xlu0 %v8401, 60
        %v8806 = vpop.permute.xlu0 %8805
        %8807 = vrot.lane.b32.xlu0 %v8402, 60
        %v8808 = vpop.permute.xlu0 %8807
        %8809 = vrot.lane.b32.xlu0 %v8403, 60
        %v8810 = vpop.permute.xlu0 %8809
        %8811 = vrot.lane.b32.xlu0 %v8404, 60
        %v8812 = vpop.permute.xlu0 %8811
        %8813 = vrot.lane.b32.xlu0 %v8405, 60
        %v8814 = vpop.permute.xlu0 %8813
        %8815 = vrot.lane.b32.xlu0 %v8406, 60
        %v8816 = vpop.permute.xlu0 %8815
        %8817 = vrot.lane.b32.xlu0 %v8407, 60
        %v8818 = vpop.permute.xlu0 %8817
        %8819 = vrot.lane.b32.xlu0 %v8408, 60
        %v8820 = vpop.permute.xlu0 %8819
        %vm8821 = vcmask 490496
        %v8822 = vsel %vm8821, %v8782, %v8784
        %v8823 = vsel %vm8821, %v8784, %v8786
        %v8824 = vsel %vm8821, %v8786, %v8788
        %v8825 = vsel %vm8821, %v8788, %v8790
        %v8826 = vsel %vm8821, %v8790, %v8792
        %v8827 = vsel %vm8821, %v8792, %v8794
        %v8828 = vsel %vm8821, %v8794, %v8796
        %v8829 = vsel %vm8821, %v8796, %v8798
        %v8830 = vsel %vm8821, %v8798, %v8800
        %v8831 = vsel %vm8821, %v8802, %v8804
        %v8832 = vsel %vm8821, %v8804, %v8806
        %v8833 = vsel %vm8821, %v8806, %v8808
        %v8834 = vsel %vm8821, %v8808, %v8810
        %v8835 = vsel %vm8821, %v8810, %v8812
        %v8836 = vsel %vm8821, %v8812, %v8814
        %v8837 = vsel %vm8821, %v8814, %v8816
        %v8838 = vsel %vm8821, %v8816, %v8818
        %v8839 = vsel %vm8821, %v8818, %v8820
        %8858 = vrot.lane.b32.xlu0 %v8389, 59
        %v8859 = vpop.permute.xlu0 %8858
        %8860 = vrot.lane.b32.xlu0 %v8390, 59
        %v8861 = vpop.permute.xlu0 %8860
        %8862 = vrot.lane.b32.xlu0 %v8391, 59
        %v8863 = vpop.permute.xlu0 %8862
        %8864 = vrot.lane.b32.xlu0 %v8392, 59
        %v8865 = vpop.permute.xlu0 %8864
        %8866 = vrot.lane.b32.xlu0 %v8393, 59
        %v8867 = vpop.permute.xlu0 %8866
        %8868 = vrot.lane.b32.xlu0 %v8394, 59
        %v8869 = vpop.permute.xlu0 %8868
        %8870 = vrot.lane.b32.xlu0 %v8395, 59
        %v8871 = vpop.permute.xlu0 %8870
        %8872 = vrot.lane.b32.xlu0 %v8396, 59
        %v8873 = vpop.permute.xlu0 %8872
        %8874 = vrot.lane.b32.xlu0 %v8397, 59
        %v8875 = vpop.permute.xlu0 %8874
        %8876 = vrot.lane.b32.xlu0 %v8398, 59
        %v8877 = vpop.permute.xlu0 %8876
        %8878 = vrot.lane.b32.xlu0 %v8399, 59
        %v8879 = vpop.permute.xlu0 %8878
        %8880 = vrot.lane.b32.xlu0 %v8400, 59
        %v8881 = vpop.permute.xlu0 %8880
        %8882 = vrot.lane.b32.xlu0 %v8401, 59
        %v8883 = vpop.permute.xlu0 %8882
        %8884 = vrot.lane.b32.xlu0 %v8402, 59
        %v8885 = vpop.permute.xlu0 %8884
        %8886 = vrot.lane.b32.xlu0 %v8403, 59
        %v8887 = vpop.permute.xlu0 %8886
        %8888 = vrot.lane.b32.xlu0 %v8404, 59
        %v8889 = vpop.permute.xlu0 %8888
        %8890 = vrot.lane.b32.xlu0 %v8405, 59
        %v8891 = vpop.permute.xlu0 %8890
        %8892 = vrot.lane.b32.xlu0 %v8406, 59
        %v8893 = vpop.permute.xlu0 %8892
        %8894 = vrot.lane.b32.xlu0 %v8407, 59
        %v8895 = vpop.permute.xlu0 %8894
        %8896 = vrot.lane.b32.xlu0 %v8408, 59
        %v8897 = vpop.permute.xlu0 %8896
        %vm8898 = vcmask 482304
        %v8899 = vsel %vm8898, %v8859, %v8861
        %v8900 = vsel %vm8898, %v8861, %v8863
        %v8901 = vsel %vm8898, %v8863, %v8865
        %v8902 = vsel %vm8898, %v8865, %v8867
        %v8903 = vsel %vm8898, %v8867, %v8869
        %v8904 = vsel %vm8898, %v8869, %v8871
        %v8905 = vsel %vm8898, %v8871, %v8873
        %v8906 = vsel %vm8898, %v8873, %v8875
        %v8907 = vsel %vm8898, %v8875, %v8877
        %v8908 = vsel %vm8898, %v8879, %v8881
        %v8909 = vsel %vm8898, %v8881, %v8883
        %v8910 = vsel %vm8898, %v8883, %v8885
        %v8911 = vsel %vm8898, %v8885, %v8887
        %v8912 = vsel %vm8898, %v8887, %v8889
        %v8913 = vsel %vm8898, %v8889, %v8891
        %v8914 = vsel %vm8898, %v8891, %v8893
        %v8915 = vsel %vm8898, %v8893, %v8895
        %v8916 = vsel %vm8898, %v8895, %v8897
        %8935 = vrot.lane.b32.xlu0 %v8389, 58
        %v8936 = vpop.permute.xlu0 %8935
        %8937 = vrot.lane.b32.xlu0 %v8390, 58
        %v8938 = vpop.permute.xlu0 %8937
        %8939 = vrot.lane.b32.xlu0 %v8391, 58
        %v8940 = vpop.permute.xlu0 %8939
        %8941 = vrot.lane.b32.xlu0 %v8392, 58
        %v8942 = vpop.permute.xlu0 %8941
        %8943 = vrot.lane.b32.xlu0 %v8393, 58
        %v8944 = vpop.permute.xlu0 %8943
        %8945 = vrot.lane.b32.xlu0 %v8394, 58
        %v8946 = vpop.permute.xlu0 %8945
        %8947 = vrot.lane.b32.xlu0 %v8395, 58
        %v8948 = vpop.permute.xlu0 %8947
        %8949 = vrot.lane.b32.xlu0 %v8396, 58
        %v8950 = vpop.permute.xlu0 %8949
        %8951 = vrot.lane.b32.xlu0 %v8397, 58
        %v8952 = vpop.permute.xlu0 %8951
        %8953 = vrot.lane.b32.xlu0 %v8398, 58
        %v8954 = vpop.permute.xlu0 %8953
        %8955 = vrot.lane.b32.xlu0 %v8399, 58
        %v8956 = vpop.permute.xlu0 %8955
        %8957 = vrot.lane.b32.xlu0 %v8400, 58
        %v8958 = vpop.permute.xlu0 %8957
        %8959 = vrot.lane.b32.xlu0 %v8401, 58
        %v8960 = vpop.permute.xlu0 %8959
        %8961 = vrot.lane.b32.xlu0 %v8402, 58
        %v8962 = vpop.permute.xlu0 %8961
        %8963 = vrot.lane.b32.xlu0 %v8403, 58
        %v8964 = vpop.permute.xlu0 %8963
        %8965 = vrot.lane.b32.xlu0 %v8404, 58
        %v8966 = vpop.permute.xlu0 %8965
        %8967 = vrot.lane.b32.xlu0 %v8405, 58
        %v8968 = vpop.permute.xlu0 %8967
        %8969 = vrot.lane.b32.xlu0 %v8406, 58
        %v8970 = vpop.permute.xlu0 %8969
        %8971 = vrot.lane.b32.xlu0 %v8407, 58
        %v8972 = vpop.permute.xlu0 %8971
        %8973 = vrot.lane.b32.xlu0 %v8408, 58
        %v8974 = vpop.permute.xlu0 %8973
        %vm8975 = vcmask 474112
        %v8976 = vsel %vm8975, %v8936, %v8938
        %v8977 = vsel %vm8975, %v8938, %v8940
        %v8978 = vsel %vm8975, %v8940, %v8942
        %v8979 = vsel %vm8975, %v8942, %v8944
        %v8980 = vsel %vm8975, %v8944, %v8946
        %v8981 = vsel %vm8975, %v8946, %v8948
        %v8982 = vsel %vm8975, %v8948, %v8950
        %v8983 = vsel %vm8975, %v8950, %v8952
        %v8984 = vsel %vm8975, %v8952, %v8954
        %v8985 = vsel %vm8975, %v8956, %v8958
        %v8986 = vsel %vm8975, %v8958, %v8960
        %v8987 = vsel %vm8975, %v8960, %v8962
        %v8988 = vsel %vm8975, %v8962, %v8964
        %v8989 = vsel %vm8975, %v8964, %v8966
        %v8990 = vsel %vm8975, %v8966, %v8968
        %v8991 = vsel %vm8975, %v8968, %v8970
        %v8992 = vsel %vm8975, %v8970, %v8972
        %v8993 = vsel %vm8975, %v8972, %v8974
        %v9012 = vld [vmem:[#allocation18] sm:$0xff]
        %v9013 = vld [vmem:[#allocation18 + $0x8] sm:$0xff]
        %v9014 = vld [vmem:[#allocation18 + $0x10] sm:$0xf]
        %v9015 = vld [vmem:[#allocation18 + $0x18] sm:$0xf]
        %v9016 = vld [vmem:[%s18] sm:$0xff]
        %v9017 = vld [vmem:[%s18 + $0x8] sm:$0xf]
        %9019 = vset.pattern.permute.xlu0 0
        %9020 = vperm.xlu0 %9019, %v9016
        %v9021 = vpop.permute.xlu0 %9020
        %9024 = vset.pattern.permute.xlu0 0
        %9025 = vperm.xlu0 %9024, %v9017
        %v9026 = vpop.permute.xlu0 %9025
        %v9029 = vsel %vm768, %v9013, 0
        %v9032 = vsel %vm768, %v9015, 0
        %9034 = vmatprep.subr.mxu0 %v8390
        %9035 = vmatpush1.msra.mxu0 %v8389
        %9036 = vmatprep.subr.mxu0 %v8400
        %9037 = vmatpush1.msra.mxu0 %v8399
        %9038 = vmatprep.subr.mxu0 %v8464
        %9039 = vmatpush1.msra.mxu0 %v8463
        %9040 = vmatprep.subr.mxu0 %v8472
        %9041 = vmatpush1.msra.mxu0 %v8471
        %9042 = vmatprep.subr.mxu0 %v8534
        %9043 = vmatpush1.msra.mxu0 %v8533
        %9044 = vmatprep.subr.mxu0 %v8542
        %9045 = vmatpush1.msra.mxu0 %v8541
        %9046 = vmatprep.subr.mxu0 %v8605
        %9047 = vmatpush1.msra.mxu0 %v8604
        %9048 = vmatprep.subr.mxu0 %v8613
        %9049 = vmatpush1.msra.mxu0 %v8612
        %9050 = vmatprep.subr.mxu0 %v8676
        %9051 = vmatpush1.msra.mxu0 %v8675
        %9052 = vmatprep.subr.mxu0 %v8684
        %9053 = vmatpush1.msra.mxu0 %v8683
        %9054 = vmatprep.subr.mxu0 %v8746
        %9055 = vmatpush1.msra.mxu0 %v8745
        %9056 = vmatprep.subr.mxu0 %v8754
        %9057 = vmatpush1.msra.mxu0 %v8753
        %9058 = vmatprep.subr.mxu0 %v8823
        %9059 = vmatpush1.msra.mxu0 %v8822
        %9060 = vmatprep.subr.mxu0 %v8832
        %9061 = vmatpush1.msra.mxu0 %v8831
        %9062 = vmatprep.subr.mxu0 %v8900
        %9063 = vmatpush1.msra.mxu0 %v8899
        %9064 = vmatprep.subr.mxu0 %v8909
        %9065 = vmatpush1.msra.mxu0 %v8908
        %9066 = vmatprep.subr.mxu0 %v8977
        %9067 = vmatpush1.msra.mxu0 %v8976
        %9068 = vmatprep.subr.mxu0 %v8986
        %9069 = vmatpush1.msra.mxu0 %v8985
        %9070 = vmatprep.subr.mxu0 0.0
        %9071 = vmatpush1.msra.mxu0 0.0
        %9072 = vmatprep.subr.mxu0 0.0
        %9073 = vmatpush1.msra.mxu0 0.0
        %9074 = vmatprep.subr.mxu0 0.0
        %9075 = vmatpush1.msra.mxu0 0.0
        %9076 = vmatprep.subr.mxu0 0.0
        %9077 = vmatpush1.msra.mxu0 0.0
        %9078 = vmatprep.subr.mxu0 0.0
        %9079 = vmatpush1.msra.mxu0 0.0
        %9080 = vmatprep.subr.mxu0 0.0
        %9081 = vmatpush1.msra.mxu0 0.0
        %9082 = vmatprep.subr.mxu0 0.0
        %9083 = vmatpush1.msra.mxu0 0.0
        %9084 = vmatprep.subr.mxu0 0.0
        %9085 = vmatpush1.msra.mxu0 0.0
        %9086 = vmatprep.subr.mxu0 0.0
        %9087 = vmatpush1.msra.mxu0 0.0
        %9088 = vmatprep.subr.mxu0 0.0
        %9089 = vmatpush1.msra.mxu0 0.0
        %9090 = vmatprep.subr.mxu0 0.0
        %9091 = vmatpush1.msra.mxu0 0.0
        %9092 = vmatprep.subr.mxu0 0.0
        %9093 = vmatpush1.msra.mxu0 0.0
        %9094 = vmatprep.subr.mxu0 0.0
        %9095 = vmatpush1.msra.mxu0 0.0
        %9096 = vmatprep.subr.mxu0 0.0
        %9097 = vmatpush1.msra.mxu0 0.0
        %9098 = vmatprep.mubr.f32.mxu0 %v9029
        %9099 = vmatmul.mubr.f32.gmra.mrb[0].mxu0 %v9012
        %v9100 = vpop.f32.mrb[0].mxu0
        %v9101 = vadd.f32 %v9021, %v9100
        %v9102 = vpop.f32.mrb[0].mxu0
        %v9103 = vadd.f32 %v9021, %v9102
        %9104 = vmatprep.mubr.f32.mxu0 %v9032
        %9105 = vmatmul.mubr.f32.gmra.mrb[0].mxu0 %v9014
        %v9106 = vpop.f32.mrb[0].mxu0
        %v9107 = vadd.f32 %v9026, %v9106
        %v9108 = vpop.f32.mrb[0].mxu0
        %v9109 = vadd.f32 %v9026, %v9108
        %9110 = vdwg.mxu0
        %9111 = vmatprep.subr.mxu0 %v8392
        %9112 = vmatpush1.msra.mxu0 %v8391
        %9113 = vmatprep.subr.mxu0 %v8402
        %9114 = vmatpush1.msra.mxu0 %v8401
        %9115 = vmatprep.subr.mxu0 %v8466
        %9116 = vmatpush1.msra.mxu0 %v8465
        %9117 = vmatprep.subr.mxu0 %v8474
        %9118 = vmatpush1.msra.mxu0 %v8473
        %9119 = vmatprep.subr.mxu0 %v8536
        %9120 = vmatpush1.msra.mxu0 %v8535
        %9121 = vmatprep.subr.mxu0 %v8544
        %9122 = vmatpush1.msra.mxu0 %v8543
        %9123 = vmatprep.subr.mxu0 %v8607
        %9124 = vmatpush1.msra.mxu0 %v8606
        %9125 = vmatprep.subr.mxu0 %v8615
        %9126 = vmatpush1.msra.mxu0 %v8614
        %9127 = vmatprep.subr.mxu0 %v8678
        %9128 = vmatpush1.msra.mxu0 %v8677
        %9129 = vmatprep.subr.mxu0 %v8686
        %9130 = vmatpush1.msra.mxu0 %v8685
        %9131 = vmatprep.subr.mxu0 %v8748
        %9132 = vmatpush1.msra.mxu0 %v8747
        %9133 = vmatprep.subr.mxu0 %v8756
        %9134 = vmatpush1.msra.mxu0 %v8755
        %9135 = vmatprep.subr.mxu0 %v8825
        %9136 = vmatpush1.msra.mxu0 %v8824
        %9137 = vmatprep.subr.mxu0 %v8834
        %9138 = vmatpush1.msra.mxu0 %v8833
        %9139 = vmatprep.subr.mxu0 %v8902
        %9140 = vmatpush1.msra.mxu0 %v8901
        %9141 = vmatprep.subr.mxu0 %v8911
        %9142 = vmatpush1.msra.mxu0 %v8910
        %9143 = vmatprep.subr.mxu0 %v8979
        %9144 = vmatpush1.msra.mxu0 %v8978
        %9145 = vmatprep.subr.mxu0 %v8988
        %9146 = vmatpush1.msra.mxu0 %v8987
        %9147 = vmatprep.subr.mxu0 0.0
        %9148 = vmatpush1.msra.mxu0 0.0
        %9149 = vmatprep.subr.mxu0 0.0
        %9150 = vmatpush1.msra.mxu0 0.0
        %9151 = vmatprep.subr.mxu0 0.0
        %9152 = vmatpush1.msra.mxu0 0.0
        %9153 = vmatprep.subr.mxu0 0.0
        %9154 = vmatpush1.msra.mxu0 0.0
        %9155 = vmatprep.subr.mxu0 0.0
        %9156 = vmatpush1.msra.mxu0 0.0
        %9157 = vmatprep.subr.mxu0 0.0
        %9158 = vmatpush1.msra.mxu0 0.0
        %9159 = vmatprep.subr.mxu0 0.0
        %9160 = vmatpush1.msra.mxu0 0.0
        %9161 = vmatprep.subr.mxu0 0.0
        %9162 = vmatpush1.msra.mxu0 0.0
        %9163 = vmatprep.subr.mxu0 0.0
        %9164 = vmatpush1.msra.mxu0 0.0
        %9165 = vmatprep.subr.mxu0 0.0
        %9166 = vmatpush1.msra.mxu0 0.0
        %9167 = vmatprep.subr.mxu0 0.0
        %9168 = vmatpush1.msra.mxu0 0.0
        %9169 = vmatprep.subr.mxu0 0.0
        %9170 = vmatpush1.msra.mxu0 0.0
        %9171 = vmatprep.subr.mxu0 0.0
        %9172 = vmatpush1.msra.mxu0 0.0
        %9173 = vmatprep.subr.mxu0 0.0
        %9174 = vmatpush1.msra.mxu0 0.0
        %9175 = vmatprep.mubr.f32.mxu0 %v9029
        %9176 = vmatmul.mubr.f32.gmra.mrb[0].mxu0 %v9012
        %v9177 = vpop.f32.mrb[0].mxu0
        %v9178 = vadd.f32 %v9021, %v9177
        %v9179 = vpop.f32.mrb[0].mxu0
        %v9180 = vadd.f32 %v9021, %v9179
        %9181 = vmatprep.mubr.f32.mxu0 %v9032
        %9182 = vmatmul.mubr.f32.gmra.mrb[0].mxu0 %v9014
        %v9183 = vpop.f32.mrb[0].mxu0
        %v9184 = vadd.f32 %v9026, %v9183
        %v9185 = vpop.f32.mrb[0].mxu0
        %v9186 = vadd.f32 %v9026, %v9185
        %9187 = vdwg.mxu0
        %9188 = vmatprep.subr.mxu0 %v8394
        %9189 = vmatpush1.msra.mxu0 %v8393
        %9190 = vmatprep.subr.mxu0 %v8404
        %9191 = vmatpush1.msra.mxu0 %v8403
        %9192 = vmatprep.subr.mxu0 %v8468
        %9193 = vmatpush1.msra.mxu0 %v8467
        %9194 = vmatprep.subr.mxu0 %v8476
        %9195 = vmatpush1.msra.mxu0 %v8475
        %9196 = vmatprep.subr.mxu0 %v8538
        %9197 = vmatpush1.msra.mxu0 %v8537
        %9198 = vmatprep.subr.mxu0 %v8546
        %9199 = vmatpush1.msra.mxu0 %v8545
        %9200 = vmatprep.subr.mxu0 %v8609
        %9201 = vmatpush1.msra.mxu0 %v8608
        %9202 = vmatprep.subr.mxu0 %v8617
        %9203 = vmatpush1.msra.mxu0 %v8616
        %9204 = vmatprep.subr.mxu0 %v8680
        %9205 = vmatpush1.msra.mxu0 %v8679
        %9206 = vmatprep.subr.mxu0 %v8688
        %9207 = vmatpush1.msra.mxu0 %v8687
        %9208 = vmatprep.subr.mxu0 %v8750
        %9209 = vmatpush1.msra.mxu0 %v8749
        %9210 = vmatprep.subr.mxu0 %v8758
        %9211 = vmatpush1.msra.mxu0 %v8757
        %9212 = vmatprep.subr.mxu0 %v8827
        %9213 = vmatpush1.msra.mxu0 %v8826
        %9214 = vmatprep.subr.mxu0 %v8836
        %9215 = vmatpush1.msra.mxu0 %v8835
        %9216 = vmatprep.subr.mxu0 %v8904
        %9217 = vmatpush1.msra.mxu0 %v8903
        %9218 = vmatprep.subr.mxu0 %v8913
        %9219 = vmatpush1.msra.mxu0 %v8912
        %9220 = vmatprep.subr.mxu0 %v8981
        %9221 = vmatpush1.msra.mxu0 %v8980
        %9222 = vmatprep.subr.mxu0 %v8990
        %9223 = vmatpush1.msra.mxu0 %v8989
        %9224 = vmatprep.subr.mxu0 0.0
        %9225 = vmatpush1.msra.mxu0 0.0
        %9226 = vmatprep.subr.mxu0 0.0
        %9227 = vmatpush1.msra.mxu0 0.0
        %9228 = vmatprep.subr.mxu0 0.0
        %9229 = vmatpush1.msra.mxu0 0.0
        %9230 = vmatprep.subr.mxu0 0.0
        %9231 = vmatpush1.msra.mxu0 0.0
        %9232 = vmatprep.subr.mxu0 0.0
        %9233 = vmatpush1.msra.mxu0 0.0
        %9234 = vmatprep.subr.mxu0 0.0
        %9235 = vmatpush1.msra.mxu0 0.0
        %9236 = vmatprep.subr.mxu0 0.0
        %9237 = vmatpush1.msra.mxu0 0.0
        %9238 = vmatprep.subr.mxu0 0.0
        %9239 = vmatpush1.msra.mxu0 0.0
        %9240 = vmatprep.subr.mxu0 0.0
        %9241 = vmatpush1.msra.mxu0 0.0
        %9242 = vmatprep.subr.mxu0 0.0
        %9243 = vmatpush1.msra.mxu0 0.0
        %9244 = vmatprep.subr.mxu0 0.0
        %9245 = vmatpush1.msra.mxu0 0.0
        %9246 = vmatprep.subr.mxu0 0.0
        %9247 = vmatpush1.msra.mxu0 0.0
        %9248 = vmatprep.subr.mxu0 0.0
        %9249 = vmatpush1.msra.mxu0 0.0
        %9250 = vmatprep.subr.mxu0 0.0
        %9251 = vmatpush1.msra.mxu0 0.0
        %9252 = vmatprep.mubr.f32.mxu0 %v9029
        %9253 = vmatmul.mubr.f32.gmra.mrb[0].mxu0 %v9012
        %v9254 = vpop.f32.mrb[0].mxu0
        %v9255 = vadd.f32 %v9021, %v9254
        %v9256 = vpop.f32.mrb[0].mxu0
        %v9257 = vadd.f32 %v9021, %v9256
        %9258 = vmatprep.mubr.f32.mxu0 %v9032
        %9259 = vmatmul.mubr.f32.gmra.mrb[0].mxu0 %v9014
        %v9260 = vpop.f32.mrb[0].mxu0
        %v9261 = vadd.f32 %v9026, %v9260
        %v9262 = vpop.f32.mrb[0].mxu0
        %v9263 = vadd.f32 %v9026, %v9262
        %9264 = vdwg.mxu0
        %9265 = vmatprep.subr.mxu0 %v8396
        %9266 = vmatpush1.msra.mxu0 %v8395
        %9267 = vmatprep.subr.mxu0 %v8406
        %9268 = vmatpush1.msra.mxu0 %v8405
        %9269 = vmatprep.subr.mxu0 %v8470
        %9270 = vmatpush1.msra.mxu0 %v8469
        %9271 = vmatprep.subr.mxu0 %v8478
        %9272 = vmatpush1.msra.mxu0 %v8477
        %9273 = vmatprep.subr.mxu0 %v8540
        %9274 = vmatpush1.msra.mxu0 %v8539
        %9275 = vmatprep.subr.mxu0 %v8548
        %9276 = vmatpush1.msra.mxu0 %v8547
        %9277 = vmatprep.subr.mxu0 %v8611
        %9278 = vmatpush1.msra.mxu0 %v8610
        %9279 = vmatprep.subr.mxu0 %v8619
        %9280 = vmatpush1.msra.mxu0 %v8618
        %9281 = vmatprep.subr.mxu0 %v8682
        %9282 = vmatpush1.msra.mxu0 %v8681
        %9283 = vmatprep.subr.mxu0 %v8690
        %9284 = vmatpush1.msra.mxu0 %v8689
        %9285 = vmatprep.subr.mxu0 %v8752
        %9286 = vmatpush1.msra.mxu0 %v8751
        %9287 = vmatprep.subr.mxu0 %v8760
        %9288 = vmatpush1.msra.mxu0 %v8759
        %9289 = vmatprep.subr.mxu0 %v8829
        %9290 = vmatpush1.msra.mxu0 %v8828
        %9291 = vmatprep.subr.mxu0 %v8838
        %9292 = vmatpush1.msra.mxu0 %v8837
        %9293 = vmatprep.subr.mxu0 %v8906
        %9294 = vmatpush1.msra.mxu0 %v8905
        %9295 = vmatprep.subr.mxu0 %v8915
        %9296 = vmatpush1.msra.mxu0 %v8914
        %9297 = vmatprep.subr.mxu0 %v8983
        %9298 = vmatpush1.msra.mxu0 %v8982
        %9299 = vmatprep.subr.mxu0 %v8992
        %9300 = vmatpush1.msra.mxu0 %v8991
        %9301 = vmatprep.subr.mxu0 0.0
        %9302 = vmatpush1.msra.mxu0 0.0
        %9303 = vmatprep.subr.mxu0 0.0
        %9304 = vmatpush1.msra.mxu0 0.0
        %9305 = vmatprep.subr.mxu0 0.0
        %9306 = vmatpush1.msra.mxu0 0.0
        %9307 = vmatprep.subr.mxu0 0.0
        %9308 = vmatpush1.msra.mxu0 0.0
        %9309 = vmatprep.subr.mxu0 0.0
        %9310 = vmatpush1.msra.mxu0 0.0
        %9311 = vmatprep.subr.mxu0 0.0
        %9312 = vmatpush1.msra.mxu0 0.0
        %9313 = vmatprep.subr.mxu0 0.0
        %9314 = vmatpush1.msra.mxu0 0.0
        %9315 = vmatprep.subr.mxu0 0.0
        %9316 = vmatpush1.msra.mxu0 0.0
        %9317 = vmatprep.subr.mxu0 0.0
        %9318 = vmatpush1.msra.mxu0 0.0
        %9319 = vmatprep.subr.mxu0 0.0
        %9320 = vmatpush1.msra.mxu0 0.0
        %9321 = vmatprep.subr.mxu0 0.0
        %9322 = vmatpush1.msra.mxu0 0.0
        %9323 = vmatprep.subr.mxu0 0.0
        %9324 = vmatpush1.msra.mxu0 0.0
        %9325 = vmatprep.subr.mxu0 0.0
        %9326 = vmatpush1.msra.mxu0 0.0
        %9327 = vmatprep.subr.mxu0 0.0
        %9328 = vmatpush1.msra.mxu0 0.0
        %9329 = vmatprep.mubr.f32.mxu0 %v9029
        %9330 = vmatmul.mubr.f32.gmra.mrb[0].mxu0 %v9012
        %v9331 = vpop.f32.mrb[0].mxu0
        %v9332 = vadd.f32 %v9021, %v9331
        %v9333 = vpop.f32.mrb[0].mxu0
        %v9334 = vadd.f32 %v9021, %v9333
        %9335 = vmatprep.mubr.f32.mxu0 %v9032
        %9336 = vmatmul.mubr.f32.gmra.mrb[0].mxu0 %v9014
        %v9337 = vpop.f32.mrb[0].mxu0
        %v9338 = vadd.f32 %v9026, %v9337
        %v9339 = vpop.f32.mrb[0].mxu0
        %v9340 = vadd.f32 %v9026, %v9339
        %9341 = vdwg.mxu0
        %9342 = vmatprep.subr.mxu0 0.0
        %9343 = vmatpush1.msra.mxu0 %v8397
        %9344 = vmatprep.subr.mxu0 0.0
        %9345 = vmatpush1.msra.mxu0 %v8407
        %9346 = vmatprep.subr.mxu0 0.0
        %9347 = vmatpush1.msra.mxu0 %v8444
        %9348 = vmatprep.subr.mxu0 0.0
        %9349 = vmatpush1.msra.mxu0 %v8462
        %9350 = vmatprep.subr.mxu0 0.0
        %9351 = vmatpush1.msra.mxu0 %v8514
        %9352 = vmatprep.subr.mxu0 0.0
        %9353 = vmatpush1.msra.mxu0 %v8532
        %9354 = vmatprep.subr.mxu0 0.0
        %9355 = vmatpush1.msra.mxu0 %v8584
        %9356 = vmatprep.subr.mxu0 0.0
        %9357 = vmatpush1.msra.mxu0 %v8602
        %9358 = vmatprep.subr.mxu0 0.0
        %9359 = vmatpush1.msra.mxu0 %v8655
        %9360 = vmatprep.subr.mxu0 0.0
        %9361 = vmatpush1.msra.mxu0 %v8673
        %9362 = vmatprep.subr.mxu0 0.0
        %9363 = vmatpush1.msra.mxu0 %v8726
        %9364 = vmatprep.subr.mxu0 0.0
        %9365 = vmatpush1.msra.mxu0 %v8744
        %9366 = vmatprep.subr.mxu0 0.0
        %9367 = vmatpush1.msra.mxu0 %v8830
        %9368 = vmatprep.subr.mxu0 0.0
        %9369 = vmatpush1.msra.mxu0 %v8839
        %9370 = vmatprep.subr.mxu0 0.0
        %9371 = vmatpush1.msra.mxu0 %v8907
        %9372 = vmatprep.subr.mxu0 0.0
        %9373 = vmatpush1.msra.mxu0 %v8916
        %9374 = vmatprep.subr.mxu0 0.0
        %9375 = vmatpush1.msra.mxu0 %v8984
        %9376 = vmatprep.subr.mxu0 0.0
        %9377 = vmatpush1.msra.mxu0 %v8993
        %9378 = vmatprep.subr.mxu0 0.0
        %9379 = vmatpush1.msra.mxu0 0.0
        %9380 = vmatprep.subr.mxu0 0.0
        %9381 = vmatpush1.msra.mxu0 0.0
        %9382 = vmatprep.subr.mxu0 0.0
        %9383 = vmatpush1.msra.mxu0 0.0
        %9384 = vmatprep.subr.mxu0 0.0
        %9385 = vmatpush1.msra.mxu0 0.0
        %9386 = vmatprep.subr.mxu0 0.0
        %9387 = vmatpush1.msra.mxu0 0.0
        %9388 = vmatprep.subr.mxu0 0.0
        %9389 = vmatpush1.msra.mxu0 0.0
        %9390 = vmatprep.subr.mxu0 0.0
        %9391 = vmatpush1.msra.mxu0 0.0
        %9392 = vmatprep.subr.mxu0 0.0
        %9393 = vmatpush1.msra.mxu0 0.0
        %9394 = vmatprep.subr.mxu0 0.0
        %9395 = vmatpush1.msra.mxu0 0.0
        %9396 = vmatprep.subr.mxu0 0.0
        %9397 = vmatpush1.msra.mxu0 0.0
        %9398 = vmatprep.subr.mxu0 0.0
        %9399 = vmatpush1.msra.mxu0 0.0
        %9400 = vmatprep.subr.mxu0 0.0
        %9401 = vmatpush1.msra.mxu0 0.0
        %9402 = vmatprep.subr.mxu0 0.0
        %9403 = vmatpush1.msra.mxu0 0.0
        %9404 = vmatprep.subr.mxu0 0.0
        %9405 = vmatpush1.msra.mxu0 0.0
        %9406 = vmatprep.mubr.f32.mxu0 %v9029
        %9407 = vmatmul.mubr.f32.gmra.mrb[0].mxu0 %v9012
        %v9408 = vpop.f32.mrb[0].mxu0
        %v9409 = vadd.f32 %v9021, %v9408
        %v9410 = vpop.f32.mrb[0].mxu0
        %9411 = vmatprep.mubr.f32.mxu0 %v9032
        %9412 = vmatmul.mubr.f32.gmra.mrb[0].mxu0 %v9014
        %v9413 = vpop.f32.mrb[0].mxu0
        %v9414 = vadd.f32 %v9026, %v9413
        %v9415 = vpop.f32.mrb[0].mxu0
        %9416 = vdwg.mxu0
        %9417 = vst [vmem:[%s762] sm:$0xff] %v9101
        %9418 = vst [vmem:[%s762 + $0x8] sm:$0xff] %v9103
        %9419 = vst [vmem:[%s762 + $0x10] sm:$0xff] %v9178
        %9420 = vst [vmem:[%s762 + $0x18] sm:$0xff] %v9180
        %9421 = vst [vmem:[%s762 + $0x20] sm:$0xff] %v9255
        %9422 = vst [vmem:[%s762 + $0x28] sm:$0xff] %v9257
        %9423 = vst [vmem:[%s762 + $0x30] sm:$0xff] %v9332
        %9424 = vst [vmem:[%s762 + $0x38] sm:$0xff] %v9334
        %vm9425 = vcmask 523264
        %9426 = vst.msk [vmem:[%s762 + $0x40] sm:$0xff] %vm9425, %v9409
        %9427 = vst [vmem:[%s762 + $0x48] sm:$0xf] %v9107
        %9428 = vst [vmem:[%s762 + $0x50] sm:$0xf] %v9109
        %9429 = vst [vmem:[%s762 + $0x58] sm:$0xf] %v9184
        %9430 = vst [vmem:[%s762 + $0x60] sm:$0xf] %v9186
        %9431 = vst [vmem:[%s762 + $0x68] sm:$0xf] %v9261
        %9432 = vst [vmem:[%s762 + $0x70] sm:$0xf] %v9263
        %9433 = vst [vmem:[%s762 + $0x78] sm:$0xf] %v9338
        %9434 = vst [vmem:[%s762 + $0x80] sm:$0xf] %v9340
        %vm9435 = vcmask 519168
        %9436 = vst.msk [vmem:[%s762 + $0x88] sm:$0xf] %vm9435, %v9414
        %p9437 = scmp.lt.s32.totalorder %s36, 1
        %s9438 = scalar_select %p9437, %s36, 1
        %s9439 = smul.addr %s9438, 18
        %s9440 = smul.addr %s9439, 8
        %s9441 = scalar_lea.vmem %s19, %s9440
        // Predicated region
        $region141: #{decoder_forward.1} parent=95 // pred_check
          %p9442 = pneg %p458
        $region142: #{decoder_forward.1} parent=95 // pred_check_branch
          %9444 = sbr.rel (%p9442) target = $region144
        $region143: #{decoder_forward.1} parent=95 // pred_region
          _
        $region144: #{decoder_forward.1} parent=95 // pred_fallthru
          _
      $region96: #{decoder_forward.1} parent=5 // pred_fallthru
        _
      %p9445 = scmp.le.s32.totalorder 2, %s31
      // Predicated region
      $region145: #{decoder_forward.1} parent=5 // pred_check
        %p9446 = pneg %p9445
      $region146: #{decoder_forward.1} parent=5 // pred_check_branch
        %9448 = sbr.rel (%p9446) target = $region148
      $region147: #{decoder_forward.1} parent=5 // pred_region
        %s9449 = ssub.s32 %s31, 2
        // Predicated region
        $region149: #{decoder_forward.1} parent=147 // pred_check
          %p9450 = pneg %p464
        $region150: #{decoder_forward.1} parent=147 // pred_check_branch
          %9452 = sbr.rel (%p9450) target = $region152
        $region151: #{decoder_forward.1} parent=147 // pred_region
          %p9453 = scmp.lt.s32.totalorder %s37, 1
          %s9454 = scalar_select %p9453, %s37, 1
          %s9455 = smul.addr %s9454, 18
          %s9456 = smul.addr %s9455, 8
          %s9457 = scalar_lea.vmem %s19, %s9456
        $region152: #{decoder_forward.1} parent=147 // pred_fallthru
          _
      $region148: #{decoder_forward.1} parent=5 // pred_fallthru
        _
    $region6: #{decoder_forward.1} parent=1 // loop_footer
      %s35 = sadd.s32 1, %s31
    $region7: #{decoder_forward.1} parent=1 // loop_footer_branch
      %30 = sbr.rel target = $region3
    $region8: #{decoder_forward.1} parent=1 // loop_exit
      _
    %9458 = vsyncpa [#allocation3], 1
    %s9459 = scalar_lea.sflag [#allocation3], 1
    %9460 = vsyncpa %s9459, 1
    %9461 = vsyncpa [#allocation5], 1
    %9462 = vsyncpa [#allocation8], 1
    %9463 = vsyncpa [#allocation11], 1
    %9464 = vsyncpa [#allocation14], 1
    %9465 = vsyncpa [#allocation17], 1

</llo_original>
